<compile_context>
chip_gen: v6e
topology: v6e:2x2x1
jax: 0.10.0
libtpu: 0.0.40
codegen_flags: <defaults>
</compile_context>

<pallas_src>
import numpy as np

import jax
import jax.numpy as jnp
from jax import lax
from jax.experimental import pallas as pl
from jax.experimental.pallas import tpu as pltpu


# ----------------------------------------------------------------------------
# Static geometry (4x4 / stride 2 / pad 1 convs) and constant selection matrices
# ----------------------------------------------------------------------------
def _conv_geom(input_num):
    # (H, W, C_in, C_out) for conv1..conv4
    return [(16, 160, input_num, 8), (8, 80, 8, 16), (4, 40, 16, 16), (2, 20, 16, 32)]


def _w_select(W):
    """0/1 matrix (W, 4*w_out): column (j, ow) picks input col 2*ow + j - 1 (pad -> 0)."""
    w_out = W // 2
    S = np.zeros((W, 4 * w_out), np.float32)
    for j in range(4):
        for ow in range(w_out):
            w = 2 * ow + j - 1
            if 0 <= w < W:
                S[w, j * w_out + ow] = 1.0
    return jnp.asarray(S)


def _h_select(H, c_in):
    """0/1 matrix (h_out*4*c_in, H*c_in): row (oh, i, ci) picks input row (2*oh+i-1, ci)."""
    h_out = H // 2
    M = np.zeros((h_out * 4 * c_in, H * c_in), np.float32)
    for oh in range(h_out):
        for i in range(4):
            h = 2 * oh + i - 1
            if 0 <= h < H:
                for ci in range(c_in):
                    M[(oh * 4 + i) * c_in + ci, h * c_in + ci] = 1.0
    return jnp.asarray(M)


# ----------------------------------------------------------------------------
# Parameter init (deterministic, PyTorch-like fan-in uniform) + one-time re-layout
# ----------------------------------------------------------------------------
def _uniform(key, shape, fan_in):
    bound = 1.0 / jnp.sqrt(jnp.float32(fan_in))
    return jax.random.uniform(key, shape, jnp.float32, -bound, bound)


def init_params(key, input_num=2, nb_vel=2, nb_actions=4):
    keys = jax.random.split(key, 16)
    p = {}
    conv_defs = [
        ("c1", 8, input_num, 4, 4),
        ("c2", 16, 8, 4, 4),
        ("c3", 16, 16, 4, 4),
        ("c4", 32, 16, 4, 4),
        ("c5", 32, 32, 1, 10),
    ]
    k = 0
    for name, co, ci, kh, kw in conv_defs:
        fan_in = ci * kh * kw
        p[name + "_w"] = _uniform(keys[k], (co, ci, kh, kw), fan_in); k += 1
        p[name + "_b"] = _uniform(keys[k], (co,), fan_in); k += 1
    lin_defs = [("fc1", 32, 32 + nb_vel), ("fc2", 16, 32), ("head", nb_actions, 16)]
    for name, out_f, in_f in lin_defs:
        p[name + "_w"] = _uniform(keys[k], (out_f, in_f), in_f); k += 1
        p[name + "_b"] = _uniform(keys[k], (out_f,), in_f); k += 1
    return p


def prepare_params(params, input_num=2):
    """One-time re-layout of parameters into the fused kernel's GEMM formats."""
    prep = {}
    for name, (H, W, cin, cout) in zip(["c1", "c2", "c3", "c4"], _conv_geom(input_num)):
        w = params[name + "_w"]                       # (cout, cin, 4, 4) torch layout
        # column order (j, i, ci) to match the in-kernel patch row ordering
        prep[name + "_wg"] = jnp.transpose(w, (0, 3, 2, 1)).reshape(cout, 16 * cin)
        prep[name + "_bg"] = params[name + "_b"].reshape(cout, 1)
        prep[name + "_S"] = _w_select(W)
        prep[name + "_H"] = _h_select(H, cin)
    w5 = params["c5_w"]                               # (32, 32, 1, 10)
    prep["c5_wg"] = jnp.transpose(w5, (0, 3, 2, 1)).reshape(32, 320)   # col = j*32 + ci
    prep["c5_bg"] = params["c5_b"].reshape(32, 1)
    prep["fc1_w"] = params["fc1_w"]
    prep["fc2_w"] = params["fc2_w"]
    prep["head_w"] = params["head_w"]
    prep["fc1_b"] = params["fc1_b"].reshape(-1, 1)
    prep["fc2_b"] = params["fc2_b"].reshape(-1, 1)
    prep["head_b"] = params["head_b"].reshape(-1, 1)
    return prep


# ----------------------------------------------------------------------------
# The fused Pallas kernel (single program; everything VMEM-resident)
# ----------------------------------------------------------------------------
def _make_kernel(B, input_num, nb_vel, nb_actions):
    geom = _conv_geom(input_num)

    def kernel(*refs):
        (x_ref, yt_ref,
         s1_ref, s2_ref, s3_ref, s4_ref,
         h1_ref, h2_ref, h3_ref, h4_ref,
         w1_ref, w2_ref, w3_ref, w4_ref, w5_ref,
         cb1_ref, cb2_ref, cb3_ref, cb4_ref, cb5_ref,
         fw1_ref, fw2_ref, fw3_ref,
         fb1_ref, fb2_ref, fb3_ref,
         o_ref) = refs

        sall = [s1_ref[...], s2_ref[...], s3_ref[...], s4_ref[...]]
        hsel = [h1_ref[...], h2_ref[...], h3_ref[...], h4_ref[...]]
        wg = [w1_ref[...], w2_ref[...], w3_ref[...], w4_ref[...]]
        bg = [cb1_ref[...], cb2_ref[...], cb3_ref[...], cb4_ref[...]]
        w5g, b5g = w5_ref[...], cb5_ref[...]
        fc_w = [fw1_ref[...], fw2_ref[...], fw3_ref[...]]
        fc_b = [fb1_ref[...], fb2_ref[...], fb3_ref[...]]

        x_all = x_ref[...]        # (B*16*C1, 160), row = (b, h, ci)
        y_all = yt_ref[...]       # (nb_vel, B)

        H1, W1, C1, _ = geom[0]
        out_cols = []
        for bi in range(B):                                     # static unroll (B small)
            a = x_all[bi * H1 * C1:(bi + 1) * H1 * C1, :]       # (H1*C1, W1)

            # conv1..conv4: 4x4, stride 2, pad 1 -- separable selection-matmul im2col
            for l, (H, W, c_in, c_out) in enumerate(geom):
                h_out, w_out = H // 2, W // 2
                # W-direction taps: (H*c_in, W) @ (W, 4*w_out)
                gall = jnp.dot(a, sall[l], preferred_element_type=jnp.float32)
                # H-direction taps + zero padding rows: (h_out*4*c_in, H*c_in) @ gall
                pall = jnp.dot(hsel[l], gall, preferred_element_type=jnp.float32)
                rows = []
                for oh in range(h_out):
                    blk = pall[oh * 4 * c_in:(oh + 1) * 4 * c_in, :]       # rows (i, ci)
                    pblk = jnp.concatenate(
                        [blk[:, j * w_out:(j + 1) * w_out] for j in range(4)],
                        axis=0)                                            # (16*c_in, w_out)
                    acc = jnp.dot(wg[l], pblk,
                                  preferred_element_type=jnp.float32) + bg[l]
                    rows.append(jnp.maximum(acc, 0.0))                     # (c_out, w_out)
                a = jnp.concatenate(rows, axis=0)                          # (h_out*c_out, w_out)

            # conv5: (1, 10) kernel on a (1, 10) map == dense contraction; a is (32, 10)
            vec = jnp.concatenate([a[:, j:j + 1] for j in range(10)], axis=0)  # (320, 1)
            feat = jnp.maximum(
                jnp.dot(w5g, vec, preferred_element_type=jnp.float32) + b5g, 0.0)  # (32, 1)

            # fc stage (column orientation): concat velocity in-kernel
            xx = jnp.concatenate([feat, y_all[:, bi:bi + 1]], axis=0)      # (32+nb_vel, 1)
            hid = jnp.maximum(
                jnp.dot(fc_w[0], xx, preferred_element_type=jnp.float32) + fc_b[0], 0.0)
            hid = jnp.maximum(
                jnp.dot(fc_w[1], hid, preferred_element_type=jnp.float32) + fc_b[1], 0.0)
            out_cols.append(
                jnp.dot(fc_w[2], hid, preferred_element_type=jnp.float32) + fc_b[2])

        o_ref[...] = jnp.concatenate(out_cols, axis=1)          # (nb_actions, B)

    return kernel


# ----------------------------------------------------------------------------
# Forward pass (omni_dir = False)
# ----------------------------------------------------------------------------
# TODO(synk): omni_dir=True (4-view feature concat) and forward_disp's intermediate
# activation outputs are not implemented; only the default forward path is.
def dqn_conv_forward(prep, x, y):
    B, C_in, H, W = x.shape
    assert (H, W) == (16, 160), "DQNConv geometry requires input spatial (16, 160)"
    nb_vel = y.shape[1]
    nb_actions = prep["head_w"].shape[0]

    # Layout plumbing (cheap, outside the kernel): rows = (b, h, ci), lanes = w.
    x2d = jnp.transpose(x, (0, 2, 1, 3)).reshape(B * H * C_in, W).astype(jnp.float32)
    y_t = y.astype(jnp.float32).T                              # (nb_vel, B)

    operands = [
        x2d, y_t,
        prep["c1_S"], prep["c2_S"], prep["c3_S"], prep["c4_S"],
        prep["c1_H"], prep["c2_H"], prep["c3_H"], prep["c4_H"],
        prep["c1_wg"], prep["c2_wg"], prep["c3_wg"], prep["c4_wg"], prep["c5_wg"],
        prep["c1_bg"], prep["c2_bg"], prep["c3_bg"], prep["c4_bg"], prep["c5_bg"],
        prep["fc1_w"], prep["fc2_w"], prep["head_w"],
        prep["fc1_b"], prep["fc2_b"], prep["head_b"],
    ]

    vmem = pl.BlockSpec(memory_space=pltpu.MemorySpace.VMEM)
    out_t = pl.pallas_call(
        _make_kernel(B, C_in, nb_vel, nb_actions),
        out_shape=jax.ShapeDtypeStruct((nb_actions, B), jnp.float32),
        in_specs=[vmem] * len(operands),
        out_specs=vmem,
        cost_estimate=pl.CostEstimate(
            flops=25_000_000, transcendentals=0, bytes_accessed=500_000),
    )(*operands)
    return out_t.T                                             # (B, nb_actions)


# ----------------------------------------------------------------------------
# Pure-JAX reference (XLA conv) for a correctness check
# ----------------------------------------------------------------------------
def reference_forward(params, x, y):
    prec = lax.Precision.HIGHEST

    def conv(z, w, b, stride, pad):
        out = lax.conv_general_dilated(
            z, w, window_strides=(stride, stride),
            padding=[(pad, pad), (pad, pad)],
            dimension_numbers=("NCHW", "OIHW", "NCHW"),
            precision=prec)
        return out + b.reshape(1, -1, 1, 1)

    a = jax.nn.relu(conv(x, params["c1_w"], params["c1_b"], 2, 1))
    a = jax.nn.relu(conv(a, params["c2_w"], params["c2_b"], 2, 1))
    a = jax.nn.relu(conv(a, params["c3_w"], params["c3_b"], 2, 1))
    a = jax.nn.relu(conv(a, params["c4_w"], params["c4_b"], 2, 1))
    a = jax.nn.relu(conv(a, params["c5_w"], params["c5_b"], 1, 0))
    feat = a.reshape(a.shape[0], -1)
    xx = jnp.concatenate([feat, y], axis=1)
    xx = jax.nn.relu(jnp.dot(xx, params["fc1_w"].T, precision=prec) + params["fc1_b"])
    xx = jax.nn.relu(jnp.dot(xx, params["fc2_w"].T, precision=prec) + params["fc2_b"])
    return jnp.dot(xx, params["head_w"].T, precision=prec) + params["head_b"]


if __name__ == "__main__":
    B, input_num, H, W = 2, 2, 16, 160
    nb_vel, nb_actions = 2, 4

    key = jax.random.PRNGKey(0)
    k_params, k_x, k_y = jax.random.split(key, 3)
    params = init_params(k_params, input_num=input_num, nb_vel=nb_vel,
                         nb_actions=nb_actions)
    prep = prepare_params(params, input_num=input_num)

    x = jax.random.normal(k_x, (B, input_num, H, W), jnp.float32)
    y = jax.random.normal(k_y, (B, nb_vel), jnp.float32)

    out = jax.jit(dqn_conv_forward)(prep, x, y)
    out = jax.block_until_ready(out)
    assert out.shape == (B, nb_actions), out.shape
    assert bool(jnp.all(jnp.isfinite(out)))

    ref = jax.block_until_ready(jax.jit(reference_forward)(params, x, y))
    assert jnp.allclose(out, ref, rtol=2e-2, atol=2e-2), (out, ref)

    print("KERNEL_OK")
</pallas_src>

<mosaic_0001>
module attributes {stable_mosaic.version = 11 : i64} {
  func.func @kernel(%arg0: memref<64x160xf32, #tpu.memory_space<vmem>>, %arg1: memref<2x2xf32, #tpu.memory_space<vmem>>, %arg2: memref<160x320xf32, #tpu.memory_space<vmem>>, %arg3: memref<80x160xf32, #tpu.memory_space<vmem>>, %arg4: memref<40x80xf32, #tpu.memory_space<vmem>>, %arg5: memref<20x40xf32, #tpu.memory_space<vmem>>, %arg6: memref<64x32xf32, #tpu.memory_space<vmem>>, %arg7: memref<128x64xf32, #tpu.memory_space<vmem>>, %arg8: memref<128x64xf32, #tpu.memory_space<vmem>>, %arg9: memref<64x32xf32, #tpu.memory_space<vmem>>, %arg10: memref<8x32xf32, #tpu.memory_space<vmem>>, %arg11: memref<16x128xf32, #tpu.memory_space<vmem>>, %arg12: memref<16x256xf32, #tpu.memory_space<vmem>>, %arg13: memref<32x256xf32, #tpu.memory_space<vmem>>, %arg14: memref<32x320xf32, #tpu.memory_space<vmem>>, %arg15: memref<8x1xf32, #tpu.memory_space<vmem>>, %arg16: memref<16x1xf32, #tpu.memory_space<vmem>>, %arg17: memref<16x1xf32, #tpu.memory_space<vmem>>, %arg18: memref<32x1xf32, #tpu.memory_space<vmem>>, %arg19: memref<32x1xf32, #tpu.memory_space<vmem>>, %arg20: memref<32x34xf32, #tpu.memory_space<vmem>>, %arg21: memref<16x32xf32, #tpu.memory_space<vmem>>, %arg22: memref<4x16xf32, #tpu.memory_space<vmem>>, %arg23: memref<32x1xf32, #tpu.memory_space<vmem>>, %arg24: memref<16x1xf32, #tpu.memory_space<vmem>>, %arg25: memref<4x1xf32, #tpu.memory_space<vmem>>, %arg26: memref<4x2xf32, #tpu.memory_space<vmem>>) attributes {dimension_semantics = [], scalar_prefetch = 0 : i64, scratch_operands = 0 : i64, tpu.core_type = #tpu.core_type<tc>} {
    %c0 = arith.constant 0 : index
    %c0_0 = arith.constant 0 : index
    %0 = vector.load %arg2[%c0, %c0_0] : memref<160x320xf32, #tpu.memory_space<vmem>>, vector<160x320xf32>
    %c0_1 = arith.constant 0 : index
    %c0_2 = arith.constant 0 : index
    %1 = vector.load %arg3[%c0_1, %c0_2] : memref<80x160xf32, #tpu.memory_space<vmem>>, vector<80x160xf32>
    %c0_3 = arith.constant 0 : index
    %c0_4 = arith.constant 0 : index
    %2 = vector.load %arg4[%c0_3, %c0_4] : memref<40x80xf32, #tpu.memory_space<vmem>>, vector<40x80xf32>
    %c0_5 = arith.constant 0 : index
    %c0_6 = arith.constant 0 : index
    %3 = vector.load %arg5[%c0_5, %c0_6] : memref<20x40xf32, #tpu.memory_space<vmem>>, vector<20x40xf32>
    %c0_7 = arith.constant 0 : index
    %c0_8 = arith.constant 0 : index
    %4 = vector.load %arg6[%c0_7, %c0_8] : memref<64x32xf32, #tpu.memory_space<vmem>>, vector<64x32xf32>
    %c0_9 = arith.constant 0 : index
    %c0_10 = arith.constant 0 : index
    %5 = vector.load %arg7[%c0_9, %c0_10] : memref<128x64xf32, #tpu.memory_space<vmem>>, vector<128x64xf32>
    %c0_11 = arith.constant 0 : index
    %c0_12 = arith.constant 0 : index
    %6 = vector.load %arg8[%c0_11, %c0_12] : memref<128x64xf32, #tpu.memory_space<vmem>>, vector<128x64xf32>
    %c0_13 = arith.constant 0 : index
    %c0_14 = arith.constant 0 : index
    %7 = vector.load %arg9[%c0_13, %c0_14] : memref<64x32xf32, #tpu.memory_space<vmem>>, vector<64x32xf32>
    %c0_15 = arith.constant 0 : index
    %c0_16 = arith.constant 0 : index
    %8 = vector.load %arg10[%c0_15, %c0_16] : memref<8x32xf32, #tpu.memory_space<vmem>>, vector<8x32xf32>
    %c0_17 = arith.constant 0 : index
    %c0_18 = arith.constant 0 : index
    %9 = vector.load %arg11[%c0_17, %c0_18] : memref<16x128xf32, #tpu.memory_space<vmem>>, vector<16x128xf32>
    %c0_19 = arith.constant 0 : index
    %c0_20 = arith.constant 0 : index
    %10 = vector.load %arg12[%c0_19, %c0_20] : memref<16x256xf32, #tpu.memory_space<vmem>>, vector<16x256xf32>
    %c0_21 = arith.constant 0 : index
    %c0_22 = arith.constant 0 : index
    %11 = vector.load %arg13[%c0_21, %c0_22] : memref<32x256xf32, #tpu.memory_space<vmem>>, vector<32x256xf32>
    %c0_23 = arith.constant 0 : index
    %c0_24 = arith.constant 0 : index
    %12 = vector.load %arg15[%c0_23, %c0_24] : memref<8x1xf32, #tpu.memory_space<vmem>>, vector<8x1xf32>
    %c0_25 = arith.constant 0 : index
    %c0_26 = arith.constant 0 : index
    %13 = vector.load %arg16[%c0_25, %c0_26] : memref<16x1xf32, #tpu.memory_space<vmem>>, vector<16x1xf32>
    %c0_27 = arith.constant 0 : index
    %c0_28 = arith.constant 0 : index
    %14 = vector.load %arg17[%c0_27, %c0_28] : memref<16x1xf32, #tpu.memory_space<vmem>>, vector<16x1xf32>
    %c0_29 = arith.constant 0 : index
    %c0_30 = arith.constant 0 : index
    %15 = vector.load %arg18[%c0_29, %c0_30] : memref<32x1xf32, #tpu.memory_space<vmem>>, vector<32x1xf32>
    %c0_31 = arith.constant 0 : index
    %c0_32 = arith.constant 0 : index
    %16 = vector.load %arg14[%c0_31, %c0_32] : memref<32x320xf32, #tpu.memory_space<vmem>>, vector<32x320xf32>
    %c0_33 = arith.constant 0 : index
    %c0_34 = arith.constant 0 : index
    %17 = vector.load %arg19[%c0_33, %c0_34] : memref<32x1xf32, #tpu.memory_space<vmem>>, vector<32x1xf32>
    %c0_35 = arith.constant 0 : index
    %c0_36 = arith.constant 0 : index
    %18 = vector.load %arg20[%c0_35, %c0_36] : memref<32x34xf32, #tpu.memory_space<vmem>>, vector<32x34xf32>
    %c0_37 = arith.constant 0 : index
    %c0_38 = arith.constant 0 : index
    %19 = vector.load %arg21[%c0_37, %c0_38] : memref<16x32xf32, #tpu.memory_space<vmem>>, vector<16x32xf32>
    %c0_39 = arith.constant 0 : index
    %c0_40 = arith.constant 0 : index
    %20 = vector.load %arg22[%c0_39, %c0_40] : memref<4x16xf32, #tpu.memory_space<vmem>>, vector<4x16xf32>
    %c0_41 = arith.constant 0 : index
    %c0_42 = arith.constant 0 : index
    %21 = vector.load %arg23[%c0_41, %c0_42] : memref<32x1xf32, #tpu.memory_space<vmem>>, vector<32x1xf32>
    %c0_43 = arith.constant 0 : index
    %c0_44 = arith.constant 0 : index
    %22 = vector.load %arg24[%c0_43, %c0_44] : memref<16x1xf32, #tpu.memory_space<vmem>>, vector<16x1xf32>
    %c0_45 = arith.constant 0 : index
    %c0_46 = arith.constant 0 : index
    %23 = vector.load %arg25[%c0_45, %c0_46] : memref<4x1xf32, #tpu.memory_space<vmem>>, vector<4x1xf32>
    %c0_47 = arith.constant 0 : index
    %c0_48 = arith.constant 0 : index
    %24 = vector.load %arg0[%c0_47, %c0_48] : memref<64x160xf32, #tpu.memory_space<vmem>>, vector<64x160xf32>
    %c0_49 = arith.constant 0 : index
    %c0_50 = arith.constant 0 : index
    %25 = vector.load %arg1[%c0_49, %c0_50] : memref<2x2xf32, #tpu.memory_space<vmem>>, vector<2x2xf32>
    %26 = vector.extract_strided_slice %24 {offsets = [0, 0], sizes = [32, 160], strides = [1, 1]} : vector<64x160xf32> to vector<32x160xf32>
    %cst = arith.constant dense<0.000000e+00> : vector<32x320xf32>
    %27 = tpu.matmul %26, %0, %cst {dimension_numbers = #tpu.dot_dimension_numbers<[1], [0], [0], [1], [0, 0, 1, 1], [], []>} : vector<32x160xf32>, vector<160x320xf32>, vector<32x320xf32> -> vector<32x320xf32>
    %cst_51 = arith.constant dense<0.000000e+00> : vector<64x320xf32>
    %28 = tpu.matmul %4, %27, %cst_51 {dimension_numbers = #tpu.dot_dimension_numbers<[1], [0], [0], [1], [0, 0, 1, 1], [], []>} : vector<64x32xf32>, vector<32x320xf32>, vector<64x320xf32> -> vector<64x320xf32>
    %29 = vector.extract_strided_slice %28 {offsets = [0, 0], sizes = [8, 320], strides = [1, 1]} : vector<64x320xf32> to vector<8x320xf32>
    %30 = vector.extract_strided_slice %29 {offsets = [0, 0], sizes = [8, 80], strides = [1, 1]} : vector<8x320xf32> to vector<8x80xf32>
    %31 = vector.extract_strided_slice %29 {offsets = [0, 80], sizes = [8, 80], strides = [1, 1]} : vector<8x320xf32> to vector<8x80xf32>
    %32 = vector.extract_strided_slice %29 {offsets = [0, 160], sizes = [8, 80], strides = [1, 1]} : vector<8x320xf32> to vector<8x80xf32>
    %33 = vector.extract_strided_slice %29 {offsets = [0, 240], sizes = [8, 80], strides = [1, 1]} : vector<8x320xf32> to vector<8x80xf32>
    %34 = tpu.concatenate %30, %31, %32, %33 in 0 : vector<8x80xf32>, vector<8x80xf32>, vector<8x80xf32>, vector<8x80xf32> -> vector<32x80xf32>
    %cst_52 = arith.constant dense<0.000000e+00> : vector<8x80xf32>
    %35 = tpu.matmul %8, %34, %cst_52 {dimension_numbers = #tpu.dot_dimension_numbers<[1], [0], [0], [1], [0, 0, 1, 1], [], []>} : vector<8x32xf32>, vector<32x80xf32>, vector<8x80xf32> -> vector<8x80xf32>
    %36 = vector.broadcast %12 : vector<8x1xf32> to vector<8x80xf32>
    %37 = arith.addf %35, %36 : vector<8x80xf32>
    %cst_53 = arith.constant 0.000000e+00 : f32
    %38 = vector.broadcast %cst_53 : f32 to vector<8x80xf32>
    %39 = arith.maximumf %37, %38 : vector<8x80xf32>
    %40 = vector.extract_strided_slice %28 {offsets = [8, 0], sizes = [8, 320], strides = [1, 1]} : vector<64x320xf32> to vector<8x320xf32>
    %41 = vector.extract_strided_slice %40 {offsets = [0, 0], sizes = [8, 80], strides = [1, 1]} : vector<8x320xf32> to vector<8x80xf32>
    %42 = vector.extract_strided_slice %40 {offsets = [0, 80], sizes = [8, 80], strides = [1, 1]} : vector<8x320xf32> to vector<8x80xf32>
    %43 = vector.extract_strided_slice %40 {offsets = [0, 160], sizes = [8, 80], strides = [1, 1]} : vector<8x320xf32> to vector<8x80xf32>
    %44 = vector.extract_strided_slice %40 {offsets = [0, 240], sizes = [8, 80], strides = [1, 1]} : vector<8x320xf32> to vector<8x80xf32>
    %45 = tpu.concatenate %41, %42, %43, %44 in 0 : vector<8x80xf32>, vector<8x80xf32>, vector<8x80xf32>, vector<8x80xf32> -> vector<32x80xf32>
    %cst_54 = arith.constant dense<0.000000e+00> : vector<8x80xf32>
    %46 = tpu.matmul %8, %45, %cst_54 {dimension_numbers = #tpu.dot_dimension_numbers<[1], [0], [0], [1], [0, 0, 1, 1], [], []>} : vector<8x32xf32>, vector<32x80xf32>, vector<8x80xf32> -> vector<8x80xf32>
    %47 = vector.broadcast %12 : vector<8x1xf32> to vector<8x80xf32>
    %48 = arith.addf %46, %47 : vector<8x80xf32>
    %cst_55 = arith.constant 0.000000e+00 : f32
    %49 = vector.broadcast %cst_55 : f32 to vector<8x80xf32>
    %50 = arith.maximumf %48, %49 : vector<8x80xf32>
    %51 = vector.extract_strided_slice %28 {offsets = [16, 0], sizes = [8, 320], strides = [1, 1]} : vector<64x320xf32> to vector<8x320xf32>
    %52 = vector.extract_strided_slice %51 {offsets = [0, 0], sizes = [8, 80], strides = [1, 1]} : vector<8x320xf32> to vector<8x80xf32>
    %53 = vector.extract_strided_slice %51 {offsets = [0, 80], sizes = [8, 80], strides = [1, 1]} : vector<8x320xf32> to vector<8x80xf32>
    %54 = vector.extract_strided_slice %51 {offsets = [0, 160], sizes = [8, 80], strides = [1, 1]} : vector<8x320xf32> to vector<8x80xf32>
    %55 = vector.extract_strided_slice %51 {offsets = [0, 240], sizes = [8, 80], strides = [1, 1]} : vector<8x320xf32> to vector<8x80xf32>
    %56 = tpu.concatenate %52, %53, %54, %55 in 0 : vector<8x80xf32>, vector<8x80xf32>, vector<8x80xf32>, vector<8x80xf32> -> vector<32x80xf32>
    %cst_56 = arith.constant dense<0.000000e+00> : vector<8x80xf32>
    %57 = tpu.matmul %8, %56, %cst_56 {dimension_numbers = #tpu.dot_dimension_numbers<[1], [0], [0], [1], [0, 0, 1, 1], [], []>} : vector<8x32xf32>, vector<32x80xf32>, vector<8x80xf32> -> vector<8x80xf32>
    %58 = vector.broadcast %12 : vector<8x1xf32> to vector<8x80xf32>
    %59 = arith.addf %57, %58 : vector<8x80xf32>
    %cst_57 = arith.constant 0.000000e+00 : f32
    %60 = vector.broadcast %cst_57 : f32 to vector<8x80xf32>
    %61 = arith.maximumf %59, %60 : vector<8x80xf32>
    %62 = vector.extract_strided_slice %28 {offsets = [24, 0], sizes = [8, 320], strides = [1, 1]} : vector<64x320xf32> to vector<8x320xf32>
    %63 = vector.extract_strided_slice %62 {offsets = [0, 0], sizes = [8, 80], strides = [1, 1]} : vector<8x320xf32> to vector<8x80xf32>
    %64 = vector.extract_strided_slice %62 {offsets = [0, 80], sizes = [8, 80], strides = [1, 1]} : vector<8x320xf32> to vector<8x80xf32>
    %65 = vector.extract_strided_slice %62 {offsets = [0, 160], sizes = [8, 80], strides = [1, 1]} : vector<8x320xf32> to vector<8x80xf32>
    %66 = vector.extract_strided_slice %62 {offsets = [0, 240], sizes = [8, 80], strides = [1, 1]} : vector<8x320xf32> to vector<8x80xf32>
    %67 = tpu.concatenate %63, %64, %65, %66 in 0 : vector<8x80xf32>, vector<8x80xf32>, vector<8x80xf32>, vector<8x80xf32> -> vector<32x80xf32>
    %cst_58 = arith.constant dense<0.000000e+00> : vector<8x80xf32>
    %68 = tpu.matmul %8, %67, %cst_58 {dimension_numbers = #tpu.dot_dimension_numbers<[1], [0], [0], [1], [0, 0, 1, 1], [], []>} : vector<8x32xf32>, vector<32x80xf32>, vector<8x80xf32> -> vector<8x80xf32>
    %69 = vector.broadcast %12 : vector<8x1xf32> to vector<8x80xf32>
    %70 = arith.addf %68, %69 : vector<8x80xf32>
    %cst_59 = arith.constant 0.000000e+00 : f32
    %71 = vector.broadcast %cst_59 : f32 to vector<8x80xf32>
    %72 = arith.maximumf %70, %71 : vector<8x80xf32>
    %73 = vector.extract_strided_slice %28 {offsets = [32, 0], sizes = [8, 320], strides = [1, 1]} : vector<64x320xf32> to vector<8x320xf32>
    %74 = vector.extract_strided_slice %73 {offsets = [0, 0], sizes = [8, 80], strides = [1, 1]} : vector<8x320xf32> to vector<8x80xf32>
    %75 = vector.extract_strided_slice %73 {offsets = [0, 80], sizes = [8, 80], strides = [1, 1]} : vector<8x320xf32> to vector<8x80xf32>
    %76 = vector.extract_strided_slice %73 {offsets = [0, 160], sizes = [8, 80], strides = [1, 1]} : vector<8x320xf32> to vector<8x80xf32>
    %77 = vector.extract_strided_slice %73 {offsets = [0, 240], sizes = [8, 80], strides = [1, 1]} : vector<8x320xf32> to vector<8x80xf32>
    %78 = tpu.concatenate %74, %75, %76, %77 in 0 : vector<8x80xf32>, vector<8x80xf32>, vector<8x80xf32>, vector<8x80xf32> -> vector<32x80xf32>
    %cst_60 = arith.constant dense<0.000000e+00> : vector<8x80xf32>
    %79 = tpu.matmul %8, %78, %cst_60 {dimension_numbers = #tpu.dot_dimension_numbers<[1], [0], [0], [1], [0, 0, 1, 1], [], []>} : vector<8x32xf32>, vector<32x80xf32>, vector<8x80xf32> -> vector<8x80xf32>
    %80 = vector.broadcast %12 : vector<8x1xf32> to vector<8x80xf32>
    %81 = arith.addf %79, %80 : vector<8x80xf32>
    %cst_61 = arith.constant 0.000000e+00 : f32
    %82 = vector.broadcast %cst_61 : f32 to vector<8x80xf32>
    %83 = arith.maximumf %81, %82 : vector<8x80xf32>
    %84 = vector.extract_strided_slice %28 {offsets = [40, 0], sizes = [8, 320], strides = [1, 1]} : vector<64x320xf32> to vector<8x320xf32>
    %85 = vector.extract_strided_slice %84 {offsets = [0, 0], sizes = [8, 80], strides = [1, 1]} : vector<8x320xf32> to vector<8x80xf32>
    %86 = vector.extract_strided_slice %84 {offsets = [0, 80], sizes = [8, 80], strides = [1, 1]} : vector<8x320xf32> to vector<8x80xf32>
    %87 = vector.extract_strided_slice %84 {offsets = [0, 160], sizes = [8, 80], strides = [1, 1]} : vector<8x320xf32> to vector<8x80xf32>
    %88 = vector.extract_strided_slice %84 {offsets = [0, 240], sizes = [8, 80], strides = [1, 1]} : vector<8x320xf32> to vector<8x80xf32>
    %89 = tpu.concatenate %85, %86, %87, %88 in 0 : vector<8x80xf32>, vector<8x80xf32>, vector<8x80xf32>, vector<8x80xf32> -> vector<32x80xf32>
    %cst_62 = arith.constant dense<0.000000e+00> : vector<8x80xf32>
    %90 = tpu.matmul %8, %89, %cst_62 {dimension_numbers = #tpu.dot_dimension_numbers<[1], [0], [0], [1], [0, 0, 1, 1], [], []>} : vector<8x32xf32>, vector<32x80xf32>, vector<8x80xf32> -> vector<8x80xf32>
    %91 = vector.broadcast %12 : vector<8x1xf32> to vector<8x80xf32>
    %92 = arith.addf %90, %91 : vector<8x80xf32>
    %cst_63 = arith.constant 0.000000e+00 : f32
    %93 = vector.broadcast %cst_63 : f32 to vector<8x80xf32>
    %94 = arith.maximumf %92, %93 : vector<8x80xf32>
    %95 = vector.extract_strided_slice %28 {offsets = [48, 0], sizes = [8, 320], strides = [1, 1]} : vector<64x320xf32> to vector<8x320xf32>
    %96 = vector.extract_strided_slice %95 {offsets = [0, 0], sizes = [8, 80], strides = [1, 1]} : vector<8x320xf32> to vector<8x80xf32>
    %97 = vector.extract_strided_slice %95 {offsets = [0, 80], sizes = [8, 80], strides = [1, 1]} : vector<8x320xf32> to vector<8x80xf32>
    %98 = vector.extract_strided_slice %95 {offsets = [0, 160], sizes = [8, 80], strides = [1, 1]} : vector<8x320xf32> to vector<8x80xf32>
    %99 = vector.extract_strided_slice %95 {offsets = [0, 240], sizes = [8, 80], strides = [1, 1]} : vector<8x320xf32> to vector<8x80xf32>
    %100 = tpu.concatenate %96, %97, %98, %99 in 0 : vector<8x80xf32>, vector<8x80xf32>, vector<8x80xf32>, vector<8x80xf32> -> vector<32x80xf32>
    %cst_64 = arith.constant dense<0.000000e+00> : vector<8x80xf32>
    %101 = tpu.matmul %8, %100, %cst_64 {dimension_numbers = #tpu.dot_dimension_numbers<[1], [0], [0], [1], [0, 0, 1, 1], [], []>} : vector<8x32xf32>, vector<32x80xf32>, vector<8x80xf32> -> vector<8x80xf32>
    %102 = vector.broadcast %12 : vector<8x1xf32> to vector<8x80xf32>
    %103 = arith.addf %101, %102 : vector<8x80xf32>
    %cst_65 = arith.constant 0.000000e+00 : f32
    %104 = vector.broadcast %cst_65 : f32 to vector<8x80xf32>
    %105 = arith.maximumf %103, %104 : vector<8x80xf32>
    %106 = vector.extract_strided_slice %28 {offsets = [56, 0], sizes = [8, 320], strides = [1, 1]} : vector<64x320xf32> to vector<8x320xf32>
    %107 = vector.extract_strided_slice %106 {offsets = [0, 0], sizes = [8, 80], strides = [1, 1]} : vector<8x320xf32> to vector<8x80xf32>
    %108 = vector.extract_strided_slice %106 {offsets = [0, 80], sizes = [8, 80], strides = [1, 1]} : vector<8x320xf32> to vector<8x80xf32>
    %109 = vector.extract_strided_slice %106 {offsets = [0, 160], sizes = [8, 80], strides = [1, 1]} : vector<8x320xf32> to vector<8x80xf32>
    %110 = vector.extract_strided_slice %106 {offsets = [0, 240], sizes = [8, 80], strides = [1, 1]} : vector<8x320xf32> to vector<8x80xf32>
    %111 = tpu.concatenate %107, %108, %109, %110 in 0 : vector<8x80xf32>, vector<8x80xf32>, vector<8x80xf32>, vector<8x80xf32> -> vector<32x80xf32>
    %cst_66 = arith.constant dense<0.000000e+00> : vector<8x80xf32>
    %112 = tpu.matmul %8, %111, %cst_66 {dimension_numbers = #tpu.dot_dimension_numbers<[1], [0], [0], [1], [0, 0, 1, 1], [], []>} : vector<8x32xf32>, vector<32x80xf32>, vector<8x80xf32> -> vector<8x80xf32>
    %113 = vector.broadcast %12 : vector<8x1xf32> to vector<8x80xf32>
    %114 = arith.addf %112, %113 : vector<8x80xf32>
    %cst_67 = arith.constant 0.000000e+00 : f32
    %115 = vector.broadcast %cst_67 : f32 to vector<8x80xf32>
    %116 = arith.maximumf %114, %115 : vector<8x80xf32>
    %117 = tpu.concatenate %39, %50, %61, %72, %83, %94, %105, %116 in 0 : vector<8x80xf32>, vector<8x80xf32>, vector<8x80xf32>, vector<8x80xf32>, vector<8x80xf32>, vector<8x80xf32>, vector<8x80xf32>, vector<8x80xf32> -> vector<64x80xf32>
    %cst_68 = arith.constant dense<0.000000e+00> : vector<64x160xf32>
    %118 = tpu.matmul %117, %1, %cst_68 {dimension_numbers = #tpu.dot_dimension_numbers<[1], [0], [0], [1], [0, 0, 1, 1], [], []>} : vector<64x80xf32>, vector<80x160xf32>, vector<64x160xf32> -> vector<64x160xf32>
    %cst_69 = arith.constant dense<0.000000e+00> : vector<128x160xf32>
    %119 = tpu.matmul %5, %118, %cst_69 {dimension_numbers = #tpu.dot_dimension_numbers<[1], [0], [0], [1], [0, 0, 1, 1], [], []>} : vector<128x64xf32>, vector<64x160xf32>, vector<128x160xf32> -> vector<128x160xf32>
    %120 = vector.extract_strided_slice %119 {offsets = [0, 0], sizes = [32, 160], strides = [1, 1]} : vector<128x160xf32> to vector<32x160xf32>
    %121 = vector.extract_strided_slice %120 {offsets = [0, 0], sizes = [32, 40], strides = [1, 1]} : vector<32x160xf32> to vector<32x40xf32>
    %122 = vector.extract_strided_slice %120 {offsets = [0, 40], sizes = [32, 40], strides = [1, 1]} : vector<32x160xf32> to vector<32x40xf32>
    %123 = vector.extract_strided_slice %120 {offsets = [0, 80], sizes = [32, 40], strides = [1, 1]} : vector<32x160xf32> to vector<32x40xf32>
    %124 = vector.extract_strided_slice %120 {offsets = [0, 120], sizes = [32, 40], strides = [1, 1]} : vector<32x160xf32> to vector<32x40xf32>
    %125 = tpu.concatenate %121, %122, %123, %124 in 0 : vector<32x40xf32>, vector<32x40xf32>, vector<32x40xf32>, vector<32x40xf32> -> vector<128x40xf32>
    %cst_70 = arith.constant dense<0.000000e+00> : vector<16x40xf32>
    %126 = tpu.matmul %9, %125, %cst_70 {dimension_numbers = #tpu.dot_dimension_numbers<[1], [0], [0], [1], [0, 0, 1, 1], [], []>} : vector<16x128xf32>, vector<128x40xf32>, vector<16x40xf32> -> vector<16x40xf32>
    %127 = vector.broadcast %13 : vector<16x1xf32> to vector<16x40xf32>
    %128 = arith.addf %126, %127 : vector<16x40xf32>
    %cst_71 = arith.constant 0.000000e+00 : f32
    %129 = vector.broadcast %cst_71 : f32 to vector<16x40xf32>
    %130 = arith.maximumf %128, %129 : vector<16x40xf32>
    %131 = vector.extract_strided_slice %119 {offsets = [32, 0], sizes = [32, 160], strides = [1, 1]} : vector<128x160xf32> to vector<32x160xf32>
    %132 = vector.extract_strided_slice %131 {offsets = [0, 0], sizes = [32, 40], strides = [1, 1]} : vector<32x160xf32> to vector<32x40xf32>
    %133 = vector.extract_strided_slice %131 {offsets = [0, 40], sizes = [32, 40], strides = [1, 1]} : vector<32x160xf32> to vector<32x40xf32>
    %134 = vector.extract_strided_slice %131 {offsets = [0, 80], sizes = [32, 40], strides = [1, 1]} : vector<32x160xf32> to vector<32x40xf32>
    %135 = vector.extract_strided_slice %131 {offsets = [0, 120], sizes = [32, 40], strides = [1, 1]} : vector<32x160xf32> to vector<32x40xf32>
    %136 = tpu.concatenate %132, %133, %134, %135 in 0 : vector<32x40xf32>, vector<32x40xf32>, vector<32x40xf32>, vector<32x40xf32> -> vector<128x40xf32>
    %cst_72 = arith.constant dense<0.000000e+00> : vector<16x40xf32>
    %137 = tpu.matmul %9, %136, %cst_72 {dimension_numbers = #tpu.dot_dimension_numbers<[1], [0], [0], [1], [0, 0, 1, 1], [], []>} : vector<16x128xf32>, vector<128x40xf32>, vector<16x40xf32> -> vector<16x40xf32>
    %138 = vector.broadcast %13 : vector<16x1xf32> to vector<16x40xf32>
    %139 = arith.addf %137, %138 : vector<16x40xf32>
    %cst_73 = arith.constant 0.000000e+00 : f32
    %140 = vector.broadcast %cst_73 : f32 to vector<16x40xf32>
    %141 = arith.maximumf %139, %140 : vector<16x40xf32>
    %142 = vector.extract_strided_slice %119 {offsets = [64, 0], sizes = [32, 160], strides = [1, 1]} : vector<128x160xf32> to vector<32x160xf32>
    %143 = vector.extract_strided_slice %142 {offsets = [0, 0], sizes = [32, 40], strides = [1, 1]} : vector<32x160xf32> to vector<32x40xf32>
    %144 = vector.extract_strided_slice %142 {offsets = [0, 40], sizes = [32, 40], strides = [1, 1]} : vector<32x160xf32> to vector<32x40xf32>
    %145 = vector.extract_strided_slice %142 {offsets = [0, 80], sizes = [32, 40], strides = [1, 1]} : vector<32x160xf32> to vector<32x40xf32>
    %146 = vector.extract_strided_slice %142 {offsets = [0, 120], sizes = [32, 40], strides = [1, 1]} : vector<32x160xf32> to vector<32x40xf32>
    %147 = tpu.concatenate %143, %144, %145, %146 in 0 : vector<32x40xf32>, vector<32x40xf32>, vector<32x40xf32>, vector<32x40xf32> -> vector<128x40xf32>
    %cst_74 = arith.constant dense<0.000000e+00> : vector<16x40xf32>
    %148 = tpu.matmul %9, %147, %cst_74 {dimension_numbers = #tpu.dot_dimension_numbers<[1], [0], [0], [1], [0, 0, 1, 1], [], []>} : vector<16x128xf32>, vector<128x40xf32>, vector<16x40xf32> -> vector<16x40xf32>
    %149 = vector.broadcast %13 : vector<16x1xf32> to vector<16x40xf32>
    %150 = arith.addf %148, %149 : vector<16x40xf32>
    %cst_75 = arith.constant 0.000000e+00 : f32
    %151 = vector.broadcast %cst_75 : f32 to vector<16x40xf32>
    %152 = arith.maximumf %150, %151 : vector<16x40xf32>
    %153 = vector.extract_strided_slice %119 {offsets = [96, 0], sizes = [32, 160], strides = [1, 1]} : vector<128x160xf32> to vector<32x160xf32>
    %154 = vector.extract_strided_slice %153 {offsets = [0, 0], sizes = [32, 40], strides = [1, 1]} : vector<32x160xf32> to vector<32x40xf32>
    %155 = vector.extract_strided_slice %153 {offsets = [0, 40], sizes = [32, 40], strides = [1, 1]} : vector<32x160xf32> to vector<32x40xf32>
    %156 = vector.extract_strided_slice %153 {offsets = [0, 80], sizes = [32, 40], strides = [1, 1]} : vector<32x160xf32> to vector<32x40xf32>
    %157 = vector.extract_strided_slice %153 {offsets = [0, 120], sizes = [32, 40], strides = [1, 1]} : vector<32x160xf32> to vector<32x40xf32>
    %158 = tpu.concatenate %154, %155, %156, %157 in 0 : vector<32x40xf32>, vector<32x40xf32>, vector<32x40xf32>, vector<32x40xf32> -> vector<128x40xf32>
    %cst_76 = arith.constant dense<0.000000e+00> : vector<16x40xf32>
    %159 = tpu.matmul %9, %158, %cst_76 {dimension_numbers = #tpu.dot_dimension_numbers<[1], [0], [0], [1], [0, 0, 1, 1], [], []>} : vector<16x128xf32>, vector<128x40xf32>, vector<16x40xf32> -> vector<16x40xf32>
    %160 = vector.broadcast %13 : vector<16x1xf32> to vector<16x40xf32>
    %161 = arith.addf %159, %160 : vector<16x40xf32>
    %cst_77 = arith.constant 0.000000e+00 : f32
    %162 = vector.broadcast %cst_77 : f32 to vector<16x40xf32>
    %163 = arith.maximumf %161, %162 : vector<16x40xf32>
    %164 = tpu.concatenate %130, %141, %152, %163 in 0 : vector<16x40xf32>, vector<16x40xf32>, vector<16x40xf32>, vector<16x40xf32> -> vector<64x40xf32>
    %cst_78 = arith.constant dense<0.000000e+00> : vector<64x80xf32>
    %165 = tpu.matmul %164, %2, %cst_78 {dimension_numbers = #tpu.dot_dimension_numbers<[1], [0], [0], [1], [0, 0, 1, 1], [], []>} : vector<64x40xf32>, vector<40x80xf32>, vector<64x80xf32> -> vector<64x80xf32>
    %cst_79 = arith.constant dense<0.000000e+00> : vector<128x80xf32>
    %166 = tpu.matmul %6, %165, %cst_79 {dimension_numbers = #tpu.dot_dimension_numbers<[1], [0], [0], [1], [0, 0, 1, 1], [], []>} : vector<128x64xf32>, vector<64x80xf32>, vector<128x80xf32> -> vector<128x80xf32>
    %167 = vector.extract_strided_slice %166 {offsets = [0, 0], sizes = [64, 80], strides = [1, 1]} : vector<128x80xf32> to vector<64x80xf32>
    %168 = vector.extract_strided_slice %167 {offsets = [0, 0], sizes = [64, 20], strides = [1, 1]} : vector<64x80xf32> to vector<64x20xf32>
    %169 = vector.extract_strided_slice %167 {offsets = [0, 20], sizes = [64, 20], strides = [1, 1]} : vector<64x80xf32> to vector<64x20xf32>
    %170 = vector.extract_strided_slice %167 {offsets = [0, 40], sizes = [64, 20], strides = [1, 1]} : vector<64x80xf32> to vector<64x20xf32>
    %171 = vector.extract_strided_slice %167 {offsets = [0, 60], sizes = [64, 20], strides = [1, 1]} : vector<64x80xf32> to vector<64x20xf32>
    %172 = tpu.concatenate %168, %169, %170, %171 in 0 : vector<64x20xf32>, vector<64x20xf32>, vector<64x20xf32>, vector<64x20xf32> -> vector<256x20xf32>
    %cst_80 = arith.constant dense<0.000000e+00> : vector<16x20xf32>
    %173 = tpu.matmul %10, %172, %cst_80 {dimension_numbers = #tpu.dot_dimension_numbers<[1], [0], [0], [1], [0, 0, 1, 1], [], []>} : vector<16x256xf32>, vector<256x20xf32>, vector<16x20xf32> -> vector<16x20xf32>
    %174 = vector.broadcast %14 : vector<16x1xf32> to vector<16x20xf32>
    %175 = arith.addf %173, %174 : vector<16x20xf32>
    %cst_81 = arith.constant 0.000000e+00 : f32
    %176 = vector.broadcast %cst_81 : f32 to vector<16x20xf32>
    %177 = arith.maximumf %175, %176 : vector<16x20xf32>
    %178 = vector.extract_strided_slice %166 {offsets = [64, 0], sizes = [64, 80], strides = [1, 1]} : vector<128x80xf32> to vector<64x80xf32>
    %179 = vector.extract_strided_slice %178 {offsets = [0, 0], sizes = [64, 20], strides = [1, 1]} : vector<64x80xf32> to vector<64x20xf32>
    %180 = vector.extract_strided_slice %178 {offsets = [0, 20], sizes = [64, 20], strides = [1, 1]} : vector<64x80xf32> to vector<64x20xf32>
    %181 = vector.extract_strided_slice %178 {offsets = [0, 40], sizes = [64, 20], strides = [1, 1]} : vector<64x80xf32> to vector<64x20xf32>
    %182 = vector.extract_strided_slice %178 {offsets = [0, 60], sizes = [64, 20], strides = [1, 1]} : vector<64x80xf32> to vector<64x20xf32>
    %183 = tpu.concatenate %179, %180, %181, %182 in 0 : vector<64x20xf32>, vector<64x20xf32>, vector<64x20xf32>, vector<64x20xf32> -> vector<256x20xf32>
    %cst_82 = arith.constant dense<0.000000e+00> : vector<16x20xf32>
    %184 = tpu.matmul %10, %183, %cst_82 {dimension_numbers = #tpu.dot_dimension_numbers<[1], [0], [0], [1], [0, 0, 1, 1], [], []>} : vector<16x256xf32>, vector<256x20xf32>, vector<16x20xf32> -> vector<16x20xf32>
    %185 = vector.broadcast %14 : vector<16x1xf32> to vector<16x20xf32>
    %186 = arith.addf %184, %185 : vector<16x20xf32>
    %cst_83 = arith.constant 0.000000e+00 : f32
    %187 = vector.broadcast %cst_83 : f32 to vector<16x20xf32>
    %188 = arith.maximumf %186, %187 : vector<16x20xf32>
    %189 = tpu.concatenate %177, %188 in 0 : vector<16x20xf32>, vector<16x20xf32> -> vector<32x20xf32>
    %cst_84 = arith.constant dense<0.000000e+00> : vector<32x40xf32>
    %190 = tpu.matmul %189, %3, %cst_84 {dimension_numbers = #tpu.dot_dimension_numbers<[1], [0], [0], [1], [0, 0, 1, 1], [], []>} : vector<32x20xf32>, vector<20x40xf32>, vector<32x40xf32> -> vector<32x40xf32>
    %cst_85 = arith.constant dense<0.000000e+00> : vector<64x40xf32>
    %191 = tpu.matmul %7, %190, %cst_85 {dimension_numbers = #tpu.dot_dimension_numbers<[1], [0], [0], [1], [0, 0, 1, 1], [], []>} : vector<64x32xf32>, vector<32x40xf32>, vector<64x40xf32> -> vector<64x40xf32>
    %192 = vector.extract_strided_slice %191 {offsets = [0, 0], sizes = [64, 10], strides = [1, 1]} : vector<64x40xf32> to vector<64x10xf32>
    %193 = vector.extract_strided_slice %191 {offsets = [0, 10], sizes = [64, 10], strides = [1, 1]} : vector<64x40xf32> to vector<64x10xf32>
    %194 = vector.extract_strided_slice %191 {offsets = [0, 20], sizes = [64, 10], strides = [1, 1]} : vector<64x40xf32> to vector<64x10xf32>
    %195 = vector.extract_strided_slice %191 {offsets = [0, 30], sizes = [64, 10], strides = [1, 1]} : vector<64x40xf32> to vector<64x10xf32>
    %196 = tpu.concatenate %192, %193, %194, %195 in 0 : vector<64x10xf32>, vector<64x10xf32>, vector<64x10xf32>, vector<64x10xf32> -> vector<256x10xf32>
    %cst_86 = arith.constant dense<0.000000e+00> : vector<32x10xf32>
    %197 = tpu.matmul %11, %196, %cst_86 {dimension_numbers = #tpu.dot_dimension_numbers<[1], [0], [0], [1], [0, 0, 1, 1], [], []>} : vector<32x256xf32>, vector<256x10xf32>, vector<32x10xf32> -> vector<32x10xf32>
    %198 = vector.broadcast %15 : vector<32x1xf32> to vector<32x10xf32>
    %199 = arith.addf %197, %198 : vector<32x10xf32>
    %cst_87 = arith.constant 0.000000e+00 : f32
    %200 = vector.broadcast %cst_87 : f32 to vector<32x10xf32>
    %201 = arith.maximumf %199, %200 : vector<32x10xf32>
    %202 = vector.extract_strided_slice %201 {offsets = [0, 0], sizes = [32, 1], strides = [1, 1]} : vector<32x10xf32> to vector<32x1xf32>
    %203 = vector.extract_strided_slice %201 {offsets = [0, 1], sizes = [32, 1], strides = [1, 1]} : vector<32x10xf32> to vector<32x1xf32>
    %204 = vector.extract_strided_slice %201 {offsets = [0, 2], sizes = [32, 1], strides = [1, 1]} : vector<32x10xf32> to vector<32x1xf32>
    %205 = vector.extract_strided_slice %201 {offsets = [0, 3], sizes = [32, 1], strides = [1, 1]} : vector<32x10xf32> to vector<32x1xf32>
    %206 = vector.extract_strided_slice %201 {offsets = [0, 4], sizes = [32, 1], strides = [1, 1]} : vector<32x10xf32> to vector<32x1xf32>
    %207 = vector.extract_strided_slice %201 {offsets = [0, 5], sizes = [32, 1], strides = [1, 1]} : vector<32x10xf32> to vector<32x1xf32>
    %208 = vector.extract_strided_slice %201 {offsets = [0, 6], sizes = [32, 1], strides = [1, 1]} : vector<32x10xf32> to vector<32x1xf32>
    %209 = vector.extract_strided_slice %201 {offsets = [0, 7], sizes = [32, 1], strides = [1, 1]} : vector<32x10xf32> to vector<32x1xf32>
    %210 = vector.extract_strided_slice %201 {offsets = [0, 8], sizes = [32, 1], strides = [1, 1]} : vector<32x10xf32> to vector<32x1xf32>
    %211 = vector.extract_strided_slice %201 {offsets = [0, 9], sizes = [32, 1], strides = [1, 1]} : vector<32x10xf32> to vector<32x1xf32>
    %212 = tpu.concatenate %202, %203, %204, %205, %206, %207, %208, %209, %210, %211 in 0 : vector<32x1xf32>, vector<32x1xf32>, vector<32x1xf32>, vector<32x1xf32>, vector<32x1xf32>, vector<32x1xf32>, vector<32x1xf32>, vector<32x1xf32>, vector<32x1xf32>, vector<32x1xf32> -> vector<320x1xf32>
    %cst_88 = arith.constant dense<0.000000e+00> : vector<32x1xf32>
    %213 = tpu.matmul %16, %212, %cst_88 {dimension_numbers = #tpu.dot_dimension_numbers<[1], [0], [0], [1], [0, 0, 1, 1], [], []>} : vector<32x320xf32>, vector<320x1xf32>, vector<32x1xf32> -> vector<32x1xf32>
    %214 = arith.addf %213, %17 : vector<32x1xf32>
    %cst_89 = arith.constant 0.000000e+00 : f32
    %215 = vector.broadcast %cst_89 : f32 to vector<32x1xf32>
    %216 = arith.maximumf %214, %215 : vector<32x1xf32>
    %217 = vector.extract_strided_slice %25 {offsets = [0, 0], sizes = [2, 1], strides = [1, 1]} : vector<2x2xf32> to vector<2x1xf32>
    %218 = tpu.concatenate %216, %217 in 0 : vector<32x1xf32>, vector<2x1xf32> -> vector<34x1xf32>
    %cst_90 = arith.constant dense<0.000000e+00> : vector<32x1xf32>
    %219 = tpu.matmul %18, %218, %cst_90 {dimension_numbers = #tpu.dot_dimension_numbers<[1], [0], [0], [1], [0, 0, 1, 1], [], []>} : vector<32x34xf32>, vector<34x1xf32>, vector<32x1xf32> -> vector<32x1xf32>
    %220 = arith.addf %219, %21 : vector<32x1xf32>
    %cst_91 = arith.constant 0.000000e+00 : f32
    %221 = vector.broadcast %cst_91 : f32 to vector<32x1xf32>
    %222 = arith.maximumf %220, %221 : vector<32x1xf32>
    %cst_92 = arith.constant dense<0.000000e+00> : vector<16x1xf32>
    %223 = tpu.matmul %19, %222, %cst_92 {dimension_numbers = #tpu.dot_dimension_numbers<[1], [0], [0], [1], [0, 0, 1, 1], [], []>} : vector<16x32xf32>, vector<32x1xf32>, vector<16x1xf32> -> vector<16x1xf32>
    %224 = arith.addf %223, %22 : vector<16x1xf32>
    %cst_93 = arith.constant 0.000000e+00 : f32
    %225 = vector.broadcast %cst_93 : f32 to vector<16x1xf32>
    %226 = arith.maximumf %224, %225 : vector<16x1xf32>
    %cst_94 = arith.constant dense<0.000000e+00> : vector<4x1xf32>
    %227 = tpu.matmul %20, %226, %cst_94 {dimension_numbers = #tpu.dot_dimension_numbers<[1], [0], [0], [1], [0, 0, 1, 1], [], []>} : vector<4x16xf32>, vector<16x1xf32>, vector<4x1xf32> -> vector<4x1xf32>
    %228 = arith.addf %227, %23 : vector<4x1xf32>
    %229 = vector.extract_strided_slice %24 {offsets = [32, 0], sizes = [32, 160], strides = [1, 1]} : vector<64x160xf32> to vector<32x160xf32>
    %cst_95 = arith.constant dense<0.000000e+00> : vector<32x320xf32>
    %230 = tpu.matmul %229, %0, %cst_95 {dimension_numbers = #tpu.dot_dimension_numbers<[1], [0], [0], [1], [0, 0, 1, 1], [], []>} : vector<32x160xf32>, vector<160x320xf32>, vector<32x320xf32> -> vector<32x320xf32>
    %cst_96 = arith.constant dense<0.000000e+00> : vector<64x320xf32>
    %231 = tpu.matmul %4, %230, %cst_96 {dimension_numbers = #tpu.dot_dimension_numbers<[1], [0], [0], [1], [0, 0, 1, 1], [], []>} : vector<64x32xf32>, vector<32x320xf32>, vector<64x320xf32> -> vector<64x320xf32>
    %232 = vector.extract_strided_slice %231 {offsets = [0, 0], sizes = [8, 320], strides = [1, 1]} : vector<64x320xf32> to vector<8x320xf32>
    %233 = vector.extract_strided_slice %232 {offsets = [0, 0], sizes = [8, 80], strides = [1, 1]} : vector<8x320xf32> to vector<8x80xf32>
    %234 = vector.extract_strided_slice %232 {offsets = [0, 80], sizes = [8, 80], strides = [1, 1]} : vector<8x320xf32> to vector<8x80xf32>
    %235 = vector.extract_strided_slice %232 {offsets = [0, 160], sizes = [8, 80], strides = [1, 1]} : vector<8x320xf32> to vector<8x80xf32>
    %236 = vector.extract_strided_slice %232 {offsets = [0, 240], sizes = [8, 80], strides = [1, 1]} : vector<8x320xf32> to vector<8x80xf32>
    %237 = tpu.concatenate %233, %234, %235, %236 in 0 : vector<8x80xf32>, vector<8x80xf32>, vector<8x80xf32>, vector<8x80xf32> -> vector<32x80xf32>
    %cst_97 = arith.constant dense<0.000000e+00> : vector<8x80xf32>
    %238 = tpu.matmul %8, %237, %cst_97 {dimension_numbers = #tpu.dot_dimension_numbers<[1], [0], [0], [1], [0, 0, 1, 1], [], []>} : vector<8x32xf32>, vector<32x80xf32>, vector<8x80xf32> -> vector<8x80xf32>
    %239 = vector.broadcast %12 : vector<8x1xf32> to vector<8x80xf32>
    %240 = arith.addf %238, %239 : vector<8x80xf32>
    %cst_98 = arith.constant 0.000000e+00 : f32
    %241 = vector.broadcast %cst_98 : f32 to vector<8x80xf32>
    %242 = arith.maximumf %240, %241 : vector<8x80xf32>
    %243 = vector.extract_strided_slice %231 {offsets = [8, 0], sizes = [8, 320], strides = [1, 1]} : vector<64x320xf32> to vector<8x320xf32>
    %244 = vector.extract_strided_slice %243 {offsets = [0, 0], sizes = [8, 80], strides = [1, 1]} : vector<8x320xf32> to vector<8x80xf32>
    %245 = vector.extract_strided_slice %243 {offsets = [0, 80], sizes = [8, 80], strides = [1, 1]} : vector<8x320xf32> to vector<8x80xf32>
    %246 = vector.extract_strided_slice %243 {offsets = [0, 160], sizes = [8, 80], strides = [1, 1]} : vector<8x320xf32> to vector<8x80xf32>
    %247 = vector.extract_strided_slice %243 {offsets = [0, 240], sizes = [8, 80], strides = [1, 1]} : vector<8x320xf32> to vector<8x80xf32>
    %248 = tpu.concatenate %244, %245, %246, %247 in 0 : vector<8x80xf32>, vector<8x80xf32>, vector<8x80xf32>, vector<8x80xf32> -> vector<32x80xf32>
    %cst_99 = arith.constant dense<0.000000e+00> : vector<8x80xf32>
    %249 = tpu.matmul %8, %248, %cst_99 {dimension_numbers = #tpu.dot_dimension_numbers<[1], [0], [0], [1], [0, 0, 1, 1], [], []>} : vector<8x32xf32>, vector<32x80xf32>, vector<8x80xf32> -> vector<8x80xf32>
    %250 = vector.broadcast %12 : vector<8x1xf32> to vector<8x80xf32>
    %251 = arith.addf %249, %250 : vector<8x80xf32>
    %cst_100 = arith.constant 0.000000e+00 : f32
    %252 = vector.broadcast %cst_100 : f32 to vector<8x80xf32>
    %253 = arith.maximumf %251, %252 : vector<8x80xf32>
    %254 = vector.extract_strided_slice %231 {offsets = [16, 0], sizes = [8, 320], strides = [1, 1]} : vector<64x320xf32> to vector<8x320xf32>
    %255 = vector.extract_strided_slice %254 {offsets = [0, 0], sizes = [8, 80], strides = [1, 1]} : vector<8x320xf32> to vector<8x80xf32>
    %256 = vector.extract_strided_slice %254 {offsets = [0, 80], sizes = [8, 80], strides = [1, 1]} : vector<8x320xf32> to vector<8x80xf32>
    %257 = vector.extract_strided_slice %254 {offsets = [0, 160], sizes = [8, 80], strides = [1, 1]} : vector<8x320xf32> to vector<8x80xf32>
    %258 = vector.extract_strided_slice %254 {offsets = [0, 240], sizes = [8, 80], strides = [1, 1]} : vector<8x320xf32> to vector<8x80xf32>
    %259 = tpu.concatenate %255, %256, %257, %258 in 0 : vector<8x80xf32>, vector<8x80xf32>, vector<8x80xf32>, vector<8x80xf32> -> vector<32x80xf32>
    %cst_101 = arith.constant dense<0.000000e+00> : vector<8x80xf32>
    %260 = tpu.matmul %8, %259, %cst_101 {dimension_numbers = #tpu.dot_dimension_numbers<[1], [0], [0], [1], [0, 0, 1, 1], [], []>} : vector<8x32xf32>, vector<32x80xf32>, vector<8x80xf32> -> vector<8x80xf32>
    %261 = vector.broadcast %12 : vector<8x1xf32> to vector<8x80xf32>
    %262 = arith.addf %260, %261 : vector<8x80xf32>
    %cst_102 = arith.constant 0.000000e+00 : f32
    %263 = vector.broadcast %cst_102 : f32 to vector<8x80xf32>
    %264 = arith.maximumf %262, %263 : vector<8x80xf32>
    %265 = vector.extract_strided_slice %231 {offsets = [24, 0], sizes = [8, 320], strides = [1, 1]} : vector<64x320xf32> to vector<8x320xf32>
    %266 = vector.extract_strided_slice %265 {offsets = [0, 0], sizes = [8, 80], strides = [1, 1]} : vector<8x320xf32> to vector<8x80xf32>
    %267 = vector.extract_strided_slice %265 {offsets = [0, 80], sizes = [8, 80], strides = [1, 1]} : vector<8x320xf32> to vector<8x80xf32>
    %268 = vector.extract_strided_slice %265 {offsets = [0, 160], sizes = [8, 80], strides = [1, 1]} : vector<8x320xf32> to vector<8x80xf32>
    %269 = vector.extract_strided_slice %265 {offsets = [0, 240], sizes = [8, 80], strides = [1, 1]} : vector<8x320xf32> to vector<8x80xf32>
    %270 = tpu.concatenate %266, %267, %268, %269 in 0 : vector<8x80xf32>, vector<8x80xf32>, vector<8x80xf32>, vector<8x80xf32> -> vector<32x80xf32>
    %cst_103 = arith.constant dense<0.000000e+00> : vector<8x80xf32>
    %271 = tpu.matmul %8, %270, %cst_103 {dimension_numbers = #tpu.dot_dimension_numbers<[1], [0], [0], [1], [0, 0, 1, 1], [], []>} : vector<8x32xf32>, vector<32x80xf32>, vector<8x80xf32> -> vector<8x80xf32>
    %272 = vector.broadcast %12 : vector<8x1xf32> to vector<8x80xf32>
    %273 = arith.addf %271, %272 : vector<8x80xf32>
    %cst_104 = arith.constant 0.000000e+00 : f32
    %274 = vector.broadcast %cst_104 : f32 to vector<8x80xf32>
    %275 = arith.maximumf %273, %274 : vector<8x80xf32>
    %276 = vector.extract_strided_slice %231 {offsets = [32, 0], sizes = [8, 320], strides = [1, 1]} : vector<64x320xf32> to vector<8x320xf32>
    %277 = vector.extract_strided_slice %276 {offsets = [0, 0], sizes = [8, 80], strides = [1, 1]} : vector<8x320xf32> to vector<8x80xf32>
    %278 = vector.extract_strided_slice %276 {offsets = [0, 80], sizes = [8, 80], strides = [1, 1]} : vector<8x320xf32> to vector<8x80xf32>
    %279 = vector.extract_strided_slice %276 {offsets = [0, 160], sizes = [8, 80], strides = [1, 1]} : vector<8x320xf32> to vector<8x80xf32>
    %280 = vector.extract_strided_slice %276 {offsets = [0, 240], sizes = [8, 80], strides = [1, 1]} : vector<8x320xf32> to vector<8x80xf32>
    %281 = tpu.concatenate %277, %278, %279, %280 in 0 : vector<8x80xf32>, vector<8x80xf32>, vector<8x80xf32>, vector<8x80xf32> -> vector<32x80xf32>
    %cst_105 = arith.constant dense<0.000000e+00> : vector<8x80xf32>
    %282 = tpu.matmul %8, %281, %cst_105 {dimension_numbers = #tpu.dot_dimension_numbers<[1], [0], [0], [1], [0, 0, 1, 1], [], []>} : vector<8x32xf32>, vector<32x80xf32>, vector<8x80xf32> -> vector<8x80xf32>
    %283 = vector.broadcast %12 : vector<8x1xf32> to vector<8x80xf32>
    %284 = arith.addf %282, %283 : vector<8x80xf32>
    %cst_106 = arith.constant 0.000000e+00 : f32
    %285 = vector.broadcast %cst_106 : f32 to vector<8x80xf32>
    %286 = arith.maximumf %284, %285 : vector<8x80xf32>
    %287 = vector.extract_strided_slice %231 {offsets = [40, 0], sizes = [8, 320], strides = [1, 1]} : vector<64x320xf32> to vector<8x320xf32>
    %288 = vector.extract_strided_slice %287 {offsets = [0, 0], sizes = [8, 80], strides = [1, 1]} : vector<8x320xf32> to vector<8x80xf32>
    %289 = vector.extract_strided_slice %287 {offsets = [0, 80], sizes = [8, 80], strides = [1, 1]} : vector<8x320xf32> to vector<8x80xf32>
    %290 = vector.extract_strided_slice %287 {offsets = [0, 160], sizes = [8, 80], strides = [1, 1]} : vector<8x320xf32> to vector<8x80xf32>
    %291 = vector.extract_strided_slice %287 {offsets = [0, 240], sizes = [8, 80], strides = [1, 1]} : vector<8x320xf32> to vector<8x80xf32>
    %292 = tpu.concatenate %288, %289, %290, %291 in 0 : vector<8x80xf32>, vector<8x80xf32>, vector<8x80xf32>, vector<8x80xf32> -> vector<32x80xf32>
    %cst_107 = arith.constant dense<0.000000e+00> : vector<8x80xf32>
    %293 = tpu.matmul %8, %292, %cst_107 {dimension_numbers = #tpu.dot_dimension_numbers<[1], [0], [0], [1], [0, 0, 1, 1], [], []>} : vector<8x32xf32>, vector<32x80xf32>, vector<8x80xf32> -> vector<8x80xf32>
    %294 = vector.broadcast %12 : vector<8x1xf32> to vector<8x80xf32>
    %295 = arith.addf %293, %294 : vector<8x80xf32>
    %cst_108 = arith.constant 0.000000e+00 : f32
    %296 = vector.broadcast %cst_108 : f32 to vector<8x80xf32>
    %297 = arith.maximumf %295, %296 : vector<8x80xf32>
    %298 = vector.extract_strided_slice %231 {offsets = [48, 0], sizes = [8, 320], strides = [1, 1]} : vector<64x320xf32> to vector<8x320xf32>
    %299 = vector.extract_strided_slice %298 {offsets = [0, 0], sizes = [8, 80], strides = [1, 1]} : vector<8x320xf32> to vector<8x80xf32>
    %300 = vector.extract_strided_slice %298 {offsets = [0, 80], sizes = [8, 80], strides = [1, 1]} : vector<8x320xf32> to vector<8x80xf32>
    %301 = vector.extract_strided_slice %298 {offsets = [0, 160], sizes = [8, 80], strides = [1, 1]} : vector<8x320xf32> to vector<8x80xf32>
    %302 = vector.extract_strided_slice %298 {offsets = [0, 240], sizes = [8, 80], strides = [1, 1]} : vector<8x320xf32> to vector<8x80xf32>
    %303 = tpu.concatenate %299, %300, %301, %302 in 0 : vector<8x80xf32>, vector<8x80xf32>, vector<8x80xf32>, vector<8x80xf32> -> vector<32x80xf32>
    %cst_109 = arith.constant dense<0.000000e+00> : vector<8x80xf32>
    %304 = tpu.matmul %8, %303, %cst_109 {dimension_numbers = #tpu.dot_dimension_numbers<[1], [0], [0], [1], [0, 0, 1, 1], [], []>} : vector<8x32xf32>, vector<32x80xf32>, vector<8x80xf32> -> vector<8x80xf32>
    %305 = vector.broadcast %12 : vector<8x1xf32> to vector<8x80xf32>
    %306 = arith.addf %304, %305 : vector<8x80xf32>
    %cst_110 = arith.constant 0.000000e+00 : f32
    %307 = vector.broadcast %cst_110 : f32 to vector<8x80xf32>
    %308 = arith.maximumf %306, %307 : vector<8x80xf32>
    %309 = vector.extract_strided_slice %231 {offsets = [56, 0], sizes = [8, 320], strides = [1, 1]} : vector<64x320xf32> to vector<8x320xf32>
    %310 = vector.extract_strided_slice %309 {offsets = [0, 0], sizes = [8, 80], strides = [1, 1]} : vector<8x320xf32> to vector<8x80xf32>
    %311 = vector.extract_strided_slice %309 {offsets = [0, 80], sizes = [8, 80], strides = [1, 1]} : vector<8x320xf32> to vector<8x80xf32>
    %312 = vector.extract_strided_slice %309 {offsets = [0, 160], sizes = [8, 80], strides = [1, 1]} : vector<8x320xf32> to vector<8x80xf32>
    %313 = vector.extract_strided_slice %309 {offsets = [0, 240], sizes = [8, 80], strides = [1, 1]} : vector<8x320xf32> to vector<8x80xf32>
    %314 = tpu.concatenate %310, %311, %312, %313 in 0 : vector<8x80xf32>, vector<8x80xf32>, vector<8x80xf32>, vector<8x80xf32> -> vector<32x80xf32>
    %cst_111 = arith.constant dense<0.000000e+00> : vector<8x80xf32>
    %315 = tpu.matmul %8, %314, %cst_111 {dimension_numbers = #tpu.dot_dimension_numbers<[1], [0], [0], [1], [0, 0, 1, 1], [], []>} : vector<8x32xf32>, vector<32x80xf32>, vector<8x80xf32> -> vector<8x80xf32>
    %316 = vector.broadcast %12 : vector<8x1xf32> to vector<8x80xf32>
    %317 = arith.addf %315, %316 : vector<8x80xf32>
    %cst_112 = arith.constant 0.000000e+00 : f32
    %318 = vector.broadcast %cst_112 : f32 to vector<8x80xf32>
    %319 = arith.maximumf %317, %318 : vector<8x80xf32>
    %320 = tpu.concatenate %242, %253, %264, %275, %286, %297, %308, %319 in 0 : vector<8x80xf32>, vector<8x80xf32>, vector<8x80xf32>, vector<8x80xf32>, vector<8x80xf32>, vector<8x80xf32>, vector<8x80xf32>, vector<8x80xf32> -> vector<64x80xf32>
    %cst_113 = arith.constant dense<0.000000e+00> : vector<64x160xf32>
    %321 = tpu.matmul %320, %1, %cst_113 {dimension_numbers = #tpu.dot_dimension_numbers<[1], [0], [0], [1], [0, 0, 1, 1], [], []>} : vector<64x80xf32>, vector<80x160xf32>, vector<64x160xf32> -> vector<64x160xf32>
    %cst_114 = arith.constant dense<0.000000e+00> : vector<128x160xf32>
    %322 = tpu.matmul %5, %321, %cst_114 {dimension_numbers = #tpu.dot_dimension_numbers<[1], [0], [0], [1], [0, 0, 1, 1], [], []>} : vector<128x64xf32>, vector<64x160xf32>, vector<128x160xf32> -> vector<128x160xf32>
    %323 = vector.extract_strided_slice %322 {offsets = [0, 0], sizes = [32, 160], strides = [1, 1]} : vector<128x160xf32> to vector<32x160xf32>
    %324 = vector.extract_strided_slice %323 {offsets = [0, 0], sizes = [32, 40], strides = [1, 1]} : vector<32x160xf32> to vector<32x40xf32>
    %325 = vector.extract_strided_slice %323 {offsets = [0, 40], sizes = [32, 40], strides = [1, 1]} : vector<32x160xf32> to vector<32x40xf32>
    %326 = vector.extract_strided_slice %323 {offsets = [0, 80], sizes = [32, 40], strides = [1, 1]} : vector<32x160xf32> to vector<32x40xf32>
    %327 = vector.extract_strided_slice %323 {offsets = [0, 120], sizes = [32, 40], strides = [1, 1]} : vector<32x160xf32> to vector<32x40xf32>
    %328 = tpu.concatenate %324, %325, %326, %327 in 0 : vector<32x40xf32>, vector<32x40xf32>, vector<32x40xf32>, vector<32x40xf32> -> vector<128x40xf32>
    %cst_115 = arith.constant dense<0.000000e+00> : vector<16x40xf32>
    %329 = tpu.matmul %9, %328, %cst_115 {dimension_numbers = #tpu.dot_dimension_numbers<[1], [0], [0], [1], [0, 0, 1, 1], [], []>} : vector<16x128xf32>, vector<128x40xf32>, vector<16x40xf32> -> vector<16x40xf32>
    %330 = vector.broadcast %13 : vector<16x1xf32> to vector<16x40xf32>
    %331 = arith.addf %329, %330 : vector<16x40xf32>
    %cst_116 = arith.constant 0.000000e+00 : f32
    %332 = vector.broadcast %cst_116 : f32 to vector<16x40xf32>
    %333 = arith.maximumf %331, %332 : vector<16x40xf32>
    %334 = vector.extract_strided_slice %322 {offsets = [32, 0], sizes = [32, 160], strides = [1, 1]} : vector<128x160xf32> to vector<32x160xf32>
    %335 = vector.extract_strided_slice %334 {offsets = [0, 0], sizes = [32, 40], strides = [1, 1]} : vector<32x160xf32> to vector<32x40xf32>
    %336 = vector.extract_strided_slice %334 {offsets = [0, 40], sizes = [32, 40], strides = [1, 1]} : vector<32x160xf32> to vector<32x40xf32>
    %337 = vector.extract_strided_slice %334 {offsets = [0, 80], sizes = [32, 40], strides = [1, 1]} : vector<32x160xf32> to vector<32x40xf32>
    %338 = vector.extract_strided_slice %334 {offsets = [0, 120], sizes = [32, 40], strides = [1, 1]} : vector<32x160xf32> to vector<32x40xf32>
    %339 = tpu.concatenate %335, %336, %337, %338 in 0 : vector<32x40xf32>, vector<32x40xf32>, vector<32x40xf32>, vector<32x40xf32> -> vector<128x40xf32>
    %cst_117 = arith.constant dense<0.000000e+00> : vector<16x40xf32>
    %340 = tpu.matmul %9, %339, %cst_117 {dimension_numbers = #tpu.dot_dimension_numbers<[1], [0], [0], [1], [0, 0, 1, 1], [], []>} : vector<16x128xf32>, vector<128x40xf32>, vector<16x40xf32> -> vector<16x40xf32>
    %341 = vector.broadcast %13 : vector<16x1xf32> to vector<16x40xf32>
    %342 = arith.addf %340, %341 : vector<16x40xf32>
    %cst_118 = arith.constant 0.000000e+00 : f32
    %343 = vector.broadcast %cst_118 : f32 to vector<16x40xf32>
    %344 = arith.maximumf %342, %343 : vector<16x40xf32>
    %345 = vector.extract_strided_slice %322 {offsets = [64, 0], sizes = [32, 160], strides = [1, 1]} : vector<128x160xf32> to vector<32x160xf32>
    %346 = vector.extract_strided_slice %345 {offsets = [0, 0], sizes = [32, 40], strides = [1, 1]} : vector<32x160xf32> to vector<32x40xf32>
    %347 = vector.extract_strided_slice %345 {offsets = [0, 40], sizes = [32, 40], strides = [1, 1]} : vector<32x160xf32> to vector<32x40xf32>
    %348 = vector.extract_strided_slice %345 {offsets = [0, 80], sizes = [32, 40], strides = [1, 1]} : vector<32x160xf32> to vector<32x40xf32>
    %349 = vector.extract_strided_slice %345 {offsets = [0, 120], sizes = [32, 40], strides = [1, 1]} : vector<32x160xf32> to vector<32x40xf32>
    %350 = tpu.concatenate %346, %347, %348, %349 in 0 : vector<32x40xf32>, vector<32x40xf32>, vector<32x40xf32>, vector<32x40xf32> -> vector<128x40xf32>
    %cst_119 = arith.constant dense<0.000000e+00> : vector<16x40xf32>
    %351 = tpu.matmul %9, %350, %cst_119 {dimension_numbers = #tpu.dot_dimension_numbers<[1], [0], [0], [1], [0, 0, 1, 1], [], []>} : vector<16x128xf32>, vector<128x40xf32>, vector<16x40xf32> -> vector<16x40xf32>
    %352 = vector.broadcast %13 : vector<16x1xf32> to vector<16x40xf32>
    %353 = arith.addf %351, %352 : vector<16x40xf32>
    %cst_120 = arith.constant 0.000000e+00 : f32
    %354 = vector.broadcast %cst_120 : f32 to vector<16x40xf32>
    %355 = arith.maximumf %353, %354 : vector<16x40xf32>
    %356 = vector.extract_strided_slice %322 {offsets = [96, 0], sizes = [32, 160], strides = [1, 1]} : vector<128x160xf32> to vector<32x160xf32>
    %357 = vector.extract_strided_slice %356 {offsets = [0, 0], sizes = [32, 40], strides = [1, 1]} : vector<32x160xf32> to vector<32x40xf32>
    %358 = vector.extract_strided_slice %356 {offsets = [0, 40], sizes = [32, 40], strides = [1, 1]} : vector<32x160xf32> to vector<32x40xf32>
    %359 = vector.extract_strided_slice %356 {offsets = [0, 80], sizes = [32, 40], strides = [1, 1]} : vector<32x160xf32> to vector<32x40xf32>
    %360 = vector.extract_strided_slice %356 {offsets = [0, 120], sizes = [32, 40], strides = [1, 1]} : vector<32x160xf32> to vector<32x40xf32>
    %361 = tpu.concatenate %357, %358, %359, %360 in 0 : vector<32x40xf32>, vector<32x40xf32>, vector<32x40xf32>, vector<32x40xf32> -> vector<128x40xf32>
    %cst_121 = arith.constant dense<0.000000e+00> : vector<16x40xf32>
    %362 = tpu.matmul %9, %361, %cst_121 {dimension_numbers = #tpu.dot_dimension_numbers<[1], [0], [0], [1], [0, 0, 1, 1], [], []>} : vector<16x128xf32>, vector<128x40xf32>, vector<16x40xf32> -> vector<16x40xf32>
    %363 = vector.broadcast %13 : vector<16x1xf32> to vector<16x40xf32>
    %364 = arith.addf %362, %363 : vector<16x40xf32>
    %cst_122 = arith.constant 0.000000e+00 : f32
    %365 = vector.broadcast %cst_122 : f32 to vector<16x40xf32>
    %366 = arith.maximumf %364, %365 : vector<16x40xf32>
    %367 = tpu.concatenate %333, %344, %355, %366 in 0 : vector<16x40xf32>, vector<16x40xf32>, vector<16x40xf32>, vector<16x40xf32> -> vector<64x40xf32>
    %cst_123 = arith.constant dense<0.000000e+00> : vector<64x80xf32>
    %368 = tpu.matmul %367, %2, %cst_123 {dimension_numbers = #tpu.dot_dimension_numbers<[1], [0], [0], [1], [0, 0, 1, 1], [], []>} : vector<64x40xf32>, vector<40x80xf32>, vector<64x80xf32> -> vector<64x80xf32>
    %cst_124 = arith.constant dense<0.000000e+00> : vector<128x80xf32>
    %369 = tpu.matmul %6, %368, %cst_124 {dimension_numbers = #tpu.dot_dimension_numbers<[1], [0], [0], [1], [0, 0, 1, 1], [], []>} : vector<128x64xf32>, vector<64x80xf32>, vector<128x80xf32> -> vector<128x80xf32>
    %370 = vector.extract_strided_slice %369 {offsets = [0, 0], sizes = [64, 80], strides = [1, 1]} : vector<128x80xf32> to vector<64x80xf32>
    %371 = vector.extract_strided_slice %370 {offsets = [0, 0], sizes = [64, 20], strides = [1, 1]} : vector<64x80xf32> to vector<64x20xf32>
    %372 = vector.extract_strided_slice %370 {offsets = [0, 20], sizes = [64, 20], strides = [1, 1]} : vector<64x80xf32> to vector<64x20xf32>
    %373 = vector.extract_strided_slice %370 {offsets = [0, 40], sizes = [64, 20], strides = [1, 1]} : vector<64x80xf32> to vector<64x20xf32>
    %374 = vector.extract_strided_slice %370 {offsets = [0, 60], sizes = [64, 20], strides = [1, 1]} : vector<64x80xf32> to vector<64x20xf32>
    %375 = tpu.concatenate %371, %372, %373, %374 in 0 : vector<64x20xf32>, vector<64x20xf32>, vector<64x20xf32>, vector<64x20xf32> -> vector<256x20xf32>
    %cst_125 = arith.constant dense<0.000000e+00> : vector<16x20xf32>
    %376 = tpu.matmul %10, %375, %cst_125 {dimension_numbers = #tpu.dot_dimension_numbers<[1], [0], [0], [1], [0, 0, 1, 1], [], []>} : vector<16x256xf32>, vector<256x20xf32>, vector<16x20xf32> -> vector<16x20xf32>
    %377 = vector.broadcast %14 : vector<16x1xf32> to vector<16x20xf32>
    %378 = arith.addf %376, %377 : vector<16x20xf32>
    %cst_126 = arith.constant 0.000000e+00 : f32
    %379 = vector.broadcast %cst_126 : f32 to vector<16x20xf32>
    %380 = arith.maximumf %378, %379 : vector<16x20xf32>
    %381 = vector.extract_strided_slice %369 {offsets = [64, 0], sizes = [64, 80], strides = [1, 1]} : vector<128x80xf32> to vector<64x80xf32>
    %382 = vector.extract_strided_slice %381 {offsets = [0, 0], sizes = [64, 20], strides = [1, 1]} : vector<64x80xf32> to vector<64x20xf32>
    %383 = vector.extract_strided_slice %381 {offsets = [0, 20], sizes = [64, 20], strides = [1, 1]} : vector<64x80xf32> to vector<64x20xf32>
    %384 = vector.extract_strided_slice %381 {offsets = [0, 40], sizes = [64, 20], strides = [1, 1]} : vector<64x80xf32> to vector<64x20xf32>
    %385 = vector.extract_strided_slice %381 {offsets = [0, 60], sizes = [64, 20], strides = [1, 1]} : vector<64x80xf32> to vector<64x20xf32>
    %386 = tpu.concatenate %382, %383, %384, %385 in 0 : vector<64x20xf32>, vector<64x20xf32>, vector<64x20xf32>, vector<64x20xf32> -> vector<256x20xf32>
    %cst_127 = arith.constant dense<0.000000e+00> : vector<16x20xf32>
    %387 = tpu.matmul %10, %386, %cst_127 {dimension_numbers = #tpu.dot_dimension_numbers<[1], [0], [0], [1], [0, 0, 1, 1], [], []>} : vector<16x256xf32>, vector<256x20xf32>, vector<16x20xf32> -> vector<16x20xf32>
    %388 = vector.broadcast %14 : vector<16x1xf32> to vector<16x20xf32>
    %389 = arith.addf %387, %388 : vector<16x20xf32>
    %cst_128 = arith.constant 0.000000e+00 : f32
    %390 = vector.broadcast %cst_128 : f32 to vector<16x20xf32>
    %391 = arith.maximumf %389, %390 : vector<16x20xf32>
    %392 = tpu.concatenate %380, %391 in 0 : vector<16x20xf32>, vector<16x20xf32> -> vector<32x20xf32>
    %cst_129 = arith.constant dense<0.000000e+00> : vector<32x40xf32>
    %393 = tpu.matmul %392, %3, %cst_129 {dimension_numbers = #tpu.dot_dimension_numbers<[1], [0], [0], [1], [0, 0, 1, 1], [], []>} : vector<32x20xf32>, vector<20x40xf32>, vector<32x40xf32> -> vector<32x40xf32>
    %cst_130 = arith.constant dense<0.000000e+00> : vector<64x40xf32>
    %394 = tpu.matmul %7, %393, %cst_130 {dimension_numbers = #tpu.dot_dimension_numbers<[1], [0], [0], [1], [0, 0, 1, 1], [], []>} : vector<64x32xf32>, vector<32x40xf32>, vector<64x40xf32> -> vector<64x40xf32>
    %395 = vector.extract_strided_slice %394 {offsets = [0, 0], sizes = [64, 10], strides = [1, 1]} : vector<64x40xf32> to vector<64x10xf32>
    %396 = vector.extract_strided_slice %394 {offsets = [0, 10], sizes = [64, 10], strides = [1, 1]} : vector<64x40xf32> to vector<64x10xf32>
    %397 = vector.extract_strided_slice %394 {offsets = [0, 20], sizes = [64, 10], strides = [1, 1]} : vector<64x40xf32> to vector<64x10xf32>
    %398 = vector.extract_strided_slice %394 {offsets = [0, 30], sizes = [64, 10], strides = [1, 1]} : vector<64x40xf32> to vector<64x10xf32>
    %399 = tpu.concatenate %395, %396, %397, %398 in 0 : vector<64x10xf32>, vector<64x10xf32>, vector<64x10xf32>, vector<64x10xf32> -> vector<256x10xf32>
    %cst_131 = arith.constant dense<0.000000e+00> : vector<32x10xf32>
    %400 = tpu.matmul %11, %399, %cst_131 {dimension_numbers = #tpu.dot_dimension_numbers<[1], [0], [0], [1], [0, 0, 1, 1], [], []>} : vector<32x256xf32>, vector<256x10xf32>, vector<32x10xf32> -> vector<32x10xf32>
    %401 = vector.broadcast %15 : vector<32x1xf32> to vector<32x10xf32>
    %402 = arith.addf %400, %401 : vector<32x10xf32>
    %cst_132 = arith.constant 0.000000e+00 : f32
    %403 = vector.broadcast %cst_132 : f32 to vector<32x10xf32>
    %404 = arith.maximumf %402, %403 : vector<32x10xf32>
    %405 = vector.extract_strided_slice %404 {offsets = [0, 0], sizes = [32, 1], strides = [1, 1]} : vector<32x10xf32> to vector<32x1xf32>
    %406 = vector.extract_strided_slice %404 {offsets = [0, 1], sizes = [32, 1], strides = [1, 1]} : vector<32x10xf32> to vector<32x1xf32>
    %407 = vector.extract_strided_slice %404 {offsets = [0, 2], sizes = [32, 1], strides = [1, 1]} : vector<32x10xf32> to vector<32x1xf32>
    %408 = vector.extract_strided_slice %404 {offsets = [0, 3], sizes = [32, 1], strides = [1, 1]} : vector<32x10xf32> to vector<32x1xf32>
    %409 = vector.extract_strided_slice %404 {offsets = [0, 4], sizes = [32, 1], strides = [1, 1]} : vector<32x10xf32> to vector<32x1xf32>
    %410 = vector.extract_strided_slice %404 {offsets = [0, 5], sizes = [32, 1], strides = [1, 1]} : vector<32x10xf32> to vector<32x1xf32>
    %411 = vector.extract_strided_slice %404 {offsets = [0, 6], sizes = [32, 1], strides = [1, 1]} : vector<32x10xf32> to vector<32x1xf32>
    %412 = vector.extract_strided_slice %404 {offsets = [0, 7], sizes = [32, 1], strides = [1, 1]} : vector<32x10xf32> to vector<32x1xf32>
    %413 = vector.extract_strided_slice %404 {offsets = [0, 8], sizes = [32, 1], strides = [1, 1]} : vector<32x10xf32> to vector<32x1xf32>
    %414 = vector.extract_strided_slice %404 {offsets = [0, 9], sizes = [32, 1], strides = [1, 1]} : vector<32x10xf32> to vector<32x1xf32>
    %415 = tpu.concatenate %405, %406, %407, %408, %409, %410, %411, %412, %413, %414 in 0 : vector<32x1xf32>, vector<32x1xf32>, vector<32x1xf32>, vector<32x1xf32>, vector<32x1xf32>, vector<32x1xf32>, vector<32x1xf32>, vector<32x1xf32>, vector<32x1xf32>, vector<32x1xf32> -> vector<320x1xf32>
    %cst_133 = arith.constant dense<0.000000e+00> : vector<32x1xf32>
    %416 = tpu.matmul %16, %415, %cst_133 {dimension_numbers = #tpu.dot_dimension_numbers<[1], [0], [0], [1], [0, 0, 1, 1], [], []>} : vector<32x320xf32>, vector<320x1xf32>, vector<32x1xf32> -> vector<32x1xf32>
    %417 = arith.addf %416, %17 : vector<32x1xf32>
    %cst_134 = arith.constant 0.000000e+00 : f32
    %418 = vector.broadcast %cst_134 : f32 to vector<32x1xf32>
    %419 = arith.maximumf %417, %418 : vector<32x1xf32>
    %420 = vector.extract_strided_slice %25 {offsets = [0, 1], sizes = [2, 1], strides = [1, 1]} : vector<2x2xf32> to vector<2x1xf32>
    %421 = tpu.concatenate %419, %420 in 0 : vector<32x1xf32>, vector<2x1xf32> -> vector<34x1xf32>
    %cst_135 = arith.constant dense<0.000000e+00> : vector<32x1xf32>
    %422 = tpu.matmul %18, %421, %cst_135 {dimension_numbers = #tpu.dot_dimension_numbers<[1], [0], [0], [1], [0, 0, 1, 1], [], []>} : vector<32x34xf32>, vector<34x1xf32>, vector<32x1xf32> -> vector<32x1xf32>
    %423 = arith.addf %422, %21 : vector<32x1xf32>
    %cst_136 = arith.constant 0.000000e+00 : f32
    %424 = vector.broadcast %cst_136 : f32 to vector<32x1xf32>
    %425 = arith.maximumf %423, %424 : vector<32x1xf32>
    %cst_137 = arith.constant dense<0.000000e+00> : vector<16x1xf32>
    %426 = tpu.matmul %19, %425, %cst_137 {dimension_numbers = #tpu.dot_dimension_numbers<[1], [0], [0], [1], [0, 0, 1, 1], [], []>} : vector<16x32xf32>, vector<32x1xf32>, vector<16x1xf32> -> vector<16x1xf32>
    %427 = arith.addf %426, %22 : vector<16x1xf32>
    %cst_138 = arith.constant 0.000000e+00 : f32
    %428 = vector.broadcast %cst_138 : f32 to vector<16x1xf32>
    %429 = arith.maximumf %427, %428 : vector<16x1xf32>
    %cst_139 = arith.constant dense<0.000000e+00> : vector<4x1xf32>
    %430 = tpu.matmul %20, %429, %cst_139 {dimension_numbers = #tpu.dot_dimension_numbers<[1], [0], [0], [1], [0, 0, 1, 1], [], []>} : vector<4x16xf32>, vector<16x1xf32>, vector<4x1xf32> -> vector<4x1xf32>
    %431 = arith.addf %430, %23 : vector<4x1xf32>
    %432 = tpu.concatenate %228, %431 in 1 : vector<4x1xf32>, vector<4x1xf32> -> vector<4x2xf32>
    %c0_140 = arith.constant 0 : index
    %c0_141 = arith.constant 0 : index
    %433 = vector.load %arg26[%c0_140, %c0_141] : memref<4x2xf32, #tpu.memory_space<vmem>>, vector<4x2xf32>
    tpu.vector_store %arg26[%c0_140, %c0_141], %432 {strides = array<i32>} : memref<4x2xf32, #tpu.memory_space<vmem>>, vector<4x2xf32>,
    return
  }
}

</mosaic_0001>

<llo_original>
// kernel: dqn_conv_forward.1
$region0: #{dqn_conv_forward.1}
  #allocation0 [shape = 'u32[]', space=smem, size = 0x4, offset = 0x4, fixed_abs, tag = 'smem constant byte address 0x4 - core index']
  #allocation1 [shape = 'u32[144,128]{1,0:T(1,128)}', space=vmem, size = 0x12000, scoped, tag = 'internal scratch']
  %s0 = inlined_call_operand.vmem [shape: f32[64,160], index: 0, kind: input, shape index: {}]
  %s1 = inlined_call_operand.vmem [shape: f32[2,2], index: 1, kind: input, shape index: {}]
  %s2 = inlined_call_operand.vmem [shape: f32[160,320], index: 2, kind: input, shape index: {}]
  %s3 = inlined_call_operand.vmem [shape: f32[80,160], index: 3, kind: input, shape index: {}]
  %s4 = inlined_call_operand.vmem [shape: f32[40,80], index: 4, kind: input, shape index: {}]
  %s5 = inlined_call_operand.vmem [shape: f32[20,40], index: 5, kind: input, shape index: {}]
  %s6 = inlined_call_operand.vmem [shape: f32[64,32], index: 6, kind: input, shape index: {}]
  %s7 = inlined_call_operand.vmem [shape: f32[128,64], index: 7, kind: input, shape index: {}]
  %s8 = inlined_call_operand.vmem [shape: f32[128,64], index: 8, kind: input, shape index: {}]
  %s9 = inlined_call_operand.vmem [shape: f32[64,32], index: 9, kind: input, shape index: {}]
  %s10 = inlined_call_operand.vmem [shape: f32[8,32], index: 10, kind: input, shape index: {}]
  %s11 = inlined_call_operand.vmem [shape: f32[16,128], index: 11, kind: input, shape index: {}]
  %s12 = inlined_call_operand.vmem [shape: f32[16,256], index: 12, kind: input, shape index: {}]
  %s13 = inlined_call_operand.vmem [shape: f32[32,256], index: 13, kind: input, shape index: {}]
  %s14 = inlined_call_operand.vmem [shape: f32[32,320], index: 14, kind: input, shape index: {}]
  %s15 = inlined_call_operand.vmem [shape: f32[8,1], index: 15, kind: input, shape index: {}]
  %s16 = inlined_call_operand.vmem [shape: f32[16,1], index: 16, kind: input, shape index: {}]
  %s17 = inlined_call_operand.vmem [shape: f32[16,1], index: 17, kind: input, shape index: {}]
  %s18 = inlined_call_operand.vmem [shape: f32[32,1], index: 18, kind: input, shape index: {}]
  %s19 = inlined_call_operand.vmem [shape: f32[32,1], index: 19, kind: input, shape index: {}]
  %s20 = inlined_call_operand.vmem [shape: f32[32,34], index: 20, kind: input, shape index: {}]
  %s21 = inlined_call_operand.vmem [shape: f32[16,32], index: 21, kind: input, shape index: {}]
  %s22 = inlined_call_operand.vmem [shape: f32[4,16], index: 22, kind: input, shape index: {}]
  %s23 = inlined_call_operand.vmem [shape: f32[32,1], index: 23, kind: input, shape index: {}]
  %s24 = inlined_call_operand.vmem [shape: f32[16,1], index: 24, kind: input, shape index: {}]
  %s25 = inlined_call_operand.vmem [shape: f32[4,1], index: 25, kind: input, shape index: {}]
  %s26 = inlined_call_operand.vmem [shape: f32[4,2], index: 26, kind: output, shape index: {}]
  %s27 = sld [smem:[#allocation0]]
  $region114: #{dqn_conv_forward.1} parent=0
    _
  %s29 = ssub.s32 1, %s27
  %s30 = scalar_select 0, %s29, %s27
  // Predicated region
  $region2: #{dqn_conv_forward.1} parent=0 // pred_check
    _
  $region3: #{dqn_conv_forward.1} parent=0 // pred_check_branch
    %32 = sbr.rel (0) target = $region5
  $region4: #{dqn_conv_forward.1} parent=0 // pred_region
    _
  $region5: #{dqn_conv_forward.1} parent=0 // pred_fallthru
    _
  // Predicated region
  $region6: #{dqn_conv_forward.1} parent=0 // pred_check
    _
  $region7: #{dqn_conv_forward.1} parent=0 // pred_check_branch
    %34 = sbr.rel (0) target = $region9
  $region8: #{dqn_conv_forward.1} parent=0 // pred_region
    _
  $region9: #{dqn_conv_forward.1} parent=0 // pred_fallthru
    _
  // Predicated region
  $region10: #{dqn_conv_forward.1} parent=0 // pred_check
    _
  $region11: #{dqn_conv_forward.1} parent=0 // pred_check_branch
    %36 = sbr.rel (0) target = $region13
  $region12: #{dqn_conv_forward.1} parent=0 // pred_region
    _
  $region13: #{dqn_conv_forward.1} parent=0 // pred_fallthru
    _
  // Predicated region
  $region14: #{dqn_conv_forward.1} parent=0 // pred_check
    _
  $region15: #{dqn_conv_forward.1} parent=0 // pred_check_branch
    %38 = sbr.rel (0) target = $region17
  $region16: #{dqn_conv_forward.1} parent=0 // pred_region
    _
  $region17: #{dqn_conv_forward.1} parent=0 // pred_fallthru
    _
  // Predicated region
  $region18: #{dqn_conv_forward.1} parent=0 // pred_check
    _
  $region19: #{dqn_conv_forward.1} parent=0 // pred_check_branch
    %40 = sbr.rel (0) target = $region21
  $region20: #{dqn_conv_forward.1} parent=0 // pred_region
    _
  $region21: #{dqn_conv_forward.1} parent=0 // pred_fallthru
    _
  // Predicated region
  $region22: #{dqn_conv_forward.1} parent=0 // pred_check
    _
  $region23: #{dqn_conv_forward.1} parent=0 // pred_check_branch
    %42 = sbr.rel (0) target = $region25
  $region24: #{dqn_conv_forward.1} parent=0 // pred_region
    _
  $region25: #{dqn_conv_forward.1} parent=0 // pred_fallthru
    _
  // Predicated region
  $region26: #{dqn_conv_forward.1} parent=0 // pred_check
    _
  $region27: #{dqn_conv_forward.1} parent=0 // pred_check_branch
    %44 = sbr.rel (0) target = $region29
  $region28: #{dqn_conv_forward.1} parent=0 // pred_region
    _
  $region29: #{dqn_conv_forward.1} parent=0 // pred_fallthru
    _
  // Predicated region
  $region30: #{dqn_conv_forward.1} parent=0 // pred_check
    _
  $region31: #{dqn_conv_forward.1} parent=0 // pred_check_branch
    %46 = sbr.rel (0) target = $region33
  $region32: #{dqn_conv_forward.1} parent=0 // pred_region
    _
  $region33: #{dqn_conv_forward.1} parent=0 // pred_fallthru
    _
  // Predicated region
  $region34: #{dqn_conv_forward.1} parent=0 // pred_check
    _
  $region35: #{dqn_conv_forward.1} parent=0 // pred_check_branch
    %48 = sbr.rel (0) target = $region37
  $region36: #{dqn_conv_forward.1} parent=0 // pred_region
    _
  $region37: #{dqn_conv_forward.1} parent=0 // pred_fallthru
    _
  // Predicated region
  $region38: #{dqn_conv_forward.1} parent=0 // pred_check
    _
  $region39: #{dqn_conv_forward.1} parent=0 // pred_check_branch
    %50 = sbr.rel (0) target = $region41
  $region40: #{dqn_conv_forward.1} parent=0 // pred_region
    _
  $region41: #{dqn_conv_forward.1} parent=0 // pred_fallthru
    _
  // Predicated region
  $region42: #{dqn_conv_forward.1} parent=0 // pred_check
    _
  $region43: #{dqn_conv_forward.1} parent=0 // pred_check_branch
    %52 = sbr.rel (0) target = $region45
  $region44: #{dqn_conv_forward.1} parent=0 // pred_region
    _
  $region45: #{dqn_conv_forward.1} parent=0 // pred_fallthru
    _
  // Predicated region
  $region46: #{dqn_conv_forward.1} parent=0 // pred_check
    _
  $region47: #{dqn_conv_forward.1} parent=0 // pred_check_branch
    %54 = sbr.rel (0) target = $region49
  $region48: #{dqn_conv_forward.1} parent=0 // pred_region
    _
  $region49: #{dqn_conv_forward.1} parent=0 // pred_fallthru
    _
  // Predicated region
  $region50: #{dqn_conv_forward.1} parent=0 // pred_check
    _
  $region51: #{dqn_conv_forward.1} parent=0 // pred_check_branch
    %56 = sbr.rel (0) target = $region53
  $region52: #{dqn_conv_forward.1} parent=0 // pred_region
    _
  $region53: #{dqn_conv_forward.1} parent=0 // pred_fallthru
    _
  // Predicated region
  $region54: #{dqn_conv_forward.1} parent=0 // pred_check
    _
  $region55: #{dqn_conv_forward.1} parent=0 // pred_check_branch
    %58 = sbr.rel (0) target = $region57
  $region56: #{dqn_conv_forward.1} parent=0 // pred_region
    _
  $region57: #{dqn_conv_forward.1} parent=0 // pred_fallthru
    _
  // Predicated region
  $region58: #{dqn_conv_forward.1} parent=0 // pred_check
    _
  $region59: #{dqn_conv_forward.1} parent=0 // pred_check_branch
    %60 = sbr.rel (0) target = $region61
  $region60: #{dqn_conv_forward.1} parent=0 // pred_region
    _
  $region61: #{dqn_conv_forward.1} parent=0 // pred_fallthru
    _
  // Predicated region
  $region62: #{dqn_conv_forward.1} parent=0 // pred_check
    _
  $region63: #{dqn_conv_forward.1} parent=0 // pred_check_branch
    %62 = sbr.rel (0) target = $region65
  $region64: #{dqn_conv_forward.1} parent=0 // pred_region
    _
  $region65: #{dqn_conv_forward.1} parent=0 // pred_fallthru
    _
  // Predicated region
  $region66: #{dqn_conv_forward.1} parent=0 // pred_check
    _
  $region67: #{dqn_conv_forward.1} parent=0 // pred_check_branch
    %64 = sbr.rel (0) target = $region69
  $region68: #{dqn_conv_forward.1} parent=0 // pred_region
    _
  $region69: #{dqn_conv_forward.1} parent=0 // pred_fallthru
    _
  // Predicated region
  $region70: #{dqn_conv_forward.1} parent=0 // pred_check
    _
  $region71: #{dqn_conv_forward.1} parent=0 // pred_check_branch
    %66 = sbr.rel (0) target = $region73
  $region72: #{dqn_conv_forward.1} parent=0 // pred_region
    _
  $region73: #{dqn_conv_forward.1} parent=0 // pred_fallthru
    _
  // Predicated region
  $region74: #{dqn_conv_forward.1} parent=0 // pred_check
    _
  $region75: #{dqn_conv_forward.1} parent=0 // pred_check_branch
    %68 = sbr.rel (0) target = $region77
  $region76: #{dqn_conv_forward.1} parent=0 // pred_region
    _
  $region77: #{dqn_conv_forward.1} parent=0 // pred_fallthru
    _
  // Predicated region
  $region78: #{dqn_conv_forward.1} parent=0 // pred_check
    _
  $region79: #{dqn_conv_forward.1} parent=0 // pred_check_branch
    %70 = sbr.rel (0) target = $region81
  $region80: #{dqn_conv_forward.1} parent=0 // pred_region
    _
  $region81: #{dqn_conv_forward.1} parent=0 // pred_fallthru
    _
  // Predicated region
  $region82: #{dqn_conv_forward.1} parent=0 // pred_check
    _
  $region83: #{dqn_conv_forward.1} parent=0 // pred_check_branch
    %72 = sbr.rel (0) target = $region85
  $region84: #{dqn_conv_forward.1} parent=0 // pred_region
    _
  $region85: #{dqn_conv_forward.1} parent=0 // pred_fallthru
    _
  // Predicated region
  $region86: #{dqn_conv_forward.1} parent=0 // pred_check
    _
  $region87: #{dqn_conv_forward.1} parent=0 // pred_check_branch
    %74 = sbr.rel (0) target = $region89
  $region88: #{dqn_conv_forward.1} parent=0 // pred_region
    _
  $region89: #{dqn_conv_forward.1} parent=0 // pred_fallthru
    _
  // Predicated region
  $region90: #{dqn_conv_forward.1} parent=0 // pred_check
    _
  $region91: #{dqn_conv_forward.1} parent=0 // pred_check_branch
    %76 = sbr.rel (0) target = $region93
  $region92: #{dqn_conv_forward.1} parent=0 // pred_region
    _
  $region93: #{dqn_conv_forward.1} parent=0 // pred_fallthru
    _
  // Predicated region
  $region94: #{dqn_conv_forward.1} parent=0 // pred_check
    _
  $region95: #{dqn_conv_forward.1} parent=0 // pred_check_branch
    %78 = sbr.rel (0) target = $region97
  $region96: #{dqn_conv_forward.1} parent=0 // pred_region
    _
  $region97: #{dqn_conv_forward.1} parent=0 // pred_fallthru
    _
  // Predicated region
  $region98: #{dqn_conv_forward.1} parent=0 // pred_check
    _
  $region99: #{dqn_conv_forward.1} parent=0 // pred_check_branch
    %80 = sbr.rel (0) target = $region101
  $region100: #{dqn_conv_forward.1} parent=0 // pred_region
    _
  $region101: #{dqn_conv_forward.1} parent=0 // pred_fallthru
    _
  // Predicated region
  $region102: #{dqn_conv_forward.1} parent=0 // pred_check
    _
  $region103: #{dqn_conv_forward.1} parent=0 // pred_check_branch
    %82 = sbr.rel (0) target = $region105
  $region104: #{dqn_conv_forward.1} parent=0 // pred_region
    _
  $region105: #{dqn_conv_forward.1} parent=0 // pred_fallthru
    _
  %v83 = vld [vmem:[%s2] sm:$0xff]
  %v84 = vld [vmem:[%s2 + $0x8] sm:$0xff]
  %v85 = vld [vmem:[%s2 + $0x10] sm:$0xff]
  %v86 = vld [vmem:[%s2 + $0x18] sm:$0xff]
  %v87 = vld [vmem:[%s2 + $0x20] sm:$0xff]
  %v88 = vld [vmem:[%s2 + $0x28] sm:$0xff]
  %v89 = vld [vmem:[%s2 + $0x30] sm:$0xff]
  %v90 = vld [vmem:[%s2 + $0x38] sm:$0xff]
  %v91 = vld [vmem:[%s2 + $0x40] sm:$0xff]
  %v92 = vld [vmem:[%s2 + $0x48] sm:$0xff]
  %v93 = vld [vmem:[%s2 + $0x50] sm:$0xff]
  %v94 = vld [vmem:[%s2 + $0x58] sm:$0xff]
  %v95 = vld [vmem:[%s2 + $0x60] sm:$0xff]
  %v96 = vld [vmem:[%s2 + $0x68] sm:$0xff]
  %v97 = vld [vmem:[%s2 + $0x70] sm:$0xff]
  %v98 = vld [vmem:[%s2 + $0x78] sm:$0xff]
  %v99 = vld [vmem:[%s2 + $0x80] sm:$0xff]
  %v100 = vld [vmem:[%s2 + $0x88] sm:$0xff]
  %v101 = vld [vmem:[%s2 + $0x90] sm:$0xff]
  %v102 = vld [vmem:[%s2 + $0x98] sm:$0xff]
  %v103 = vld [vmem:[%s2 + $0xa0] sm:$0xff]
  %v104 = vld [vmem:[%s2 + $0xa8] sm:$0xff]
  %v105 = vld [vmem:[%s2 + $0xb0] sm:$0xff]
  %v106 = vld [vmem:[%s2 + $0xb8] sm:$0xff]
  %v107 = vld [vmem:[%s2 + $0xc0] sm:$0xff]
  %v108 = vld [vmem:[%s2 + $0xc8] sm:$0xff]
  %v109 = vld [vmem:[%s2 + $0xd0] sm:$0xff]
  %v110 = vld [vmem:[%s2 + $0xd8] sm:$0xff]
  %v111 = vld [vmem:[%s2 + $0xe0] sm:$0xff]
  %v112 = vld [vmem:[%s2 + $0xe8] sm:$0xff]
  %v113 = vld [vmem:[%s2 + $0xf0] sm:$0xff]
  %v114 = vld [vmem:[%s2 + $0xf8] sm:$0xff]
  %v115 = vld [vmem:[%s2 + $0x100] sm:$0xff]
  %v116 = vld [vmem:[%s2 + $0x108] sm:$0xff]
  %v117 = vld [vmem:[%s2 + $0x110] sm:$0xff]
  %v118 = vld [vmem:[%s2 + $0x118] sm:$0xff]
  %v119 = vld [vmem:[%s2 + $0x120] sm:$0xff]
  %v120 = vld [vmem:[%s2 + $0x128] sm:$0xff]
  %v121 = vld [vmem:[%s2 + $0x130] sm:$0xff]
  %v122 = vld [vmem:[%s2 + $0x138] sm:$0xff]
  %v123 = vld [vmem:[%s2 + $0x140] sm:$0xff]
  %v124 = vld [vmem:[%s2 + $0x148] sm:$0xff]
  %v125 = vld [vmem:[%s2 + $0x150] sm:$0xff]
  %v126 = vld [vmem:[%s2 + $0x158] sm:$0xff]
  %v127 = vld [vmem:[%s2 + $0x160] sm:$0xff]
  %v128 = vld [vmem:[%s2 + $0x168] sm:$0xff]
  %v129 = vld [vmem:[%s2 + $0x170] sm:$0xff]
  %v130 = vld [vmem:[%s2 + $0x178] sm:$0xff]
  %v131 = vld [vmem:[%s2 + $0x180] sm:$0xff]
  %v132 = vld [vmem:[%s2 + $0x188] sm:$0xff]
  %v133 = vld [vmem:[%s2 + $0x190] sm:$0xff]
  %v134 = vld [vmem:[%s2 + $0x198] sm:$0xff]
  %v135 = vld [vmem:[%s2 + $0x1a0] sm:$0xff]
  %v136 = vld [vmem:[%s2 + $0x1a8] sm:$0xff]
  %v137 = vld [vmem:[%s2 + $0x1b0] sm:$0xff]
  %v138 = vld [vmem:[%s2 + $0x1b8] sm:$0xff]
  %v139 = vld [vmem:[%s2 + $0x1c0] sm:$0xff]
  %v140 = vld [vmem:[%s2 + $0x1c8] sm:$0xff]
  %v141 = vld [vmem:[%s2 + $0x1d0] sm:$0xff]
  %v142 = vld [vmem:[%s2 + $0x1d8] sm:$0xff]
  %v143 = vld [vmem:[%s3] sm:$0xff]
  %v144 = vld [vmem:[%s3 + $0x8] sm:$0xff]
  %v145 = vld [vmem:[%s3 + $0x10] sm:$0xff]
  %v146 = vld [vmem:[%s3 + $0x18] sm:$0xff]
  %v147 = vld [vmem:[%s3 + $0x20] sm:$0xff]
  %v148 = vld [vmem:[%s3 + $0x28] sm:$0xff]
  %v149 = vld [vmem:[%s3 + $0x30] sm:$0xff]
  %v150 = vld [vmem:[%s3 + $0x38] sm:$0xff]
  %v151 = vld [vmem:[%s3 + $0x40] sm:$0xff]
  %v152 = vld [vmem:[%s3 + $0x48] sm:$0xff]
  %v153 = vld [vmem:[%s3 + $0x50] sm:$0xff]
  %v154 = vld [vmem:[%s3 + $0x58] sm:$0xff]
  %v155 = vld [vmem:[%s3 + $0x60] sm:$0xff]
  %v156 = vld [vmem:[%s3 + $0x68] sm:$0xff]
  %v157 = vld [vmem:[%s3 + $0x70] sm:$0xff]
  %v158 = vld [vmem:[%s3 + $0x78] sm:$0xff]
  %v159 = vld [vmem:[%s3 + $0x80] sm:$0xff]
  %v160 = vld [vmem:[%s3 + $0x88] sm:$0xff]
  %v161 = vld [vmem:[%s3 + $0x90] sm:$0xff]
  %v162 = vld [vmem:[%s3 + $0x98] sm:$0xff]
  %v163 = vld [vmem:[%s4] sm:$0xff]
  %v164 = vld [vmem:[%s4 + $0x8] sm:$0xff]
  %v165 = vld [vmem:[%s4 + $0x10] sm:$0xff]
  %v166 = vld [vmem:[%s4 + $0x18] sm:$0xff]
  %v167 = vld [vmem:[%s4 + $0x20] sm:$0xff]
  %v168 = vld [vmem:[%s5] sm:$0xff]
  %v169 = vld [vmem:[%s5 + $0x8] sm:$0xff]
  %v170 = vld [vmem:[%s5 + $0x10] sm:$0xf]
  %v171 = vld [vmem:[%s6] sm:$0xff]
  %v172 = vld [vmem:[%s6 + $0x8] sm:$0xff]
  %v173 = vld [vmem:[%s6 + $0x10] sm:$0xff]
  %v174 = vld [vmem:[%s6 + $0x18] sm:$0xff]
  %v175 = vld [vmem:[%s6 + $0x20] sm:$0xff]
  %v176 = vld [vmem:[%s6 + $0x28] sm:$0xff]
  %v177 = vld [vmem:[%s6 + $0x30] sm:$0xff]
  %v178 = vld [vmem:[%s6 + $0x38] sm:$0xff]
  %v179 = vld [vmem:[%s7] sm:$0xff]
  %v180 = vld [vmem:[%s7 + $0x8] sm:$0xff]
  %v181 = vld [vmem:[%s7 + $0x10] sm:$0xff]
  %v182 = vld [vmem:[%s7 + $0x18] sm:$0xff]
  %v183 = vld [vmem:[%s7 + $0x20] sm:$0xff]
  %v184 = vld [vmem:[%s7 + $0x28] sm:$0xff]
  %v185 = vld [vmem:[%s7 + $0x30] sm:$0xff]
  %v186 = vld [vmem:[%s7 + $0x38] sm:$0xff]
  %v187 = vld [vmem:[%s7 + $0x40] sm:$0xff]
  %v188 = vld [vmem:[%s7 + $0x48] sm:$0xff]
  %v189 = vld [vmem:[%s7 + $0x50] sm:$0xff]
  %v190 = vld [vmem:[%s7 + $0x58] sm:$0xff]
  %v191 = vld [vmem:[%s7 + $0x60] sm:$0xff]
  %v192 = vld [vmem:[%s7 + $0x68] sm:$0xff]
  %v193 = vld [vmem:[%s7 + $0x70] sm:$0xff]
  %v194 = vld [vmem:[%s7 + $0x78] sm:$0xff]
  %v195 = vld [vmem:[%s8] sm:$0xff]
  %v196 = vld [vmem:[%s8 + $0x8] sm:$0xff]
  %v197 = vld [vmem:[%s8 + $0x10] sm:$0xff]
  %v198 = vld [vmem:[%s8 + $0x18] sm:$0xff]
  %v199 = vld [vmem:[%s8 + $0x20] sm:$0xff]
  %v200 = vld [vmem:[%s8 + $0x28] sm:$0xff]
  %v201 = vld [vmem:[%s8 + $0x30] sm:$0xff]
  %v202 = vld [vmem:[%s8 + $0x38] sm:$0xff]
  %v203 = vld [vmem:[%s8 + $0x40] sm:$0xff]
  %v204 = vld [vmem:[%s8 + $0x48] sm:$0xff]
  %v205 = vld [vmem:[%s8 + $0x50] sm:$0xff]
  %v206 = vld [vmem:[%s8 + $0x58] sm:$0xff]
  %v207 = vld [vmem:[%s8 + $0x60] sm:$0xff]
  %v208 = vld [vmem:[%s8 + $0x68] sm:$0xff]
  %v209 = vld [vmem:[%s8 + $0x70] sm:$0xff]
  %v210 = vld [vmem:[%s8 + $0x78] sm:$0xff]
  %v211 = vld [vmem:[%s9] sm:$0xff]
  %v212 = vld [vmem:[%s9 + $0x8] sm:$0xff]
  %v213 = vld [vmem:[%s9 + $0x10] sm:$0xff]
  %v214 = vld [vmem:[%s9 + $0x18] sm:$0xff]
  %v215 = vld [vmem:[%s9 + $0x20] sm:$0xff]
  %v216 = vld [vmem:[%s9 + $0x28] sm:$0xff]
  %v217 = vld [vmem:[%s9 + $0x30] sm:$0xff]
  %v218 = vld [vmem:[%s9 + $0x38] sm:$0xff]
  %v219 = vld [vmem:[%s10] sm:$0xff]
  %v220 = vld [vmem:[%s11] sm:$0xff]
  %v221 = vld [vmem:[%s11 + $0x8] sm:$0xff]
  %v222 = vld [vmem:[%s12] sm:$0xff]
  %v223 = vld [vmem:[%s12 + $0x8] sm:$0xff]
  %v224 = vld [vmem:[%s12 + $0x10] sm:$0xff]
  %v225 = vld [vmem:[%s12 + $0x18] sm:$0xff]
  %v226 = vld [vmem:[%s13] sm:$0xff]
  %v227 = vld [vmem:[%s13 + $0x8] sm:$0xff]
  %v228 = vld [vmem:[%s13 + $0x10] sm:$0xff]
  %v229 = vld [vmem:[%s13 + $0x18] sm:$0xff]
  %v230 = vld [vmem:[%s13 + $0x20] sm:$0xff]
  %v231 = vld [vmem:[%s13 + $0x28] sm:$0xff]
  %v232 = vld [vmem:[%s13 + $0x30] sm:$0xff]
  %v233 = vld [vmem:[%s13 + $0x38] sm:$0xff]
  %v234 = vld [vmem:[%s15] sm:$0xff]
  %v235 = vld [vmem:[%s16] sm:$0xff]
  %v236 = vld [vmem:[%s16 + $0x8] sm:$0xff]
  %v237 = vld [vmem:[%s17] sm:$0xff]
  %v238 = vld [vmem:[%s17 + $0x8] sm:$0xff]
  %v239 = vld [vmem:[%s18] sm:$0xff]
  %v240 = vld [vmem:[%s18 + $0x8] sm:$0xff]
  %v241 = vld [vmem:[%s18 + $0x10] sm:$0xff]
  %v242 = vld [vmem:[%s18 + $0x18] sm:$0xff]
  %v243 = vld [vmem:[%s14] sm:$0xff]
  %v244 = vld [vmem:[%s14 + $0x8] sm:$0xff]
  %v245 = vld [vmem:[%s14 + $0x10] sm:$0xff]
  %v246 = vld [vmem:[%s14 + $0x18] sm:$0xff]
  %v247 = vld [vmem:[%s14 + $0x20] sm:$0xff]
  %v248 = vld [vmem:[%s14 + $0x28] sm:$0xff]
  %v249 = vld [vmem:[%s14 + $0x30] sm:$0xff]
  %v250 = vld [vmem:[%s14 + $0x38] sm:$0xff]
  %v251 = vld [vmem:[%s14 + $0x40] sm:$0xff]
  %v252 = vld [vmem:[%s14 + $0x48] sm:$0xff]
  %v253 = vld [vmem:[%s14 + $0x50] sm:$0xff]
  %v254 = vld [vmem:[%s14 + $0x58] sm:$0xff]
  %v255 = vld [vmem:[%s19] sm:$0xff]
  %v256 = vld [vmem:[%s19 + $0x8] sm:$0xff]
  %v257 = vld [vmem:[%s19 + $0x10] sm:$0xff]
  %v258 = vld [vmem:[%s19 + $0x18] sm:$0xff]
  %v259 = vld [vmem:[%s20] sm:$0xff]
  %v260 = vld [vmem:[%s20 + $0x8] sm:$0xff]
  %v261 = vld [vmem:[%s20 + $0x10] sm:$0xff]
  %v262 = vld [vmem:[%s20 + $0x18] sm:$0xff]
  %v263 = vld [vmem:[%s21] sm:$0xff]
  %v264 = vld [vmem:[%s21 + $0x8] sm:$0xff]
  %v265 = vld [vmem:[%s22] sm:$0xf]
  %v266 = vld [vmem:[%s23] sm:$0xff]
  %v267 = vld [vmem:[%s23 + $0x8] sm:$0xff]
  %v268 = vld [vmem:[%s23 + $0x10] sm:$0xff]
  %v269 = vld [vmem:[%s23 + $0x18] sm:$0xff]
  %v270 = vld [vmem:[%s24] sm:$0xff]
  %v271 = vld [vmem:[%s24 + $0x8] sm:$0xff]
  %v272 = vld [vmem:[%s25] sm:$0xf]
  %v273 = vld [vmem:[%s0] sm:$0xff]
  %v274 = vld [vmem:[%s0 + $0x8] sm:$0xff]
  %v275 = vld [vmem:[%s0 + $0x10] sm:$0xff]
  %v276 = vld [vmem:[%s0 + $0x18] sm:$0xff]
  %v277 = vld [vmem:[%s0 + $0x20] sm:$0xff]
  %v278 = vld [vmem:[%s0 + $0x28] sm:$0xff]
  %v279 = vld [vmem:[%s0 + $0x30] sm:$0xff]
  %v280 = vld [vmem:[%s0 + $0x38] sm:$0xff]
  %v281 = vld [vmem:[%s0 + $0x40] sm:$0xff]
  %v282 = vld [vmem:[%s0 + $0x48] sm:$0xff]
  %v283 = vld [vmem:[%s0 + $0x50] sm:$0xff]
  %v284 = vld [vmem:[%s0 + $0x58] sm:$0xff]
  %v285 = vld [vmem:[%s0 + $0x60] sm:$0xff]
  %v286 = vld [vmem:[%s0 + $0x68] sm:$0xff]
  %v287 = vld [vmem:[%s0 + $0x70] sm:$0xff]
  %v288 = vld [vmem:[%s0 + $0x78] sm:$0xff]
  %v289 = vld [vmem:[%s1] sm:$0x3]
  %vm290 = vcmask 261120
  %v292 = vsel %vm290, %v274, 0
  %v295 = vsel %vm290, %v276, 0
  %v298 = vsel %vm290, %v278, 0
  %v301 = vsel %vm290, %v280, 0
  %303 = vmatprep.subr.mxu0 %v129
  %304 = vmatpush1.msra.mxu0 %v128
  %305 = vmatprep.subr.mxu0 %v126
  %306 = vmatpush1.msra.mxu0 %v125
  %307 = vmatprep.subr.mxu0 %v123
  %308 = vmatpush1.msra.mxu0 %v122
  %309 = vmatprep.subr.mxu0 %v120
  %310 = vmatpush1.msra.mxu0 %v119
  %311 = vmatprep.subr.mxu0 %v117
  %312 = vmatpush1.msra.mxu0 %v116
  %313 = vmatprep.subr.mxu0 %v114
  %314 = vmatpush1.msra.mxu0 %v113
  %315 = vmatprep.subr.mxu0 %v111
  %316 = vmatpush1.msra.mxu0 %v110
  %317 = vmatprep.subr.mxu0 %v108
  %318 = vmatpush1.msra.mxu0 %v107
  %319 = vmatprep.subr.mxu0 %v105
  %320 = vmatpush1.msra.mxu0 %v104
  %321 = vmatprep.subr.mxu0 %v102
  %322 = vmatpush1.msra.mxu0 %v101
  %323 = vmatprep.subr.mxu0 %v99
  %324 = vmatpush1.msra.mxu0 %v98
  %325 = vmatprep.subr.mxu0 %v96
  %326 = vmatpush1.msra.mxu0 %v95
  %327 = vmatprep.subr.mxu0 %v93
  %328 = vmatpush1.msra.mxu0 %v92
  %329 = vmatprep.subr.mxu0 %v90
  %330 = vmatpush1.msra.mxu0 %v89
  %331 = vmatprep.subr.mxu0 %v87
  %332 = vmatpush1.msra.mxu0 %v86
  %333 = vmatprep.subr.mxu0 %v84
  %334 = vmatpush1.msra.mxu0 %v83
  %335 = vmatprep.subr.mxu0 0.0
  %336 = vmatpush2.msra.mxu0 0.0
  %337 = vmatprep.subr.mxu0 0.0
  %338 = vmatpush2.msra.mxu0 0.0
  %339 = vmatprep.subr.mxu0 0.0
  %340 = vmatpush2.msra.mxu0 0.0
  %341 = vmatprep.subr.mxu0 0.0
  %342 = vmatpush2.msra.mxu0 0.0
  %343 = vmatprep.subr.mxu0 0.0
  %344 = vmatpush2.msra.mxu0 0.0
  %345 = vmatprep.subr.mxu0 0.0
  %346 = vmatpush2.msra.mxu0 0.0
  %347 = vmatprep.subr.mxu0 0.0
  %348 = vmatpush2.msra.mxu0 0.0
  %349 = vmatprep.subr.mxu0 0.0
  %350 = vmatpush2.msra.mxu0 0.0
  %351 = vmatprep.subr.mxu0 0.0
  %352 = vmatpush2.msra.mxu0 0.0
  %353 = vmatprep.subr.mxu0 0.0
  %354 = vmatpush2.msra.mxu0 0.0
  %355 = vmatprep.subr.mxu0 0.0
  %356 = vmatpush2.msra.mxu0 0.0
  %357 = vmatprep.subr.mxu0 0.0
  %358 = vmatpush2.msra.mxu0 0.0
  %359 = vmatprep.subr.mxu0 %v141
  %360 = vmatpush2.msra.mxu0 %v140
  %361 = vmatprep.subr.mxu0 %v138
  %362 = vmatpush2.msra.mxu0 %v137
  %363 = vmatprep.subr.mxu0 %v135
  %364 = vmatpush2.msra.mxu0 %v134
  %365 = vmatprep.subr.mxu0 %v132
  %366 = vmatpush2.msra.mxu0 %v131
  %367 = vmatprep.mubr.f32.mxu0 %v292
  %368 = vmatmul.mubr.f32.gmra.mxu0 %v273
  %v369 = vpop.f32.mrf.mxu0
  %v370 = vadd.f32 0.0, %v369
  %v371 = vpop.f32.mrf.mxu0
  %v372 = vadd.f32 0.0, %v371
  %373 = vmatprep.mubr.f32.mxu0 %v295
  %374 = vmatmul.mubr.f32.gmra.mxu0 %v275
  %v375 = vpop.f32.mrf.mxu0
  %v376 = vadd.f32 0.0, %v375
  %v377 = vpop.f32.mrf.mxu0
  %v378 = vadd.f32 0.0, %v377
  %379 = vmatprep.mubr.f32.mxu0 %v298
  %380 = vmatmul.mubr.f32.gmra.mxu0 %v277
  %v381 = vpop.f32.mrf.mxu0
  %v382 = vadd.f32 0.0, %v381
  %v383 = vpop.f32.mrf.mxu0
  %v384 = vadd.f32 0.0, %v383
  %385 = vmatprep.mubr.f32.mxu0 %v301
  %386 = vmatmul.mubr.f32.gmra.mxu0 %v279
  %v387 = vpop.f32.mrf.mxu0
  %v388 = vadd.f32 0.0, %v387
  %v389 = vpop.f32.mrf.mxu0
  %v390 = vadd.f32 0.0, %v389
  %391 = vdwg.mxu0
  %392 = vmatprep.subr.mxu0 0.0
  %393 = vmatpush1.msra.mxu0 %v130
  %394 = vmatprep.subr.mxu0 0.0
  %395 = vmatpush1.msra.mxu0 %v127
  %396 = vmatprep.subr.mxu0 0.0
  %397 = vmatpush1.msra.mxu0 %v124
  %398 = vmatprep.subr.mxu0 0.0
  %399 = vmatpush1.msra.mxu0 %v121
  %400 = vmatprep.subr.mxu0 0.0
  %401 = vmatpush1.msra.mxu0 %v118
  %402 = vmatprep.subr.mxu0 0.0
  %403 = vmatpush1.msra.mxu0 %v115
  %404 = vmatprep.subr.mxu0 0.0
  %405 = vmatpush1.msra.mxu0 %v112
  %406 = vmatprep.subr.mxu0 0.0
  %407 = vmatpush1.msra.mxu0 %v109
  %408 = vmatprep.subr.mxu0 0.0
  %409 = vmatpush1.msra.mxu0 %v106
  %410 = vmatprep.subr.mxu0 0.0
  %411 = vmatpush1.msra.mxu0 %v103
  %412 = vmatprep.subr.mxu0 0.0
  %413 = vmatpush1.msra.mxu0 %v100
  %414 = vmatprep.subr.mxu0 0.0
  %415 = vmatpush1.msra.mxu0 %v97
  %416 = vmatprep.subr.mxu0 0.0
  %417 = vmatpush1.msra.mxu0 %v94
  %418 = vmatprep.subr.mxu0 0.0
  %419 = vmatpush1.msra.mxu0 %v91
  %420 = vmatprep.subr.mxu0 0.0
  %421 = vmatpush1.msra.mxu0 %v88
  %422 = vmatprep.subr.mxu0 0.0
  %423 = vmatpush1.msra.mxu0 %v85
  %424 = vmatprep.subr.mxu0 0.0
  %425 = vmatpush2.msra.mxu0 0.0
  %426 = vmatprep.subr.mxu0 0.0
  %427 = vmatpush2.msra.mxu0 0.0
  %428 = vmatprep.subr.mxu0 0.0
  %429 = vmatpush2.msra.mxu0 0.0
  %430 = vmatprep.subr.mxu0 0.0
  %431 = vmatpush2.msra.mxu0 0.0
  %432 = vmatprep.subr.mxu0 0.0
  %433 = vmatpush2.msra.mxu0 0.0
  %434 = vmatprep.subr.mxu0 0.0
  %435 = vmatpush2.msra.mxu0 0.0
  %436 = vmatprep.subr.mxu0 0.0
  %437 = vmatpush2.msra.mxu0 0.0
  %438 = vmatprep.subr.mxu0 0.0
  %439 = vmatpush2.msra.mxu0 0.0
  %440 = vmatprep.subr.mxu0 0.0
  %441 = vmatpush2.msra.mxu0 0.0
  %442 = vmatprep.subr.mxu0 0.0
  %443 = vmatpush2.msra.mxu0 0.0
  %444 = vmatprep.subr.mxu0 0.0
  %445 = vmatpush2.msra.mxu0 0.0
  %446 = vmatprep.subr.mxu0 0.0
  %447 = vmatpush2.msra.mxu0 0.0
  %448 = vmatprep.subr.mxu0 0.0
  %449 = vmatpush2.msra.mxu0 %v142
  %450 = vmatprep.subr.mxu0 0.0
  %451 = vmatpush2.msra.mxu0 %v139
  %452 = vmatprep.subr.mxu0 0.0
  %453 = vmatpush2.msra.mxu0 %v136
  %454 = vmatprep.subr.mxu0 0.0
  %455 = vmatpush2.msra.mxu0 %v133
  %456 = vmatprep.mubr.f32.mxu0 %v292
  %457 = vmatmul.mubr.f32.gmra.mxu0 %v273
  %v458 = vpop.f32.mrf.mxu0
  %v459 = vadd.f32 0.0, %v458
  %v460 = vpop.f32.mrf.mxu0
  %461 = vmatprep.mubr.f32.mxu0 %v295
  %462 = vmatmul.mubr.f32.gmra.mxu0 %v275
  %v463 = vpop.f32.mrf.mxu0
  %v464 = vadd.f32 0.0, %v463
  %v465 = vpop.f32.mrf.mxu0
  %466 = vmatprep.mubr.f32.mxu0 %v298
  %467 = vmatmul.mubr.f32.gmra.mxu0 %v277
  %v468 = vpop.f32.mrf.mxu0
  %v469 = vadd.f32 0.0, %v468
  %v470 = vpop.f32.mrf.mxu0
  %471 = vmatprep.mubr.f32.mxu0 %v301
  %472 = vmatmul.mubr.f32.gmra.mxu0 %v279
  %v473 = vpop.f32.mrf.mxu0
  %v474 = vadd.f32 0.0, %v473
  %v475 = vpop.f32.mrf.mxu0
  %476 = vdwg.mxu0
  %v478 = vsel %vm290, %v171, 0
  %v481 = vsel %vm290, %v172, 0
  %v484 = vsel %vm290, %v173, 0
  %v487 = vsel %vm290, %v174, 0
  %v490 = vsel %vm290, %v175, 0
  %v493 = vsel %vm290, %v176, 0
  %v496 = vsel %vm290, %v177, 0
  %v499 = vsel %vm290, %v178, 0
  %501 = vmatprep.subr.mxu0 0.0
  %502 = vmatpush1.msra.mxu0 0.0
  %503 = vmatprep.subr.mxu0 0.0
  %504 = vmatpush1.msra.mxu0 0.0
  %505 = vmatprep.subr.mxu0 0.0
  %506 = vmatpush1.msra.mxu0 0.0
  %507 = vmatprep.subr.mxu0 0.0
  %508 = vmatpush1.msra.mxu0 0.0
  %509 = vmatprep.subr.mxu0 0.0
  %510 = vmatpush1.msra.mxu0 0.0
  %511 = vmatprep.subr.mxu0 0.0
  %512 = vmatpush1.msra.mxu0 0.0
  %513 = vmatprep.subr.mxu0 0.0
  %514 = vmatpush1.msra.mxu0 0.0
  %515 = vmatprep.subr.mxu0 0.0
  %516 = vmatpush1.msra.mxu0 0.0
  %517 = vmatprep.subr.mxu0 0.0
  %518 = vmatpush1.msra.mxu0 0.0
  %519 = vmatprep.subr.mxu0 0.0
  %520 = vmatpush1.msra.mxu0 0.0
  %521 = vmatprep.subr.mxu0 0.0
  %522 = vmatpush1.msra.mxu0 0.0
  %523 = vmatprep.subr.mxu0 0.0
  %524 = vmatpush1.msra.mxu0 0.0
  %525 = vmatprep.subr.mxu0 %v390
  %526 = vmatpush1.msra.mxu0 %v388
  %527 = vmatprep.subr.mxu0 %v384
  %528 = vmatpush1.msra.mxu0 %v382
  %529 = vmatprep.subr.mxu0 %v378
  %530 = vmatpush1.msra.mxu0 %v376
  %531 = vmatprep.subr.mxu0 %v372
  %532 = vmatpush1.msra.mxu0 %v370
  %533 = vmatprep.subr.mxu0 0.0
  %534 = vmatpush2.msra.mxu0 0.0
  %535 = vmatprep.subr.mxu0 0.0
  %536 = vmatpush2.msra.mxu0 0.0
  %537 = vmatprep.subr.mxu0 0.0
  %538 = vmatpush2.msra.mxu0 0.0
  %539 = vmatprep.subr.mxu0 0.0
  %540 = vmatpush2.msra.mxu0 0.0
  %541 = vmatprep.subr.mxu0 0.0
  %542 = vmatpush2.msra.mxu0 0.0
  %543 = vmatprep.subr.mxu0 0.0
  %544 = vmatpush2.msra.mxu0 0.0
  %545 = vmatprep.subr.mxu0 0.0
  %546 = vmatpush2.msra.mxu0 0.0
  %547 = vmatprep.subr.mxu0 0.0
  %548 = vmatpush2.msra.mxu0 0.0
  %549 = vmatprep.subr.mxu0 0.0
  %550 = vmatpush2.msra.mxu0 0.0
  %551 = vmatprep.subr.mxu0 0.0
  %552 = vmatpush2.msra.mxu0 0.0
  %553 = vmatprep.subr.mxu0 0.0
  %554 = vmatpush2.msra.mxu0 0.0
  %555 = vmatprep.subr.mxu0 0.0
  %556 = vmatpush2.msra.mxu0 0.0
  %557 = vmatprep.subr.mxu0 0.0
  %558 = vmatpush2.msra.mxu0 0.0
  %559 = vmatprep.subr.mxu0 0.0
  %560 = vmatpush2.msra.mxu0 0.0
  %561 = vmatprep.subr.mxu0 0.0
  %562 = vmatpush2.msra.mxu0 0.0
  %563 = vmatprep.subr.mxu0 0.0
  %564 = vmatpush2.msra.mxu0 0.0
  %565 = vmatprep.mubr.f32.mxu0 0.0
  %566 = vmatmul.mubr.f32.gmra.mxu0 %v478
  %v567 = vpop.f32.mrf.mxu0
  %v568 = vadd.f32 0.0, %v567
  %v569 = vpop.f32.mrf.mxu0
  %v570 = vadd.f32 0.0, %v569
  %571 = vmatprep.mubr.f32.mxu0 0.0
  %572 = vmatmul.mubr.f32.gmra.mxu0 %v481
  %v573 = vpop.f32.mrf.mxu0
  %v574 = vadd.f32 0.0, %v573
  %v575 = vpop.f32.mrf.mxu0
  %v576 = vadd.f32 0.0, %v575
  %577 = vmatprep.mubr.f32.mxu0 0.0
  %578 = vmatmul.mubr.f32.gmra.mxu0 %v484
  %v579 = vpop.f32.mrf.mxu0
  %v580 = vadd.f32 0.0, %v579
  %v581 = vpop.f32.mrf.mxu0
  %v582 = vadd.f32 0.0, %v581
  %583 = vmatprep.mubr.f32.mxu0 0.0
  %584 = vmatmul.mubr.f32.gmra.mxu0 %v487
  %v585 = vpop.f32.mrf.mxu0
  %v586 = vadd.f32 0.0, %v585
  %v587 = vpop.f32.mrf.mxu0
  %v588 = vadd.f32 0.0, %v587
  %589 = vmatprep.mubr.f32.mxu0 0.0
  %590 = vmatmul.mubr.f32.gmra.mxu0 %v490
  %v591 = vpop.f32.mrf.mxu0
  %v592 = vadd.f32 0.0, %v591
  %v593 = vpop.f32.mrf.mxu0
  %v594 = vadd.f32 0.0, %v593
  %595 = vmatprep.mubr.f32.mxu0 0.0
  %596 = vmatmul.mubr.f32.gmra.mxu0 %v493
  %v597 = vpop.f32.mrf.mxu0
  %v598 = vadd.f32 0.0, %v597
  %v599 = vpop.f32.mrf.mxu0
  %v600 = vadd.f32 0.0, %v599
  %601 = vmatprep.mubr.f32.mxu0 0.0
  %602 = vmatmul.mubr.f32.gmra.mxu0 %v496
  %v603 = vpop.f32.mrf.mxu0
  %v604 = vadd.f32 0.0, %v603
  %v605 = vpop.f32.mrf.mxu0
  %v606 = vadd.f32 0.0, %v605
  %607 = vmatprep.mubr.f32.mxu0 0.0
  %608 = vmatmul.mubr.f32.gmra.mxu0 %v499
  %v609 = vpop.f32.mrf.mxu0
  %v610 = vadd.f32 0.0, %v609
  %v611 = vpop.f32.mrf.mxu0
  %v612 = vadd.f32 0.0, %v611
  %613 = vdwg.mxu0
  %614 = vmatprep.subr.mxu0 0.0
  %615 = vmatpush1.msra.mxu0 0.0
  %616 = vmatprep.subr.mxu0 0.0
  %617 = vmatpush1.msra.mxu0 0.0
  %618 = vmatprep.subr.mxu0 0.0
  %619 = vmatpush1.msra.mxu0 0.0
  %620 = vmatprep.subr.mxu0 0.0
  %621 = vmatpush1.msra.mxu0 0.0
  %622 = vmatprep.subr.mxu0 0.0
  %623 = vmatpush1.msra.mxu0 0.0
  %624 = vmatprep.subr.mxu0 0.0
  %625 = vmatpush1.msra.mxu0 0.0
  %626 = vmatprep.subr.mxu0 0.0
  %627 = vmatpush1.msra.mxu0 0.0
  %628 = vmatprep.subr.mxu0 0.0
  %629 = vmatpush1.msra.mxu0 0.0
  %630 = vmatprep.subr.mxu0 0.0
  %631 = vmatpush1.msra.mxu0 0.0
  %632 = vmatprep.subr.mxu0 0.0
  %633 = vmatpush1.msra.mxu0 0.0
  %634 = vmatprep.subr.mxu0 0.0
  %635 = vmatpush1.msra.mxu0 0.0
  %636 = vmatprep.subr.mxu0 0.0
  %637 = vmatpush1.msra.mxu0 0.0
  %638 = vmatprep.subr.mxu0 0.0
  %639 = vmatpush1.msra.mxu0 %v474
  %640 = vmatprep.subr.mxu0 0.0
  %641 = vmatpush1.msra.mxu0 %v469
  %642 = vmatprep.subr.mxu0 0.0
  %643 = vmatpush1.msra.mxu0 %v464
  %644 = vmatprep.subr.mxu0 0.0
  %645 = vmatpush1.msra.mxu0 %v459
  %646 = vmatprep.subr.mxu0 0.0
  %647 = vmatpush2.msra.mxu0 0.0
  %648 = vmatprep.subr.mxu0 0.0
  %649 = vmatpush2.msra.mxu0 0.0
  %650 = vmatprep.subr.mxu0 0.0
  %651 = vmatpush2.msra.mxu0 0.0
  %652 = vmatprep.subr.mxu0 0.0
  %653 = vmatpush2.msra.mxu0 0.0
  %654 = vmatprep.subr.mxu0 0.0
  %655 = vmatpush2.msra.mxu0 0.0
  %656 = vmatprep.subr.mxu0 0.0
  %657 = vmatpush2.msra.mxu0 0.0
  %658 = vmatprep.subr.mxu0 0.0
  %659 = vmatpush2.msra.mxu0 0.0
  %660 = vmatprep.subr.mxu0 0.0
  %661 = vmatpush2.msra.mxu0 0.0
  %662 = vmatprep.subr.mxu0 0.0
  %663 = vmatpush2.msra.mxu0 0.0
  %664 = vmatprep.subr.mxu0 0.0
  %665 = vmatpush2.msra.mxu0 0.0
  %666 = vmatprep.subr.mxu0 0.0
  %667 = vmatpush2.msra.mxu0 0.0
  %668 = vmatprep.subr.mxu0 0.0
  %669 = vmatpush2.msra.mxu0 0.0
  %670 = vmatprep.subr.mxu0 0.0
  %671 = vmatpush2.msra.mxu0 0.0
  %672 = vmatprep.subr.mxu0 0.0
  %673 = vmatpush2.msra.mxu0 0.0
  %674 = vmatprep.subr.mxu0 0.0
  %675 = vmatpush2.msra.mxu0 0.0
  %676 = vmatprep.subr.mxu0 0.0
  %677 = vmatpush2.msra.mxu0 0.0
  %678 = vmatprep.mubr.f32.mxu0 0.0
  %679 = vmatmul.mubr.f32.gmra.mxu0 %v478
  %v680 = vpop.f32.mrf.mxu0
  %v681 = vadd.f32 0.0, %v680
  %v682 = vpop.f32.mrf.mxu0
  %683 = vmatprep.mubr.f32.mxu0 0.0
  %684 = vmatmul.mubr.f32.gmra.mxu0 %v481
  %v685 = vpop.f32.mrf.mxu0
  %v686 = vadd.f32 0.0, %v685
  %v687 = vpop.f32.mrf.mxu0
  %688 = vmatprep.mubr.f32.mxu0 0.0
  %689 = vmatmul.mubr.f32.gmra.mxu0 %v484
  %v690 = vpop.f32.mrf.mxu0
  %v691 = vadd.f32 0.0, %v690
  %v692 = vpop.f32.mrf.mxu0
  %693 = vmatprep.mubr.f32.mxu0 0.0
  %694 = vmatmul.mubr.f32.gmra.mxu0 %v487
  %v695 = vpop.f32.mrf.mxu0
  %v696 = vadd.f32 0.0, %v695
  %v697 = vpop.f32.mrf.mxu0
  %698 = vmatprep.mubr.f32.mxu0 0.0
  %699 = vmatmul.mubr.f32.gmra.mxu0 %v490
  %v700 = vpop.f32.mrf.mxu0
  %v701 = vadd.f32 0.0, %v700
  %v702 = vpop.f32.mrf.mxu0
  %703 = vmatprep.mubr.f32.mxu0 0.0
  %704 = vmatmul.mubr.f32.gmra.mxu0 %v493
  %v705 = vpop.f32.mrf.mxu0
  %v706 = vadd.f32 0.0, %v705
  %v707 = vpop.f32.mrf.mxu0
  %708 = vmatprep.mubr.f32.mxu0 0.0
  %709 = vmatmul.mubr.f32.gmra.mxu0 %v496
  %v710 = vpop.f32.mrf.mxu0
  %v711 = vadd.f32 0.0, %v710
  %v712 = vpop.f32.mrf.mxu0
  %713 = vmatprep.mubr.f32.mxu0 0.0
  %714 = vmatmul.mubr.f32.gmra.mxu0 %v499
  %v715 = vpop.f32.mrf.mxu0
  %v716 = vadd.f32 0.0, %v715
  %v717 = vpop.f32.mrf.mxu0
  %718 = vdwg.mxu0
  %721 = vrot.lane.b32.xlu0 %v568, 48
  %v722 = vpop.permute.xlu0 %721
  %723 = vrot.lane.b32.xlu0 %v570, 48
  %v724 = vpop.permute.xlu0 %723
  %vm725 = vcmask 392192
  %v726 = vsel %vm725, %v722, %v724
  %728 = vrot.lane.b32.xlu0 %v570, 96
  %v729 = vpop.permute.xlu0 %728
  %732 = vrot.lane.b32.xlu0 %v570, 16
  %v733 = vpop.permute.xlu0 %732
  %734 = vrot.lane.b32.xlu0 %v681, 16
  %v735 = vpop.permute.xlu0 %734
  %vm736 = vcmask 130048
  %v737 = vsel %vm736, %v733, %v735
  %740 = vset.pattern.permute.xlu0 0
  %741 = vperm.xlu0 %740, %v234
  %v742 = vpop.permute.xlu0 %741
  %v745 = vsel %vm290, %v219, 0
  %747 = vmatprep.subr.mxu0 0.0
  %748 = vmatpush1.msra.mxu0 0.0
  %749 = vmatprep.subr.mxu0 0.0
  %750 = vmatpush1.msra.mxu0 0.0
  %751 = vmatprep.subr.mxu0 0.0
  %752 = vmatpush1.msra.mxu0 0.0
  %753 = vmatprep.subr.mxu0 0.0
  %754 = vmatpush1.msra.mxu0 0.0
  %755 = vmatprep.subr.mxu0 0.0
  %756 = vmatpush1.msra.mxu0 0.0
  %757 = vmatprep.subr.mxu0 0.0
  %758 = vmatpush1.msra.mxu0 0.0
  %759 = vmatprep.subr.mxu0 0.0
  %760 = vmatpush1.msra.mxu0 0.0
  %761 = vmatprep.subr.mxu0 0.0
  %762 = vmatpush1.msra.mxu0 0.0
  %763 = vmatprep.subr.mxu0 0.0
  %764 = vmatpush1.msra.mxu0 0.0
  %765 = vmatprep.subr.mxu0 0.0
  %766 = vmatpush1.msra.mxu0 0.0
  %767 = vmatprep.subr.mxu0 0.0
  %768 = vmatpush1.msra.mxu0 0.0
  %769 = vmatprep.subr.mxu0 0.0
  %770 = vmatpush1.msra.mxu0 0.0
  %771 = vmatprep.subr.mxu0 0.0
  %772 = vmatpush1.msra.mxu0 %v737
  %773 = vmatprep.subr.mxu0 0.0
  %774 = vmatpush1.msra.mxu0 %v729
  %775 = vmatprep.subr.mxu0 0.0
  %776 = vmatpush1.msra.mxu0 %v726
  %777 = vmatprep.subr.mxu0 0.0
  %778 = vmatpush1.msra.mxu0 %v568
  %779 = vmatprep.subr.mxu0 0.0
  %780 = vmatpush2.msra.mxu0 0.0
  %781 = vmatprep.subr.mxu0 0.0
  %782 = vmatpush2.msra.mxu0 0.0
  %783 = vmatprep.subr.mxu0 0.0
  %784 = vmatpush2.msra.mxu0 0.0
  %785 = vmatprep.subr.mxu0 0.0
  %786 = vmatpush2.msra.mxu0 0.0
  %787 = vmatprep.subr.mxu0 0.0
  %788 = vmatpush2.msra.mxu0 0.0
  %789 = vmatprep.subr.mxu0 0.0
  %790 = vmatpush2.msra.mxu0 0.0
  %791 = vmatprep.subr.mxu0 0.0
  %792 = vmatpush2.msra.mxu0 0.0
  %793 = vmatprep.subr.mxu0 0.0
  %794 = vmatpush2.msra.mxu0 0.0
  %795 = vmatprep.subr.mxu0 0.0
  %796 = vmatpush2.msra.mxu0 0.0
  %797 = vmatprep.subr.mxu0 0.0
  %798 = vmatpush2.msra.mxu0 0.0
  %799 = vmatprep.subr.mxu0 0.0
  %800 = vmatpush2.msra.mxu0 0.0
  %801 = vmatprep.subr.mxu0 0.0
  %802 = vmatpush2.msra.mxu0 0.0
  %803 = vmatprep.subr.mxu0 0.0
  %804 = vmatpush2.msra.mxu0 0.0
  %805 = vmatprep.subr.mxu0 0.0
  %806 = vmatpush2.msra.mxu0 0.0
  %807 = vmatprep.subr.mxu0 0.0
  %808 = vmatpush2.msra.mxu0 0.0
  %809 = vmatprep.subr.mxu0 0.0
  %810 = vmatpush2.msra.mxu0 0.0
  %811 = vmatprep.mubr.f32.mxu0 0.0
  %812 = vmatmul.mubr.f32.gmra.mxu0 %v745
  %v813 = vpop.f32.mrf.mxu0
  %v814 = vadd.f32 %v742, %v813
  %v815 = vpop.f32.mrf.mxu0
  %816 = vdwg.mxu0
  %v817 = vmax.f32 %v814, 0.0
  %820 = vrot.lane.b32.xlu0 %v574, 48
  %v821 = vpop.permute.xlu0 %820
  %822 = vrot.lane.b32.xlu0 %v576, 48
  %v823 = vpop.permute.xlu0 %822
  %v824 = vsel %vm725, %v821, %v823
  %826 = vrot.lane.b32.xlu0 %v576, 96
  %v827 = vpop.permute.xlu0 %826
  %830 = vrot.lane.b32.xlu0 %v576, 16
  %v831 = vpop.permute.xlu0 %830
  %832 = vrot.lane.b32.xlu0 %v686, 16
  %v833 = vpop.permute.xlu0 %832
  %v834 = vsel %vm736, %v831, %v833
  %836 = vmatprep.subr.mxu0 0.0
  %837 = vmatpush1.msra.mxu0 0.0
  %838 = vmatprep.subr.mxu0 0.0
  %839 = vmatpush1.msra.mxu0 0.0
  %840 = vmatprep.subr.mxu0 0.0
  %841 = vmatpush1.msra.mxu0 0.0
  %842 = vmatprep.subr.mxu0 0.0
  %843 = vmatpush1.msra.mxu0 0.0
  %844 = vmatprep.subr.mxu0 0.0
  %845 = vmatpush1.msra.mxu0 0.0
  %846 = vmatprep.subr.mxu0 0.0
  %847 = vmatpush1.msra.mxu0 0.0
  %848 = vmatprep.subr.mxu0 0.0
  %849 = vmatpush1.msra.mxu0 0.0
  %850 = vmatprep.subr.mxu0 0.0
  %851 = vmatpush1.msra.mxu0 0.0
  %852 = vmatprep.subr.mxu0 0.0
  %853 = vmatpush1.msra.mxu0 0.0
  %854 = vmatprep.subr.mxu0 0.0
  %855 = vmatpush1.msra.mxu0 0.0
  %856 = vmatprep.subr.mxu0 0.0
  %857 = vmatpush1.msra.mxu0 0.0
  %858 = vmatprep.subr.mxu0 0.0
  %859 = vmatpush1.msra.mxu0 0.0
  %860 = vmatprep.subr.mxu0 0.0
  %861 = vmatpush1.msra.mxu0 %v834
  %862 = vmatprep.subr.mxu0 0.0
  %863 = vmatpush1.msra.mxu0 %v827
  %864 = vmatprep.subr.mxu0 0.0
  %865 = vmatpush1.msra.mxu0 %v824
  %866 = vmatprep.subr.mxu0 0.0
  %867 = vmatpush1.msra.mxu0 %v574
  %868 = vmatprep.subr.mxu0 0.0
  %869 = vmatpush2.msra.mxu0 0.0
  %870 = vmatprep.subr.mxu0 0.0
  %871 = vmatpush2.msra.mxu0 0.0
  %872 = vmatprep.subr.mxu0 0.0
  %873 = vmatpush2.msra.mxu0 0.0
  %874 = vmatprep.subr.mxu0 0.0
  %875 = vmatpush2.msra.mxu0 0.0
  %876 = vmatprep.subr.mxu0 0.0
  %877 = vmatpush2.msra.mxu0 0.0
  %878 = vmatprep.subr.mxu0 0.0
  %879 = vmatpush2.msra.mxu0 0.0
  %880 = vmatprep.subr.mxu0 0.0
  %881 = vmatpush2.msra.mxu0 0.0
  %882 = vmatprep.subr.mxu0 0.0
  %883 = vmatpush2.msra.mxu0 0.0
  %884 = vmatprep.subr.mxu0 0.0
  %885 = vmatpush2.msra.mxu0 0.0
  %886 = vmatprep.subr.mxu0 0.0
  %887 = vmatpush2.msra.mxu0 0.0
  %888 = vmatprep.subr.mxu0 0.0
  %889 = vmatpush2.msra.mxu0 0.0
  %890 = vmatprep.subr.mxu0 0.0
  %891 = vmatpush2.msra.mxu0 0.0
  %892 = vmatprep.subr.mxu0 0.0
  %893 = vmatpush2.msra.mxu0 0.0
  %894 = vmatprep.subr.mxu0 0.0
  %895 = vmatpush2.msra.mxu0 0.0
  %896 = vmatprep.subr.mxu0 0.0
  %897 = vmatpush2.msra.mxu0 0.0
  %898 = vmatprep.subr.mxu0 0.0
  %899 = vmatpush2.msra.mxu0 0.0
  %900 = vmatprep.mubr.f32.mxu0 0.0
  %901 = vmatmul.mubr.f32.gmra.mxu0 %v745
  %v902 = vpop.f32.mrf.mxu0
  %v903 = vadd.f32 %v742, %v902
  %v904 = vpop.f32.mrf.mxu0
  %905 = vdwg.mxu0
  %v906 = vmax.f32 %v903, 0.0
  %909 = vrot.lane.b32.xlu0 %v580, 48
  %v910 = vpop.permute.xlu0 %909
  %911 = vrot.lane.b32.xlu0 %v582, 48
  %v912 = vpop.permute.xlu0 %911
  %v913 = vsel %vm725, %v910, %v912
  %915 = vrot.lane.b32.xlu0 %v582, 96
  %v916 = vpop.permute.xlu0 %915
  %919 = vrot.lane.b32.xlu0 %v582, 16
  %v920 = vpop.permute.xlu0 %919
  %921 = vrot.lane.b32.xlu0 %v691, 16
  %v922 = vpop.permute.xlu0 %921
  %v923 = vsel %vm736, %v920, %v922
  %925 = vmatprep.subr.mxu0 0.0
  %926 = vmatpush1.msra.mxu0 0.0
  %927 = vmatprep.subr.mxu0 0.0
  %928 = vmatpush1.msra.mxu0 0.0
  %929 = vmatprep.subr.mxu0 0.0
  %930 = vmatpush1.msra.mxu0 0.0
  %931 = vmatprep.subr.mxu0 0.0
  %932 = vmatpush1.msra.mxu0 0.0
  %933 = vmatprep.subr.mxu0 0.0
  %934 = vmatpush1.msra.mxu0 0.0
  %935 = vmatprep.subr.mxu0 0.0
  %936 = vmatpush1.msra.mxu0 0.0
  %937 = vmatprep.subr.mxu0 0.0
  %938 = vmatpush1.msra.mxu0 0.0
  %939 = vmatprep.subr.mxu0 0.0
  %940 = vmatpush1.msra.mxu0 0.0
  %941 = vmatprep.subr.mxu0 0.0
  %942 = vmatpush1.msra.mxu0 0.0
  %943 = vmatprep.subr.mxu0 0.0
  %944 = vmatpush1.msra.mxu0 0.0
  %945 = vmatprep.subr.mxu0 0.0
  %946 = vmatpush1.msra.mxu0 0.0
  %947 = vmatprep.subr.mxu0 0.0
  %948 = vmatpush1.msra.mxu0 0.0
  %949 = vmatprep.subr.mxu0 0.0
  %950 = vmatpush1.msra.mxu0 %v923
  %951 = vmatprep.subr.mxu0 0.0
  %952 = vmatpush1.msra.mxu0 %v916
  %953 = vmatprep.subr.mxu0 0.0
  %954 = vmatpush1.msra.mxu0 %v913
  %955 = vmatprep.subr.mxu0 0.0
  %956 = vmatpush1.msra.mxu0 %v580
  %957 = vmatprep.subr.mxu0 0.0
  %958 = vmatpush2.msra.mxu0 0.0
  %959 = vmatprep.subr.mxu0 0.0
  %960 = vmatpush2.msra.mxu0 0.0
  %961 = vmatprep.subr.mxu0 0.0
  %962 = vmatpush2.msra.mxu0 0.0
  %963 = vmatprep.subr.mxu0 0.0
  %964 = vmatpush2.msra.mxu0 0.0
  %965 = vmatprep.subr.mxu0 0.0
  %966 = vmatpush2.msra.mxu0 0.0
  %967 = vmatprep.subr.mxu0 0.0
  %968 = vmatpush2.msra.mxu0 0.0
  %969 = vmatprep.subr.mxu0 0.0
  %970 = vmatpush2.msra.mxu0 0.0
  %971 = vmatprep.subr.mxu0 0.0
  %972 = vmatpush2.msra.mxu0 0.0
  %973 = vmatprep.subr.mxu0 0.0
  %974 = vmatpush2.msra.mxu0 0.0
  %975 = vmatprep.subr.mxu0 0.0
  %976 = vmatpush2.msra.mxu0 0.0
  %977 = vmatprep.subr.mxu0 0.0
  %978 = vmatpush2.msra.mxu0 0.0
  %979 = vmatprep.subr.mxu0 0.0
  %980 = vmatpush2.msra.mxu0 0.0
  %981 = vmatprep.subr.mxu0 0.0
  %982 = vmatpush2.msra.mxu0 0.0
  %983 = vmatprep.subr.mxu0 0.0
  %984 = vmatpush2.msra.mxu0 0.0
  %985 = vmatprep.subr.mxu0 0.0
  %986 = vmatpush2.msra.mxu0 0.0
  %987 = vmatprep.subr.mxu0 0.0
  %988 = vmatpush2.msra.mxu0 0.0
  %989 = vmatprep.mubr.f32.mxu0 0.0
  %990 = vmatmul.mubr.f32.gmra.mxu0 %v745
  %v991 = vpop.f32.mrf.mxu0
  %v992 = vadd.f32 %v742, %v991
  %v993 = vpop.f32.mrf.mxu0
  %994 = vdwg.mxu0
  %v995 = vmax.f32 %v992, 0.0
  %998 = vrot.lane.b32.xlu0 %v586, 48
  %v999 = vpop.permute.xlu0 %998
  %1000 = vrot.lane.b32.xlu0 %v588, 48
  %v1001 = vpop.permute.xlu0 %1000
  %v1002 = vsel %vm725, %v999, %v1001
  %1004 = vrot.lane.b32.xlu0 %v588, 96
  %v1005 = vpop.permute.xlu0 %1004
  %1008 = vrot.lane.b32.xlu0 %v588, 16
  %v1009 = vpop.permute.xlu0 %1008
  %1010 = vrot.lane.b32.xlu0 %v696, 16
  %v1011 = vpop.permute.xlu0 %1010
  %v1012 = vsel %vm736, %v1009, %v1011
  %1014 = vmatprep.subr.mxu0 0.0
  %1015 = vmatpush1.msra.mxu0 0.0
  %1016 = vmatprep.subr.mxu0 0.0
  %1017 = vmatpush1.msra.mxu0 0.0
  %1018 = vmatprep.subr.mxu0 0.0
  %1019 = vmatpush1.msra.mxu0 0.0
  %1020 = vmatprep.subr.mxu0 0.0
  %1021 = vmatpush1.msra.mxu0 0.0
  %1022 = vmatprep.subr.mxu0 0.0
  %1023 = vmatpush1.msra.mxu0 0.0
  %1024 = vmatprep.subr.mxu0 0.0
  %1025 = vmatpush1.msra.mxu0 0.0
  %1026 = vmatprep.subr.mxu0 0.0
  %1027 = vmatpush1.msra.mxu0 0.0
  %1028 = vmatprep.subr.mxu0 0.0
  %1029 = vmatpush1.msra.mxu0 0.0
  %1030 = vmatprep.subr.mxu0 0.0
  %1031 = vmatpush1.msra.mxu0 0.0
  %1032 = vmatprep.subr.mxu0 0.0
  %1033 = vmatpush1.msra.mxu0 0.0
  %1034 = vmatprep.subr.mxu0 0.0
  %1035 = vmatpush1.msra.mxu0 0.0
  %1036 = vmatprep.subr.mxu0 0.0
  %1037 = vmatpush1.msra.mxu0 0.0
  %1038 = vmatprep.subr.mxu0 0.0
  %1039 = vmatpush1.msra.mxu0 %v1012
  %1040 = vmatprep.subr.mxu0 0.0
  %1041 = vmatpush1.msra.mxu0 %v1005
  %1042 = vmatprep.subr.mxu0 0.0
  %1043 = vmatpush1.msra.mxu0 %v1002
  %1044 = vmatprep.subr.mxu0 0.0
  %1045 = vmatpush1.msra.mxu0 %v586
  %1046 = vmatprep.subr.mxu0 0.0
  %1047 = vmatpush2.msra.mxu0 0.0
  %1048 = vmatprep.subr.mxu0 0.0
  %1049 = vmatpush2.msra.mxu0 0.0
  %1050 = vmatprep.subr.mxu0 0.0
  %1051 = vmatpush2.msra.mxu0 0.0
  %1052 = vmatprep.subr.mxu0 0.0
  %1053 = vmatpush2.msra.mxu0 0.0
  %1054 = vmatprep.subr.mxu0 0.0
  %1055 = vmatpush2.msra.mxu0 0.0
  %1056 = vmatprep.subr.mxu0 0.0
  %1057 = vmatpush2.msra.mxu0 0.0
  %1058 = vmatprep.subr.mxu0 0.0
  %1059 = vmatpush2.msra.mxu0 0.0
  %1060 = vmatprep.subr.mxu0 0.0
  %1061 = vmatpush2.msra.mxu0 0.0
  %1062 = vmatprep.subr.mxu0 0.0
  %1063 = vmatpush2.msra.mxu0 0.0
  %1064 = vmatprep.subr.mxu0 0.0
  %1065 = vmatpush2.msra.mxu0 0.0
  %1066 = vmatprep.subr.mxu0 0.0
  %1067 = vmatpush2.msra.mxu0 0.0
  %1068 = vmatprep.subr.mxu0 0.0
  %1069 = vmatpush2.msra.mxu0 0.0
  %1070 = vmatprep.subr.mxu0 0.0
  %1071 = vmatpush2.msra.mxu0 0.0
  %1072 = vmatprep.subr.mxu0 0.0
  %1073 = vmatpush2.msra.mxu0 0.0
  %1074 = vmatprep.subr.mxu0 0.0
  %1075 = vmatpush2.msra.mxu0 0.0
  %1076 = vmatprep.subr.mxu0 0.0
  %1077 = vmatpush2.msra.mxu0 0.0
  %1078 = vmatprep.mubr.f32.mxu0 0.0
  %1079 = vmatmul.mubr.f32.gmra.mxu0 %v745
  %v1080 = vpop.f32.mrf.mxu0
  %v1081 = vadd.f32 %v742, %v1080
  %v1082 = vpop.f32.mrf.mxu0
  %1083 = vdwg.mxu0
  %v1084 = vmax.f32 %v1081, 0.0
  %1087 = vrot.lane.b32.xlu0 %v592, 48
  %v1088 = vpop.permute.xlu0 %1087
  %1089 = vrot.lane.b32.xlu0 %v594, 48
  %v1090 = vpop.permute.xlu0 %1089
  %v1091 = vsel %vm725, %v1088, %v1090
  %1093 = vrot.lane.b32.xlu0 %v594, 96
  %v1094 = vpop.permute.xlu0 %1093
  %1097 = vrot.lane.b32.xlu0 %v594, 16
  %v1098 = vpop.permute.xlu0 %1097
  %1099 = vrot.lane.b32.xlu0 %v701, 16
  %v1100 = vpop.permute.xlu0 %1099
  %v1101 = vsel %vm736, %v1098, %v1100
  %1103 = vmatprep.subr.mxu0 0.0
  %1104 = vmatpush1.msra.mxu0 0.0
  %1105 = vmatprep.subr.mxu0 0.0
  %1106 = vmatpush1.msra.mxu0 0.0
  %1107 = vmatprep.subr.mxu0 0.0
  %1108 = vmatpush1.msra.mxu0 0.0
  %1109 = vmatprep.subr.mxu0 0.0
  %1110 = vmatpush1.msra.mxu0 0.0
  %1111 = vmatprep.subr.mxu0 0.0
  %1112 = vmatpush1.msra.mxu0 0.0
  %1113 = vmatprep.subr.mxu0 0.0
  %1114 = vmatpush1.msra.mxu0 0.0
  %1115 = vmatprep.subr.mxu0 0.0
  %1116 = vmatpush1.msra.mxu0 0.0
  %1117 = vmatprep.subr.mxu0 0.0
  %1118 = vmatpush1.msra.mxu0 0.0
  %1119 = vmatprep.subr.mxu0 0.0
  %1120 = vmatpush1.msra.mxu0 0.0
  %1121 = vmatprep.subr.mxu0 0.0
  %1122 = vmatpush1.msra.mxu0 0.0
  %1123 = vmatprep.subr.mxu0 0.0
  %1124 = vmatpush1.msra.mxu0 0.0
  %1125 = vmatprep.subr.mxu0 0.0
  %1126 = vmatpush1.msra.mxu0 0.0
  %1127 = vmatprep.subr.mxu0 0.0
  %1128 = vmatpush1.msra.mxu0 %v1101
  %1129 = vmatprep.subr.mxu0 0.0
  %1130 = vmatpush1.msra.mxu0 %v1094
  %1131 = vmatprep.subr.mxu0 0.0
  %1132 = vmatpush1.msra.mxu0 %v1091
  %1133 = vmatprep.subr.mxu0 0.0
  %1134 = vmatpush1.msra.mxu0 %v592
  %1135 = vmatprep.subr.mxu0 0.0
  %1136 = vmatpush2.msra.mxu0 0.0
  %1137 = vmatprep.subr.mxu0 0.0
  %1138 = vmatpush2.msra.mxu0 0.0
  %1139 = vmatprep.subr.mxu0 0.0
  %1140 = vmatpush2.msra.mxu0 0.0
  %1141 = vmatprep.subr.mxu0 0.0
  %1142 = vmatpush2.msra.mxu0 0.0
  %1143 = vmatprep.subr.mxu0 0.0
  %1144 = vmatpush2.msra.mxu0 0.0
  %1145 = vmatprep.subr.mxu0 0.0
  %1146 = vmatpush2.msra.mxu0 0.0
  %1147 = vmatprep.subr.mxu0 0.0
  %1148 = vmatpush2.msra.mxu0 0.0
  %1149 = vmatprep.subr.mxu0 0.0
  %1150 = vmatpush2.msra.mxu0 0.0
  %1151 = vmatprep.subr.mxu0 0.0
  %1152 = vmatpush2.msra.mxu0 0.0
  %1153 = vmatprep.subr.mxu0 0.0
  %1154 = vmatpush2.msra.mxu0 0.0
  %1155 = vmatprep.subr.mxu0 0.0
  %1156 = vmatpush2.msra.mxu0 0.0
  %1157 = vmatprep.subr.mxu0 0.0
  %1158 = vmatpush2.msra.mxu0 0.0
  %1159 = vmatprep.subr.mxu0 0.0
  %1160 = vmatpush2.msra.mxu0 0.0
  %1161 = vmatprep.subr.mxu0 0.0
  %1162 = vmatpush2.msra.mxu0 0.0
  %1163 = vmatprep.subr.mxu0 0.0
  %1164 = vmatpush2.msra.mxu0 0.0
  %1165 = vmatprep.subr.mxu0 0.0
  %1166 = vmatpush2.msra.mxu0 0.0
  %1167 = vmatprep.mubr.f32.mxu0 0.0
  %1168 = vmatmul.mubr.f32.gmra.mxu0 %v745
  %v1169 = vpop.f32.mrf.mxu0
  %v1170 = vadd.f32 %v742, %v1169
  %v1171 = vpop.f32.mrf.mxu0
  %1172 = vdwg.mxu0
  %v1173 = vmax.f32 %v1170, 0.0
  %1176 = vrot.lane.b32.xlu0 %v598, 48
  %v1177 = vpop.permute.xlu0 %1176
  %1178 = vrot.lane.b32.xlu0 %v600, 48
  %v1179 = vpop.permute.xlu0 %1178
  %v1180 = vsel %vm725, %v1177, %v1179
  %1182 = vrot.lane.b32.xlu0 %v600, 96
  %v1183 = vpop.permute.xlu0 %1182
  %1186 = vrot.lane.b32.xlu0 %v600, 16
  %v1187 = vpop.permute.xlu0 %1186
  %1188 = vrot.lane.b32.xlu0 %v706, 16
  %v1189 = vpop.permute.xlu0 %1188
  %v1190 = vsel %vm736, %v1187, %v1189
  %1192 = vmatprep.subr.mxu0 0.0
  %1193 = vmatpush1.msra.mxu0 0.0
  %1194 = vmatprep.subr.mxu0 0.0
  %1195 = vmatpush1.msra.mxu0 0.0
  %1196 = vmatprep.subr.mxu0 0.0
  %1197 = vmatpush1.msra.mxu0 0.0
  %1198 = vmatprep.subr.mxu0 0.0
  %1199 = vmatpush1.msra.mxu0 0.0
  %1200 = vmatprep.subr.mxu0 0.0
  %1201 = vmatpush1.msra.mxu0 0.0
  %1202 = vmatprep.subr.mxu0 0.0
  %1203 = vmatpush1.msra.mxu0 0.0
  %1204 = vmatprep.subr.mxu0 0.0
  %1205 = vmatpush1.msra.mxu0 0.0
  %1206 = vmatprep.subr.mxu0 0.0
  %1207 = vmatpush1.msra.mxu0 0.0
  %1208 = vmatprep.subr.mxu0 0.0
  %1209 = vmatpush1.msra.mxu0 0.0
  %1210 = vmatprep.subr.mxu0 0.0
  %1211 = vmatpush1.msra.mxu0 0.0
  %1212 = vmatprep.subr.mxu0 0.0
  %1213 = vmatpush1.msra.mxu0 0.0
  %1214 = vmatprep.subr.mxu0 0.0
  %1215 = vmatpush1.msra.mxu0 0.0
  %1216 = vmatprep.subr.mxu0 0.0
  %1217 = vmatpush1.msra.mxu0 %v1190
  %1218 = vmatprep.subr.mxu0 0.0
  %1219 = vmatpush1.msra.mxu0 %v1183
  %1220 = vmatprep.subr.mxu0 0.0
  %1221 = vmatpush1.msra.mxu0 %v1180
  %1222 = vmatprep.subr.mxu0 0.0
  %1223 = vmatpush1.msra.mxu0 %v598
  %1224 = vmatprep.subr.mxu0 0.0
  %1225 = vmatpush2.msra.mxu0 0.0
  %1226 = vmatprep.subr.mxu0 0.0
  %1227 = vmatpush2.msra.mxu0 0.0
  %1228 = vmatprep.subr.mxu0 0.0
  %1229 = vmatpush2.msra.mxu0 0.0
  %1230 = vmatprep.subr.mxu0 0.0
  %1231 = vmatpush2.msra.mxu0 0.0
  %1232 = vmatprep.subr.mxu0 0.0
  %1233 = vmatpush2.msra.mxu0 0.0
  %1234 = vmatprep.subr.mxu0 0.0
  %1235 = vmatpush2.msra.mxu0 0.0
  %1236 = vmatprep.subr.mxu0 0.0
  %1237 = vmatpush2.msra.mxu0 0.0
  %1238 = vmatprep.subr.mxu0 0.0
  %1239 = vmatpush2.msra.mxu0 0.0
  %1240 = vmatprep.subr.mxu0 0.0
  %1241 = vmatpush2.msra.mxu0 0.0
  %1242 = vmatprep.subr.mxu0 0.0
  %1243 = vmatpush2.msra.mxu0 0.0
  %1244 = vmatprep.subr.mxu0 0.0
  %1245 = vmatpush2.msra.mxu0 0.0
  %1246 = vmatprep.subr.mxu0 0.0
  %1247 = vmatpush2.msra.mxu0 0.0
  %1248 = vmatprep.subr.mxu0 0.0
  %1249 = vmatpush2.msra.mxu0 0.0
  %1250 = vmatprep.subr.mxu0 0.0
  %1251 = vmatpush2.msra.mxu0 0.0
  %1252 = vmatprep.subr.mxu0 0.0
  %1253 = vmatpush2.msra.mxu0 0.0
  %1254 = vmatprep.subr.mxu0 0.0
  %1255 = vmatpush2.msra.mxu0 0.0
  %1256 = vmatprep.mubr.f32.mxu0 0.0
  %1257 = vmatmul.mubr.f32.gmra.mxu0 %v745
  %v1258 = vpop.f32.mrf.mxu0
  %v1259 = vadd.f32 %v742, %v1258
  %v1260 = vpop.f32.mrf.mxu0
  %1261 = vdwg.mxu0
  %v1262 = vmax.f32 %v1259, 0.0
  %1265 = vrot.lane.b32.xlu0 %v604, 48
  %v1266 = vpop.permute.xlu0 %1265
  %1267 = vrot.lane.b32.xlu0 %v606, 48
  %v1268 = vpop.permute.xlu0 %1267
  %v1269 = vsel %vm725, %v1266, %v1268
  %1271 = vrot.lane.b32.xlu0 %v606, 96
  %v1272 = vpop.permute.xlu0 %1271
  %1275 = vrot.lane.b32.xlu0 %v606, 16
  %v1276 = vpop.permute.xlu0 %1275
  %1277 = vrot.lane.b32.xlu0 %v711, 16
  %v1278 = vpop.permute.xlu0 %1277
  %v1279 = vsel %vm736, %v1276, %v1278
  %1281 = vmatprep.subr.mxu0 0.0
  %1282 = vmatpush1.msra.mxu0 0.0
  %1283 = vmatprep.subr.mxu0 0.0
  %1284 = vmatpush1.msra.mxu0 0.0
  %1285 = vmatprep.subr.mxu0 0.0
  %1286 = vmatpush1.msra.mxu0 0.0
  %1287 = vmatprep.subr.mxu0 0.0
  %1288 = vmatpush1.msra.mxu0 0.0
  %1289 = vmatprep.subr.mxu0 0.0
  %1290 = vmatpush1.msra.mxu0 0.0
  %1291 = vmatprep.subr.mxu0 0.0
  %1292 = vmatpush1.msra.mxu0 0.0
  %1293 = vmatprep.subr.mxu0 0.0
  %1294 = vmatpush1.msra.mxu0 0.0
  %1295 = vmatprep.subr.mxu0 0.0
  %1296 = vmatpush1.msra.mxu0 0.0
  %1297 = vmatprep.subr.mxu0 0.0
  %1298 = vmatpush1.msra.mxu0 0.0
  %1299 = vmatprep.subr.mxu0 0.0
  %1300 = vmatpush1.msra.mxu0 0.0
  %1301 = vmatprep.subr.mxu0 0.0
  %1302 = vmatpush1.msra.mxu0 0.0
  %1303 = vmatprep.subr.mxu0 0.0
  %1304 = vmatpush1.msra.mxu0 0.0
  %1305 = vmatprep.subr.mxu0 0.0
  %1306 = vmatpush1.msra.mxu0 %v1279
  %1307 = vmatprep.subr.mxu0 0.0
  %1308 = vmatpush1.msra.mxu0 %v1272
  %1309 = vmatprep.subr.mxu0 0.0
  %1310 = vmatpush1.msra.mxu0 %v1269
  %1311 = vmatprep.subr.mxu0 0.0
  %1312 = vmatpush1.msra.mxu0 %v604
  %1313 = vmatprep.subr.mxu0 0.0
  %1314 = vmatpush2.msra.mxu0 0.0
  %1315 = vmatprep.subr.mxu0 0.0
  %1316 = vmatpush2.msra.mxu0 0.0
  %1317 = vmatprep.subr.mxu0 0.0
  %1318 = vmatpush2.msra.mxu0 0.0
  %1319 = vmatprep.subr.mxu0 0.0
  %1320 = vmatpush2.msra.mxu0 0.0
  %1321 = vmatprep.subr.mxu0 0.0
  %1322 = vmatpush2.msra.mxu0 0.0
  %1323 = vmatprep.subr.mxu0 0.0
  %1324 = vmatpush2.msra.mxu0 0.0
  %1325 = vmatprep.subr.mxu0 0.0
  %1326 = vmatpush2.msra.mxu0 0.0
  %1327 = vmatprep.subr.mxu0 0.0
  %1328 = vmatpush2.msra.mxu0 0.0
  %1329 = vmatprep.subr.mxu0 0.0
  %1330 = vmatpush2.msra.mxu0 0.0
  %1331 = vmatprep.subr.mxu0 0.0
  %1332 = vmatpush2.msra.mxu0 0.0
  %1333 = vmatprep.subr.mxu0 0.0
  %1334 = vmatpush2.msra.mxu0 0.0
  %1335 = vmatprep.subr.mxu0 0.0
  %1336 = vmatpush2.msra.mxu0 0.0
  %1337 = vmatprep.subr.mxu0 0.0
  %1338 = vmatpush2.msra.mxu0 0.0
  %1339 = vmatprep.subr.mxu0 0.0
  %1340 = vmatpush2.msra.mxu0 0.0
  %1341 = vmatprep.subr.mxu0 0.0
  %1342 = vmatpush2.msra.mxu0 0.0
  %1343 = vmatprep.subr.mxu0 0.0
  %1344 = vmatpush2.msra.mxu0 0.0
  %1345 = vmatprep.mubr.f32.mxu0 0.0
  %1346 = vmatmul.mubr.f32.gmra.mxu0 %v745
  %v1347 = vpop.f32.mrf.mxu0
  %v1348 = vadd.f32 %v742, %v1347
  %v1349 = vpop.f32.mrf.mxu0
  %1350 = vdwg.mxu0
  %v1351 = vmax.f32 %v1348, 0.0
  %1354 = vrot.lane.b32.xlu0 %v610, 48
  %v1355 = vpop.permute.xlu0 %1354
  %1356 = vrot.lane.b32.xlu0 %v612, 48
  %v1357 = vpop.permute.xlu0 %1356
  %v1358 = vsel %vm725, %v1355, %v1357
  %1360 = vrot.lane.b32.xlu0 %v612, 96
  %v1361 = vpop.permute.xlu0 %1360
  %1364 = vrot.lane.b32.xlu0 %v612, 16
  %v1365 = vpop.permute.xlu0 %1364
  %1366 = vrot.lane.b32.xlu0 %v716, 16
  %v1367 = vpop.permute.xlu0 %1366
  %v1368 = vsel %vm736, %v1365, %v1367
  %1370 = vmatprep.subr.mxu0 0.0
  %1371 = vmatpush1.msra.mxu0 0.0
  %1372 = vmatprep.subr.mxu0 0.0
  %1373 = vmatpush1.msra.mxu0 0.0
  %1374 = vmatprep.subr.mxu0 0.0
  %1375 = vmatpush1.msra.mxu0 0.0
  %1376 = vmatprep.subr.mxu0 0.0
  %1377 = vmatpush1.msra.mxu0 0.0
  %1378 = vmatprep.subr.mxu0 0.0
  %1379 = vmatpush1.msra.mxu0 0.0
  %1380 = vmatprep.subr.mxu0 0.0
  %1381 = vmatpush1.msra.mxu0 0.0
  %1382 = vmatprep.subr.mxu0 0.0
  %1383 = vmatpush1.msra.mxu0 0.0
  %1384 = vmatprep.subr.mxu0 0.0
  %1385 = vmatpush1.msra.mxu0 0.0
  %1386 = vmatprep.subr.mxu0 0.0
  %1387 = vmatpush1.msra.mxu0 0.0
  %1388 = vmatprep.subr.mxu0 0.0
  %1389 = vmatpush1.msra.mxu0 0.0
  %1390 = vmatprep.subr.mxu0 0.0
  %1391 = vmatpush1.msra.mxu0 0.0
  %1392 = vmatprep.subr.mxu0 0.0
  %1393 = vmatpush1.msra.mxu0 0.0
  %1394 = vmatprep.subr.mxu0 0.0
  %1395 = vmatpush1.msra.mxu0 %v1368
  %1396 = vmatprep.subr.mxu0 0.0
  %1397 = vmatpush1.msra.mxu0 %v1361
  %1398 = vmatprep.subr.mxu0 0.0
  %1399 = vmatpush1.msra.mxu0 %v1358
  %1400 = vmatprep.subr.mxu0 0.0
  %1401 = vmatpush1.msra.mxu0 %v610
  %1402 = vmatprep.subr.mxu0 0.0
  %1403 = vmatpush2.msra.mxu0 0.0
  %1404 = vmatprep.subr.mxu0 0.0
  %1405 = vmatpush2.msra.mxu0 0.0
  %1406 = vmatprep.subr.mxu0 0.0
  %1407 = vmatpush2.msra.mxu0 0.0
  %1408 = vmatprep.subr.mxu0 0.0
  %1409 = vmatpush2.msra.mxu0 0.0
  %1410 = vmatprep.subr.mxu0 0.0
  %1411 = vmatpush2.msra.mxu0 0.0
  %1412 = vmatprep.subr.mxu0 0.0
  %1413 = vmatpush2.msra.mxu0 0.0
  %1414 = vmatprep.subr.mxu0 0.0
  %1415 = vmatpush2.msra.mxu0 0.0
  %1416 = vmatprep.subr.mxu0 0.0
  %1417 = vmatpush2.msra.mxu0 0.0
  %1418 = vmatprep.subr.mxu0 0.0
  %1419 = vmatpush2.msra.mxu0 0.0
  %1420 = vmatprep.subr.mxu0 0.0
  %1421 = vmatpush2.msra.mxu0 0.0
  %1422 = vmatprep.subr.mxu0 0.0
  %1423 = vmatpush2.msra.mxu0 0.0
  %1424 = vmatprep.subr.mxu0 0.0
  %1425 = vmatpush2.msra.mxu0 0.0
  %1426 = vmatprep.subr.mxu0 0.0
  %1427 = vmatpush2.msra.mxu0 0.0
  %1428 = vmatprep.subr.mxu0 0.0
  %1429 = vmatpush2.msra.mxu0 0.0
  %1430 = vmatprep.subr.mxu0 0.0
  %1431 = vmatpush2.msra.mxu0 0.0
  %1432 = vmatprep.subr.mxu0 0.0
  %1433 = vmatpush2.msra.mxu0 0.0
  %1434 = vmatprep.mubr.f32.mxu0 0.0
  %1435 = vmatmul.mubr.f32.gmra.mxu0 %v745
  %v1436 = vpop.f32.mrf.mxu0
  %v1437 = vadd.f32 %v742, %v1436
  %v1438 = vpop.f32.mrf.mxu0
  %1439 = vdwg.mxu0
  %v1440 = vmax.f32 %v1437, 0.0
  %vm1441 = vcmask 654336
  %v1443 = vsel %vm1441, %v817, 0
  %v1446 = vsel %vm1441, %v906, 0
  %v1449 = vsel %vm1441, %v995, 0
  %v1452 = vsel %vm1441, %v1084, 0
  %v1455 = vsel %vm1441, %v1173, 0
  %v1458 = vsel %vm1441, %v1262, 0
  %v1461 = vsel %vm1441, %v1351, 0
  %v1464 = vsel %vm1441, %v1440, 0
  %1466 = vmatprep.subr.mxu0 0.0
  %1467 = vmatpush1.msra.mxu0 0.0
  %1468 = vmatprep.subr.mxu0 0.0
  %1469 = vmatpush1.msra.mxu0 0.0
  %1470 = vmatprep.subr.mxu0 0.0
  %1471 = vmatpush1.msra.mxu0 0.0
  %1472 = vmatprep.subr.mxu0 0.0
  %1473 = vmatpush1.msra.mxu0 0.0
  %1474 = vmatprep.subr.mxu0 0.0
  %1475 = vmatpush1.msra.mxu0 0.0
  %1476 = vmatprep.subr.mxu0 0.0
  %1477 = vmatpush1.msra.mxu0 0.0
  %1478 = vmatprep.subr.mxu0 %v162
  %1479 = vmatpush1.msra.mxu0 %v161
  %1480 = vmatprep.subr.mxu0 %v160
  %1481 = vmatpush1.msra.mxu0 %v159
  %1482 = vmatprep.subr.mxu0 %v158
  %1483 = vmatpush1.msra.mxu0 %v157
  %1484 = vmatprep.subr.mxu0 %v156
  %1485 = vmatpush1.msra.mxu0 %v155
  %1486 = vmatprep.subr.mxu0 %v154
  %1487 = vmatpush1.msra.mxu0 %v153
  %1488 = vmatprep.subr.mxu0 %v152
  %1489 = vmatpush1.msra.mxu0 %v151
  %1490 = vmatprep.subr.mxu0 %v150
  %1491 = vmatpush1.msra.mxu0 %v149
  %1492 = vmatprep.subr.mxu0 %v148
  %1493 = vmatpush1.msra.mxu0 %v147
  %1494 = vmatprep.subr.mxu0 %v146
  %1495 = vmatpush1.msra.mxu0 %v145
  %1496 = vmatprep.subr.mxu0 %v144
  %1497 = vmatpush1.msra.mxu0 %v143
  %1498 = vmatprep.subr.mxu0 0.0
  %1499 = vmatpush2.msra.mxu0 0.0
  %1500 = vmatprep.subr.mxu0 0.0
  %1501 = vmatpush2.msra.mxu0 0.0
  %1502 = vmatprep.subr.mxu0 0.0
  %1503 = vmatpush2.msra.mxu0 0.0
  %1504 = vmatprep.subr.mxu0 0.0
  %1505 = vmatpush2.msra.mxu0 0.0
  %1506 = vmatprep.subr.mxu0 0.0
  %1507 = vmatpush2.msra.mxu0 0.0
  %1508 = vmatprep.subr.mxu0 0.0
  %1509 = vmatpush2.msra.mxu0 0.0
  %1510 = vmatprep.subr.mxu0 0.0
  %1511 = vmatpush2.msra.mxu0 0.0
  %1512 = vmatprep.subr.mxu0 0.0
  %1513 = vmatpush2.msra.mxu0 0.0
  %1514 = vmatprep.subr.mxu0 0.0
  %1515 = vmatpush2.msra.mxu0 0.0
  %1516 = vmatprep.subr.mxu0 0.0
  %1517 = vmatpush2.msra.mxu0 0.0
  %1518 = vmatprep.subr.mxu0 0.0
  %1519 = vmatpush2.msra.mxu0 0.0
  %1520 = vmatprep.subr.mxu0 0.0
  %1521 = vmatpush2.msra.mxu0 0.0
  %1522 = vmatprep.subr.mxu0 0.0
  %1523 = vmatpush2.msra.mxu0 0.0
  %1524 = vmatprep.subr.mxu0 0.0
  %1525 = vmatpush2.msra.mxu0 0.0
  %1526 = vmatprep.subr.mxu0 0.0
  %1527 = vmatpush2.msra.mxu0 0.0
  %1528 = vmatprep.subr.mxu0 0.0
  %1529 = vmatpush2.msra.mxu0 0.0
  %1530 = vmatprep.mubr.f32.mxu0 0.0
  %1531 = vmatmul.mubr.f32.gmra.mxu0 %v1443
  %v1532 = vpop.f32.mrf.mxu0
  %v1533 = vadd.f32 0.0, %v1532
  %v1534 = vpop.f32.mrf.mxu0
  %v1535 = vadd.f32 0.0, %v1534
  %1536 = vmatprep.mubr.f32.mxu0 0.0
  %1537 = vmatmul.mubr.f32.gmra.mxu0 %v1446
  %v1538 = vpop.f32.mrf.mxu0
  %v1539 = vadd.f32 0.0, %v1538
  %v1540 = vpop.f32.mrf.mxu0
  %v1541 = vadd.f32 0.0, %v1540
  %1542 = vmatprep.mubr.f32.mxu0 0.0
  %1543 = vmatmul.mubr.f32.gmra.mxu0 %v1449
  %v1544 = vpop.f32.mrf.mxu0
  %v1545 = vadd.f32 0.0, %v1544
  %v1546 = vpop.f32.mrf.mxu0
  %v1547 = vadd.f32 0.0, %v1546
  %1548 = vmatprep.mubr.f32.mxu0 0.0
  %1549 = vmatmul.mubr.f32.gmra.mxu0 %v1452
  %v1550 = vpop.f32.mrf.mxu0
  %v1551 = vadd.f32 0.0, %v1550
  %v1552 = vpop.f32.mrf.mxu0
  %v1553 = vadd.f32 0.0, %v1552
  %1554 = vmatprep.mubr.f32.mxu0 0.0
  %1555 = vmatmul.mubr.f32.gmra.mxu0 %v1455
  %v1556 = vpop.f32.mrf.mxu0
  %v1557 = vadd.f32 0.0, %v1556
  %v1558 = vpop.f32.mrf.mxu0
  %v1559 = vadd.f32 0.0, %v1558
  %1560 = vmatprep.mubr.f32.mxu0 0.0
  %1561 = vmatmul.mubr.f32.gmra.mxu0 %v1458
  %v1562 = vpop.f32.mrf.mxu0
  %v1563 = vadd.f32 0.0, %v1562
  %v1564 = vpop.f32.mrf.mxu0
  %v1565 = vadd.f32 0.0, %v1564
  %1566 = vmatprep.mubr.f32.mxu0 0.0
  %1567 = vmatmul.mubr.f32.gmra.mxu0 %v1461
  %v1568 = vpop.f32.mrf.mxu0
  %v1569 = vadd.f32 0.0, %v1568
  %v1570 = vpop.f32.mrf.mxu0
  %v1571 = vadd.f32 0.0, %v1570
  %1572 = vmatprep.mubr.f32.mxu0 0.0
  %1573 = vmatmul.mubr.f32.gmra.mxu0 %v1464
  %v1574 = vpop.f32.mrf.mxu0
  %v1575 = vadd.f32 0.0, %v1574
  %v1576 = vpop.f32.mrf.mxu0
  %v1577 = vadd.f32 0.0, %v1576
  %1578 = vdwg.mxu0
  %vm1579 = vcmask 523264
  %v1581 = vsel %vm1579, %v179, 0
  %v1584 = vsel %vm1579, %v180, 0
  %v1587 = vsel %vm1579, %v181, 0
  %v1590 = vsel %vm1579, %v182, 0
  %v1593 = vsel %vm1579, %v183, 0
  %v1596 = vsel %vm1579, %v184, 0
  %v1599 = vsel %vm1579, %v185, 0
  %v1602 = vsel %vm1579, %v186, 0
  %v1605 = vsel %vm1579, %v187, 0
  %v1608 = vsel %vm1579, %v188, 0
  %v1611 = vsel %vm1579, %v189, 0
  %v1614 = vsel %vm1579, %v190, 0
  %v1617 = vsel %vm1579, %v191, 0
  %v1620 = vsel %vm1579, %v192, 0
  %v1623 = vsel %vm1579, %v193, 0
  %v1626 = vsel %vm1579, %v194, 0
  %1628 = vmatprep.subr.mxu0 0.0
  %1629 = vmatpush1.msra.mxu0 0.0
  %1630 = vmatprep.subr.mxu0 0.0
  %1631 = vmatpush1.msra.mxu0 0.0
  %1632 = vmatprep.subr.mxu0 0.0
  %1633 = vmatpush1.msra.mxu0 0.0
  %1634 = vmatprep.subr.mxu0 0.0
  %1635 = vmatpush1.msra.mxu0 0.0
  %1636 = vmatprep.subr.mxu0 0.0
  %1637 = vmatpush1.msra.mxu0 0.0
  %1638 = vmatprep.subr.mxu0 0.0
  %1639 = vmatpush1.msra.mxu0 0.0
  %1640 = vmatprep.subr.mxu0 0.0
  %1641 = vmatpush1.msra.mxu0 0.0
  %1642 = vmatprep.subr.mxu0 0.0
  %1643 = vmatpush1.msra.mxu0 0.0
  %1644 = vmatprep.subr.mxu0 %v1577
  %1645 = vmatpush1.msra.mxu0 %v1575
  %1646 = vmatprep.subr.mxu0 %v1571
  %1647 = vmatpush1.msra.mxu0 %v1569
  %1648 = vmatprep.subr.mxu0 %v1565
  %1649 = vmatpush1.msra.mxu0 %v1563
  %1650 = vmatprep.subr.mxu0 %v1559
  %1651 = vmatpush1.msra.mxu0 %v1557
  %1652 = vmatprep.subr.mxu0 %v1553
  %1653 = vmatpush1.msra.mxu0 %v1551
  %1654 = vmatprep.subr.mxu0 %v1547
  %1655 = vmatpush1.msra.mxu0 %v1545
  %1656 = vmatprep.subr.mxu0 %v1541
  %1657 = vmatpush1.msra.mxu0 %v1539
  %1658 = vmatprep.subr.mxu0 %v1535
  %1659 = vmatpush1.msra.mxu0 %v1533
  %1660 = vmatprep.subr.mxu0 0.0
  %1661 = vmatpush2.msra.mxu0 0.0
  %1662 = vmatprep.subr.mxu0 0.0
  %1663 = vmatpush2.msra.mxu0 0.0
  %1664 = vmatprep.subr.mxu0 0.0
  %1665 = vmatpush2.msra.mxu0 0.0
  %1666 = vmatprep.subr.mxu0 0.0
  %1667 = vmatpush2.msra.mxu0 0.0
  %1668 = vmatprep.subr.mxu0 0.0
  %1669 = vmatpush2.msra.mxu0 0.0
  %1670 = vmatprep.subr.mxu0 0.0
  %1671 = vmatpush2.msra.mxu0 0.0
  %1672 = vmatprep.subr.mxu0 0.0
  %1673 = vmatpush2.msra.mxu0 0.0
  %1674 = vmatprep.subr.mxu0 0.0
  %1675 = vmatpush2.msra.mxu0 0.0
  %1676 = vmatprep.subr.mxu0 0.0
  %1677 = vmatpush2.msra.mxu0 0.0
  %1678 = vmatprep.subr.mxu0 0.0
  %1679 = vmatpush2.msra.mxu0 0.0
  %1680 = vmatprep.subr.mxu0 0.0
  %1681 = vmatpush2.msra.mxu0 0.0
  %1682 = vmatprep.subr.mxu0 0.0
  %1683 = vmatpush2.msra.mxu0 0.0
  %1684 = vmatprep.subr.mxu0 0.0
  %1685 = vmatpush2.msra.mxu0 0.0
  %1686 = vmatprep.subr.mxu0 0.0
  %1687 = vmatpush2.msra.mxu0 0.0
  %1688 = vmatprep.subr.mxu0 0.0
  %1689 = vmatpush2.msra.mxu0 0.0
  %1690 = vmatprep.subr.mxu0 0.0
  %1691 = vmatpush2.msra.mxu0 0.0
  %1692 = vmatprep.mubr.f32.mxu0 0.0
  %1693 = vmatmul.mubr.f32.gmra.mxu0 %v1581
  %v1694 = vpop.f32.mrf.mxu0
  %v1695 = vadd.f32 0.0, %v1694
  %v1696 = vpop.f32.mrf.mxu0
  %v1697 = vadd.f32 0.0, %v1696
  %1698 = vmatprep.mubr.f32.mxu0 0.0
  %1699 = vmatmul.mubr.f32.gmra.mxu0 %v1584
  %v1700 = vpop.f32.mrf.mxu0
  %v1701 = vadd.f32 0.0, %v1700
  %v1702 = vpop.f32.mrf.mxu0
  %v1703 = vadd.f32 0.0, %v1702
  %1704 = vmatprep.mubr.f32.mxu0 0.0
  %1705 = vmatmul.mubr.f32.gmra.mxu0 %v1587
  %v1706 = vpop.f32.mrf.mxu0
  %v1707 = vadd.f32 0.0, %v1706
  %v1708 = vpop.f32.mrf.mxu0
  %v1709 = vadd.f32 0.0, %v1708
  %1710 = vmatprep.mubr.f32.mxu0 0.0
  %1711 = vmatmul.mubr.f32.gmra.mxu0 %v1590
  %v1712 = vpop.f32.mrf.mxu0
  %v1713 = vadd.f32 0.0, %v1712
  %v1714 = vpop.f32.mrf.mxu0
  %v1715 = vadd.f32 0.0, %v1714
  %1716 = vmatprep.mubr.f32.mxu0 0.0
  %1717 = vmatmul.mubr.f32.gmra.mxu0 %v1593
  %v1718 = vpop.f32.mrf.mxu0
  %v1719 = vadd.f32 0.0, %v1718
  %v1720 = vpop.f32.mrf.mxu0
  %v1721 = vadd.f32 0.0, %v1720
  %1722 = vmatprep.mubr.f32.mxu0 0.0
  %1723 = vmatmul.mubr.f32.gmra.mxu0 %v1596
  %v1724 = vpop.f32.mrf.mxu0
  %v1725 = vadd.f32 0.0, %v1724
  %v1726 = vpop.f32.mrf.mxu0
  %v1727 = vadd.f32 0.0, %v1726
  %1728 = vmatprep.mubr.f32.mxu0 0.0
  %1729 = vmatmul.mubr.f32.gmra.mxu0 %v1599
  %v1730 = vpop.f32.mrf.mxu0
  %v1731 = vadd.f32 0.0, %v1730
  %v1732 = vpop.f32.mrf.mxu0
  %v1733 = vadd.f32 0.0, %v1732
  %1734 = vmatprep.mubr.f32.mxu0 0.0
  %1735 = vmatmul.mubr.f32.gmra.mxu0 %v1602
  %v1736 = vpop.f32.mrf.mxu0
  %v1737 = vadd.f32 0.0, %v1736
  %v1738 = vpop.f32.mrf.mxu0
  %v1739 = vadd.f32 0.0, %v1738
  %1740 = vmatprep.mubr.f32.mxu0 0.0
  %1741 = vmatmul.mubr.f32.gmra.mxu0 %v1605
  %v1742 = vpop.f32.mrf.mxu0
  %v1743 = vadd.f32 0.0, %v1742
  %v1744 = vpop.f32.mrf.mxu0
  %v1745 = vadd.f32 0.0, %v1744
  %1746 = vmatprep.mubr.f32.mxu0 0.0
  %1747 = vmatmul.mubr.f32.gmra.mxu0 %v1608
  %v1748 = vpop.f32.mrf.mxu0
  %v1749 = vadd.f32 0.0, %v1748
  %v1750 = vpop.f32.mrf.mxu0
  %v1751 = vadd.f32 0.0, %v1750
  %1752 = vmatprep.mubr.f32.mxu0 0.0
  %1753 = vmatmul.mubr.f32.gmra.mxu0 %v1611
  %v1754 = vpop.f32.mrf.mxu0
  %v1755 = vadd.f32 0.0, %v1754
  %v1756 = vpop.f32.mrf.mxu0
  %v1757 = vadd.f32 0.0, %v1756
  %1758 = vmatprep.mubr.f32.mxu0 0.0
  %1759 = vmatmul.mubr.f32.gmra.mxu0 %v1614
  %v1760 = vpop.f32.mrf.mxu0
  %v1761 = vadd.f32 0.0, %v1760
  %v1762 = vpop.f32.mrf.mxu0
  %v1763 = vadd.f32 0.0, %v1762
  %1764 = vmatprep.mubr.f32.mxu0 0.0
  %1765 = vmatmul.mubr.f32.gmra.mxu0 %v1617
  %v1766 = vpop.f32.mrf.mxu0
  %v1767 = vadd.f32 0.0, %v1766
  %v1768 = vpop.f32.mrf.mxu0
  %v1769 = vadd.f32 0.0, %v1768
  %1770 = vmatprep.mubr.f32.mxu0 0.0
  %1771 = vmatmul.mubr.f32.gmra.mxu0 %v1620
  %v1772 = vpop.f32.mrf.mxu0
  %v1773 = vadd.f32 0.0, %v1772
  %v1774 = vpop.f32.mrf.mxu0
  %v1775 = vadd.f32 0.0, %v1774
  %1776 = vmatprep.mubr.f32.mxu0 0.0
  %1777 = vmatmul.mubr.f32.gmra.mxu0 %v1623
  %v1778 = vpop.f32.mrf.mxu0
  %v1779 = vadd.f32 0.0, %v1778
  %v1780 = vpop.f32.mrf.mxu0
  %v1781 = vadd.f32 0.0, %v1780
  %1782 = vmatprep.mubr.f32.mxu0 0.0
  %1783 = vmatmul.mubr.f32.gmra.mxu0 %v1626
  %v1784 = vpop.f32.mrf.mxu0
  %v1785 = vadd.f32 0.0, %v1784
  %v1786 = vpop.f32.mrf.mxu0
  %v1787 = vadd.f32 0.0, %v1786
  %1788 = vdwg.mxu0
  %1793 = vrot.lane.b32.xlu0 %v1695, 88
  %v1794 = vpop.permute.xlu0 %1793
  %1795 = vrot.lane.b32.xlu0 %v1701, 88
  %v1796 = vpop.permute.xlu0 %1795
  %1797 = vrot.lane.b32.xlu0 %v1707, 88
  %v1798 = vpop.permute.xlu0 %1797
  %1799 = vrot.lane.b32.xlu0 %v1713, 88
  %v1800 = vpop.permute.xlu0 %1799
  %1805 = vrot.lane.b32.xlu0 %v1695, 48
  %v1806 = vpop.permute.xlu0 %1805
  %1807 = vrot.lane.b32.xlu0 %v1701, 48
  %v1808 = vpop.permute.xlu0 %1807
  %1809 = vrot.lane.b32.xlu0 %v1707, 48
  %v1810 = vpop.permute.xlu0 %1809
  %1811 = vrot.lane.b32.xlu0 %v1713, 48
  %v1812 = vpop.permute.xlu0 %1811
  %1821 = vrot.lane.b32.xlu0 %v1695, 8
  %v1822 = vpop.permute.xlu0 %1821
  %1823 = vrot.lane.b32.xlu0 %v1697, 8
  %v1824 = vpop.permute.xlu0 %1823
  %1825 = vrot.lane.b32.xlu0 %v1701, 8
  %v1826 = vpop.permute.xlu0 %1825
  %1827 = vrot.lane.b32.xlu0 %v1703, 8
  %v1828 = vpop.permute.xlu0 %1827
  %1829 = vrot.lane.b32.xlu0 %v1707, 8
  %v1830 = vpop.permute.xlu0 %1829
  %1831 = vrot.lane.b32.xlu0 %v1709, 8
  %v1832 = vpop.permute.xlu0 %1831
  %1833 = vrot.lane.b32.xlu0 %v1713, 8
  %v1834 = vpop.permute.xlu0 %1833
  %1835 = vrot.lane.b32.xlu0 %v1715, 8
  %v1836 = vpop.permute.xlu0 %1835
  %vm1837 = vcmask 64512
  %v1838 = vsel %vm1837, %v1822, %v1824
  %v1839 = vsel %vm1837, %v1826, %v1828
  %v1840 = vsel %vm1837, %v1830, %v1832
  %v1841 = vsel %vm1837, %v1834, %v1836
  %1847 = vset.pattern.permute.xlu0 0
  %1848 = vperm.xlu0 %1847, %v235
  %v1849 = vpop.permute.xlu0 %1848
  %1852 = vset.pattern.permute.xlu0 0
  %1853 = vperm.xlu0 %1852, %v236
  %v1854 = vpop.permute.xlu0 %1853
  %1856 = vmatprep.subr.mxu0 0.0
  %1857 = vmatpush1.msra.mxu0 %v1841
  %1858 = vmatprep.subr.mxu0 0.0
  %1859 = vmatpush1.msra.mxu0 %v1840
  %1860 = vmatprep.subr.mxu0 0.0
  %1861 = vmatpush1.msra.mxu0 %v1839
  %1862 = vmatprep.subr.mxu0 0.0
  %1863 = vmatpush1.msra.mxu0 %v1838
  %1864 = vmatprep.subr.mxu0 0.0
  %1865 = vmatpush1.msra.mxu0 %v1812
  %1866 = vmatprep.subr.mxu0 0.0
  %1867 = vmatpush1.msra.mxu0 %v1810
  %1868 = vmatprep.subr.mxu0 0.0
  %1869 = vmatpush1.msra.mxu0 %v1808
  %1870 = vmatprep.subr.mxu0 0.0
  %1871 = vmatpush1.msra.mxu0 %v1806
  %1872 = vmatprep.subr.mxu0 0.0
  %1873 = vmatpush1.msra.mxu0 %v1800
  %1874 = vmatprep.subr.mxu0 0.0
  %1875 = vmatpush1.msra.mxu0 %v1798
  %1876 = vmatprep.subr.mxu0 0.0
  %1877 = vmatpush1.msra.mxu0 %v1796
  %1878 = vmatprep.subr.mxu0 0.0
  %1879 = vmatpush1.msra.mxu0 %v1794
  %1880 = vmatprep.subr.mxu0 0.0
  %1881 = vmatpush1.msra.mxu0 %v1713
  %1882 = vmatprep.subr.mxu0 0.0
  %1883 = vmatpush1.msra.mxu0 %v1707
  %1884 = vmatprep.subr.mxu0 0.0
  %1885 = vmatpush1.msra.mxu0 %v1701
  %1886 = vmatprep.subr.mxu0 0.0
  %1887 = vmatpush1.msra.mxu0 %v1695
  %1888 = vmatprep.subr.mxu0 0.0
  %1889 = vmatpush2.msra.mxu0 0.0
  %1890 = vmatprep.subr.mxu0 0.0
  %1891 = vmatpush2.msra.mxu0 0.0
  %1892 = vmatprep.subr.mxu0 0.0
  %1893 = vmatpush2.msra.mxu0 0.0
  %1894 = vmatprep.subr.mxu0 0.0
  %1895 = vmatpush2.msra.mxu0 0.0
  %1896 = vmatprep.subr.mxu0 0.0
  %1897 = vmatpush2.msra.mxu0 0.0
  %1898 = vmatprep.subr.mxu0 0.0
  %1899 = vmatpush2.msra.mxu0 0.0
  %1900 = vmatprep.subr.mxu0 0.0
  %1901 = vmatpush2.msra.mxu0 0.0
  %1902 = vmatprep.subr.mxu0 0.0
  %1903 = vmatpush2.msra.mxu0 0.0
  %1904 = vmatprep.subr.mxu0 0.0
  %1905 = vmatpush2.msra.mxu0 0.0
  %1906 = vmatprep.subr.mxu0 0.0
  %1907 = vmatpush2.msra.mxu0 0.0
  %1908 = vmatprep.subr.mxu0 0.0
  %1909 = vmatpush2.msra.mxu0 0.0
  %1910 = vmatprep.subr.mxu0 0.0
  %1911 = vmatpush2.msra.mxu0 0.0
  %1912 = vmatprep.subr.mxu0 0.0
  %1913 = vmatpush2.msra.mxu0 0.0
  %1914 = vmatprep.subr.mxu0 0.0
  %1915 = vmatpush2.msra.mxu0 0.0
  %1916 = vmatprep.subr.mxu0 0.0
  %1917 = vmatpush2.msra.mxu0 0.0
  %1918 = vmatprep.subr.mxu0 0.0
  %1919 = vmatpush2.msra.mxu0 0.0
  %1920 = vmatprep.mubr.f32.mxu0 0.0
  %1921 = vmatmul.mubr.f32.gmra.mxu0 %v220
  %v1922 = vpop.f32.mrf.mxu0
  %v1923 = vadd.f32 %v1849, %v1922
  %v1924 = vpop.f32.mrf.mxu0
  %1925 = vmatprep.mubr.f32.mxu0 0.0
  %1926 = vmatmul.mubr.f32.gmra.mxu0 %v221
  %v1927 = vpop.f32.mrf.mxu0
  %v1928 = vadd.f32 %v1854, %v1927
  %v1929 = vpop.f32.mrf.mxu0
  %1930 = vdwg.mxu0
  %v1931 = vmax.f32 %v1923, 0.0
  %v1932 = vmax.f32 %v1928, 0.0
  %1937 = vrot.lane.b32.xlu0 %v1719, 88
  %v1938 = vpop.permute.xlu0 %1937
  %1939 = vrot.lane.b32.xlu0 %v1725, 88
  %v1940 = vpop.permute.xlu0 %1939
  %1941 = vrot.lane.b32.xlu0 %v1731, 88
  %v1942 = vpop.permute.xlu0 %1941
  %1943 = vrot.lane.b32.xlu0 %v1737, 88
  %v1944 = vpop.permute.xlu0 %1943
  %1949 = vrot.lane.b32.xlu0 %v1719, 48
  %v1950 = vpop.permute.xlu0 %1949
  %1951 = vrot.lane.b32.xlu0 %v1725, 48
  %v1952 = vpop.permute.xlu0 %1951
  %1953 = vrot.lane.b32.xlu0 %v1731, 48
  %v1954 = vpop.permute.xlu0 %1953
  %1955 = vrot.lane.b32.xlu0 %v1737, 48
  %v1956 = vpop.permute.xlu0 %1955
  %1965 = vrot.lane.b32.xlu0 %v1719, 8
  %v1966 = vpop.permute.xlu0 %1965
  %1967 = vrot.lane.b32.xlu0 %v1721, 8
  %v1968 = vpop.permute.xlu0 %1967
  %1969 = vrot.lane.b32.xlu0 %v1725, 8
  %v1970 = vpop.permute.xlu0 %1969
  %1971 = vrot.lane.b32.xlu0 %v1727, 8
  %v1972 = vpop.permute.xlu0 %1971
  %1973 = vrot.lane.b32.xlu0 %v1731, 8
  %v1974 = vpop.permute.xlu0 %1973
  %1975 = vrot.lane.b32.xlu0 %v1733, 8
  %v1976 = vpop.permute.xlu0 %1975
  %1977 = vrot.lane.b32.xlu0 %v1737, 8
  %v1978 = vpop.permute.xlu0 %1977
  %1979 = vrot.lane.b32.xlu0 %v1739, 8
  %v1980 = vpop.permute.xlu0 %1979
  %v1981 = vsel %vm1837, %v1966, %v1968
  %v1982 = vsel %vm1837, %v1970, %v1972
  %v1983 = vsel %vm1837, %v1974, %v1976
  %v1984 = vsel %vm1837, %v1978, %v1980
  %1989 = vmatprep.subr.mxu0 0.0
  %1990 = vmatpush1.msra.mxu0 %v1984
  %1991 = vmatprep.subr.mxu0 0.0
  %1992 = vmatpush1.msra.mxu0 %v1983
  %1993 = vmatprep.subr.mxu0 0.0
  %1994 = vmatpush1.msra.mxu0 %v1982
  %1995 = vmatprep.subr.mxu0 0.0
  %1996 = vmatpush1.msra.mxu0 %v1981
  %1997 = vmatprep.subr.mxu0 0.0
  %1998 = vmatpush1.msra.mxu0 %v1956
  %1999 = vmatprep.subr.mxu0 0.0
  %2000 = vmatpush1.msra.mxu0 %v1954
  %2001 = vmatprep.subr.mxu0 0.0
  %2002 = vmatpush1.msra.mxu0 %v1952
  %2003 = vmatprep.subr.mxu0 0.0
  %2004 = vmatpush1.msra.mxu0 %v1950
  %2005 = vmatprep.subr.mxu0 0.0
  %2006 = vmatpush1.msra.mxu0 %v1944
  %2007 = vmatprep.subr.mxu0 0.0
  %2008 = vmatpush1.msra.mxu0 %v1942
  %2009 = vmatprep.subr.mxu0 0.0
  %2010 = vmatpush1.msra.mxu0 %v1940
  %2011 = vmatprep.subr.mxu0 0.0
  %2012 = vmatpush1.msra.mxu0 %v1938
  %2013 = vmatprep.subr.mxu0 0.0
  %2014 = vmatpush1.msra.mxu0 %v1737
  %2015 = vmatprep.subr.mxu0 0.0
  %2016 = vmatpush1.msra.mxu0 %v1731
  %2017 = vmatprep.subr.mxu0 0.0
  %2018 = vmatpush1.msra.mxu0 %v1725
  %2019 = vmatprep.subr.mxu0 0.0
  %2020 = vmatpush1.msra.mxu0 %v1719
  %2021 = vmatprep.subr.mxu0 0.0
  %2022 = vmatpush2.msra.mxu0 0.0
  %2023 = vmatprep.subr.mxu0 0.0
  %2024 = vmatpush2.msra.mxu0 0.0
  %2025 = vmatprep.subr.mxu0 0.0
  %2026 = vmatpush2.msra.mxu0 0.0
  %2027 = vmatprep.subr.mxu0 0.0
  %2028 = vmatpush2.msra.mxu0 0.0
  %2029 = vmatprep.subr.mxu0 0.0
  %2030 = vmatpush2.msra.mxu0 0.0
  %2031 = vmatprep.subr.mxu0 0.0
  %2032 = vmatpush2.msra.mxu0 0.0
  %2033 = vmatprep.subr.mxu0 0.0
  %2034 = vmatpush2.msra.mxu0 0.0
  %2035 = vmatprep.subr.mxu0 0.0
  %2036 = vmatpush2.msra.mxu0 0.0
  %2037 = vmatprep.subr.mxu0 0.0
  %2038 = vmatpush2.msra.mxu0 0.0
  %2039 = vmatprep.subr.mxu0 0.0
  %2040 = vmatpush2.msra.mxu0 0.0
  %2041 = vmatprep.subr.mxu0 0.0
  %2042 = vmatpush2.msra.mxu0 0.0
  %2043 = vmatprep.subr.mxu0 0.0
  %2044 = vmatpush2.msra.mxu0 0.0
  %2045 = vmatprep.subr.mxu0 0.0
  %2046 = vmatpush2.msra.mxu0 0.0
  %2047 = vmatprep.subr.mxu0 0.0
  %2048 = vmatpush2.msra.mxu0 0.0
  %2049 = vmatprep.subr.mxu0 0.0
  %2050 = vmatpush2.msra.mxu0 0.0
  %2051 = vmatprep.subr.mxu0 0.0
  %2052 = vmatpush2.msra.mxu0 0.0
  %2053 = vmatprep.mubr.f32.mxu0 0.0
  %2054 = vmatmul.mubr.f32.gmra.mxu0 %v220
  %v2055 = vpop.f32.mrf.mxu0
  %v2056 = vadd.f32 %v1849, %v2055
  %v2057 = vpop.f32.mrf.mxu0
  %2058 = vmatprep.mubr.f32.mxu0 0.0
  %2059 = vmatmul.mubr.f32.gmra.mxu0 %v221
  %v2060 = vpop.f32.mrf.mxu0
  %v2061 = vadd.f32 %v1854, %v2060
  %v2062 = vpop.f32.mrf.mxu0
  %2063 = vdwg.mxu0
  %v2064 = vmax.f32 %v2056, 0.0
  %v2065 = vmax.f32 %v2061, 0.0
  %2070 = vrot.lane.b32.xlu0 %v1743, 88
  %v2071 = vpop.permute.xlu0 %2070
  %2072 = vrot.lane.b32.xlu0 %v1749, 88
  %v2073 = vpop.permute.xlu0 %2072
  %2074 = vrot.lane.b32.xlu0 %v1755, 88
  %v2075 = vpop.permute.xlu0 %2074
  %2076 = vrot.lane.b32.xlu0 %v1761, 88
  %v2077 = vpop.permute.xlu0 %2076
  %2082 = vrot.lane.b32.xlu0 %v1743, 48
  %v2083 = vpop.permute.xlu0 %2082
  %2084 = vrot.lane.b32.xlu0 %v1749, 48
  %v2085 = vpop.permute.xlu0 %2084
  %2086 = vrot.lane.b32.xlu0 %v1755, 48
  %v2087 = vpop.permute.xlu0 %2086
  %2088 = vrot.lane.b32.xlu0 %v1761, 48
  %v2089 = vpop.permute.xlu0 %2088
  %2098 = vrot.lane.b32.xlu0 %v1743, 8
  %v2099 = vpop.permute.xlu0 %2098
  %2100 = vrot.lane.b32.xlu0 %v1745, 8
  %v2101 = vpop.permute.xlu0 %2100
  %2102 = vrot.lane.b32.xlu0 %v1749, 8
  %v2103 = vpop.permute.xlu0 %2102
  %2104 = vrot.lane.b32.xlu0 %v1751, 8
  %v2105 = vpop.permute.xlu0 %2104
  %2106 = vrot.lane.b32.xlu0 %v1755, 8
  %v2107 = vpop.permute.xlu0 %2106
  %2108 = vrot.lane.b32.xlu0 %v1757, 8
  %v2109 = vpop.permute.xlu0 %2108
  %2110 = vrot.lane.b32.xlu0 %v1761, 8
  %v2111 = vpop.permute.xlu0 %2110
  %2112 = vrot.lane.b32.xlu0 %v1763, 8
  %v2113 = vpop.permute.xlu0 %2112
  %v2114 = vsel %vm1837, %v2099, %v2101
  %v2115 = vsel %vm1837, %v2103, %v2105
  %v2116 = vsel %vm1837, %v2107, %v2109
  %v2117 = vsel %vm1837, %v2111, %v2113
  %2122 = vmatprep.subr.mxu0 0.0
  %2123 = vmatpush1.msra.mxu0 %v2117
  %2124 = vmatprep.subr.mxu0 0.0
  %2125 = vmatpush1.msra.mxu0 %v2116
  %2126 = vmatprep.subr.mxu0 0.0
  %2127 = vmatpush1.msra.mxu0 %v2115
  %2128 = vmatprep.subr.mxu0 0.0
  %2129 = vmatpush1.msra.mxu0 %v2114
  %2130 = vmatprep.subr.mxu0 0.0
  %2131 = vmatpush1.msra.mxu0 %v2089
  %2132 = vmatprep.subr.mxu0 0.0
  %2133 = vmatpush1.msra.mxu0 %v2087
  %2134 = vmatprep.subr.mxu0 0.0
  %2135 = vmatpush1.msra.mxu0 %v2085
  %2136 = vmatprep.subr.mxu0 0.0
  %2137 = vmatpush1.msra.mxu0 %v2083
  %2138 = vmatprep.subr.mxu0 0.0
  %2139 = vmatpush1.msra.mxu0 %v2077
  %2140 = vmatprep.subr.mxu0 0.0
  %2141 = vmatpush1.msra.mxu0 %v2075
  %2142 = vmatprep.subr.mxu0 0.0
  %2143 = vmatpush1.msra.mxu0 %v2073
  %2144 = vmatprep.subr.mxu0 0.0
  %2145 = vmatpush1.msra.mxu0 %v2071
  %2146 = vmatprep.subr.mxu0 0.0
  %2147 = vmatpush1.msra.mxu0 %v1761
  %2148 = vmatprep.subr.mxu0 0.0
  %2149 = vmatpush1.msra.mxu0 %v1755
  %2150 = vmatprep.subr.mxu0 0.0
  %2151 = vmatpush1.msra.mxu0 %v1749
  %2152 = vmatprep.subr.mxu0 0.0
  %2153 = vmatpush1.msra.mxu0 %v1743
  %2154 = vmatprep.subr.mxu0 0.0
  %2155 = vmatpush2.msra.mxu0 0.0
  %2156 = vmatprep.subr.mxu0 0.0
  %2157 = vmatpush2.msra.mxu0 0.0
  %2158 = vmatprep.subr.mxu0 0.0
  %2159 = vmatpush2.msra.mxu0 0.0
  %2160 = vmatprep.subr.mxu0 0.0
  %2161 = vmatpush2.msra.mxu0 0.0
  %2162 = vmatprep.subr.mxu0 0.0
  %2163 = vmatpush2.msra.mxu0 0.0
  %2164 = vmatprep.subr.mxu0 0.0
  %2165 = vmatpush2.msra.mxu0 0.0
  %2166 = vmatprep.subr.mxu0 0.0
  %2167 = vmatpush2.msra.mxu0 0.0
  %2168 = vmatprep.subr.mxu0 0.0
  %2169 = vmatpush2.msra.mxu0 0.0
  %2170 = vmatprep.subr.mxu0 0.0
  %2171 = vmatpush2.msra.mxu0 0.0
  %2172 = vmatprep.subr.mxu0 0.0
  %2173 = vmatpush2.msra.mxu0 0.0
  %2174 = vmatprep.subr.mxu0 0.0
  %2175 = vmatpush2.msra.mxu0 0.0
  %2176 = vmatprep.subr.mxu0 0.0
  %2177 = vmatpush2.msra.mxu0 0.0
  %2178 = vmatprep.subr.mxu0 0.0
  %2179 = vmatpush2.msra.mxu0 0.0
  %2180 = vmatprep.subr.mxu0 0.0
  %2181 = vmatpush2.msra.mxu0 0.0
  %2182 = vmatprep.subr.mxu0 0.0
  %2183 = vmatpush2.msra.mxu0 0.0
  %2184 = vmatprep.subr.mxu0 0.0
  %2185 = vmatpush2.msra.mxu0 0.0
  %2186 = vmatprep.mubr.f32.mxu0 0.0
  %2187 = vmatmul.mubr.f32.gmra.mxu0 %v220
  %v2188 = vpop.f32.mrf.mxu0
  %v2189 = vadd.f32 %v1849, %v2188
  %v2190 = vpop.f32.mrf.mxu0
  %2191 = vmatprep.mubr.f32.mxu0 0.0
  %2192 = vmatmul.mubr.f32.gmra.mxu0 %v221
  %v2193 = vpop.f32.mrf.mxu0
  %v2194 = vadd.f32 %v1854, %v2193
  %v2195 = vpop.f32.mrf.mxu0
  %2196 = vdwg.mxu0
  %v2197 = vmax.f32 %v2189, 0.0
  %v2198 = vmax.f32 %v2194, 0.0
  %2203 = vrot.lane.b32.xlu0 %v1767, 88
  %v2204 = vpop.permute.xlu0 %2203
  %2205 = vrot.lane.b32.xlu0 %v1773, 88
  %v2206 = vpop.permute.xlu0 %2205
  %2207 = vrot.lane.b32.xlu0 %v1779, 88
  %v2208 = vpop.permute.xlu0 %2207
  %2209 = vrot.lane.b32.xlu0 %v1785, 88
  %v2210 = vpop.permute.xlu0 %2209
  %2215 = vrot.lane.b32.xlu0 %v1767, 48
  %v2216 = vpop.permute.xlu0 %2215
  %2217 = vrot.lane.b32.xlu0 %v1773, 48
  %v2218 = vpop.permute.xlu0 %2217
  %2219 = vrot.lane.b32.xlu0 %v1779, 48
  %v2220 = vpop.permute.xlu0 %2219
  %2221 = vrot.lane.b32.xlu0 %v1785, 48
  %v2222 = vpop.permute.xlu0 %2221
  %2231 = vrot.lane.b32.xlu0 %v1767, 8
  %v2232 = vpop.permute.xlu0 %2231
  %2233 = vrot.lane.b32.xlu0 %v1769, 8
  %v2234 = vpop.permute.xlu0 %2233
  %2235 = vrot.lane.b32.xlu0 %v1773, 8
  %v2236 = vpop.permute.xlu0 %2235
  %2237 = vrot.lane.b32.xlu0 %v1775, 8
  %v2238 = vpop.permute.xlu0 %2237
  %2239 = vrot.lane.b32.xlu0 %v1779, 8
  %v2240 = vpop.permute.xlu0 %2239
  %2241 = vrot.lane.b32.xlu0 %v1781, 8
  %v2242 = vpop.permute.xlu0 %2241
  %2243 = vrot.lane.b32.xlu0 %v1785, 8
  %v2244 = vpop.permute.xlu0 %2243
  %2245 = vrot.lane.b32.xlu0 %v1787, 8
  %v2246 = vpop.permute.xlu0 %2245
  %v2247 = vsel %vm1837, %v2232, %v2234
  %v2248 = vsel %vm1837, %v2236, %v2238
  %v2249 = vsel %vm1837, %v2240, %v2242
  %v2250 = vsel %vm1837, %v2244, %v2246
  %2255 = vmatprep.subr.mxu0 0.0
  %2256 = vmatpush1.msra.mxu0 %v2250
  %2257 = vmatprep.subr.mxu0 0.0
  %2258 = vmatpush1.msra.mxu0 %v2249
  %2259 = vmatprep.subr.mxu0 0.0
  %2260 = vmatpush1.msra.mxu0 %v2248
  %2261 = vmatprep.subr.mxu0 0.0
  %2262 = vmatpush1.msra.mxu0 %v2247
  %2263 = vmatprep.subr.mxu0 0.0
  %2264 = vmatpush1.msra.mxu0 %v2222
  %2265 = vmatprep.subr.mxu0 0.0
  %2266 = vmatpush1.msra.mxu0 %v2220
  %2267 = vmatprep.subr.mxu0 0.0
  %2268 = vmatpush1.msra.mxu0 %v2218
  %2269 = vmatprep.subr.mxu0 0.0
  %2270 = vmatpush1.msra.mxu0 %v2216
  %2271 = vmatprep.subr.mxu0 0.0
  %2272 = vmatpush1.msra.mxu0 %v2210
  %2273 = vmatprep.subr.mxu0 0.0
  %2274 = vmatpush1.msra.mxu0 %v2208
  %2275 = vmatprep.subr.mxu0 0.0
  %2276 = vmatpush1.msra.mxu0 %v2206
  %2277 = vmatprep.subr.mxu0 0.0
  %2278 = vmatpush1.msra.mxu0 %v2204
  %2279 = vmatprep.subr.mxu0 0.0
  %2280 = vmatpush1.msra.mxu0 %v1785
  %2281 = vmatprep.subr.mxu0 0.0
  %2282 = vmatpush1.msra.mxu0 %v1779
  %2283 = vmatprep.subr.mxu0 0.0
  %2284 = vmatpush1.msra.mxu0 %v1773
  %2285 = vmatprep.subr.mxu0 0.0
  %2286 = vmatpush1.msra.mxu0 %v1767
  %2287 = vmatprep.subr.mxu0 0.0
  %2288 = vmatpush2.msra.mxu0 0.0
  %2289 = vmatprep.subr.mxu0 0.0
  %2290 = vmatpush2.msra.mxu0 0.0
  %2291 = vmatprep.subr.mxu0 0.0
  %2292 = vmatpush2.msra.mxu0 0.0
  %2293 = vmatprep.subr.mxu0 0.0
  %2294 = vmatpush2.msra.mxu0 0.0
  %2295 = vmatprep.subr.mxu0 0.0
  %2296 = vmatpush2.msra.mxu0 0.0
  %2297 = vmatprep.subr.mxu0 0.0
  %2298 = vmatpush2.msra.mxu0 0.0
  %2299 = vmatprep.subr.mxu0 0.0
  %2300 = vmatpush2.msra.mxu0 0.0
  %2301 = vmatprep.subr.mxu0 0.0
  %2302 = vmatpush2.msra.mxu0 0.0
  %2303 = vmatprep.subr.mxu0 0.0
  %2304 = vmatpush2.msra.mxu0 0.0
  %2305 = vmatprep.subr.mxu0 0.0
  %2306 = vmatpush2.msra.mxu0 0.0
  %2307 = vmatprep.subr.mxu0 0.0
  %2308 = vmatpush2.msra.mxu0 0.0
  %2309 = vmatprep.subr.mxu0 0.0
  %2310 = vmatpush2.msra.mxu0 0.0
  %2311 = vmatprep.subr.mxu0 0.0
  %2312 = vmatpush2.msra.mxu0 0.0
  %2313 = vmatprep.subr.mxu0 0.0
  %2314 = vmatpush2.msra.mxu0 0.0
  %2315 = vmatprep.subr.mxu0 0.0
  %2316 = vmatpush2.msra.mxu0 0.0
  %2317 = vmatprep.subr.mxu0 0.0
  %2318 = vmatpush2.msra.mxu0 0.0
  %2319 = vmatprep.mubr.f32.mxu0 0.0
  %2320 = vmatmul.mubr.f32.gmra.mxu0 %v220
  %v2321 = vpop.f32.mrf.mxu0
  %v2322 = vadd.f32 %v1849, %v2321
  %v2323 = vpop.f32.mrf.mxu0
  %2324 = vmatprep.mubr.f32.mxu0 0.0
  %2325 = vmatmul.mubr.f32.gmra.mxu0 %v221
  %v2326 = vpop.f32.mrf.mxu0
  %v2327 = vadd.f32 %v1854, %v2326
  %v2328 = vpop.f32.mrf.mxu0
  %2329 = vdwg.mxu0
  %v2330 = vmax.f32 %v2322, 0.0
  %v2331 = vmax.f32 %v2327, 0.0
  %vm2332 = vcmask 326656
  %v2334 = vsel %vm2332, %v1931, 0
  %v2337 = vsel %vm2332, %v1932, 0
  %v2340 = vsel %vm2332, %v2064, 0
  %v2343 = vsel %vm2332, %v2065, 0
  %v2346 = vsel %vm2332, %v2197, 0
  %v2349 = vsel %vm2332, %v2198, 0
  %v2352 = vsel %vm2332, %v2330, 0
  %v2355 = vsel %vm2332, %v2331, 0
  %2357 = vmatprep.subr.mxu0 0.0
  %2358 = vmatpush1.msra.mxu0 0.0
  %2359 = vmatprep.subr.mxu0 0.0
  %2360 = vmatpush1.msra.mxu0 0.0
  %2361 = vmatprep.subr.mxu0 0.0
  %2362 = vmatpush1.msra.mxu0 0.0
  %2363 = vmatprep.subr.mxu0 0.0
  %2364 = vmatpush1.msra.mxu0 0.0
  %2365 = vmatprep.subr.mxu0 0.0
  %2366 = vmatpush1.msra.mxu0 0.0
  %2367 = vmatprep.subr.mxu0 0.0
  %2368 = vmatpush1.msra.mxu0 0.0
  %2369 = vmatprep.subr.mxu0 0.0
  %2370 = vmatpush1.msra.mxu0 0.0
  %2371 = vmatprep.subr.mxu0 0.0
  %2372 = vmatpush1.msra.mxu0 0.0
  %2373 = vmatprep.subr.mxu0 0.0
  %2374 = vmatpush1.msra.mxu0 0.0
  %2375 = vmatprep.subr.mxu0 0.0
  %2376 = vmatpush1.msra.mxu0 0.0
  %2377 = vmatprep.subr.mxu0 0.0
  %2378 = vmatpush1.msra.mxu0 0.0
  %2379 = vmatprep.subr.mxu0 0.0
  %2380 = vmatpush1.msra.mxu0 %v167
  %2381 = vmatprep.subr.mxu0 0.0
  %2382 = vmatpush1.msra.mxu0 %v166
  %2383 = vmatprep.subr.mxu0 0.0
  %2384 = vmatpush1.msra.mxu0 %v165
  %2385 = vmatprep.subr.mxu0 0.0
  %2386 = vmatpush1.msra.mxu0 %v164
  %2387 = vmatprep.subr.mxu0 0.0
  %2388 = vmatpush1.msra.mxu0 %v163
  %2389 = vmatprep.subr.mxu0 0.0
  %2390 = vmatpush2.msra.mxu0 0.0
  %2391 = vmatprep.subr.mxu0 0.0
  %2392 = vmatpush2.msra.mxu0 0.0
  %2393 = vmatprep.subr.mxu0 0.0
  %2394 = vmatpush2.msra.mxu0 0.0
  %2395 = vmatprep.subr.mxu0 0.0
  %2396 = vmatpush2.msra.mxu0 0.0
  %2397 = vmatprep.subr.mxu0 0.0
  %2398 = vmatpush2.msra.mxu0 0.0
  %2399 = vmatprep.subr.mxu0 0.0
  %2400 = vmatpush2.msra.mxu0 0.0
  %2401 = vmatprep.subr.mxu0 0.0
  %2402 = vmatpush2.msra.mxu0 0.0
  %2403 = vmatprep.subr.mxu0 0.0
  %2404 = vmatpush2.msra.mxu0 0.0
  %2405 = vmatprep.subr.mxu0 0.0
  %2406 = vmatpush2.msra.mxu0 0.0
  %2407 = vmatprep.subr.mxu0 0.0
  %2408 = vmatpush2.msra.mxu0 0.0
  %2409 = vmatprep.subr.mxu0 0.0
  %2410 = vmatpush2.msra.mxu0 0.0
  %2411 = vmatprep.subr.mxu0 0.0
  %2412 = vmatpush2.msra.mxu0 0.0
  %2413 = vmatprep.subr.mxu0 0.0
  %2414 = vmatpush2.msra.mxu0 0.0
  %2415 = vmatprep.subr.mxu0 0.0
  %2416 = vmatpush2.msra.mxu0 0.0
  %2417 = vmatprep.subr.mxu0 0.0
  %2418 = vmatpush2.msra.mxu0 0.0
  %2419 = vmatprep.subr.mxu0 0.0
  %2420 = vmatpush2.msra.mxu0 0.0
  %2421 = vmatprep.mubr.f32.mxu0 0.0
  %2422 = vmatmul.mubr.f32.gmra.mxu0 %v2334
  %v2423 = vpop.f32.mrf.mxu0
  %v2424 = vadd.f32 0.0, %v2423
  %v2425 = vpop.f32.mrf.mxu0
  %2426 = vmatprep.mubr.f32.mxu0 0.0
  %2427 = vmatmul.mubr.f32.gmra.mxu0 %v2337
  %v2428 = vpop.f32.mrf.mxu0
  %v2429 = vadd.f32 0.0, %v2428
  %v2430 = vpop.f32.mrf.mxu0
  %2431 = vmatprep.mubr.f32.mxu0 0.0
  %2432 = vmatmul.mubr.f32.gmra.mxu0 %v2340
  %v2433 = vpop.f32.mrf.mxu0
  %v2434 = vadd.f32 0.0, %v2433
  %v2435 = vpop.f32.mrf.mxu0
  %2436 = vmatprep.mubr.f32.mxu0 0.0
  %2437 = vmatmul.mubr.f32.gmra.mxu0 %v2343
  %v2438 = vpop.f32.mrf.mxu0
  %v2439 = vadd.f32 0.0, %v2438
  %v2440 = vpop.f32.mrf.mxu0
  %2441 = vmatprep.mubr.f32.mxu0 0.0
  %2442 = vmatmul.mubr.f32.gmra.mxu0 %v2346
  %v2443 = vpop.f32.mrf.mxu0
  %v2444 = vadd.f32 0.0, %v2443
  %v2445 = vpop.f32.mrf.mxu0
  %2446 = vmatprep.mubr.f32.mxu0 0.0
  %2447 = vmatmul.mubr.f32.gmra.mxu0 %v2349
  %v2448 = vpop.f32.mrf.mxu0
  %v2449 = vadd.f32 0.0, %v2448
  %v2450 = vpop.f32.mrf.mxu0
  %2451 = vmatprep.mubr.f32.mxu0 0.0
  %2452 = vmatmul.mubr.f32.gmra.mxu0 %v2352
  %v2453 = vpop.f32.mrf.mxu0
  %v2454 = vadd.f32 0.0, %v2453
  %v2455 = vpop.f32.mrf.mxu0
  %2456 = vmatprep.mubr.f32.mxu0 0.0
  %2457 = vmatmul.mubr.f32.gmra.mxu0 %v2355
  %v2458 = vpop.f32.mrf.mxu0
  %v2459 = vadd.f32 0.0, %v2458
  %v2460 = vpop.f32.mrf.mxu0
  %2461 = vdwg.mxu0
  %v2463 = vsel %vm1579, %v195, 0
  %v2466 = vsel %vm1579, %v196, 0
  %v2469 = vsel %vm1579, %v197, 0
  %v2472 = vsel %vm1579, %v198, 0
  %v2475 = vsel %vm1579, %v199, 0
  %v2478 = vsel %vm1579, %v200, 0
  %v2481 = vsel %vm1579, %v201, 0
  %v2484 = vsel %vm1579, %v202, 0
  %v2487 = vsel %vm1579, %v203, 0
  %v2490 = vsel %vm1579, %v204, 0
  %v2493 = vsel %vm1579, %v205, 0
  %v2496 = vsel %vm1579, %v206, 0
  %v2499 = vsel %vm1579, %v207, 0
  %v2502 = vsel %vm1579, %v208, 0
  %v2505 = vsel %vm1579, %v209, 0
  %v2508 = vsel %vm1579, %v210, 0
  %2510 = vmatprep.subr.mxu0 0.0
  %2511 = vmatpush1.msra.mxu0 0.0
  %2512 = vmatprep.subr.mxu0 0.0
  %2513 = vmatpush1.msra.mxu0 0.0
  %2514 = vmatprep.subr.mxu0 0.0
  %2515 = vmatpush1.msra.mxu0 0.0
  %2516 = vmatprep.subr.mxu0 0.0
  %2517 = vmatpush1.msra.mxu0 0.0
  %2518 = vmatprep.subr.mxu0 0.0
  %2519 = vmatpush1.msra.mxu0 0.0
  %2520 = vmatprep.subr.mxu0 0.0
  %2521 = vmatpush1.msra.mxu0 0.0
  %2522 = vmatprep.subr.mxu0 0.0
  %2523 = vmatpush1.msra.mxu0 0.0
  %2524 = vmatprep.subr.mxu0 0.0
  %2525 = vmatpush1.msra.mxu0 0.0
  %2526 = vmatprep.subr.mxu0 0.0
  %2527 = vmatpush1.msra.mxu0 %v2459
  %2528 = vmatprep.subr.mxu0 0.0
  %2529 = vmatpush1.msra.mxu0 %v2454
  %2530 = vmatprep.subr.mxu0 0.0
  %2531 = vmatpush1.msra.mxu0 %v2449
  %2532 = vmatprep.subr.mxu0 0.0
  %2533 = vmatpush1.msra.mxu0 %v2444
  %2534 = vmatprep.subr.mxu0 0.0
  %2535 = vmatpush1.msra.mxu0 %v2439
  %2536 = vmatprep.subr.mxu0 0.0
  %2537 = vmatpush1.msra.mxu0 %v2434
  %2538 = vmatprep.subr.mxu0 0.0
  %2539 = vmatpush1.msra.mxu0 %v2429
  %2540 = vmatprep.subr.mxu0 0.0
  %2541 = vmatpush1.msra.mxu0 %v2424
  %2542 = vmatprep.subr.mxu0 0.0
  %2543 = vmatpush2.msra.mxu0 0.0
  %2544 = vmatprep.subr.mxu0 0.0
  %2545 = vmatpush2.msra.mxu0 0.0
  %2546 = vmatprep.subr.mxu0 0.0
  %2547 = vmatpush2.msra.mxu0 0.0
  %2548 = vmatprep.subr.mxu0 0.0
  %2549 = vmatpush2.msra.mxu0 0.0
  %2550 = vmatprep.subr.mxu0 0.0
  %2551 = vmatpush2.msra.mxu0 0.0
  %2552 = vmatprep.subr.mxu0 0.0
  %2553 = vmatpush2.msra.mxu0 0.0
  %2554 = vmatprep.subr.mxu0 0.0
  %2555 = vmatpush2.msra.mxu0 0.0
  %2556 = vmatprep.subr.mxu0 0.0
  %2557 = vmatpush2.msra.mxu0 0.0
  %2558 = vmatprep.subr.mxu0 0.0
  %2559 = vmatpush2.msra.mxu0 0.0
  %2560 = vmatprep.subr.mxu0 0.0
  %2561 = vmatpush2.msra.mxu0 0.0
  %2562 = vmatprep.subr.mxu0 0.0
  %2563 = vmatpush2.msra.mxu0 0.0
  %2564 = vmatprep.subr.mxu0 0.0
  %2565 = vmatpush2.msra.mxu0 0.0
  %2566 = vmatprep.subr.mxu0 0.0
  %2567 = vmatpush2.msra.mxu0 0.0
  %2568 = vmatprep.subr.mxu0 0.0
  %2569 = vmatpush2.msra.mxu0 0.0
  %2570 = vmatprep.subr.mxu0 0.0
  %2571 = vmatpush2.msra.mxu0 0.0
  %2572 = vmatprep.subr.mxu0 0.0
  %2573 = vmatpush2.msra.mxu0 0.0
  %2574 = vmatprep.mubr.f32.mxu0 0.0
  %2575 = vmatmul.mubr.f32.gmra.mxu0 %v2463
  %v2576 = vpop.f32.mrf.mxu0
  %v2577 = vadd.f32 0.0, %v2576
  %v2578 = vpop.f32.mrf.mxu0
  %2579 = vmatprep.mubr.f32.mxu0 0.0
  %2580 = vmatmul.mubr.f32.gmra.mxu0 %v2466
  %v2581 = vpop.f32.mrf.mxu0
  %v2582 = vadd.f32 0.0, %v2581
  %v2583 = vpop.f32.mrf.mxu0
  %2584 = vmatprep.mubr.f32.mxu0 0.0
  %2585 = vmatmul.mubr.f32.gmra.mxu0 %v2469
  %v2586 = vpop.f32.mrf.mxu0
  %v2587 = vadd.f32 0.0, %v2586
  %v2588 = vpop.f32.mrf.mxu0
  %2589 = vmatprep.mubr.f32.mxu0 0.0
  %2590 = vmatmul.mubr.f32.gmra.mxu0 %v2472
  %v2591 = vpop.f32.mrf.mxu0
  %v2592 = vadd.f32 0.0, %v2591
  %v2593 = vpop.f32.mrf.mxu0
  %2594 = vmatprep.mubr.f32.mxu0 0.0
  %2595 = vmatmul.mubr.f32.gmra.mxu0 %v2475
  %v2596 = vpop.f32.mrf.mxu0
  %v2597 = vadd.f32 0.0, %v2596
  %v2598 = vpop.f32.mrf.mxu0
  %2599 = vmatprep.mubr.f32.mxu0 0.0
  %2600 = vmatmul.mubr.f32.gmra.mxu0 %v2478
  %v2601 = vpop.f32.mrf.mxu0
  %v2602 = vadd.f32 0.0, %v2601
  %v2603 = vpop.f32.mrf.mxu0
  %2604 = vmatprep.mubr.f32.mxu0 0.0
  %2605 = vmatmul.mubr.f32.gmra.mxu0 %v2481
  %v2606 = vpop.f32.mrf.mxu0
  %v2607 = vadd.f32 0.0, %v2606
  %v2608 = vpop.f32.mrf.mxu0
  %2609 = vmatprep.mubr.f32.mxu0 0.0
  %2610 = vmatmul.mubr.f32.gmra.mxu0 %v2484
  %v2611 = vpop.f32.mrf.mxu0
  %v2612 = vadd.f32 0.0, %v2611
  %v2613 = vpop.f32.mrf.mxu0
  %2614 = vmatprep.mubr.f32.mxu0 0.0
  %2615 = vmatmul.mubr.f32.gmra.mxu0 %v2487
  %v2616 = vpop.f32.mrf.mxu0
  %v2617 = vadd.f32 0.0, %v2616
  %v2618 = vpop.f32.mrf.mxu0
  %2619 = vmatprep.mubr.f32.mxu0 0.0
  %2620 = vmatmul.mubr.f32.gmra.mxu0 %v2490
  %v2621 = vpop.f32.mrf.mxu0
  %v2622 = vadd.f32 0.0, %v2621
  %v2623 = vpop.f32.mrf.mxu0
  %2624 = vmatprep.mubr.f32.mxu0 0.0
  %2625 = vmatmul.mubr.f32.gmra.mxu0 %v2493
  %v2626 = vpop.f32.mrf.mxu0
  %v2627 = vadd.f32 0.0, %v2626
  %v2628 = vpop.f32.mrf.mxu0
  %2629 = vmatprep.mubr.f32.mxu0 0.0
  %2630 = vmatmul.mubr.f32.gmra.mxu0 %v2496
  %v2631 = vpop.f32.mrf.mxu0
  %v2632 = vadd.f32 0.0, %v2631
  %v2633 = vpop.f32.mrf.mxu0
  %2634 = vmatprep.mubr.f32.mxu0 0.0
  %2635 = vmatmul.mubr.f32.gmra.mxu0 %v2499
  %v2636 = vpop.f32.mrf.mxu0
  %v2637 = vadd.f32 0.0, %v2636
  %v2638 = vpop.f32.mrf.mxu0
  %2639 = vmatprep.mubr.f32.mxu0 0.0
  %2640 = vmatmul.mubr.f32.gmra.mxu0 %v2502
  %v2641 = vpop.f32.mrf.mxu0
  %v2642 = vadd.f32 0.0, %v2641
  %v2643 = vpop.f32.mrf.mxu0
  %2644 = vmatprep.mubr.f32.mxu0 0.0
  %2645 = vmatmul.mubr.f32.gmra.mxu0 %v2505
  %v2646 = vpop.f32.mrf.mxu0
  %v2647 = vadd.f32 0.0, %v2646
  %v2648 = vpop.f32.mrf.mxu0
  %2649 = vmatprep.mubr.f32.mxu0 0.0
  %2650 = vmatmul.mubr.f32.gmra.mxu0 %v2508
  %v2651 = vpop.f32.mrf.mxu0
  %v2652 = vadd.f32 0.0, %v2651
  %v2653 = vpop.f32.mrf.mxu0
  %2654 = vdwg.mxu0
  %2663 = vrot.lane.b32.xlu0 %v2577, 108
  %v2664 = vpop.permute.xlu0 %2663
  %2665 = vrot.lane.b32.xlu0 %v2582, 108
  %v2666 = vpop.permute.xlu0 %2665
  %2667 = vrot.lane.b32.xlu0 %v2587, 108
  %v2668 = vpop.permute.xlu0 %2667
  %2669 = vrot.lane.b32.xlu0 %v2592, 108
  %v2670 = vpop.permute.xlu0 %2669
  %2671 = vrot.lane.b32.xlu0 %v2597, 108
  %v2672 = vpop.permute.xlu0 %2671
  %2673 = vrot.lane.b32.xlu0 %v2602, 108
  %v2674 = vpop.permute.xlu0 %2673
  %2675 = vrot.lane.b32.xlu0 %v2607, 108
  %v2676 = vpop.permute.xlu0 %2675
  %2677 = vrot.lane.b32.xlu0 %v2612, 108
  %v2678 = vpop.permute.xlu0 %2677
  %2687 = vrot.lane.b32.xlu0 %v2577, 88
  %v2688 = vpop.permute.xlu0 %2687
  %2689 = vrot.lane.b32.xlu0 %v2582, 88
  %v2690 = vpop.permute.xlu0 %2689
  %2691 = vrot.lane.b32.xlu0 %v2587, 88
  %v2692 = vpop.permute.xlu0 %2691
  %2693 = vrot.lane.b32.xlu0 %v2592, 88
  %v2694 = vpop.permute.xlu0 %2693
  %2695 = vrot.lane.b32.xlu0 %v2597, 88
  %v2696 = vpop.permute.xlu0 %2695
  %2697 = vrot.lane.b32.xlu0 %v2602, 88
  %v2698 = vpop.permute.xlu0 %2697
  %2699 = vrot.lane.b32.xlu0 %v2607, 88
  %v2700 = vpop.permute.xlu0 %2699
  %2701 = vrot.lane.b32.xlu0 %v2612, 88
  %v2702 = vpop.permute.xlu0 %2701
  %2711 = vrot.lane.b32.xlu0 %v2577, 68
  %v2712 = vpop.permute.xlu0 %2711
  %2713 = vrot.lane.b32.xlu0 %v2582, 68
  %v2714 = vpop.permute.xlu0 %2713
  %2715 = vrot.lane.b32.xlu0 %v2587, 68
  %v2716 = vpop.permute.xlu0 %2715
  %2717 = vrot.lane.b32.xlu0 %v2592, 68
  %v2718 = vpop.permute.xlu0 %2717
  %2719 = vrot.lane.b32.xlu0 %v2597, 68
  %v2720 = vpop.permute.xlu0 %2719
  %2721 = vrot.lane.b32.xlu0 %v2602, 68
  %v2722 = vpop.permute.xlu0 %2721
  %2723 = vrot.lane.b32.xlu0 %v2607, 68
  %v2724 = vpop.permute.xlu0 %2723
  %2725 = vrot.lane.b32.xlu0 %v2612, 68
  %v2726 = vpop.permute.xlu0 %2725
  %2736 = vset.pattern.permute.xlu0 0
  %2737 = vperm.xlu0 %2736, %v237
  %v2738 = vpop.permute.xlu0 %2737
  %2741 = vset.pattern.permute.xlu0 0
  %2742 = vperm.xlu0 %2741, %v238
  %v2743 = vpop.permute.xlu0 %2742
  %2745 = vmatprep.subr.mxu0 0.0
  %2746 = vmatpush1.msra.mxu0 %v2678
  %2747 = vmatprep.subr.mxu0 0.0
  %2748 = vmatpush1.msra.mxu0 %v2676
  %2749 = vmatprep.subr.mxu0 0.0
  %2750 = vmatpush1.msra.mxu0 %v2674
  %2751 = vmatprep.subr.mxu0 0.0
  %2752 = vmatpush1.msra.mxu0 %v2672
  %2753 = vmatprep.subr.mxu0 0.0
  %2754 = vmatpush1.msra.mxu0 %v2670
  %2755 = vmatprep.subr.mxu0 0.0
  %2756 = vmatpush1.msra.mxu0 %v2668
  %2757 = vmatprep.subr.mxu0 0.0
  %2758 = vmatpush1.msra.mxu0 %v2666
  %2759 = vmatprep.subr.mxu0 0.0
  %2760 = vmatpush1.msra.mxu0 %v2664
  %2761 = vmatprep.subr.mxu0 0.0
  %2762 = vmatpush1.msra.mxu0 %v2612
  %2763 = vmatprep.subr.mxu0 0.0
  %2764 = vmatpush1.msra.mxu0 %v2607
  %2765 = vmatprep.subr.mxu0 0.0
  %2766 = vmatpush1.msra.mxu0 %v2602
  %2767 = vmatprep.subr.mxu0 0.0
  %2768 = vmatpush1.msra.mxu0 %v2597
  %2769 = vmatprep.subr.mxu0 0.0
  %2770 = vmatpush1.msra.mxu0 %v2592
  %2771 = vmatprep.subr.mxu0 0.0
  %2772 = vmatpush1.msra.mxu0 %v2587
  %2773 = vmatprep.subr.mxu0 0.0
  %2774 = vmatpush1.msra.mxu0 %v2582
  %2775 = vmatprep.subr.mxu0 0.0
  %2776 = vmatpush1.msra.mxu0 %v2577
  %2777 = vmatprep.subr.mxu0 0.0
  %2778 = vmatpush2.msra.mxu0 %v2726
  %2779 = vmatprep.subr.mxu0 0.0
  %2780 = vmatpush2.msra.mxu0 %v2724
  %2781 = vmatprep.subr.mxu0 0.0
  %2782 = vmatpush2.msra.mxu0 %v2722
  %2783 = vmatprep.subr.mxu0 0.0
  %2784 = vmatpush2.msra.mxu0 %v2720
  %2785 = vmatprep.subr.mxu0 0.0
  %2786 = vmatpush2.msra.mxu0 %v2718
  %2787 = vmatprep.subr.mxu0 0.0
  %2788 = vmatpush2.msra.mxu0 %v2716
  %2789 = vmatprep.subr.mxu0 0.0
  %2790 = vmatpush2.msra.mxu0 %v2714
  %2791 = vmatprep.subr.mxu0 0.0
  %2792 = vmatpush2.msra.mxu0 %v2712
  %2793 = vmatprep.subr.mxu0 0.0
  %2794 = vmatpush2.msra.mxu0 %v2702
  %2795 = vmatprep.subr.mxu0 0.0
  %2796 = vmatpush2.msra.mxu0 %v2700
  %2797 = vmatprep.subr.mxu0 0.0
  %2798 = vmatpush2.msra.mxu0 %v2698
  %2799 = vmatprep.subr.mxu0 0.0
  %2800 = vmatpush2.msra.mxu0 %v2696
  %2801 = vmatprep.subr.mxu0 0.0
  %2802 = vmatpush2.msra.mxu0 %v2694
  %2803 = vmatprep.subr.mxu0 0.0
  %2804 = vmatpush2.msra.mxu0 %v2692
  %2805 = vmatprep.subr.mxu0 0.0
  %2806 = vmatpush2.msra.mxu0 %v2690
  %2807 = vmatprep.subr.mxu0 0.0
  %2808 = vmatpush2.msra.mxu0 %v2688
  %2809 = vmatprep.mubr.f32.mxu0 %v223
  %2810 = vmatmul.mubr.f32.gmra.mxu0 %v222
  %v2811 = vpop.f32.mrf.mxu0
  %v2812 = vadd.f32 %v2738, %v2811
  %v2813 = vpop.f32.mrf.mxu0
  %2814 = vmatprep.mubr.f32.mxu0 %v225
  %2815 = vmatmul.mubr.f32.gmra.mxu0 %v224
  %v2816 = vpop.f32.mrf.mxu0
  %v2817 = vadd.f32 %v2743, %v2816
  %v2818 = vpop.f32.mrf.mxu0
  %2819 = vdwg.mxu0
  %v2820 = vmax.f32 %v2812, 0.0
  %v2821 = vmax.f32 %v2817, 0.0
  %2830 = vrot.lane.b32.xlu0 %v2617, 108
  %v2831 = vpop.permute.xlu0 %2830
  %2832 = vrot.lane.b32.xlu0 %v2622, 108
  %v2833 = vpop.permute.xlu0 %2832
  %2834 = vrot.lane.b32.xlu0 %v2627, 108
  %v2835 = vpop.permute.xlu0 %2834
  %2836 = vrot.lane.b32.xlu0 %v2632, 108
  %v2837 = vpop.permute.xlu0 %2836
  %2838 = vrot.lane.b32.xlu0 %v2637, 108
  %v2839 = vpop.permute.xlu0 %2838
  %2840 = vrot.lane.b32.xlu0 %v2642, 108
  %v2841 = vpop.permute.xlu0 %2840
  %2842 = vrot.lane.b32.xlu0 %v2647, 108
  %v2843 = vpop.permute.xlu0 %2842
  %2844 = vrot.lane.b32.xlu0 %v2652, 108
  %v2845 = vpop.permute.xlu0 %2844
  %2854 = vrot.lane.b32.xlu0 %v2617, 88
  %v2855 = vpop.permute.xlu0 %2854
  %2856 = vrot.lane.b32.xlu0 %v2622, 88
  %v2857 = vpop.permute.xlu0 %2856
  %2858 = vrot.lane.b32.xlu0 %v2627, 88
  %v2859 = vpop.permute.xlu0 %2858
  %2860 = vrot.lane.b32.xlu0 %v2632, 88
  %v2861 = vpop.permute.xlu0 %2860
  %2862 = vrot.lane.b32.xlu0 %v2637, 88
  %v2863 = vpop.permute.xlu0 %2862
  %2864 = vrot.lane.b32.xlu0 %v2642, 88
  %v2865 = vpop.permute.xlu0 %2864
  %2866 = vrot.lane.b32.xlu0 %v2647, 88
  %v2867 = vpop.permute.xlu0 %2866
  %2868 = vrot.lane.b32.xlu0 %v2652, 88
  %v2869 = vpop.permute.xlu0 %2868
  %2878 = vrot.lane.b32.xlu0 %v2617, 68
  %v2879 = vpop.permute.xlu0 %2878
  %2880 = vrot.lane.b32.xlu0 %v2622, 68
  %v2881 = vpop.permute.xlu0 %2880
  %2882 = vrot.lane.b32.xlu0 %v2627, 68
  %v2883 = vpop.permute.xlu0 %2882
  %2884 = vrot.lane.b32.xlu0 %v2632, 68
  %v2885 = vpop.permute.xlu0 %2884
  %2886 = vrot.lane.b32.xlu0 %v2637, 68
  %v2887 = vpop.permute.xlu0 %2886
  %2888 = vrot.lane.b32.xlu0 %v2642, 68
  %v2889 = vpop.permute.xlu0 %2888
  %2890 = vrot.lane.b32.xlu0 %v2647, 68
  %v2891 = vpop.permute.xlu0 %2890
  %2892 = vrot.lane.b32.xlu0 %v2652, 68
  %v2893 = vpop.permute.xlu0 %2892
  %2902 = vmatprep.subr.mxu0 0.0
  %2903 = vmatpush1.msra.mxu0 %v2845
  %2904 = vmatprep.subr.mxu0 0.0
  %2905 = vmatpush1.msra.mxu0 %v2843
  %2906 = vmatprep.subr.mxu0 0.0
  %2907 = vmatpush1.msra.mxu0 %v2841
  %2908 = vmatprep.subr.mxu0 0.0
  %2909 = vmatpush1.msra.mxu0 %v2839
  %2910 = vmatprep.subr.mxu0 0.0
  %2911 = vmatpush1.msra.mxu0 %v2837
  %2912 = vmatprep.subr.mxu0 0.0
  %2913 = vmatpush1.msra.mxu0 %v2835
  %2914 = vmatprep.subr.mxu0 0.0
  %2915 = vmatpush1.msra.mxu0 %v2833
  %2916 = vmatprep.subr.mxu0 0.0
  %2917 = vmatpush1.msra.mxu0 %v2831
  %2918 = vmatprep.subr.mxu0 0.0
  %2919 = vmatpush1.msra.mxu0 %v2652
  %2920 = vmatprep.subr.mxu0 0.0
  %2921 = vmatpush1.msra.mxu0 %v2647
  %2922 = vmatprep.subr.mxu0 0.0
  %2923 = vmatpush1.msra.mxu0 %v2642
  %2924 = vmatprep.subr.mxu0 0.0
  %2925 = vmatpush1.msra.mxu0 %v2637
  %2926 = vmatprep.subr.mxu0 0.0
  %2927 = vmatpush1.msra.mxu0 %v2632
  %2928 = vmatprep.subr.mxu0 0.0
  %2929 = vmatpush1.msra.mxu0 %v2627
  %2930 = vmatprep.subr.mxu0 0.0
  %2931 = vmatpush1.msra.mxu0 %v2622
  %2932 = vmatprep.subr.mxu0 0.0
  %2933 = vmatpush1.msra.mxu0 %v2617
  %2934 = vmatprep.subr.mxu0 0.0
  %2935 = vmatpush2.msra.mxu0 %v2893
  %2936 = vmatprep.subr.mxu0 0.0
  %2937 = vmatpush2.msra.mxu0 %v2891
  %2938 = vmatprep.subr.mxu0 0.0
  %2939 = vmatpush2.msra.mxu0 %v2889
  %2940 = vmatprep.subr.mxu0 0.0
  %2941 = vmatpush2.msra.mxu0 %v2887
  %2942 = vmatprep.subr.mxu0 0.0
  %2943 = vmatpush2.msra.mxu0 %v2885
  %2944 = vmatprep.subr.mxu0 0.0
  %2945 = vmatpush2.msra.mxu0 %v2883
  %2946 = vmatprep.subr.mxu0 0.0
  %2947 = vmatpush2.msra.mxu0 %v2881
  %2948 = vmatprep.subr.mxu0 0.0
  %2949 = vmatpush2.msra.mxu0 %v2879
  %2950 = vmatprep.subr.mxu0 0.0
  %2951 = vmatpush2.msra.mxu0 %v2869
  %2952 = vmatprep.subr.mxu0 0.0
  %2953 = vmatpush2.msra.mxu0 %v2867
  %2954 = vmatprep.subr.mxu0 0.0
  %2955 = vmatpush2.msra.mxu0 %v2865
  %2956 = vmatprep.subr.mxu0 0.0
  %2957 = vmatpush2.msra.mxu0 %v2863
  %2958 = vmatprep.subr.mxu0 0.0
  %2959 = vmatpush2.msra.mxu0 %v2861
  %2960 = vmatprep.subr.mxu0 0.0
  %2961 = vmatpush2.msra.mxu0 %v2859
  %2962 = vmatprep.subr.mxu0 0.0
  %2963 = vmatpush2.msra.mxu0 %v2857
  %2964 = vmatprep.subr.mxu0 0.0
  %2965 = vmatpush2.msra.mxu0 %v2855
  %2966 = vmatprep.mubr.f32.mxu0 %v223
  %2967 = vmatmul.mubr.f32.gmra.mxu0 %v222
  %v2968 = vpop.f32.mrf.mxu0
  %v2969 = vadd.f32 %v2738, %v2968
  %v2970 = vpop.f32.mrf.mxu0
  %2971 = vmatprep.mubr.f32.mxu0 %v225
  %2972 = vmatmul.mubr.f32.gmra.mxu0 %v224
  %v2973 = vpop.f32.mrf.mxu0
  %v2974 = vadd.f32 %v2743, %v2973
  %v2975 = vpop.f32.mrf.mxu0
  %2976 = vdwg.mxu0
  %v2977 = vmax.f32 %v2969, 0.0
  %v2978 = vmax.f32 %v2974, 0.0
  %vm2979 = vcmask 162816
  %v2981 = vsel %vm2979, %v2820, 0
  %v2984 = vsel %vm2979, %v2821, 0
  %v2987 = vsel %vm2979, %v2977, 0
  %v2990 = vsel %vm2979, %v2978, 0
  %vm2992 = vcmask 1043456
  %v2994 = vsel %vm2992, %v170, 0
  %2996 = vmatprep.subr.mxu0 0.0
  %2997 = vmatpush1.msra.mxu0 0.0
  %2998 = vmatprep.subr.mxu0 0.0
  %2999 = vmatpush1.msra.mxu0 0.0
  %3000 = vmatprep.subr.mxu0 0.0
  %3001 = vmatpush1.msra.mxu0 0.0
  %3002 = vmatprep.subr.mxu0 0.0
  %3003 = vmatpush1.msra.mxu0 0.0
  %3004 = vmatprep.subr.mxu0 0.0
  %3005 = vmatpush1.msra.mxu0 0.0
  %3006 = vmatprep.subr.mxu0 0.0
  %3007 = vmatpush1.msra.mxu0 0.0
  %3008 = vmatprep.subr.mxu0 0.0
  %3009 = vmatpush1.msra.mxu0 0.0
  %3010 = vmatprep.subr.mxu0 0.0
  %3011 = vmatpush1.msra.mxu0 0.0
  %3012 = vmatprep.subr.mxu0 0.0
  %3013 = vmatpush1.msra.mxu0 0.0
  %3014 = vmatprep.subr.mxu0 0.0
  %3015 = vmatpush1.msra.mxu0 0.0
  %3016 = vmatprep.subr.mxu0 0.0
  %3017 = vmatpush1.msra.mxu0 0.0
  %3018 = vmatprep.subr.mxu0 0.0
  %3019 = vmatpush1.msra.mxu0 0.0
  %3020 = vmatprep.subr.mxu0 0.0
  %3021 = vmatpush1.msra.mxu0 0.0
  %3022 = vmatprep.subr.mxu0 0.0
  %3023 = vmatpush1.msra.mxu0 %v2994
  %3024 = vmatprep.subr.mxu0 0.0
  %3025 = vmatpush1.msra.mxu0 %v169
  %3026 = vmatprep.subr.mxu0 0.0
  %3027 = vmatpush1.msra.mxu0 %v168
  %3028 = vmatprep.subr.mxu0 0.0
  %3029 = vmatpush2.msra.mxu0 0.0
  %3030 = vmatprep.subr.mxu0 0.0
  %3031 = vmatpush2.msra.mxu0 0.0
  %3032 = vmatprep.subr.mxu0 0.0
  %3033 = vmatpush2.msra.mxu0 0.0
  %3034 = vmatprep.subr.mxu0 0.0
  %3035 = vmatpush2.msra.mxu0 0.0
  %3036 = vmatprep.subr.mxu0 0.0
  %3037 = vmatpush2.msra.mxu0 0.0
  %3038 = vmatprep.subr.mxu0 0.0
  %3039 = vmatpush2.msra.mxu0 0.0
  %3040 = vmatprep.subr.mxu0 0.0
  %3041 = vmatpush2.msra.mxu0 0.0
  %3042 = vmatprep.subr.mxu0 0.0
  %3043 = vmatpush2.msra.mxu0 0.0
  %3044 = vmatprep.subr.mxu0 0.0
  %3045 = vmatpush2.msra.mxu0 0.0
  %3046 = vmatprep.subr.mxu0 0.0
  %3047 = vmatpush2.msra.mxu0 0.0
  %3048 = vmatprep.subr.mxu0 0.0
  %3049 = vmatpush2.msra.mxu0 0.0
  %3050 = vmatprep.subr.mxu0 0.0
  %3051 = vmatpush2.msra.mxu0 0.0
  %3052 = vmatprep.subr.mxu0 0.0
  %3053 = vmatpush2.msra.mxu0 0.0
  %3054 = vmatprep.subr.mxu0 0.0
  %3055 = vmatpush2.msra.mxu0 0.0
  %3056 = vmatprep.subr.mxu0 0.0
  %3057 = vmatpush2.msra.mxu0 0.0
  %3058 = vmatprep.subr.mxu0 0.0
  %3059 = vmatpush2.msra.mxu0 0.0
  %3060 = vmatprep.mubr.f32.mxu0 0.0
  %3061 = vmatmul.mubr.f32.gmra.mxu0 %v2981
  %v3062 = vpop.f32.mrf.mxu0
  %v3063 = vadd.f32 0.0, %v3062
  %v3064 = vpop.f32.mrf.mxu0
  %3065 = vmatprep.mubr.f32.mxu0 0.0
  %3066 = vmatmul.mubr.f32.gmra.mxu0 %v2984
  %v3067 = vpop.f32.mrf.mxu0
  %v3068 = vadd.f32 0.0, %v3067
  %v3069 = vpop.f32.mrf.mxu0
  %3070 = vmatprep.mubr.f32.mxu0 0.0
  %3071 = vmatmul.mubr.f32.gmra.mxu0 %v2987
  %v3072 = vpop.f32.mrf.mxu0
  %v3073 = vadd.f32 0.0, %v3072
  %v3074 = vpop.f32.mrf.mxu0
  %3075 = vmatprep.mubr.f32.mxu0 0.0
  %3076 = vmatmul.mubr.f32.gmra.mxu0 %v2990
  %v3077 = vpop.f32.mrf.mxu0
  %v3078 = vadd.f32 0.0, %v3077
  %v3079 = vpop.f32.mrf.mxu0
  %3080 = vdwg.mxu0
  %v3082 = vsel %vm290, %v211, 0
  %v3085 = vsel %vm290, %v212, 0
  %v3088 = vsel %vm290, %v213, 0
  %v3091 = vsel %vm290, %v214, 0
  %v3094 = vsel %vm290, %v215, 0
  %v3097 = vsel %vm290, %v216, 0
  %v3100 = vsel %vm290, %v217, 0
  %v3103 = vsel %vm290, %v218, 0
  %3105 = vmatprep.subr.mxu0 0.0
  %3106 = vmatpush1.msra.mxu0 0.0
  %3107 = vmatprep.subr.mxu0 0.0
  %3108 = vmatpush1.msra.mxu0 0.0
  %3109 = vmatprep.subr.mxu0 0.0
  %3110 = vmatpush1.msra.mxu0 0.0
  %3111 = vmatprep.subr.mxu0 0.0
  %3112 = vmatpush1.msra.mxu0 0.0
  %3113 = vmatprep.subr.mxu0 0.0
  %3114 = vmatpush1.msra.mxu0 0.0
  %3115 = vmatprep.subr.mxu0 0.0
  %3116 = vmatpush1.msra.mxu0 0.0
  %3117 = vmatprep.subr.mxu0 0.0
  %3118 = vmatpush1.msra.mxu0 0.0
  %3119 = vmatprep.subr.mxu0 0.0
  %3120 = vmatpush1.msra.mxu0 0.0
  %3121 = vmatprep.subr.mxu0 0.0
  %3122 = vmatpush1.msra.mxu0 0.0
  %3123 = vmatprep.subr.mxu0 0.0
  %3124 = vmatpush1.msra.mxu0 0.0
  %3125 = vmatprep.subr.mxu0 0.0
  %3126 = vmatpush1.msra.mxu0 0.0
  %3127 = vmatprep.subr.mxu0 0.0
  %3128 = vmatpush1.msra.mxu0 0.0
  %3129 = vmatprep.subr.mxu0 0.0
  %3130 = vmatpush1.msra.mxu0 %v3078
  %3131 = vmatprep.subr.mxu0 0.0
  %3132 = vmatpush1.msra.mxu0 %v3073
  %3133 = vmatprep.subr.mxu0 0.0
  %3134 = vmatpush1.msra.mxu0 %v3068
  %3135 = vmatprep.subr.mxu0 0.0
  %3136 = vmatpush1.msra.mxu0 %v3063
  %3137 = vmatprep.subr.mxu0 0.0
  %3138 = vmatpush2.msra.mxu0 0.0
  %3139 = vmatprep.subr.mxu0 0.0
  %3140 = vmatpush2.msra.mxu0 0.0
  %3141 = vmatprep.subr.mxu0 0.0
  %3142 = vmatpush2.msra.mxu0 0.0
  %3143 = vmatprep.subr.mxu0 0.0
  %3144 = vmatpush2.msra.mxu0 0.0
  %3145 = vmatprep.subr.mxu0 0.0
  %3146 = vmatpush2.msra.mxu0 0.0
  %3147 = vmatprep.subr.mxu0 0.0
  %3148 = vmatpush2.msra.mxu0 0.0
  %3149 = vmatprep.subr.mxu0 0.0
  %3150 = vmatpush2.msra.mxu0 0.0
  %3151 = vmatprep.subr.mxu0 0.0
  %3152 = vmatpush2.msra.mxu0 0.0
  %3153 = vmatprep.subr.mxu0 0.0
  %3154 = vmatpush2.msra.mxu0 0.0
  %3155 = vmatprep.subr.mxu0 0.0
  %3156 = vmatpush2.msra.mxu0 0.0
  %3157 = vmatprep.subr.mxu0 0.0
  %3158 = vmatpush2.msra.mxu0 0.0
  %3159 = vmatprep.subr.mxu0 0.0
  %3160 = vmatpush2.msra.mxu0 0.0
  %3161 = vmatprep.subr.mxu0 0.0
  %3162 = vmatpush2.msra.mxu0 0.0
  %3163 = vmatprep.subr.mxu0 0.0
  %3164 = vmatpush2.msra.mxu0 0.0
  %3165 = vmatprep.subr.mxu0 0.0
  %3166 = vmatpush2.msra.mxu0 0.0
  %3167 = vmatprep.subr.mxu0 0.0
  %3168 = vmatpush2.msra.mxu0 0.0
  %3169 = vmatprep.mubr.f32.mxu0 0.0
  %3170 = vmatmul.mubr.f32.gmra.mxu0 %v3082
  %v3171 = vpop.f32.mrf.mxu0
  %v3172 = vadd.f32 0.0, %v3171
  %v3173 = vpop.f32.mrf.mxu0
  %3174 = vmatprep.mubr.f32.mxu0 0.0
  %3175 = vmatmul.mubr.f32.gmra.mxu0 %v3085
  %v3176 = vpop.f32.mrf.mxu0
  %v3177 = vadd.f32 0.0, %v3176
  %v3178 = vpop.f32.mrf.mxu0
  %3179 = vmatprep.mubr.f32.mxu0 0.0
  %3180 = vmatmul.mubr.f32.gmra.mxu0 %v3088
  %v3181 = vpop.f32.mrf.mxu0
  %v3182 = vadd.f32 0.0, %v3181
  %v3183 = vpop.f32.mrf.mxu0
  %3184 = vmatprep.mubr.f32.mxu0 0.0
  %3185 = vmatmul.mubr.f32.gmra.mxu0 %v3091
  %v3186 = vpop.f32.mrf.mxu0
  %v3187 = vadd.f32 0.0, %v3186
  %v3188 = vpop.f32.mrf.mxu0
  %3189 = vmatprep.mubr.f32.mxu0 0.0
  %3190 = vmatmul.mubr.f32.gmra.mxu0 %v3094
  %v3191 = vpop.f32.mrf.mxu0
  %v3192 = vadd.f32 0.0, %v3191
  %v3193 = vpop.f32.mrf.mxu0
  %3194 = vmatprep.mubr.f32.mxu0 0.0
  %3195 = vmatmul.mubr.f32.gmra.mxu0 %v3097
  %v3196 = vpop.f32.mrf.mxu0
  %v3197 = vadd.f32 0.0, %v3196
  %v3198 = vpop.f32.mrf.mxu0
  %3199 = vmatprep.mubr.f32.mxu0 0.0
  %3200 = vmatmul.mubr.f32.gmra.mxu0 %v3100
  %v3201 = vpop.f32.mrf.mxu0
  %v3202 = vadd.f32 0.0, %v3201
  %v3203 = vpop.f32.mrf.mxu0
  %3204 = vmatprep.mubr.f32.mxu0 0.0
  %3205 = vmatmul.mubr.f32.gmra.mxu0 %v3103
  %v3206 = vpop.f32.mrf.mxu0
  %v3207 = vadd.f32 0.0, %v3206
  %v3208 = vpop.f32.mrf.mxu0
  %3209 = vdwg.mxu0
  %3218 = vrot.lane.b32.xlu0 %v3172, 118
  %v3219 = vpop.permute.xlu0 %3218
  %3220 = vrot.lane.b32.xlu0 %v3177, 118
  %v3221 = vpop.permute.xlu0 %3220
  %3222 = vrot.lane.b32.xlu0 %v3182, 118
  %v3223 = vpop.permute.xlu0 %3222
  %3224 = vrot.lane.b32.xlu0 %v3187, 118
  %v3225 = vpop.permute.xlu0 %3224
  %3226 = vrot.lane.b32.xlu0 %v3192, 118
  %v3227 = vpop.permute.xlu0 %3226
  %3228 = vrot.lane.b32.xlu0 %v3197, 118
  %v3229 = vpop.permute.xlu0 %3228
  %3230 = vrot.lane.b32.xlu0 %v3202, 118
  %v3231 = vpop.permute.xlu0 %3230
  %3232 = vrot.lane.b32.xlu0 %v3207, 118
  %v3233 = vpop.permute.xlu0 %3232
  %3242 = vrot.lane.b32.xlu0 %v3172, 108
  %v3243 = vpop.permute.xlu0 %3242
  %3244 = vrot.lane.b32.xlu0 %v3177, 108
  %v3245 = vpop.permute.xlu0 %3244
  %3246 = vrot.lane.b32.xlu0 %v3182, 108
  %v3247 = vpop.permute.xlu0 %3246
  %3248 = vrot.lane.b32.xlu0 %v3187, 108
  %v3249 = vpop.permute.xlu0 %3248
  %3250 = vrot.lane.b32.xlu0 %v3192, 108
  %v3251 = vpop.permute.xlu0 %3250
  %3252 = vrot.lane.b32.xlu0 %v3197, 108
  %v3253 = vpop.permute.xlu0 %3252
  %3254 = vrot.lane.b32.xlu0 %v3202, 108
  %v3255 = vpop.permute.xlu0 %3254
  %3256 = vrot.lane.b32.xlu0 %v3207, 108
  %v3257 = vpop.permute.xlu0 %3256
  %3266 = vrot.lane.b32.xlu0 %v3172, 98
  %v3267 = vpop.permute.xlu0 %3266
  %3268 = vrot.lane.b32.xlu0 %v3177, 98
  %v3269 = vpop.permute.xlu0 %3268
  %3270 = vrot.lane.b32.xlu0 %v3182, 98
  %v3271 = vpop.permute.xlu0 %3270
  %3272 = vrot.lane.b32.xlu0 %v3187, 98
  %v3273 = vpop.permute.xlu0 %3272
  %3274 = vrot.lane.b32.xlu0 %v3192, 98
  %v3275 = vpop.permute.xlu0 %3274
  %3276 = vrot.lane.b32.xlu0 %v3197, 98
  %v3277 = vpop.permute.xlu0 %3276
  %3278 = vrot.lane.b32.xlu0 %v3202, 98
  %v3279 = vpop.permute.xlu0 %3278
  %3280 = vrot.lane.b32.xlu0 %v3207, 98
  %v3281 = vpop.permute.xlu0 %3280
  %3291 = vset.pattern.permute.xlu0 0
  %3292 = vperm.xlu0 %3291, %v239
  %v3293 = vpop.permute.xlu0 %3292
  %3296 = vset.pattern.permute.xlu0 0
  %3297 = vperm.xlu0 %3296, %v240
  %v3298 = vpop.permute.xlu0 %3297
  %3301 = vset.pattern.permute.xlu0 0
  %3302 = vperm.xlu0 %3301, %v241
  %v3303 = vpop.permute.xlu0 %3302
  %3306 = vset.pattern.permute.xlu0 0
  %3307 = vperm.xlu0 %3306, %v242
  %v3308 = vpop.permute.xlu0 %3307
  %3310 = vmatprep.subr.mxu0 0.0
  %3311 = vmatpush1.msra.mxu0 %v3233
  %3312 = vmatprep.subr.mxu0 0.0
  %3313 = vmatpush1.msra.mxu0 %v3231
  %3314 = vmatprep.subr.mxu0 0.0
  %3315 = vmatpush1.msra.mxu0 %v3229
  %3316 = vmatprep.subr.mxu0 0.0
  %3317 = vmatpush1.msra.mxu0 %v3227
  %3318 = vmatprep.subr.mxu0 0.0
  %3319 = vmatpush1.msra.mxu0 %v3225
  %3320 = vmatprep.subr.mxu0 0.0
  %3321 = vmatpush1.msra.mxu0 %v3223
  %3322 = vmatprep.subr.mxu0 0.0
  %3323 = vmatpush1.msra.mxu0 %v3221
  %3324 = vmatprep.subr.mxu0 0.0
  %3325 = vmatpush1.msra.mxu0 %v3219
  %3326 = vmatprep.subr.mxu0 0.0
  %3327 = vmatpush1.msra.mxu0 %v3207
  %3328 = vmatprep.subr.mxu0 0.0
  %3329 = vmatpush1.msra.mxu0 %v3202
  %3330 = vmatprep.subr.mxu0 0.0
  %3331 = vmatpush1.msra.mxu0 %v3197
  %3332 = vmatprep.subr.mxu0 0.0
  %3333 = vmatpush1.msra.mxu0 %v3192
  %3334 = vmatprep.subr.mxu0 0.0
  %3335 = vmatpush1.msra.mxu0 %v3187
  %3336 = vmatprep.subr.mxu0 0.0
  %3337 = vmatpush1.msra.mxu0 %v3182
  %3338 = vmatprep.subr.mxu0 0.0
  %3339 = vmatpush1.msra.mxu0 %v3177
  %3340 = vmatprep.subr.mxu0 0.0
  %3341 = vmatpush1.msra.mxu0 %v3172
  %3342 = vmatprep.subr.mxu0 0.0
  %3343 = vmatpush2.msra.mxu0 %v3281
  %3344 = vmatprep.subr.mxu0 0.0
  %3345 = vmatpush2.msra.mxu0 %v3279
  %3346 = vmatprep.subr.mxu0 0.0
  %3347 = vmatpush2.msra.mxu0 %v3277
  %3348 = vmatprep.subr.mxu0 0.0
  %3349 = vmatpush2.msra.mxu0 %v3275
  %3350 = vmatprep.subr.mxu0 0.0
  %3351 = vmatpush2.msra.mxu0 %v3273
  %3352 = vmatprep.subr.mxu0 0.0
  %3353 = vmatpush2.msra.mxu0 %v3271
  %3354 = vmatprep.subr.mxu0 0.0
  %3355 = vmatpush2.msra.mxu0 %v3269
  %3356 = vmatprep.subr.mxu0 0.0
  %3357 = vmatpush2.msra.mxu0 %v3267
  %3358 = vmatprep.subr.mxu0 0.0
  %3359 = vmatpush2.msra.mxu0 %v3257
  %3360 = vmatprep.subr.mxu0 0.0
  %3361 = vmatpush2.msra.mxu0 %v3255
  %3362 = vmatprep.subr.mxu0 0.0
  %3363 = vmatpush2.msra.mxu0 %v3253
  %3364 = vmatprep.subr.mxu0 0.0
  %3365 = vmatpush2.msra.mxu0 %v3251
  %3366 = vmatprep.subr.mxu0 0.0
  %3367 = vmatpush2.msra.mxu0 %v3249
  %3368 = vmatprep.subr.mxu0 0.0
  %3369 = vmatpush2.msra.mxu0 %v3247
  %3370 = vmatprep.subr.mxu0 0.0
  %3371 = vmatpush2.msra.mxu0 %v3245
  %3372 = vmatprep.subr.mxu0 0.0
  %3373 = vmatpush2.msra.mxu0 %v3243
  %3374 = vmatprep.mubr.f32.mxu0 %v227
  %3375 = vmatmul.mubr.f32.gmra.mxu0 %v226
  %v3376 = vpop.f32.mrf.mxu0
  %v3377 = vadd.f32 %v3293, %v3376
  %v3378 = vpop.f32.mrf.mxu0
  %3379 = vmatprep.mubr.f32.mxu0 %v229
  %3380 = vmatmul.mubr.f32.gmra.mxu0 %v228
  %v3381 = vpop.f32.mrf.mxu0
  %v3382 = vadd.f32 %v3298, %v3381
  %v3383 = vpop.f32.mrf.mxu0
  %3384 = vmatprep.mubr.f32.mxu0 %v231
  %3385 = vmatmul.mubr.f32.gmra.mxu0 %v230
  %v3386 = vpop.f32.mrf.mxu0
  %v3387 = vadd.f32 %v3303, %v3386
  %v3388 = vpop.f32.mrf.mxu0
  %3389 = vmatprep.mubr.f32.mxu0 %v233
  %3390 = vmatmul.mubr.f32.gmra.mxu0 %v232
  %v3391 = vpop.f32.mrf.mxu0
  %v3392 = vadd.f32 %v3308, %v3391
  %v3393 = vpop.f32.mrf.mxu0
  %3394 = vdwg.mxu0
  %v3395 = vmax.f32 %v3377, 0.0
  %v3396 = vmax.f32 %v3382, 0.0
  %v3397 = vmax.f32 %v3387, 0.0
  %v3398 = vmax.f32 %v3392, 0.0
  %3403 = vrot.lane.b32.xlu0 %v3395, 127
  %v3404 = vpop.permute.xlu0 %3403
  %3405 = vrot.lane.b32.xlu0 %v3396, 127
  %v3406 = vpop.permute.xlu0 %3405
  %3407 = vrot.lane.b32.xlu0 %v3397, 127
  %v3408 = vpop.permute.xlu0 %3407
  %3409 = vrot.lane.b32.xlu0 %v3398, 127
  %v3410 = vpop.permute.xlu0 %3409
  %3415 = vrot.lane.b32.xlu0 %v3395, 126
  %v3416 = vpop.permute.xlu0 %3415
  %3417 = vrot.lane.b32.xlu0 %v3396, 126
  %v3418 = vpop.permute.xlu0 %3417
  %3419 = vrot.lane.b32.xlu0 %v3397, 126
  %v3420 = vpop.permute.xlu0 %3419
  %3421 = vrot.lane.b32.xlu0 %v3398, 126
  %v3422 = vpop.permute.xlu0 %3421
  %3427 = vrot.lane.b32.xlu0 %v3395, 125
  %v3428 = vpop.permute.xlu0 %3427
  %3429 = vrot.lane.b32.xlu0 %v3396, 125
  %v3430 = vpop.permute.xlu0 %3429
  %3431 = vrot.lane.b32.xlu0 %v3397, 125
  %v3432 = vpop.permute.xlu0 %3431
  %3433 = vrot.lane.b32.xlu0 %v3398, 125
  %v3434 = vpop.permute.xlu0 %3433
  %3439 = vrot.lane.b32.xlu0 %v3395, 124
  %v3440 = vpop.permute.xlu0 %3439
  %3441 = vrot.lane.b32.xlu0 %v3396, 124
  %v3442 = vpop.permute.xlu0 %3441
  %3443 = vrot.lane.b32.xlu0 %v3397, 124
  %v3444 = vpop.permute.xlu0 %3443
  %3445 = vrot.lane.b32.xlu0 %v3398, 124
  %v3446 = vpop.permute.xlu0 %3445
  %3451 = vrot.lane.b32.xlu0 %v3395, 123
  %v3452 = vpop.permute.xlu0 %3451
  %3453 = vrot.lane.b32.xlu0 %v3396, 123
  %v3454 = vpop.permute.xlu0 %3453
  %3455 = vrot.lane.b32.xlu0 %v3397, 123
  %v3456 = vpop.permute.xlu0 %3455
  %3457 = vrot.lane.b32.xlu0 %v3398, 123
  %v3458 = vpop.permute.xlu0 %3457
  %3463 = vrot.lane.b32.xlu0 %v3395, 122
  %v3464 = vpop.permute.xlu0 %3463
  %3465 = vrot.lane.b32.xlu0 %v3396, 122
  %v3466 = vpop.permute.xlu0 %3465
  %3467 = vrot.lane.b32.xlu0 %v3397, 122
  %v3468 = vpop.permute.xlu0 %3467
  %3469 = vrot.lane.b32.xlu0 %v3398, 122
  %v3470 = vpop.permute.xlu0 %3469
  %3475 = vrot.lane.b32.xlu0 %v3395, 121
  %v3476 = vpop.permute.xlu0 %3475
  %3477 = vrot.lane.b32.xlu0 %v3396, 121
  %v3478 = vpop.permute.xlu0 %3477
  %3479 = vrot.lane.b32.xlu0 %v3397, 121
  %v3480 = vpop.permute.xlu0 %3479
  %3481 = vrot.lane.b32.xlu0 %v3398, 121
  %v3482 = vpop.permute.xlu0 %3481
  %3487 = vrot.lane.b32.xlu0 %v3395, 120
  %v3488 = vpop.permute.xlu0 %3487
  %3489 = vrot.lane.b32.xlu0 %v3396, 120
  %v3490 = vpop.permute.xlu0 %3489
  %3491 = vrot.lane.b32.xlu0 %v3397, 120
  %v3492 = vpop.permute.xlu0 %3491
  %3493 = vrot.lane.b32.xlu0 %v3398, 120
  %v3494 = vpop.permute.xlu0 %3493
  %3499 = vrot.lane.b32.xlu0 %v3395, 119
  %v3500 = vpop.permute.xlu0 %3499
  %3501 = vrot.lane.b32.xlu0 %v3396, 119
  %v3502 = vpop.permute.xlu0 %3501
  %3503 = vrot.lane.b32.xlu0 %v3397, 119
  %v3504 = vpop.permute.xlu0 %3503
  %3505 = vrot.lane.b32.xlu0 %v3398, 119
  %v3506 = vpop.permute.xlu0 %3505
  %v3512 = vsel %vm1579, %v245, 0
  %v3515 = vsel %vm1579, %v248, 0
  %v3518 = vsel %vm1579, %v251, 0
  %v3521 = vsel %vm1579, %v254, 0
  %3523 = vmatprep.subr.mxu0 0.0
  %3524 = vmatpush1.msra.mxu0 %v3434
  %3525 = vmatprep.subr.mxu0 0.0
  %3526 = vmatpush1.msra.mxu0 %v3432
  %3527 = vmatprep.subr.mxu0 0.0
  %3528 = vmatpush1.msra.mxu0 %v3430
  %3529 = vmatprep.subr.mxu0 0.0
  %3530 = vmatpush1.msra.mxu0 %v3428
  %3531 = vmatprep.subr.mxu0 0.0
  %3532 = vmatpush1.msra.mxu0 %v3422
  %3533 = vmatprep.subr.mxu0 0.0
  %3534 = vmatpush1.msra.mxu0 %v3420
  %3535 = vmatprep.subr.mxu0 0.0
  %3536 = vmatpush1.msra.mxu0 %v3418
  %3537 = vmatprep.subr.mxu0 0.0
  %3538 = vmatpush1.msra.mxu0 %v3416
  %3539 = vmatprep.subr.mxu0 0.0
  %3540 = vmatpush1.msra.mxu0 %v3410
  %3541 = vmatprep.subr.mxu0 0.0
  %3542 = vmatpush1.msra.mxu0 %v3408
  %3543 = vmatprep.subr.mxu0 0.0
  %3544 = vmatpush1.msra.mxu0 %v3406
  %3545 = vmatprep.subr.mxu0 0.0
  %3546 = vmatpush1.msra.mxu0 %v3404
  %3547 = vmatprep.subr.mxu0 0.0
  %3548 = vmatpush1.msra.mxu0 %v3398
  %3549 = vmatprep.subr.mxu0 0.0
  %3550 = vmatpush1.msra.mxu0 %v3397
  %3551 = vmatprep.subr.mxu0 0.0
  %3552 = vmatpush1.msra.mxu0 %v3396
  %3553 = vmatprep.subr.mxu0 0.0
  %3554 = vmatpush1.msra.mxu0 %v3395
  %3555 = vmatprep.subr.mxu0 0.0
  %3556 = vmatpush2.msra.mxu0 %v3482
  %3557 = vmatprep.subr.mxu0 0.0
  %3558 = vmatpush2.msra.mxu0 %v3480
  %3559 = vmatprep.subr.mxu0 0.0
  %3560 = vmatpush2.msra.mxu0 %v3478
  %3561 = vmatprep.subr.mxu0 0.0
  %3562 = vmatpush2.msra.mxu0 %v3476
  %3563 = vmatprep.subr.mxu0 0.0
  %3564 = vmatpush2.msra.mxu0 %v3470
  %3565 = vmatprep.subr.mxu0 0.0
  %3566 = vmatpush2.msra.mxu0 %v3468
  %3567 = vmatprep.subr.mxu0 0.0
  %3568 = vmatpush2.msra.mxu0 %v3466
  %3569 = vmatprep.subr.mxu0 0.0
  %3570 = vmatpush2.msra.mxu0 %v3464
  %3571 = vmatprep.subr.mxu0 0.0
  %3572 = vmatpush2.msra.mxu0 %v3458
  %3573 = vmatprep.subr.mxu0 0.0
  %3574 = vmatpush2.msra.mxu0 %v3456
  %3575 = vmatprep.subr.mxu0 0.0
  %3576 = vmatpush2.msra.mxu0 %v3454
  %3577 = vmatprep.subr.mxu0 0.0
  %3578 = vmatpush2.msra.mxu0 %v3452
  %3579 = vmatprep.subr.mxu0 0.0
  %3580 = vmatpush2.msra.mxu0 %v3446
  %3581 = vmatprep.subr.mxu0 0.0
  %3582 = vmatpush2.msra.mxu0 %v3444
  %3583 = vmatprep.subr.mxu0 0.0
  %3584 = vmatpush2.msra.mxu0 %v3442
  %3585 = vmatprep.subr.mxu0 0.0
  %3586 = vmatpush2.msra.mxu0 %v3440
  %3587 = vmatprep.mubr.f32.mxu0 %v244
  %3588 = vmatmul.mubr.f32.gmra.mxu0 %v243
  %v3589 = vpop.f32.mrf.mxu0
  %v3590 = vadd.f32 %v255, %v3589
  %v3591 = vpop.f32.mrf.mxu0
  %3592 = vmatprep.mubr.f32.mxu0 %v247
  %3593 = vmatmul.mubr.f32.gmra.mxu0 %v246
  %v3594 = vpop.f32.mrf.mxu0
  %v3595 = vadd.f32 %v256, %v3594
  %v3596 = vpop.f32.mrf.mxu0
  %3597 = vmatprep.mubr.f32.mxu0 %v250
  %3598 = vmatmul.mubr.f32.gmra.mxu0 %v249
  %v3599 = vpop.f32.mrf.mxu0
  %v3600 = vadd.f32 %v257, %v3599
  %v3601 = vpop.f32.mrf.mxu0
  %3602 = vmatprep.mubr.f32.mxu0 %v253
  %3603 = vmatmul.mubr.f32.gmra.mxu0 %v252
  %v3604 = vpop.f32.mrf.mxu0
  %v3605 = vadd.f32 %v258, %v3604
  %v3606 = vpop.f32.mrf.mxu0
  %3607 = vdwg.mxu0
  %3608 = vmatprep.subr.mxu0 0.0
  %3609 = vmatpush1.msra.mxu0 0.0
  %3610 = vmatprep.subr.mxu0 0.0
  %3611 = vmatpush1.msra.mxu0 0.0
  %3612 = vmatprep.subr.mxu0 0.0
  %3613 = vmatpush1.msra.mxu0 0.0
  %3614 = vmatprep.subr.mxu0 0.0
  %3615 = vmatpush1.msra.mxu0 0.0
  %3616 = vmatprep.subr.mxu0 0.0
  %3617 = vmatpush1.msra.mxu0 0.0
  %3618 = vmatprep.subr.mxu0 0.0
  %3619 = vmatpush1.msra.mxu0 0.0
  %3620 = vmatprep.subr.mxu0 0.0
  %3621 = vmatpush1.msra.mxu0 0.0
  %3622 = vmatprep.subr.mxu0 0.0
  %3623 = vmatpush1.msra.mxu0 0.0
  %3624 = vmatprep.subr.mxu0 0.0
  %3625 = vmatpush1.msra.mxu0 %v3506
  %3626 = vmatprep.subr.mxu0 0.0
  %3627 = vmatpush1.msra.mxu0 %v3504
  %3628 = vmatprep.subr.mxu0 0.0
  %3629 = vmatpush1.msra.mxu0 %v3502
  %3630 = vmatprep.subr.mxu0 0.0
  %3631 = vmatpush1.msra.mxu0 %v3500
  %3632 = vmatprep.subr.mxu0 0.0
  %3633 = vmatpush1.msra.mxu0 %v3494
  %3634 = vmatprep.subr.mxu0 0.0
  %3635 = vmatpush1.msra.mxu0 %v3492
  %3636 = vmatprep.subr.mxu0 0.0
  %3637 = vmatpush1.msra.mxu0 %v3490
  %3638 = vmatprep.subr.mxu0 0.0
  %3639 = vmatpush1.msra.mxu0 %v3488
  %3640 = vmatprep.subr.mxu0 0.0
  %3641 = vmatpush2.msra.mxu0 0.0
  %3642 = vmatprep.subr.mxu0 0.0
  %3643 = vmatpush2.msra.mxu0 0.0
  %3644 = vmatprep.subr.mxu0 0.0
  %3645 = vmatpush2.msra.mxu0 0.0
  %3646 = vmatprep.subr.mxu0 0.0
  %3647 = vmatpush2.msra.mxu0 0.0
  %3648 = vmatprep.subr.mxu0 0.0
  %3649 = vmatpush2.msra.mxu0 0.0
  %3650 = vmatprep.subr.mxu0 0.0
  %3651 = vmatpush2.msra.mxu0 0.0
  %3652 = vmatprep.subr.mxu0 0.0
  %3653 = vmatpush2.msra.mxu0 0.0
  %3654 = vmatprep.subr.mxu0 0.0
  %3655 = vmatpush2.msra.mxu0 0.0
  %3656 = vmatprep.subr.mxu0 0.0
  %3657 = vmatpush2.msra.mxu0 0.0
  %3658 = vmatprep.subr.mxu0 0.0
  %3659 = vmatpush2.msra.mxu0 0.0
  %3660 = vmatprep.subr.mxu0 0.0
  %3661 = vmatpush2.msra.mxu0 0.0
  %3662 = vmatprep.subr.mxu0 0.0
  %3663 = vmatpush2.msra.mxu0 0.0
  %3664 = vmatprep.subr.mxu0 0.0
  %3665 = vmatpush2.msra.mxu0 0.0
  %3666 = vmatprep.subr.mxu0 0.0
  %3667 = vmatpush2.msra.mxu0 0.0
  %3668 = vmatprep.subr.mxu0 0.0
  %3669 = vmatpush2.msra.mxu0 0.0
  %3670 = vmatprep.subr.mxu0 0.0
  %3671 = vmatpush2.msra.mxu0 0.0
  %3672 = vmatprep.mubr.f32.mxu0 0.0
  %3673 = vmatmul.mubr.f32.gmra.mxu0 %v3512
  %v3674 = vpop.f32.mrf.mxu0
  %v3675 = vadd.f32 %v3590, %v3674
  %v3676 = vpop.f32.mrf.mxu0
  %3677 = vmatprep.mubr.f32.mxu0 0.0
  %3678 = vmatmul.mubr.f32.gmra.mxu0 %v3515
  %v3679 = vpop.f32.mrf.mxu0
  %v3680 = vadd.f32 %v3595, %v3679
  %v3681 = vpop.f32.mrf.mxu0
  %3682 = vmatprep.mubr.f32.mxu0 0.0
  %3683 = vmatmul.mubr.f32.gmra.mxu0 %v3518
  %v3684 = vpop.f32.mrf.mxu0
  %v3685 = vadd.f32 %v3600, %v3684
  %v3686 = vpop.f32.mrf.mxu0
  %3687 = vmatprep.mubr.f32.mxu0 0.0
  %3688 = vmatmul.mubr.f32.gmra.mxu0 %v3521
  %v3689 = vpop.f32.mrf.mxu0
  %v3690 = vadd.f32 %v3605, %v3689
  %v3691 = vpop.f32.mrf.mxu0
  %3692 = vdwg.mxu0
  %v3693 = vmax.f32 %v3675, 0.0
  %v3694 = vmax.f32 %v3680, 0.0
  %v3695 = vmax.f32 %v3685, 0.0
  %v3696 = vmax.f32 %v3690, 0.0
  %vm3697 = vcmask 277504
  %v3699 = vsel %vm3697, %v259, 0
  %v3702 = vsel %vm3697, %v260, 0
  %v3705 = vsel %vm3697, %v261, 0
  %v3708 = vsel %vm3697, %v262, 0
  %vm3710 = vcmask 1041408
  %v3712 = vsel %vm3710, %v289, 0
  %3714 = vmatprep.subr.mxu0 0.0
  %3715 = vmatpush1.msra.mxu0 0.0
  %3716 = vmatprep.subr.mxu0 0.0
  %3717 = vmatpush1.msra.mxu0 0.0
  %3718 = vmatprep.subr.mxu0 0.0
  %3719 = vmatpush1.msra.mxu0 0.0
  %3720 = vmatprep.subr.mxu0 0.0
  %3721 = vmatpush1.msra.mxu0 0.0
  %3722 = vmatprep.subr.mxu0 0.0
  %3723 = vmatpush1.msra.mxu0 0.0
  %3724 = vmatprep.subr.mxu0 0.0
  %3725 = vmatpush1.msra.mxu0 0.0
  %3726 = vmatprep.subr.mxu0 0.0
  %3727 = vmatpush1.msra.mxu0 0.0
  %3728 = vmatprep.subr.mxu0 0.0
  %3729 = vmatpush1.msra.mxu0 0.0
  %3730 = vmatprep.subr.mxu0 0.0
  %3731 = vmatpush1.msra.mxu0 0.0
  %3732 = vmatprep.subr.mxu0 0.0
  %3733 = vmatpush1.msra.mxu0 0.0
  %3734 = vmatprep.subr.mxu0 0.0
  %3735 = vmatpush1.msra.mxu0 0.0
  %3736 = vmatprep.subr.mxu0 0.0
  %3737 = vmatpush1.msra.mxu0 %v3712
  %3738 = vmatprep.subr.mxu0 0.0
  %3739 = vmatpush1.msra.mxu0 %v3696
  %3740 = vmatprep.subr.mxu0 0.0
  %3741 = vmatpush1.msra.mxu0 %v3695
  %3742 = vmatprep.subr.mxu0 0.0
  %3743 = vmatpush1.msra.mxu0 %v3694
  %3744 = vmatprep.subr.mxu0 0.0
  %3745 = vmatpush1.msra.mxu0 %v3693
  %3746 = vmatprep.subr.mxu0 0.0
  %3747 = vmatpush2.msra.mxu0 0.0
  %3748 = vmatprep.subr.mxu0 0.0
  %3749 = vmatpush2.msra.mxu0 0.0
  %3750 = vmatprep.subr.mxu0 0.0
  %3751 = vmatpush2.msra.mxu0 0.0
  %3752 = vmatprep.subr.mxu0 0.0
  %3753 = vmatpush2.msra.mxu0 0.0
  %3754 = vmatprep.subr.mxu0 0.0
  %3755 = vmatpush2.msra.mxu0 0.0
  %3756 = vmatprep.subr.mxu0 0.0
  %3757 = vmatpush2.msra.mxu0 0.0
  %3758 = vmatprep.subr.mxu0 0.0
  %3759 = vmatpush2.msra.mxu0 0.0
  %3760 = vmatprep.subr.mxu0 0.0
  %3761 = vmatpush2.msra.mxu0 0.0
  %3762 = vmatprep.subr.mxu0 0.0
  %3763 = vmatpush2.msra.mxu0 0.0
  %3764 = vmatprep.subr.mxu0 0.0
  %3765 = vmatpush2.msra.mxu0 0.0
  %3766 = vmatprep.subr.mxu0 0.0
  %3767 = vmatpush2.msra.mxu0 0.0
  %3768 = vmatprep.subr.mxu0 0.0
  %3769 = vmatpush2.msra.mxu0 0.0
  %3770 = vmatprep.subr.mxu0 0.0
  %3771 = vmatpush2.msra.mxu0 0.0
  %3772 = vmatprep.subr.mxu0 0.0
  %3773 = vmatpush2.msra.mxu0 0.0
  %3774 = vmatprep.subr.mxu0 0.0
  %3775 = vmatpush2.msra.mxu0 0.0
  %3776 = vmatprep.subr.mxu0 0.0
  %3777 = vmatpush2.msra.mxu0 0.0
  %3778 = vmatprep.mubr.f32.mxu0 0.0
  %3779 = vmatmul.mubr.f32.gmra.mxu0 %v3699
  %v3780 = vpop.f32.mrf.mxu0
  %v3781 = vadd.f32 %v266, %v3780
  %v3782 = vpop.f32.mrf.mxu0
  %3783 = vmatprep.mubr.f32.mxu0 0.0
  %3784 = vmatmul.mubr.f32.gmra.mxu0 %v3702
  %v3785 = vpop.f32.mrf.mxu0
  %v3786 = vadd.f32 %v267, %v3785
  %v3787 = vpop.f32.mrf.mxu0
  %3788 = vmatprep.mubr.f32.mxu0 0.0
  %3789 = vmatmul.mubr.f32.gmra.mxu0 %v3705
  %v3790 = vpop.f32.mrf.mxu0
  %v3791 = vadd.f32 %v268, %v3790
  %v3792 = vpop.f32.mrf.mxu0
  %3793 = vmatprep.mubr.f32.mxu0 0.0
  %3794 = vmatmul.mubr.f32.gmra.mxu0 %v3708
  %v3795 = vpop.f32.mrf.mxu0
  %v3796 = vadd.f32 %v269, %v3795
  %v3797 = vpop.f32.mrf.mxu0
  %3798 = vdwg.mxu0
  %v3799 = vmax.f32 %v3781, 0.0
  %v3800 = vmax.f32 %v3786, 0.0
  %v3801 = vmax.f32 %v3791, 0.0
  %v3802 = vmax.f32 %v3796, 0.0
  %v3804 = vsel %vm290, %v263, 0
  %v3807 = vsel %vm290, %v264, 0
  %3809 = vmatprep.subr.mxu0 0.0
  %3810 = vmatpush1.msra.mxu0 0.0
  %3811 = vmatprep.subr.mxu0 0.0
  %3812 = vmatpush1.msra.mxu0 0.0
  %3813 = vmatprep.subr.mxu0 0.0
  %3814 = vmatpush1.msra.mxu0 0.0
  %3815 = vmatprep.subr.mxu0 0.0
  %3816 = vmatpush1.msra.mxu0 0.0
  %3817 = vmatprep.subr.mxu0 0.0
  %3818 = vmatpush1.msra.mxu0 0.0
  %3819 = vmatprep.subr.mxu0 0.0
  %3820 = vmatpush1.msra.mxu0 0.0
  %3821 = vmatprep.subr.mxu0 0.0
  %3822 = vmatpush1.msra.mxu0 0.0
  %3823 = vmatprep.subr.mxu0 0.0
  %3824 = vmatpush1.msra.mxu0 0.0
  %3825 = vmatprep.subr.mxu0 0.0
  %3826 = vmatpush1.msra.mxu0 0.0
  %3827 = vmatprep.subr.mxu0 0.0
  %3828 = vmatpush1.msra.mxu0 0.0
  %3829 = vmatprep.subr.mxu0 0.0
  %3830 = vmatpush1.msra.mxu0 0.0
  %3831 = vmatprep.subr.mxu0 0.0
  %3832 = vmatpush1.msra.mxu0 0.0
  %3833 = vmatprep.subr.mxu0 0.0
  %3834 = vmatpush1.msra.mxu0 %v3802
  %3835 = vmatprep.subr.mxu0 0.0
  %3836 = vmatpush1.msra.mxu0 %v3801
  %3837 = vmatprep.subr.mxu0 0.0
  %3838 = vmatpush1.msra.mxu0 %v3800
  %3839 = vmatprep.subr.mxu0 0.0
  %3840 = vmatpush1.msra.mxu0 %v3799
  %3841 = vmatprep.subr.mxu0 0.0
  %3842 = vmatpush2.msra.mxu0 0.0
  %3843 = vmatprep.subr.mxu0 0.0
  %3844 = vmatpush2.msra.mxu0 0.0
  %3845 = vmatprep.subr.mxu0 0.0
  %3846 = vmatpush2.msra.mxu0 0.0
  %3847 = vmatprep.subr.mxu0 0.0
  %3848 = vmatpush2.msra.mxu0 0.0
  %3849 = vmatprep.subr.mxu0 0.0
  %3850 = vmatpush2.msra.mxu0 0.0
  %3851 = vmatprep.subr.mxu0 0.0
  %3852 = vmatpush2.msra.mxu0 0.0
  %3853 = vmatprep.subr.mxu0 0.0
  %3854 = vmatpush2.msra.mxu0 0.0
  %3855 = vmatprep.subr.mxu0 0.0
  %3856 = vmatpush2.msra.mxu0 0.0
  %3857 = vmatprep.subr.mxu0 0.0
  %3858 = vmatpush2.msra.mxu0 0.0
  %3859 = vmatprep.subr.mxu0 0.0
  %3860 = vmatpush2.msra.mxu0 0.0
  %3861 = vmatprep.subr.mxu0 0.0
  %3862 = vmatpush2.msra.mxu0 0.0
  %3863 = vmatprep.subr.mxu0 0.0
  %3864 = vmatpush2.msra.mxu0 0.0
  %3865 = vmatprep.subr.mxu0 0.0
  %3866 = vmatpush2.msra.mxu0 0.0
  %3867 = vmatprep.subr.mxu0 0.0
  %3868 = vmatpush2.msra.mxu0 0.0
  %3869 = vmatprep.subr.mxu0 0.0
  %3870 = vmatpush2.msra.mxu0 0.0
  %3871 = vmatprep.subr.mxu0 0.0
  %3872 = vmatpush2.msra.mxu0 0.0
  %3873 = vmatprep.mubr.f32.mxu0 0.0
  %3874 = vmatmul.mubr.f32.gmra.mxu0 %v3804
  %v3875 = vpop.f32.mrf.mxu0
  %v3876 = vadd.f32 %v270, %v3875
  %v3877 = vpop.f32.mrf.mxu0
  %3878 = vmatprep.mubr.f32.mxu0 0.0
  %3879 = vmatmul.mubr.f32.gmra.mxu0 %v3807
  %v3880 = vpop.f32.mrf.mxu0
  %v3881 = vadd.f32 %v271, %v3880
  %v3882 = vpop.f32.mrf.mxu0
  %3883 = vdwg.mxu0
  %v3884 = vmax.f32 %v3876, 0.0
  %v3885 = vmax.f32 %v3881, 0.0
  %v3887 = vsel %vm736, %v265, 0
  %3889 = vmatprep.subr.mxu0 0.0
  %3890 = vmatpush1.msra.mxu0 0.0
  %3891 = vmatprep.subr.mxu0 0.0
  %3892 = vmatpush1.msra.mxu0 0.0
  %3893 = vmatprep.subr.mxu0 0.0
  %3894 = vmatpush1.msra.mxu0 0.0
  %3895 = vmatprep.subr.mxu0 0.0
  %3896 = vmatpush1.msra.mxu0 0.0
  %3897 = vmatprep.subr.mxu0 0.0
  %3898 = vmatpush1.msra.mxu0 0.0
  %3899 = vmatprep.subr.mxu0 0.0
  %3900 = vmatpush1.msra.mxu0 0.0
  %3901 = vmatprep.subr.mxu0 0.0
  %3902 = vmatpush1.msra.mxu0 0.0
  %3903 = vmatprep.subr.mxu0 0.0
  %3904 = vmatpush1.msra.mxu0 0.0
  %3905 = vmatprep.subr.mxu0 0.0
  %3906 = vmatpush1.msra.mxu0 0.0
  %3907 = vmatprep.subr.mxu0 0.0
  %3908 = vmatpush1.msra.mxu0 0.0
  %3909 = vmatprep.subr.mxu0 0.0
  %3910 = vmatpush1.msra.mxu0 0.0
  %3911 = vmatprep.subr.mxu0 0.0
  %3912 = vmatpush1.msra.mxu0 0.0
  %3913 = vmatprep.subr.mxu0 0.0
  %3914 = vmatpush1.msra.mxu0 0.0
  %3915 = vmatprep.subr.mxu0 0.0
  %3916 = vmatpush1.msra.mxu0 0.0
  %3917 = vmatprep.subr.mxu0 0.0
  %3918 = vmatpush1.msra.mxu0 %v3885
  %3919 = vmatprep.subr.mxu0 0.0
  %3920 = vmatpush1.msra.mxu0 %v3884
  %3921 = vmatprep.subr.mxu0 0.0
  %3922 = vmatpush2.msra.mxu0 0.0
  %3923 = vmatprep.subr.mxu0 0.0
  %3924 = vmatpush2.msra.mxu0 0.0
  %3925 = vmatprep.subr.mxu0 0.0
  %3926 = vmatpush2.msra.mxu0 0.0
  %3927 = vmatprep.subr.mxu0 0.0
  %3928 = vmatpush2.msra.mxu0 0.0
  %3929 = vmatprep.subr.mxu0 0.0
  %3930 = vmatpush2.msra.mxu0 0.0
  %3931 = vmatprep.subr.mxu0 0.0
  %3932 = vmatpush2.msra.mxu0 0.0
  %3933 = vmatprep.subr.mxu0 0.0
  %3934 = vmatpush2.msra.mxu0 0.0
  %3935 = vmatprep.subr.mxu0 0.0
  %3936 = vmatpush2.msra.mxu0 0.0
  %3937 = vmatprep.subr.mxu0 0.0
  %3938 = vmatpush2.msra.mxu0 0.0
  %3939 = vmatprep.subr.mxu0 0.0
  %3940 = vmatpush2.msra.mxu0 0.0
  %3941 = vmatprep.subr.mxu0 0.0
  %3942 = vmatpush2.msra.mxu0 0.0
  %3943 = vmatprep.subr.mxu0 0.0
  %3944 = vmatpush2.msra.mxu0 0.0
  %3945 = vmatprep.subr.mxu0 0.0
  %3946 = vmatpush2.msra.mxu0 0.0
  %3947 = vmatprep.subr.mxu0 0.0
  %3948 = vmatpush2.msra.mxu0 0.0
  %3949 = vmatprep.subr.mxu0 0.0
  %3950 = vmatpush2.msra.mxu0 0.0
  %3951 = vmatprep.subr.mxu0 0.0
  %3952 = vmatpush2.msra.mxu0 0.0
  %3953 = vmatprep.mubr.f32.mxu0 0.0
  %3954 = vmatmul.mubr.f32.gmra.mxu0 %v3887
  %v3955 = vpop.f32.mrf.mxu0
  %v3956 = vadd.f32 %v272, %v3955
  %v3957 = vpop.f32.mrf.mxu0
  %3958 = vdwg.mxu0
  %v3960 = vsel %vm290, %v282, 0
  %v3963 = vsel %vm290, %v284, 0
  %v3966 = vsel %vm290, %v286, 0
  %v3969 = vsel %vm290, %v288, 0
  %3971 = vmatprep.subr.mxu0 %v129
  %3972 = vmatpush1.msra.mxu0 %v128
  %3973 = vmatprep.subr.mxu0 %v126
  %3974 = vmatpush1.msra.mxu0 %v125
  %3975 = vmatprep.subr.mxu0 %v123
  %3976 = vmatpush1.msra.mxu0 %v122
  %3977 = vmatprep.subr.mxu0 %v120
  %3978 = vmatpush1.msra.mxu0 %v119
  %3979 = vmatprep.subr.mxu0 %v117
  %3980 = vmatpush1.msra.mxu0 %v116
  %3981 = vmatprep.subr.mxu0 %v114
  %3982 = vmatpush1.msra.mxu0 %v113
  %3983 = vmatprep.subr.mxu0 %v111
  %3984 = vmatpush1.msra.mxu0 %v110
  %3985 = vmatprep.subr.mxu0 %v108
  %3986 = vmatpush1.msra.mxu0 %v107
  %3987 = vmatprep.subr.mxu0 %v105
  %3988 = vmatpush1.msra.mxu0 %v104
  %3989 = vmatprep.subr.mxu0 %v102
  %3990 = vmatpush1.msra.mxu0 %v101
  %3991 = vmatprep.subr.mxu0 %v99
  %3992 = vmatpush1.msra.mxu0 %v98
  %3993 = vmatprep.subr.mxu0 %v96
  %3994 = vmatpush1.msra.mxu0 %v95
  %3995 = vmatprep.subr.mxu0 %v93
  %3996 = vmatpush1.msra.mxu0 %v92
  %3997 = vmatprep.subr.mxu0 %v90
  %3998 = vmatpush1.msra.mxu0 %v89
  %3999 = vmatprep.subr.mxu0 %v87
  %4000 = vmatpush1.msra.mxu0 %v86
  %4001 = vmatprep.subr.mxu0 %v84
  %4002 = vmatpush1.msra.mxu0 %v83
  %4003 = vmatprep.subr.mxu0 0.0
  %4004 = vmatpush2.msra.mxu0 0.0
  %4005 = vmatprep.subr.mxu0 0.0
  %4006 = vmatpush2.msra.mxu0 0.0
  %4007 = vmatprep.subr.mxu0 0.0
  %4008 = vmatpush2.msra.mxu0 0.0
  %4009 = vmatprep.subr.mxu0 0.0
  %4010 = vmatpush2.msra.mxu0 0.0
  %4011 = vmatprep.subr.mxu0 0.0
  %4012 = vmatpush2.msra.mxu0 0.0
  %4013 = vmatprep.subr.mxu0 0.0
  %4014 = vmatpush2.msra.mxu0 0.0
  %4015 = vmatprep.subr.mxu0 0.0
  %4016 = vmatpush2.msra.mxu0 0.0
  %4017 = vmatprep.subr.mxu0 0.0
  %4018 = vmatpush2.msra.mxu0 0.0
  %4019 = vmatprep.subr.mxu0 0.0
  %4020 = vmatpush2.msra.mxu0 0.0
  %4021 = vmatprep.subr.mxu0 0.0
  %4022 = vmatpush2.msra.mxu0 0.0
  %4023 = vmatprep.subr.mxu0 0.0
  %4024 = vmatpush2.msra.mxu0 0.0
  %4025 = vmatprep.subr.mxu0 0.0
  %4026 = vmatpush2.msra.mxu0 0.0
  %4027 = vmatprep.subr.mxu0 %v141
  %4028 = vmatpush2.msra.mxu0 %v140
  %4029 = vmatprep.subr.mxu0 %v138
  %4030 = vmatpush2.msra.mxu0 %v137
  %4031 = vmatprep.subr.mxu0 %v135
  %4032 = vmatpush2.msra.mxu0 %v134
  %4033 = vmatprep.subr.mxu0 %v132
  %4034 = vmatpush2.msra.mxu0 %v131
  %4035 = vmatprep.mubr.f32.mxu0 %v3960
  %4036 = vmatmul.mubr.f32.gmra.mxu0 %v281
  %v4037 = vpop.f32.mrf.mxu0
  %v4038 = vadd.f32 0.0, %v4037
  %v4039 = vpop.f32.mrf.mxu0
  %v4040 = vadd.f32 0.0, %v4039
  %4041 = vmatprep.mubr.f32.mxu0 %v3963
  %4042 = vmatmul.mubr.f32.gmra.mxu0 %v283
  %v4043 = vpop.f32.mrf.mxu0
  %v4044 = vadd.f32 0.0, %v4043
  %v4045 = vpop.f32.mrf.mxu0
  %v4046 = vadd.f32 0.0, %v4045
  %4047 = vmatprep.mubr.f32.mxu0 %v3966
  %4048 = vmatmul.mubr.f32.gmra.mxu0 %v285
  %v4049 = vpop.f32.mrf.mxu0
  %v4050 = vadd.f32 0.0, %v4049
  %v4051 = vpop.f32.mrf.mxu0
  %v4052 = vadd.f32 0.0, %v4051
  %4053 = vmatprep.mubr.f32.mxu0 %v3969
  %4054 = vmatmul.mubr.f32.gmra.mxu0 %v287
  %v4055 = vpop.f32.mrf.mxu0
  %v4056 = vadd.f32 0.0, %v4055
  %v4057 = vpop.f32.mrf.mxu0
  %v4058 = vadd.f32 0.0, %v4057
  %4059 = vdwg.mxu0
  %4060 = vmatprep.subr.mxu0 0.0
  %4061 = vmatpush1.msra.mxu0 %v130
  %4062 = vmatprep.subr.mxu0 0.0
  %4063 = vmatpush1.msra.mxu0 %v127
  %4064 = vmatprep.subr.mxu0 0.0
  %4065 = vmatpush1.msra.mxu0 %v124
  %4066 = vmatprep.subr.mxu0 0.0
  %4067 = vmatpush1.msra.mxu0 %v121
  %4068 = vmatprep.subr.mxu0 0.0
  %4069 = vmatpush1.msra.mxu0 %v118
  %4070 = vmatprep.subr.mxu0 0.0
  %4071 = vmatpush1.msra.mxu0 %v115
  %4072 = vmatprep.subr.mxu0 0.0
  %4073 = vmatpush1.msra.mxu0 %v112
  %4074 = vmatprep.subr.mxu0 0.0
  %4075 = vmatpush1.msra.mxu0 %v109
  %4076 = vmatprep.subr.mxu0 0.0
  %4077 = vmatpush1.msra.mxu0 %v106
  %4078 = vmatprep.subr.mxu0 0.0
  %4079 = vmatpush1.msra.mxu0 %v103
  %4080 = vmatprep.subr.mxu0 0.0
  %4081 = vmatpush1.msra.mxu0 %v100
  %4082 = vmatprep.subr.mxu0 0.0
  %4083 = vmatpush1.msra.mxu0 %v97
  %4084 = vmatprep.subr.mxu0 0.0
  %4085 = vmatpush1.msra.mxu0 %v94
  %4086 = vmatprep.subr.mxu0 0.0
  %4087 = vmatpush1.msra.mxu0 %v91
  %4088 = vmatprep.subr.mxu0 0.0
  %4089 = vmatpush1.msra.mxu0 %v88
  %4090 = vmatprep.subr.mxu0 0.0
  %4091 = vmatpush1.msra.mxu0 %v85
  %4092 = vmatprep.subr.mxu0 0.0
  %4093 = vmatpush2.msra.mxu0 0.0
  %4094 = vmatprep.subr.mxu0 0.0
  %4095 = vmatpush2.msra.mxu0 0.0
  %4096 = vmatprep.subr.mxu0 0.0
  %4097 = vmatpush2.msra.mxu0 0.0
  %4098 = vmatprep.subr.mxu0 0.0
  %4099 = vmatpush2.msra.mxu0 0.0
  %4100 = vmatprep.subr.mxu0 0.0
  %4101 = vmatpush2.msra.mxu0 0.0
  %4102 = vmatprep.subr.mxu0 0.0
  %4103 = vmatpush2.msra.mxu0 0.0
  %4104 = vmatprep.subr.mxu0 0.0
  %4105 = vmatpush2.msra.mxu0 0.0
  %4106 = vmatprep.subr.mxu0 0.0
  %4107 = vmatpush2.msra.mxu0 0.0
  %4108 = vmatprep.subr.mxu0 0.0
  %4109 = vmatpush2.msra.mxu0 0.0
  %4110 = vmatprep.subr.mxu0 0.0
  %4111 = vmatpush2.msra.mxu0 0.0
  %4112 = vmatprep.subr.mxu0 0.0
  %4113 = vmatpush2.msra.mxu0 0.0
  %4114 = vmatprep.subr.mxu0 0.0
  %4115 = vmatpush2.msra.mxu0 0.0
  %4116 = vmatprep.subr.mxu0 0.0
  %4117 = vmatpush2.msra.mxu0 %v142
  %4118 = vmatprep.subr.mxu0 0.0
  %4119 = vmatpush2.msra.mxu0 %v139
  %4120 = vmatprep.subr.mxu0 0.0
  %4121 = vmatpush2.msra.mxu0 %v136
  %4122 = vmatprep.subr.mxu0 0.0
  %4123 = vmatpush2.msra.mxu0 %v133
  %4124 = vmatprep.mubr.f32.mxu0 %v3960
  %4125 = vmatmul.mubr.f32.gmra.mxu0 %v281
  %v4126 = vpop.f32.mrf.mxu0
  %v4127 = vadd.f32 0.0, %v4126
  %v4128 = vpop.f32.mrf.mxu0
  %4129 = vmatprep.mubr.f32.mxu0 %v3963
  %4130 = vmatmul.mubr.f32.gmra.mxu0 %v283
  %v4131 = vpop.f32.mrf.mxu0
  %v4132 = vadd.f32 0.0, %v4131
  %v4133 = vpop.f32.mrf.mxu0
  %4134 = vmatprep.mubr.f32.mxu0 %v3966
  %4135 = vmatmul.mubr.f32.gmra.mxu0 %v285
  %v4136 = vpop.f32.mrf.mxu0
  %v4137 = vadd.f32 0.0, %v4136
  %v4138 = vpop.f32.mrf.mxu0
  %4139 = vmatprep.mubr.f32.mxu0 %v3969
  %4140 = vmatmul.mubr.f32.gmra.mxu0 %v287
  %v4141 = vpop.f32.mrf.mxu0
  %v4142 = vadd.f32 0.0, %v4141
  %v4143 = vpop.f32.mrf.mxu0
  %4144 = vdwg.mxu0
  %4145 = vmatprep.subr.mxu0 0.0
  %4146 = vmatpush1.msra.mxu0 0.0
  %4147 = vmatprep.subr.mxu0 0.0
  %4148 = vmatpush1.msra.mxu0 0.0
  %4149 = vmatprep.subr.mxu0 0.0
  %4150 = vmatpush1.msra.mxu0 0.0
  %4151 = vmatprep.subr.mxu0 0.0
  %4152 = vmatpush1.msra.mxu0 0.0
  %4153 = vmatprep.subr.mxu0 0.0
  %4154 = vmatpush1.msra.mxu0 0.0
  %4155 = vmatprep.subr.mxu0 0.0
  %4156 = vmatpush1.msra.mxu0 0.0
  %4157 = vmatprep.subr.mxu0 0.0
  %4158 = vmatpush1.msra.mxu0 0.0
  %4159 = vmatprep.subr.mxu0 0.0
  %4160 = vmatpush1.msra.mxu0 0.0
  %4161 = vmatprep.subr.mxu0 0.0
  %4162 = vmatpush1.msra.mxu0 0.0
  %4163 = vmatprep.subr.mxu0 0.0
  %4164 = vmatpush1.msra.mxu0 0.0
  %4165 = vmatprep.subr.mxu0 0.0
  %4166 = vmatpush1.msra.mxu0 0.0
  %4167 = vmatprep.subr.mxu0 0.0
  %4168 = vmatpush1.msra.mxu0 0.0
  %4169 = vmatprep.subr.mxu0 %v4058
  %4170 = vmatpush1.msra.mxu0 %v4056
  %4171 = vmatprep.subr.mxu0 %v4052
  %4172 = vmatpush1.msra.mxu0 %v4050
  %4173 = vmatprep.subr.mxu0 %v4046
  %4174 = vmatpush1.msra.mxu0 %v4044
  %4175 = vmatprep.subr.mxu0 %v4040
  %4176 = vmatpush1.msra.mxu0 %v4038
  %4177 = vmatprep.subr.mxu0 0.0
  %4178 = vmatpush2.msra.mxu0 0.0
  %4179 = vmatprep.subr.mxu0 0.0
  %4180 = vmatpush2.msra.mxu0 0.0
  %4181 = vmatprep.subr.mxu0 0.0
  %4182 = vmatpush2.msra.mxu0 0.0
  %4183 = vmatprep.subr.mxu0 0.0
  %4184 = vmatpush2.msra.mxu0 0.0
  %4185 = vmatprep.subr.mxu0 0.0
  %4186 = vmatpush2.msra.mxu0 0.0
  %4187 = vmatprep.subr.mxu0 0.0
  %4188 = vmatpush2.msra.mxu0 0.0
  %4189 = vmatprep.subr.mxu0 0.0
  %4190 = vmatpush2.msra.mxu0 0.0
  %4191 = vmatprep.subr.mxu0 0.0
  %4192 = vmatpush2.msra.mxu0 0.0
  %4193 = vmatprep.subr.mxu0 0.0
  %4194 = vmatpush2.msra.mxu0 0.0
  %4195 = vmatprep.subr.mxu0 0.0
  %4196 = vmatpush2.msra.mxu0 0.0
  %4197 = vmatprep.subr.mxu0 0.0
  %4198 = vmatpush2.msra.mxu0 0.0
  %4199 = vmatprep.subr.mxu0 0.0
  %4200 = vmatpush2.msra.mxu0 0.0
  %4201 = vmatprep.subr.mxu0 0.0
  %4202 = vmatpush2.msra.mxu0 0.0
  %4203 = vmatprep.subr.mxu0 0.0
  %4204 = vmatpush2.msra.mxu0 0.0
  %4205 = vmatprep.subr.mxu0 0.0
  %4206 = vmatpush2.msra.mxu0 0.0
  %4207 = vmatprep.subr.mxu0 0.0
  %4208 = vmatpush2.msra.mxu0 0.0
  %4209 = vmatprep.mubr.f32.mxu0 0.0
  %4210 = vmatmul.mubr.f32.gmra.mxu0 %v478
  %v4211 = vpop.f32.mrf.mxu0
  %v4212 = vadd.f32 0.0, %v4211
  %v4213 = vpop.f32.mrf.mxu0
  %v4214 = vadd.f32 0.0, %v4213
  %4215 = vmatprep.mubr.f32.mxu0 0.0
  %4216 = vmatmul.mubr.f32.gmra.mxu0 %v481
  %v4217 = vpop.f32.mrf.mxu0
  %v4218 = vadd.f32 0.0, %v4217
  %v4219 = vpop.f32.mrf.mxu0
  %v4220 = vadd.f32 0.0, %v4219
  %4221 = vmatprep.mubr.f32.mxu0 0.0
  %4222 = vmatmul.mubr.f32.gmra.mxu0 %v484
  %v4223 = vpop.f32.mrf.mxu0
  %v4224 = vadd.f32 0.0, %v4223
  %v4225 = vpop.f32.mrf.mxu0
  %v4226 = vadd.f32 0.0, %v4225
  %4227 = vmatprep.mubr.f32.mxu0 0.0
  %4228 = vmatmul.mubr.f32.gmra.mxu0 %v487
  %v4229 = vpop.f32.mrf.mxu0
  %v4230 = vadd.f32 0.0, %v4229
  %v4231 = vpop.f32.mrf.mxu0
  %v4232 = vadd.f32 0.0, %v4231
  %4233 = vmatprep.mubr.f32.mxu0 0.0
  %4234 = vmatmul.mubr.f32.gmra.mxu0 %v490
  %v4235 = vpop.f32.mrf.mxu0
  %v4236 = vadd.f32 0.0, %v4235
  %v4237 = vpop.f32.mrf.mxu0
  %v4238 = vadd.f32 0.0, %v4237
  %4239 = vmatprep.mubr.f32.mxu0 0.0
  %4240 = vmatmul.mubr.f32.gmra.mxu0 %v493
  %v4241 = vpop.f32.mrf.mxu0
  %v4242 = vadd.f32 0.0, %v4241
  %v4243 = vpop.f32.mrf.mxu0
  %v4244 = vadd.f32 0.0, %v4243
  %4245 = vmatprep.mubr.f32.mxu0 0.0
  %4246 = vmatmul.mubr.f32.gmra.mxu0 %v496
  %v4247 = vpop.f32.mrf.mxu0
  %v4248 = vadd.f32 0.0, %v4247
  %v4249 = vpop.f32.mrf.mxu0
  %v4250 = vadd.f32 0.0, %v4249
  %4251 = vmatprep.mubr.f32.mxu0 0.0
  %4252 = vmatmul.mubr.f32.gmra.mxu0 %v499
  %v4253 = vpop.f32.mrf.mxu0
  %v4254 = vadd.f32 0.0, %v4253
  %v4255 = vpop.f32.mrf.mxu0
  %v4256 = vadd.f32 0.0, %v4255
  %4257 = vdwg.mxu0
  %4258 = vmatprep.subr.mxu0 0.0
  %4259 = vmatpush1.msra.mxu0 0.0
  %4260 = vmatprep.subr.mxu0 0.0
  %4261 = vmatpush1.msra.mxu0 0.0
  %4262 = vmatprep.subr.mxu0 0.0
  %4263 = vmatpush1.msra.mxu0 0.0
  %4264 = vmatprep.subr.mxu0 0.0
  %4265 = vmatpush1.msra.mxu0 0.0
  %4266 = vmatprep.subr.mxu0 0.0
  %4267 = vmatpush1.msra.mxu0 0.0
  %4268 = vmatprep.subr.mxu0 0.0
  %4269 = vmatpush1.msra.mxu0 0.0
  %4270 = vmatprep.subr.mxu0 0.0
  %4271 = vmatpush1.msra.mxu0 0.0
  %4272 = vmatprep.subr.mxu0 0.0
  %4273 = vmatpush1.msra.mxu0 0.0
  %4274 = vmatprep.subr.mxu0 0.0
  %4275 = vmatpush1.msra.mxu0 0.0
  %4276 = vmatprep.subr.mxu0 0.0
  %4277 = vmatpush1.msra.mxu0 0.0
  %4278 = vmatprep.subr.mxu0 0.0
  %4279 = vmatpush1.msra.mxu0 0.0
  %4280 = vmatprep.subr.mxu0 0.0
  %4281 = vmatpush1.msra.mxu0 0.0
  %4282 = vmatprep.subr.mxu0 0.0
  %4283 = vmatpush1.msra.mxu0 %v4142
  %4284 = vmatprep.subr.mxu0 0.0
  %4285 = vmatpush1.msra.mxu0 %v4137
  %4286 = vmatprep.subr.mxu0 0.0
  %4287 = vmatpush1.msra.mxu0 %v4132
  %4288 = vmatprep.subr.mxu0 0.0
  %4289 = vmatpush1.msra.mxu0 %v4127
  %4290 = vmatprep.subr.mxu0 0.0
  %4291 = vmatpush2.msra.mxu0 0.0
  %4292 = vmatprep.subr.mxu0 0.0
  %4293 = vmatpush2.msra.mxu0 0.0
  %4294 = vmatprep.subr.mxu0 0.0
  %4295 = vmatpush2.msra.mxu0 0.0
  %4296 = vmatprep.subr.mxu0 0.0
  %4297 = vmatpush2.msra.mxu0 0.0
  %4298 = vmatprep.subr.mxu0 0.0
  %4299 = vmatpush2.msra.mxu0 0.0
  %4300 = vmatprep.subr.mxu0 0.0
  %4301 = vmatpush2.msra.mxu0 0.0
  %4302 = vmatprep.subr.mxu0 0.0
  %4303 = vmatpush2.msra.mxu0 0.0
  %4304 = vmatprep.subr.mxu0 0.0
  %4305 = vmatpush2.msra.mxu0 0.0
  %4306 = vmatprep.subr.mxu0 0.0
  %4307 = vmatpush2.msra.mxu0 0.0
  %4308 = vmatprep.subr.mxu0 0.0
  %4309 = vmatpush2.msra.mxu0 0.0
  %4310 = vmatprep.subr.mxu0 0.0
  %4311 = vmatpush2.msra.mxu0 0.0
  %4312 = vmatprep.subr.mxu0 0.0
  %4313 = vmatpush2.msra.mxu0 0.0
  %4314 = vmatprep.subr.mxu0 0.0
  %4315 = vmatpush2.msra.mxu0 0.0
  %4316 = vmatprep.subr.mxu0 0.0
  %4317 = vmatpush2.msra.mxu0 0.0
  %4318 = vmatprep.subr.mxu0 0.0
  %4319 = vmatpush2.msra.mxu0 0.0
  %4320 = vmatprep.subr.mxu0 0.0
  %4321 = vmatpush2.msra.mxu0 0.0
  %4322 = vmatprep.mubr.f32.mxu0 0.0
  %4323 = vmatmul.mubr.f32.gmra.mxu0 %v478
  %v4324 = vpop.f32.mrf.mxu0
  %v4325 = vadd.f32 0.0, %v4324
  %v4326 = vpop.f32.mrf.mxu0
  %4327 = vmatprep.mubr.f32.mxu0 0.0
  %4328 = vmatmul.mubr.f32.gmra.mxu0 %v481
  %v4329 = vpop.f32.mrf.mxu0
  %v4330 = vadd.f32 0.0, %v4329
  %v4331 = vpop.f32.mrf.mxu0
  %4332 = vmatprep.mubr.f32.mxu0 0.0
  %4333 = vmatmul.mubr.f32.gmra.mxu0 %v484
  %v4334 = vpop.f32.mrf.mxu0
  %v4335 = vadd.f32 0.0, %v4334
  %v4336 = vpop.f32.mrf.mxu0
  %4337 = vmatprep.mubr.f32.mxu0 0.0
  %4338 = vmatmul.mubr.f32.gmra.mxu0 %v487
  %v4339 = vpop.f32.mrf.mxu0
  %v4340 = vadd.f32 0.0, %v4339
  %v4341 = vpop.f32.mrf.mxu0
  %4342 = vmatprep.mubr.f32.mxu0 0.0
  %4343 = vmatmul.mubr.f32.gmra.mxu0 %v490
  %v4344 = vpop.f32.mrf.mxu0
  %v4345 = vadd.f32 0.0, %v4344
  %v4346 = vpop.f32.mrf.mxu0
  %4347 = vmatprep.mubr.f32.mxu0 0.0
  %4348 = vmatmul.mubr.f32.gmra.mxu0 %v493
  %v4349 = vpop.f32.mrf.mxu0
  %v4350 = vadd.f32 0.0, %v4349
  %v4351 = vpop.f32.mrf.mxu0
  %4352 = vmatprep.mubr.f32.mxu0 0.0
  %4353 = vmatmul.mubr.f32.gmra.mxu0 %v496
  %v4354 = vpop.f32.mrf.mxu0
  %v4355 = vadd.f32 0.0, %v4354
  %v4356 = vpop.f32.mrf.mxu0
  %4357 = vmatprep.mubr.f32.mxu0 0.0
  %4358 = vmatmul.mubr.f32.gmra.mxu0 %v499
  %v4359 = vpop.f32.mrf.mxu0
  %v4360 = vadd.f32 0.0, %v4359
  %v4361 = vpop.f32.mrf.mxu0
  %4362 = vdwg.mxu0
  %4365 = vrot.lane.b32.xlu0 %v4212, 48
  %v4366 = vpop.permute.xlu0 %4365
  %4367 = vrot.lane.b32.xlu0 %v4214, 48
  %v4368 = vpop.permute.xlu0 %4367
  %v4369 = vsel %vm725, %v4366, %v4368
  %4371 = vrot.lane.b32.xlu0 %v4214, 96
  %v4372 = vpop.permute.xlu0 %4371
  %4375 = vrot.lane.b32.xlu0 %v4214, 16
  %v4376 = vpop.permute.xlu0 %4375
  %4377 = vrot.lane.b32.xlu0 %v4325, 16
  %v4378 = vpop.permute.xlu0 %4377
  %v4379 = vsel %vm736, %v4376, %v4378
  %4381 = vmatprep.subr.mxu0 0.0
  %4382 = vmatpush1.msra.mxu0 0.0
  %4383 = vmatprep.subr.mxu0 0.0
  %4384 = vmatpush1.msra.mxu0 0.0
  %4385 = vmatprep.subr.mxu0 0.0
  %4386 = vmatpush1.msra.mxu0 0.0
  %4387 = vmatprep.subr.mxu0 0.0
  %4388 = vmatpush1.msra.mxu0 0.0
  %4389 = vmatprep.subr.mxu0 0.0
  %4390 = vmatpush1.msra.mxu0 0.0
  %4391 = vmatprep.subr.mxu0 0.0
  %4392 = vmatpush1.msra.mxu0 0.0
  %4393 = vmatprep.subr.mxu0 0.0
  %4394 = vmatpush1.msra.mxu0 0.0
  %4395 = vmatprep.subr.mxu0 0.0
  %4396 = vmatpush1.msra.mxu0 0.0
  %4397 = vmatprep.subr.mxu0 0.0
  %4398 = vmatpush1.msra.mxu0 0.0
  %4399 = vmatprep.subr.mxu0 0.0
  %4400 = vmatpush1.msra.mxu0 0.0
  %4401 = vmatprep.subr.mxu0 0.0
  %4402 = vmatpush1.msra.mxu0 0.0
  %4403 = vmatprep.subr.mxu0 0.0
  %4404 = vmatpush1.msra.mxu0 0.0
  %4405 = vmatprep.subr.mxu0 0.0
  %4406 = vmatpush1.msra.mxu0 %v4379
  %4407 = vmatprep.subr.mxu0 0.0
  %4408 = vmatpush1.msra.mxu0 %v4372
  %4409 = vmatprep.subr.mxu0 0.0
  %4410 = vmatpush1.msra.mxu0 %v4369
  %4411 = vmatprep.subr.mxu0 0.0
  %4412 = vmatpush1.msra.mxu0 %v4212
  %4413 = vmatprep.subr.mxu0 0.0
  %4414 = vmatpush2.msra.mxu0 0.0
  %4415 = vmatprep.subr.mxu0 0.0
  %4416 = vmatpush2.msra.mxu0 0.0
  %4417 = vmatprep.subr.mxu0 0.0
  %4418 = vmatpush2.msra.mxu0 0.0
  %4419 = vmatprep.subr.mxu0 0.0
  %4420 = vmatpush2.msra.mxu0 0.0
  %4421 = vmatprep.subr.mxu0 0.0
  %4422 = vmatpush2.msra.mxu0 0.0
  %4423 = vmatprep.subr.mxu0 0.0
  %4424 = vmatpush2.msra.mxu0 0.0
  %4425 = vmatprep.subr.mxu0 0.0
  %4426 = vmatpush2.msra.mxu0 0.0
  %4427 = vmatprep.subr.mxu0 0.0
  %4428 = vmatpush2.msra.mxu0 0.0
  %4429 = vmatprep.subr.mxu0 0.0
  %4430 = vmatpush2.msra.mxu0 0.0
  %4431 = vmatprep.subr.mxu0 0.0
  %4432 = vmatpush2.msra.mxu0 0.0
  %4433 = vmatprep.subr.mxu0 0.0
  %4434 = vmatpush2.msra.mxu0 0.0
  %4435 = vmatprep.subr.mxu0 0.0
  %4436 = vmatpush2.msra.mxu0 0.0
  %4437 = vmatprep.subr.mxu0 0.0
  %4438 = vmatpush2.msra.mxu0 0.0
  %4439 = vmatprep.subr.mxu0 0.0
  %4440 = vmatpush2.msra.mxu0 0.0
  %4441 = vmatprep.subr.mxu0 0.0
  %4442 = vmatpush2.msra.mxu0 0.0
  %4443 = vmatprep.subr.mxu0 0.0
  %4444 = vmatpush2.msra.mxu0 0.0
  %4445 = vmatprep.mubr.f32.mxu0 0.0
  %4446 = vmatmul.mubr.f32.gmra.mxu0 %v745
  %v4447 = vpop.f32.mrf.mxu0
  %v4448 = vadd.f32 %v742, %v4447
  %v4449 = vpop.f32.mrf.mxu0
  %4450 = vdwg.mxu0
  %v4451 = vmax.f32 %v4448, 0.0
  %4454 = vrot.lane.b32.xlu0 %v4218, 48
  %v4455 = vpop.permute.xlu0 %4454
  %4456 = vrot.lane.b32.xlu0 %v4220, 48
  %v4457 = vpop.permute.xlu0 %4456
  %v4458 = vsel %vm725, %v4455, %v4457
  %4460 = vrot.lane.b32.xlu0 %v4220, 96
  %v4461 = vpop.permute.xlu0 %4460
  %4464 = vrot.lane.b32.xlu0 %v4220, 16
  %v4465 = vpop.permute.xlu0 %4464
  %4466 = vrot.lane.b32.xlu0 %v4330, 16
  %v4467 = vpop.permute.xlu0 %4466
  %v4468 = vsel %vm736, %v4465, %v4467
  %4470 = vmatprep.subr.mxu0 0.0
  %4471 = vmatpush1.msra.mxu0 0.0
  %4472 = vmatprep.subr.mxu0 0.0
  %4473 = vmatpush1.msra.mxu0 0.0
  %4474 = vmatprep.subr.mxu0 0.0
  %4475 = vmatpush1.msra.mxu0 0.0
  %4476 = vmatprep.subr.mxu0 0.0
  %4477 = vmatpush1.msra.mxu0 0.0
  %4478 = vmatprep.subr.mxu0 0.0
  %4479 = vmatpush1.msra.mxu0 0.0
  %4480 = vmatprep.subr.mxu0 0.0
  %4481 = vmatpush1.msra.mxu0 0.0
  %4482 = vmatprep.subr.mxu0 0.0
  %4483 = vmatpush1.msra.mxu0 0.0
  %4484 = vmatprep.subr.mxu0 0.0
  %4485 = vmatpush1.msra.mxu0 0.0
  %4486 = vmatprep.subr.mxu0 0.0
  %4487 = vmatpush1.msra.mxu0 0.0
  %4488 = vmatprep.subr.mxu0 0.0
  %4489 = vmatpush1.msra.mxu0 0.0
  %4490 = vmatprep.subr.mxu0 0.0
  %4491 = vmatpush1.msra.mxu0 0.0
  %4492 = vmatprep.subr.mxu0 0.0
  %4493 = vmatpush1.msra.mxu0 0.0
  %4494 = vmatprep.subr.mxu0 0.0
  %4495 = vmatpush1.msra.mxu0 %v4468
  %4496 = vmatprep.subr.mxu0 0.0
  %4497 = vmatpush1.msra.mxu0 %v4461
  %4498 = vmatprep.subr.mxu0 0.0
  %4499 = vmatpush1.msra.mxu0 %v4458
  %4500 = vmatprep.subr.mxu0 0.0
  %4501 = vmatpush1.msra.mxu0 %v4218
  %4502 = vmatprep.subr.mxu0 0.0
  %4503 = vmatpush2.msra.mxu0 0.0
  %4504 = vmatprep.subr.mxu0 0.0
  %4505 = vmatpush2.msra.mxu0 0.0
  %4506 = vmatprep.subr.mxu0 0.0
  %4507 = vmatpush2.msra.mxu0 0.0
  %4508 = vmatprep.subr.mxu0 0.0
  %4509 = vmatpush2.msra.mxu0 0.0
  %4510 = vmatprep.subr.mxu0 0.0
  %4511 = vmatpush2.msra.mxu0 0.0
  %4512 = vmatprep.subr.mxu0 0.0
  %4513 = vmatpush2.msra.mxu0 0.0
  %4514 = vmatprep.subr.mxu0 0.0
  %4515 = vmatpush2.msra.mxu0 0.0
  %4516 = vmatprep.subr.mxu0 0.0
  %4517 = vmatpush2.msra.mxu0 0.0
  %4518 = vmatprep.subr.mxu0 0.0
  %4519 = vmatpush2.msra.mxu0 0.0
  %4520 = vmatprep.subr.mxu0 0.0
  %4521 = vmatpush2.msra.mxu0 0.0
  %4522 = vmatprep.subr.mxu0 0.0
  %4523 = vmatpush2.msra.mxu0 0.0
  %4524 = vmatprep.subr.mxu0 0.0
  %4525 = vmatpush2.msra.mxu0 0.0
  %4526 = vmatprep.subr.mxu0 0.0
  %4527 = vmatpush2.msra.mxu0 0.0
  %4528 = vmatprep.subr.mxu0 0.0
  %4529 = vmatpush2.msra.mxu0 0.0
  %4530 = vmatprep.subr.mxu0 0.0
  %4531 = vmatpush2.msra.mxu0 0.0
  %4532 = vmatprep.subr.mxu0 0.0
  %4533 = vmatpush2.msra.mxu0 0.0
  %4534 = vmatprep.mubr.f32.mxu0 0.0
  %4535 = vmatmul.mubr.f32.gmra.mxu0 %v745
  %v4536 = vpop.f32.mrf.mxu0
  %v4537 = vadd.f32 %v742, %v4536
  %v4538 = vpop.f32.mrf.mxu0
  %4539 = vdwg.mxu0
  %v4540 = vmax.f32 %v4537, 0.0
  %4543 = vrot.lane.b32.xlu0 %v4224, 48
  %v4544 = vpop.permute.xlu0 %4543
  %4545 = vrot.lane.b32.xlu0 %v4226, 48
  %v4546 = vpop.permute.xlu0 %4545
  %v4547 = vsel %vm725, %v4544, %v4546
  %4549 = vrot.lane.b32.xlu0 %v4226, 96
  %v4550 = vpop.permute.xlu0 %4549
  %4553 = vrot.lane.b32.xlu0 %v4226, 16
  %v4554 = vpop.permute.xlu0 %4553
  %4555 = vrot.lane.b32.xlu0 %v4335, 16
  %v4556 = vpop.permute.xlu0 %4555
  %v4557 = vsel %vm736, %v4554, %v4556
  %4559 = vmatprep.subr.mxu0 0.0
  %4560 = vmatpush1.msra.mxu0 0.0
  %4561 = vmatprep.subr.mxu0 0.0
  %4562 = vmatpush1.msra.mxu0 0.0
  %4563 = vmatprep.subr.mxu0 0.0
  %4564 = vmatpush1.msra.mxu0 0.0
  %4565 = vmatprep.subr.mxu0 0.0
  %4566 = vmatpush1.msra.mxu0 0.0
  %4567 = vmatprep.subr.mxu0 0.0
  %4568 = vmatpush1.msra.mxu0 0.0
  %4569 = vmatprep.subr.mxu0 0.0
  %4570 = vmatpush1.msra.mxu0 0.0
  %4571 = vmatprep.subr.mxu0 0.0
  %4572 = vmatpush1.msra.mxu0 0.0
  %4573 = vmatprep.subr.mxu0 0.0
  %4574 = vmatpush1.msra.mxu0 0.0
  %4575 = vmatprep.subr.mxu0 0.0
  %4576 = vmatpush1.msra.mxu0 0.0
  %4577 = vmatprep.subr.mxu0 0.0
  %4578 = vmatpush1.msra.mxu0 0.0
  %4579 = vmatprep.subr.mxu0 0.0
  %4580 = vmatpush1.msra.mxu0 0.0
  %4581 = vmatprep.subr.mxu0 0.0
  %4582 = vmatpush1.msra.mxu0 0.0
  %4583 = vmatprep.subr.mxu0 0.0
  %4584 = vmatpush1.msra.mxu0 %v4557
  %4585 = vmatprep.subr.mxu0 0.0
  %4586 = vmatpush1.msra.mxu0 %v4550
  %4587 = vmatprep.subr.mxu0 0.0
  %4588 = vmatpush1.msra.mxu0 %v4547
  %4589 = vmatprep.subr.mxu0 0.0
  %4590 = vmatpush1.msra.mxu0 %v4224
  %4591 = vmatprep.subr.mxu0 0.0
  %4592 = vmatpush2.msra.mxu0 0.0
  %4593 = vmatprep.subr.mxu0 0.0
  %4594 = vmatpush2.msra.mxu0 0.0
  %4595 = vmatprep.subr.mxu0 0.0
  %4596 = vmatpush2.msra.mxu0 0.0
  %4597 = vmatprep.subr.mxu0 0.0
  %4598 = vmatpush2.msra.mxu0 0.0
  %4599 = vmatprep.subr.mxu0 0.0
  %4600 = vmatpush2.msra.mxu0 0.0
  %4601 = vmatprep.subr.mxu0 0.0
  %4602 = vmatpush2.msra.mxu0 0.0
  %4603 = vmatprep.subr.mxu0 0.0
  %4604 = vmatpush2.msra.mxu0 0.0
  %4605 = vmatprep.subr.mxu0 0.0
  %4606 = vmatpush2.msra.mxu0 0.0
  %4607 = vmatprep.subr.mxu0 0.0
  %4608 = vmatpush2.msra.mxu0 0.0
  %4609 = vmatprep.subr.mxu0 0.0
  %4610 = vmatpush2.msra.mxu0 0.0
  %4611 = vmatprep.subr.mxu0 0.0
  %4612 = vmatpush2.msra.mxu0 0.0
  %4613 = vmatprep.subr.mxu0 0.0
  %4614 = vmatpush2.msra.mxu0 0.0
  %4615 = vmatprep.subr.mxu0 0.0
  %4616 = vmatpush2.msra.mxu0 0.0
  %4617 = vmatprep.subr.mxu0 0.0
  %4618 = vmatpush2.msra.mxu0 0.0
  %4619 = vmatprep.subr.mxu0 0.0
  %4620 = vmatpush2.msra.mxu0 0.0
  %4621 = vmatprep.subr.mxu0 0.0
  %4622 = vmatpush2.msra.mxu0 0.0
  %4623 = vmatprep.mubr.f32.mxu0 0.0
  %4624 = vmatmul.mubr.f32.gmra.mxu0 %v745
  %v4625 = vpop.f32.mrf.mxu0
  %v4626 = vadd.f32 %v742, %v4625
  %v4627 = vpop.f32.mrf.mxu0
  %4628 = vdwg.mxu0
  %v4629 = vmax.f32 %v4626, 0.0
  %4632 = vrot.lane.b32.xlu0 %v4230, 48
  %v4633 = vpop.permute.xlu0 %4632
  %4634 = vrot.lane.b32.xlu0 %v4232, 48
  %v4635 = vpop.permute.xlu0 %4634
  %v4636 = vsel %vm725, %v4633, %v4635
  %4638 = vrot.lane.b32.xlu0 %v4232, 96
  %v4639 = vpop.permute.xlu0 %4638
  %4642 = vrot.lane.b32.xlu0 %v4232, 16
  %v4643 = vpop.permute.xlu0 %4642
  %4644 = vrot.lane.b32.xlu0 %v4340, 16
  %v4645 = vpop.permute.xlu0 %4644
  %v4646 = vsel %vm736, %v4643, %v4645
  %4648 = vmatprep.subr.mxu0 0.0
  %4649 = vmatpush1.msra.mxu0 0.0
  %4650 = vmatprep.subr.mxu0 0.0
  %4651 = vmatpush1.msra.mxu0 0.0
  %4652 = vmatprep.subr.mxu0 0.0
  %4653 = vmatpush1.msra.mxu0 0.0
  %4654 = vmatprep.subr.mxu0 0.0
  %4655 = vmatpush1.msra.mxu0 0.0
  %4656 = vmatprep.subr.mxu0 0.0
  %4657 = vmatpush1.msra.mxu0 0.0
  %4658 = vmatprep.subr.mxu0 0.0
  %4659 = vmatpush1.msra.mxu0 0.0
  %4660 = vmatprep.subr.mxu0 0.0
  %4661 = vmatpush1.msra.mxu0 0.0
  %4662 = vmatprep.subr.mxu0 0.0
  %4663 = vmatpush1.msra.mxu0 0.0
  %4664 = vmatprep.subr.mxu0 0.0
  %4665 = vmatpush1.msra.mxu0 0.0
  %4666 = vmatprep.subr.mxu0 0.0
  %4667 = vmatpush1.msra.mxu0 0.0
  %4668 = vmatprep.subr.mxu0 0.0
  %4669 = vmatpush1.msra.mxu0 0.0
  %4670 = vmatprep.subr.mxu0 0.0
  %4671 = vmatpush1.msra.mxu0 0.0
  %4672 = vmatprep.subr.mxu0 0.0
  %4673 = vmatpush1.msra.mxu0 %v4646
  %4674 = vmatprep.subr.mxu0 0.0
  %4675 = vmatpush1.msra.mxu0 %v4639
  %4676 = vmatprep.subr.mxu0 0.0
  %4677 = vmatpush1.msra.mxu0 %v4636
  %4678 = vmatprep.subr.mxu0 0.0
  %4679 = vmatpush1.msra.mxu0 %v4230
  %4680 = vmatprep.subr.mxu0 0.0
  %4681 = vmatpush2.msra.mxu0 0.0
  %4682 = vmatprep.subr.mxu0 0.0
  %4683 = vmatpush2.msra.mxu0 0.0
  %4684 = vmatprep.subr.mxu0 0.0
  %4685 = vmatpush2.msra.mxu0 0.0
  %4686 = vmatprep.subr.mxu0 0.0
  %4687 = vmatpush2.msra.mxu0 0.0
  %4688 = vmatprep.subr.mxu0 0.0
  %4689 = vmatpush2.msra.mxu0 0.0
  %4690 = vmatprep.subr.mxu0 0.0
  %4691 = vmatpush2.msra.mxu0 0.0
  %4692 = vmatprep.subr.mxu0 0.0
  %4693 = vmatpush2.msra.mxu0 0.0
  %4694 = vmatprep.subr.mxu0 0.0
  %4695 = vmatpush2.msra.mxu0 0.0
  %4696 = vmatprep.subr.mxu0 0.0
  %4697 = vmatpush2.msra.mxu0 0.0
  %4698 = vmatprep.subr.mxu0 0.0
  %4699 = vmatpush2.msra.mxu0 0.0
  %4700 = vmatprep.subr.mxu0 0.0
  %4701 = vmatpush2.msra.mxu0 0.0
  %4702 = vmatprep.subr.mxu0 0.0
  %4703 = vmatpush2.msra.mxu0 0.0
  %4704 = vmatprep.subr.mxu0 0.0
  %4705 = vmatpush2.msra.mxu0 0.0
  %4706 = vmatprep.subr.mxu0 0.0
  %4707 = vmatpush2.msra.mxu0 0.0
  %4708 = vmatprep.subr.mxu0 0.0
  %4709 = vmatpush2.msra.mxu0 0.0
  %4710 = vmatprep.subr.mxu0 0.0
  %4711 = vmatpush2.msra.mxu0 0.0
  %4712 = vmatprep.mubr.f32.mxu0 0.0
  %4713 = vmatmul.mubr.f32.gmra.mxu0 %v745
  %v4714 = vpop.f32.mrf.mxu0
  %v4715 = vadd.f32 %v742, %v4714
  %v4716 = vpop.f32.mrf.mxu0
  %4717 = vdwg.mxu0
  %v4718 = vmax.f32 %v4715, 0.0
  %4721 = vrot.lane.b32.xlu0 %v4236, 48
  %v4722 = vpop.permute.xlu0 %4721
  %4723 = vrot.lane.b32.xlu0 %v4238, 48
  %v4724 = vpop.permute.xlu0 %4723
  %v4725 = vsel %vm725, %v4722, %v4724
  %4727 = vrot.lane.b32.xlu0 %v4238, 96
  %v4728 = vpop.permute.xlu0 %4727
  %4731 = vrot.lane.b32.xlu0 %v4238, 16
  %v4732 = vpop.permute.xlu0 %4731
  %4733 = vrot.lane.b32.xlu0 %v4345, 16
  %v4734 = vpop.permute.xlu0 %4733
  %v4735 = vsel %vm736, %v4732, %v4734
  %4737 = vmatprep.subr.mxu0 0.0
  %4738 = vmatpush1.msra.mxu0 0.0
  %4739 = vmatprep.subr.mxu0 0.0
  %4740 = vmatpush1.msra.mxu0 0.0
  %4741 = vmatprep.subr.mxu0 0.0
  %4742 = vmatpush1.msra.mxu0 0.0
  %4743 = vmatprep.subr.mxu0 0.0
  %4744 = vmatpush1.msra.mxu0 0.0
  %4745 = vmatprep.subr.mxu0 0.0
  %4746 = vmatpush1.msra.mxu0 0.0
  %4747 = vmatprep.subr.mxu0 0.0
  %4748 = vmatpush1.msra.mxu0 0.0
  %4749 = vmatprep.subr.mxu0 0.0
  %4750 = vmatpush1.msra.mxu0 0.0
  %4751 = vmatprep.subr.mxu0 0.0
  %4752 = vmatpush1.msra.mxu0 0.0
  %4753 = vmatprep.subr.mxu0 0.0
  %4754 = vmatpush1.msra.mxu0 0.0
  %4755 = vmatprep.subr.mxu0 0.0
  %4756 = vmatpush1.msra.mxu0 0.0
  %4757 = vmatprep.subr.mxu0 0.0
  %4758 = vmatpush1.msra.mxu0 0.0
  %4759 = vmatprep.subr.mxu0 0.0
  %4760 = vmatpush1.msra.mxu0 0.0
  %4761 = vmatprep.subr.mxu0 0.0
  %4762 = vmatpush1.msra.mxu0 %v4735
  %4763 = vmatprep.subr.mxu0 0.0
  %4764 = vmatpush1.msra.mxu0 %v4728
  %4765 = vmatprep.subr.mxu0 0.0
  %4766 = vmatpush1.msra.mxu0 %v4725
  %4767 = vmatprep.subr.mxu0 0.0
  %4768 = vmatpush1.msra.mxu0 %v4236
  %4769 = vmatprep.subr.mxu0 0.0
  %4770 = vmatpush2.msra.mxu0 0.0
  %4771 = vmatprep.subr.mxu0 0.0
  %4772 = vmatpush2.msra.mxu0 0.0
  %4773 = vmatprep.subr.mxu0 0.0
  %4774 = vmatpush2.msra.mxu0 0.0
  %4775 = vmatprep.subr.mxu0 0.0
  %4776 = vmatpush2.msra.mxu0 0.0
  %4777 = vmatprep.subr.mxu0 0.0
  %4778 = vmatpush2.msra.mxu0 0.0
  %4779 = vmatprep.subr.mxu0 0.0
  %4780 = vmatpush2.msra.mxu0 0.0
  %4781 = vmatprep.subr.mxu0 0.0
  %4782 = vmatpush2.msra.mxu0 0.0
  %4783 = vmatprep.subr.mxu0 0.0
  %4784 = vmatpush2.msra.mxu0 0.0
  %4785 = vmatprep.subr.mxu0 0.0
  %4786 = vmatpush2.msra.mxu0 0.0
  %4787 = vmatprep.subr.mxu0 0.0
  %4788 = vmatpush2.msra.mxu0 0.0
  %4789 = vmatprep.subr.mxu0 0.0
  %4790 = vmatpush2.msra.mxu0 0.0
  %4791 = vmatprep.subr.mxu0 0.0
  %4792 = vmatpush2.msra.mxu0 0.0
  %4793 = vmatprep.subr.mxu0 0.0
  %4794 = vmatpush2.msra.mxu0 0.0
  %4795 = vmatprep.subr.mxu0 0.0
  %4796 = vmatpush2.msra.mxu0 0.0
  %4797 = vmatprep.subr.mxu0 0.0
  %4798 = vmatpush2.msra.mxu0 0.0
  %4799 = vmatprep.subr.mxu0 0.0
  %4800 = vmatpush2.msra.mxu0 0.0
  %4801 = vmatprep.mubr.f32.mxu0 0.0
  %4802 = vmatmul.mubr.f32.gmra.mxu0 %v745
  %v4803 = vpop.f32.mrf.mxu0
  %v4804 = vadd.f32 %v742, %v4803
  %v4805 = vpop.f32.mrf.mxu0
  %4806 = vdwg.mxu0
  %v4807 = vmax.f32 %v4804, 0.0
  %4810 = vrot.lane.b32.xlu0 %v4242, 48
  %v4811 = vpop.permute.xlu0 %4810
  %4812 = vrot.lane.b32.xlu0 %v4244, 48
  %v4813 = vpop.permute.xlu0 %4812
  %v4814 = vsel %vm725, %v4811, %v4813
  %4816 = vrot.lane.b32.xlu0 %v4244, 96
  %v4817 = vpop.permute.xlu0 %4816
  %4820 = vrot.lane.b32.xlu0 %v4244, 16
  %v4821 = vpop.permute.xlu0 %4820
  %4822 = vrot.lane.b32.xlu0 %v4350, 16
  %v4823 = vpop.permute.xlu0 %4822
  %v4824 = vsel %vm736, %v4821, %v4823
  %4826 = vmatprep.subr.mxu0 0.0
  %4827 = vmatpush1.msra.mxu0 0.0
  %4828 = vmatprep.subr.mxu0 0.0
  %4829 = vmatpush1.msra.mxu0 0.0
  %4830 = vmatprep.subr.mxu0 0.0
  %4831 = vmatpush1.msra.mxu0 0.0
  %4832 = vmatprep.subr.mxu0 0.0
  %4833 = vmatpush1.msra.mxu0 0.0
  %4834 = vmatprep.subr.mxu0 0.0
  %4835 = vmatpush1.msra.mxu0 0.0
  %4836 = vmatprep.subr.mxu0 0.0
  %4837 = vmatpush1.msra.mxu0 0.0
  %4838 = vmatprep.subr.mxu0 0.0
  %4839 = vmatpush1.msra.mxu0 0.0
  %4840 = vmatprep.subr.mxu0 0.0
  %4841 = vmatpush1.msra.mxu0 0.0
  %4842 = vmatprep.subr.mxu0 0.0
  %4843 = vmatpush1.msra.mxu0 0.0
  %4844 = vmatprep.subr.mxu0 0.0
  %4845 = vmatpush1.msra.mxu0 0.0
  %4846 = vmatprep.subr.mxu0 0.0
  %4847 = vmatpush1.msra.mxu0 0.0
  %4848 = vmatprep.subr.mxu0 0.0
  %4849 = vmatpush1.msra.mxu0 0.0
  %4850 = vmatprep.subr.mxu0 0.0
  %4851 = vmatpush1.msra.mxu0 %v4824
  %4852 = vmatprep.subr.mxu0 0.0
  %4853 = vmatpush1.msra.mxu0 %v4817
  %4854 = vmatprep.subr.mxu0 0.0
  %4855 = vmatpush1.msra.mxu0 %v4814
  %4856 = vmatprep.subr.mxu0 0.0
  %4857 = vmatpush1.msra.mxu0 %v4242
  %4858 = vmatprep.subr.mxu0 0.0
  %4859 = vmatpush2.msra.mxu0 0.0
  %4860 = vmatprep.subr.mxu0 0.0
  %4861 = vmatpush2.msra.mxu0 0.0
  %4862 = vmatprep.subr.mxu0 0.0
  %4863 = vmatpush2.msra.mxu0 0.0
  %4864 = vmatprep.subr.mxu0 0.0
  %4865 = vmatpush2.msra.mxu0 0.0
  %4866 = vmatprep.subr.mxu0 0.0
  %4867 = vmatpush2.msra.mxu0 0.0
  %4868 = vmatprep.subr.mxu0 0.0
  %4869 = vmatpush2.msra.mxu0 0.0
  %4870 = vmatprep.subr.mxu0 0.0
  %4871 = vmatpush2.msra.mxu0 0.0
  %4872 = vmatprep.subr.mxu0 0.0
  %4873 = vmatpush2.msra.mxu0 0.0
  %4874 = vmatprep.subr.mxu0 0.0
  %4875 = vmatpush2.msra.mxu0 0.0
  %4876 = vmatprep.subr.mxu0 0.0
  %4877 = vmatpush2.msra.mxu0 0.0
  %4878 = vmatprep.subr.mxu0 0.0
  %4879 = vmatpush2.msra.mxu0 0.0
  %4880 = vmatprep.subr.mxu0 0.0
  %4881 = vmatpush2.msra.mxu0 0.0
  %4882 = vmatprep.subr.mxu0 0.0
  %4883 = vmatpush2.msra.mxu0 0.0
  %4884 = vmatprep.subr.mxu0 0.0
  %4885 = vmatpush2.msra.mxu0 0.0
  %4886 = vmatprep.subr.mxu0 0.0
  %4887 = vmatpush2.msra.mxu0 0.0
  %4888 = vmatprep.subr.mxu0 0.0
  %4889 = vmatpush2.msra.mxu0 0.0
  %4890 = vmatprep.mubr.f32.mxu0 0.0
  %4891 = vmatmul.mubr.f32.gmra.mxu0 %v745
  %v4892 = vpop.f32.mrf.mxu0
  %v4893 = vadd.f32 %v742, %v4892
  %v4894 = vpop.f32.mrf.mxu0
  %4895 = vdwg.mxu0
  %v4896 = vmax.f32 %v4893, 0.0
  %4899 = vrot.lane.b32.xlu0 %v4248, 48
  %v4900 = vpop.permute.xlu0 %4899
  %4901 = vrot.lane.b32.xlu0 %v4250, 48
  %v4902 = vpop.permute.xlu0 %4901
  %v4903 = vsel %vm725, %v4900, %v4902
  %4905 = vrot.lane.b32.xlu0 %v4250, 96
  %v4906 = vpop.permute.xlu0 %4905
  %4909 = vrot.lane.b32.xlu0 %v4250, 16
  %v4910 = vpop.permute.xlu0 %4909
  %4911 = vrot.lane.b32.xlu0 %v4355, 16
  %v4912 = vpop.permute.xlu0 %4911
  %v4913 = vsel %vm736, %v4910, %v4912
  %4915 = vmatprep.subr.mxu0 0.0
  %4916 = vmatpush1.msra.mxu0 0.0
  %4917 = vmatprep.subr.mxu0 0.0
  %4918 = vmatpush1.msra.mxu0 0.0
  %4919 = vmatprep.subr.mxu0 0.0
  %4920 = vmatpush1.msra.mxu0 0.0
  %4921 = vmatprep.subr.mxu0 0.0
  %4922 = vmatpush1.msra.mxu0 0.0
  %4923 = vmatprep.subr.mxu0 0.0
  %4924 = vmatpush1.msra.mxu0 0.0
  %4925 = vmatprep.subr.mxu0 0.0
  %4926 = vmatpush1.msra.mxu0 0.0
  %4927 = vmatprep.subr.mxu0 0.0
  %4928 = vmatpush1.msra.mxu0 0.0
  %4929 = vmatprep.subr.mxu0 0.0
  %4930 = vmatpush1.msra.mxu0 0.0
  %4931 = vmatprep.subr.mxu0 0.0
  %4932 = vmatpush1.msra.mxu0 0.0
  %4933 = vmatprep.subr.mxu0 0.0
  %4934 = vmatpush1.msra.mxu0 0.0
  %4935 = vmatprep.subr.mxu0 0.0
  %4936 = vmatpush1.msra.mxu0 0.0
  %4937 = vmatprep.subr.mxu0 0.0
  %4938 = vmatpush1.msra.mxu0 0.0
  %4939 = vmatprep.subr.mxu0 0.0
  %4940 = vmatpush1.msra.mxu0 %v4913
  %4941 = vmatprep.subr.mxu0 0.0
  %4942 = vmatpush1.msra.mxu0 %v4906
  %4943 = vmatprep.subr.mxu0 0.0
  %4944 = vmatpush1.msra.mxu0 %v4903
  %4945 = vmatprep.subr.mxu0 0.0
  %4946 = vmatpush1.msra.mxu0 %v4248
  %4947 = vmatprep.subr.mxu0 0.0
  %4948 = vmatpush2.msra.mxu0 0.0
  %4949 = vmatprep.subr.mxu0 0.0
  %4950 = vmatpush2.msra.mxu0 0.0
  %4951 = vmatprep.subr.mxu0 0.0
  %4952 = vmatpush2.msra.mxu0 0.0
  %4953 = vmatprep.subr.mxu0 0.0
  %4954 = vmatpush2.msra.mxu0 0.0
  %4955 = vmatprep.subr.mxu0 0.0
  %4956 = vmatpush2.msra.mxu0 0.0
  %4957 = vmatprep.subr.mxu0 0.0
  %4958 = vmatpush2.msra.mxu0 0.0
  %4959 = vmatprep.subr.mxu0 0.0
  %4960 = vmatpush2.msra.mxu0 0.0
  %4961 = vmatprep.subr.mxu0 0.0
  %4962 = vmatpush2.msra.mxu0 0.0
  %4963 = vmatprep.subr.mxu0 0.0
  %4964 = vmatpush2.msra.mxu0 0.0
  %4965 = vmatprep.subr.mxu0 0.0
  %4966 = vmatpush2.msra.mxu0 0.0
  %4967 = vmatprep.subr.mxu0 0.0
  %4968 = vmatpush2.msra.mxu0 0.0
  %4969 = vmatprep.subr.mxu0 0.0
  %4970 = vmatpush2.msra.mxu0 0.0
  %4971 = vmatprep.subr.mxu0 0.0
  %4972 = vmatpush2.msra.mxu0 0.0
  %4973 = vmatprep.subr.mxu0 0.0
  %4974 = vmatpush2.msra.mxu0 0.0
  %4975 = vmatprep.subr.mxu0 0.0
  %4976 = vmatpush2.msra.mxu0 0.0
  %4977 = vmatprep.subr.mxu0 0.0
  %4978 = vmatpush2.msra.mxu0 0.0
  %4979 = vmatprep.mubr.f32.mxu0 0.0
  %4980 = vmatmul.mubr.f32.gmra.mxu0 %v745
  %v4981 = vpop.f32.mrf.mxu0
  %v4982 = vadd.f32 %v742, %v4981
  %v4983 = vpop.f32.mrf.mxu0
  %4984 = vdwg.mxu0
  %v4985 = vmax.f32 %v4982, 0.0
  %4988 = vrot.lane.b32.xlu0 %v4254, 48
  %v4989 = vpop.permute.xlu0 %4988
  %4990 = vrot.lane.b32.xlu0 %v4256, 48
  %v4991 = vpop.permute.xlu0 %4990
  %v4992 = vsel %vm725, %v4989, %v4991
  %4994 = vrot.lane.b32.xlu0 %v4256, 96
  %v4995 = vpop.permute.xlu0 %4994
  %4998 = vrot.lane.b32.xlu0 %v4256, 16
  %v4999 = vpop.permute.xlu0 %4998
  %5000 = vrot.lane.b32.xlu0 %v4360, 16
  %v5001 = vpop.permute.xlu0 %5000
  %v5002 = vsel %vm736, %v4999, %v5001
  %5004 = vmatprep.subr.mxu0 0.0
  %5005 = vmatpush1.msra.mxu0 0.0
  %5006 = vmatprep.subr.mxu0 0.0
  %5007 = vmatpush1.msra.mxu0 0.0
  %5008 = vmatprep.subr.mxu0 0.0
  %5009 = vmatpush1.msra.mxu0 0.0
  %5010 = vmatprep.subr.mxu0 0.0
  %5011 = vmatpush1.msra.mxu0 0.0
  %5012 = vmatprep.subr.mxu0 0.0
  %5013 = vmatpush1.msra.mxu0 0.0
  %5014 = vmatprep.subr.mxu0 0.0
  %5015 = vmatpush1.msra.mxu0 0.0
  %5016 = vmatprep.subr.mxu0 0.0
  %5017 = vmatpush1.msra.mxu0 0.0
  %5018 = vmatprep.subr.mxu0 0.0
  %5019 = vmatpush1.msra.mxu0 0.0
  %5020 = vmatprep.subr.mxu0 0.0
  %5021 = vmatpush1.msra.mxu0 0.0
  %5022 = vmatprep.subr.mxu0 0.0
  %5023 = vmatpush1.msra.mxu0 0.0
  %5024 = vmatprep.subr.mxu0 0.0
  %5025 = vmatpush1.msra.mxu0 0.0
  %5026 = vmatprep.subr.mxu0 0.0
  %5027 = vmatpush1.msra.mxu0 0.0
  %5028 = vmatprep.subr.mxu0 0.0
  %5029 = vmatpush1.msra.mxu0 %v5002
  %5030 = vmatprep.subr.mxu0 0.0
  %5031 = vmatpush1.msra.mxu0 %v4995
  %5032 = vmatprep.subr.mxu0 0.0
  %5033 = vmatpush1.msra.mxu0 %v4992
  %5034 = vmatprep.subr.mxu0 0.0
  %5035 = vmatpush1.msra.mxu0 %v4254
  %5036 = vmatprep.subr.mxu0 0.0
  %5037 = vmatpush2.msra.mxu0 0.0
  %5038 = vmatprep.subr.mxu0 0.0
  %5039 = vmatpush2.msra.mxu0 0.0
  %5040 = vmatprep.subr.mxu0 0.0
  %5041 = vmatpush2.msra.mxu0 0.0
  %5042 = vmatprep.subr.mxu0 0.0
  %5043 = vmatpush2.msra.mxu0 0.0
  %5044 = vmatprep.subr.mxu0 0.0
  %5045 = vmatpush2.msra.mxu0 0.0
  %5046 = vmatprep.subr.mxu0 0.0
  %5047 = vmatpush2.msra.mxu0 0.0
  %5048 = vmatprep.subr.mxu0 0.0
  %5049 = vmatpush2.msra.mxu0 0.0
  %5050 = vmatprep.subr.mxu0 0.0
  %5051 = vmatpush2.msra.mxu0 0.0
  %5052 = vmatprep.subr.mxu0 0.0
  %5053 = vmatpush2.msra.mxu0 0.0
  %5054 = vmatprep.subr.mxu0 0.0
  %5055 = vmatpush2.msra.mxu0 0.0
  %5056 = vmatprep.subr.mxu0 0.0
  %5057 = vmatpush2.msra.mxu0 0.0
  %5058 = vmatprep.subr.mxu0 0.0
  %5059 = vmatpush2.msra.mxu0 0.0
  %5060 = vmatprep.subr.mxu0 0.0
  %5061 = vmatpush2.msra.mxu0 0.0
  %5062 = vmatprep.subr.mxu0 0.0
  %5063 = vmatpush2.msra.mxu0 0.0
  %5064 = vmatprep.subr.mxu0 0.0
  %5065 = vmatpush2.msra.mxu0 0.0
  %5066 = vmatprep.subr.mxu0 0.0
  %5067 = vmatpush2.msra.mxu0 0.0
  %5068 = vmatprep.mubr.f32.mxu0 0.0
  %5069 = vmatmul.mubr.f32.gmra.mxu0 %v745
  %v5070 = vpop.f32.mrf.mxu0
  %v5071 = vadd.f32 %v742, %v5070
  %v5072 = vpop.f32.mrf.mxu0
  %5073 = vdwg.mxu0
  %v5074 = vmax.f32 %v5071, 0.0
  %v5076 = vsel %vm1441, %v4451, 0
  %v5079 = vsel %vm1441, %v4540, 0
  %v5082 = vsel %vm1441, %v4629, 0
  %v5085 = vsel %vm1441, %v4718, 0
  %v5088 = vsel %vm1441, %v4807, 0
  %v5091 = vsel %vm1441, %v4896, 0
  %v5094 = vsel %vm1441, %v4985, 0
  %v5097 = vsel %vm1441, %v5074, 0
  %5099 = vmatprep.subr.mxu0 0.0
  %5100 = vmatpush1.msra.mxu0 0.0
  %5101 = vmatprep.subr.mxu0 0.0
  %5102 = vmatpush1.msra.mxu0 0.0
  %5103 = vmatprep.subr.mxu0 0.0
  %5104 = vmatpush1.msra.mxu0 0.0
  %5105 = vmatprep.subr.mxu0 0.0
  %5106 = vmatpush1.msra.mxu0 0.0
  %5107 = vmatprep.subr.mxu0 0.0
  %5108 = vmatpush1.msra.mxu0 0.0
  %5109 = vmatprep.subr.mxu0 0.0
  %5110 = vmatpush1.msra.mxu0 0.0
  %5111 = vmatprep.subr.mxu0 %v162
  %5112 = vmatpush1.msra.mxu0 %v161
  %5113 = vmatprep.subr.mxu0 %v160
  %5114 = vmatpush1.msra.mxu0 %v159
  %5115 = vmatprep.subr.mxu0 %v158
  %5116 = vmatpush1.msra.mxu0 %v157
  %5117 = vmatprep.subr.mxu0 %v156
  %5118 = vmatpush1.msra.mxu0 %v155
  %5119 = vmatprep.subr.mxu0 %v154
  %5120 = vmatpush1.msra.mxu0 %v153
  %5121 = vmatprep.subr.mxu0 %v152
  %5122 = vmatpush1.msra.mxu0 %v151
  %5123 = vmatprep.subr.mxu0 %v150
  %5124 = vmatpush1.msra.mxu0 %v149
  %5125 = vmatprep.subr.mxu0 %v148
  %5126 = vmatpush1.msra.mxu0 %v147
  %5127 = vmatprep.subr.mxu0 %v146
  %5128 = vmatpush1.msra.mxu0 %v145
  %5129 = vmatprep.subr.mxu0 %v144
  %5130 = vmatpush1.msra.mxu0 %v143
  %5131 = vmatprep.subr.mxu0 0.0
  %5132 = vmatpush2.msra.mxu0 0.0
  %5133 = vmatprep.subr.mxu0 0.0
  %5134 = vmatpush2.msra.mxu0 0.0
  %5135 = vmatprep.subr.mxu0 0.0
  %5136 = vmatpush2.msra.mxu0 0.0
  %5137 = vmatprep.subr.mxu0 0.0
  %5138 = vmatpush2.msra.mxu0 0.0
  %5139 = vmatprep.subr.mxu0 0.0
  %5140 = vmatpush2.msra.mxu0 0.0
  %5141 = vmatprep.subr.mxu0 0.0
  %5142 = vmatpush2.msra.mxu0 0.0
  %5143 = vmatprep.subr.mxu0 0.0
  %5144 = vmatpush2.msra.mxu0 0.0
  %5145 = vmatprep.subr.mxu0 0.0
  %5146 = vmatpush2.msra.mxu0 0.0
  %5147 = vmatprep.subr.mxu0 0.0
  %5148 = vmatpush2.msra.mxu0 0.0
  %5149 = vmatprep.subr.mxu0 0.0
  %5150 = vmatpush2.msra.mxu0 0.0
  %5151 = vmatprep.subr.mxu0 0.0
  %5152 = vmatpush2.msra.mxu0 0.0
  %5153 = vmatprep.subr.mxu0 0.0
  %5154 = vmatpush2.msra.mxu0 0.0
  %5155 = vmatprep.subr.mxu0 0.0
  %5156 = vmatpush2.msra.mxu0 0.0
  %5157 = vmatprep.subr.mxu0 0.0
  %5158 = vmatpush2.msra.mxu0 0.0
  %5159 = vmatprep.subr.mxu0 0.0
  %5160 = vmatpush2.msra.mxu0 0.0
  %5161 = vmatprep.subr.mxu0 0.0
  %5162 = vmatpush2.msra.mxu0 0.0
  %5163 = vmatprep.mubr.f32.mxu0 0.0
  %5164 = vmatmul.mubr.f32.gmra.mxu0 %v5076
  %v5165 = vpop.f32.mrf.mxu0
  %v5166 = vadd.f32 0.0, %v5165
  %v5167 = vpop.f32.mrf.mxu0
  %v5168 = vadd.f32 0.0, %v5167
  %5169 = vmatprep.mubr.f32.mxu0 0.0
  %5170 = vmatmul.mubr.f32.gmra.mxu0 %v5079
  %v5171 = vpop.f32.mrf.mxu0
  %v5172 = vadd.f32 0.0, %v5171
  %v5173 = vpop.f32.mrf.mxu0
  %v5174 = vadd.f32 0.0, %v5173
  %5175 = vmatprep.mubr.f32.mxu0 0.0
  %5176 = vmatmul.mubr.f32.gmra.mxu0 %v5082
  %v5177 = vpop.f32.mrf.mxu0
  %v5178 = vadd.f32 0.0, %v5177
  %v5179 = vpop.f32.mrf.mxu0
  %v5180 = vadd.f32 0.0, %v5179
  %5181 = vmatprep.mubr.f32.mxu0 0.0
  %5182 = vmatmul.mubr.f32.gmra.mxu0 %v5085
  %v5183 = vpop.f32.mrf.mxu0
  %v5184 = vadd.f32 0.0, %v5183
  %v5185 = vpop.f32.mrf.mxu0
  %v5186 = vadd.f32 0.0, %v5185
  %5187 = vmatprep.mubr.f32.mxu0 0.0
  %5188 = vmatmul.mubr.f32.gmra.mxu0 %v5088
  %v5189 = vpop.f32.mrf.mxu0
  %v5190 = vadd.f32 0.0, %v5189
  %v5191 = vpop.f32.mrf.mxu0
  %v5192 = vadd.f32 0.0, %v5191
  %5193 = vmatprep.mubr.f32.mxu0 0.0
  %5194 = vmatmul.mubr.f32.gmra.mxu0 %v5091
  %v5195 = vpop.f32.mrf.mxu0
  %v5196 = vadd.f32 0.0, %v5195
  %v5197 = vpop.f32.mrf.mxu0
  %v5198 = vadd.f32 0.0, %v5197
  %5199 = vmatprep.mubr.f32.mxu0 0.0
  %5200 = vmatmul.mubr.f32.gmra.mxu0 %v5094
  %v5201 = vpop.f32.mrf.mxu0
  %v5202 = vadd.f32 0.0, %v5201
  %v5203 = vpop.f32.mrf.mxu0
  %v5204 = vadd.f32 0.0, %v5203
  %5205 = vmatprep.mubr.f32.mxu0 0.0
  %5206 = vmatmul.mubr.f32.gmra.mxu0 %v5097
  %v5207 = vpop.f32.mrf.mxu0
  %v5208 = vadd.f32 0.0, %v5207
  %v5209 = vpop.f32.mrf.mxu0
  %v5210 = vadd.f32 0.0, %v5209
  %5211 = vdwg.mxu0
  %5212 = vmatprep.subr.mxu0 0.0
  %5213 = vmatpush1.msra.mxu0 0.0
  %5214 = vmatprep.subr.mxu0 0.0
  %5215 = vmatpush1.msra.mxu0 0.0
  %5216 = vmatprep.subr.mxu0 0.0
  %5217 = vmatpush1.msra.mxu0 0.0
  %5218 = vmatprep.subr.mxu0 0.0
  %5219 = vmatpush1.msra.mxu0 0.0
  %5220 = vmatprep.subr.mxu0 0.0
  %5221 = vmatpush1.msra.mxu0 0.0
  %5222 = vmatprep.subr.mxu0 0.0
  %5223 = vmatpush1.msra.mxu0 0.0
  %5224 = vmatprep.subr.mxu0 0.0
  %5225 = vmatpush1.msra.mxu0 0.0
  %5226 = vmatprep.subr.mxu0 0.0
  %5227 = vmatpush1.msra.mxu0 0.0
  %5228 = vmatprep.subr.mxu0 %v5210
  %5229 = vmatpush1.msra.mxu0 %v5208
  %5230 = vmatprep.subr.mxu0 %v5204
  %5231 = vmatpush1.msra.mxu0 %v5202
  %5232 = vmatprep.subr.mxu0 %v5198
  %5233 = vmatpush1.msra.mxu0 %v5196
  %5234 = vmatprep.subr.mxu0 %v5192
  %5235 = vmatpush1.msra.mxu0 %v5190
  %5236 = vmatprep.subr.mxu0 %v5186
  %5237 = vmatpush1.msra.mxu0 %v5184
  %5238 = vmatprep.subr.mxu0 %v5180
  %5239 = vmatpush1.msra.mxu0 %v5178
  %5240 = vmatprep.subr.mxu0 %v5174
  %5241 = vmatpush1.msra.mxu0 %v5172
  %5242 = vmatprep.subr.mxu0 %v5168
  %5243 = vmatpush1.msra.mxu0 %v5166
  %5244 = vmatprep.subr.mxu0 0.0
  %5245 = vmatpush2.msra.mxu0 0.0
  %5246 = vmatprep.subr.mxu0 0.0
  %5247 = vmatpush2.msra.mxu0 0.0
  %5248 = vmatprep.subr.mxu0 0.0
  %5249 = vmatpush2.msra.mxu0 0.0
  %5250 = vmatprep.subr.mxu0 0.0
  %5251 = vmatpush2.msra.mxu0 0.0
  %5252 = vmatprep.subr.mxu0 0.0
  %5253 = vmatpush2.msra.mxu0 0.0
  %5254 = vmatprep.subr.mxu0 0.0
  %5255 = vmatpush2.msra.mxu0 0.0
  %5256 = vmatprep.subr.mxu0 0.0
  %5257 = vmatpush2.msra.mxu0 0.0
  %5258 = vmatprep.subr.mxu0 0.0
  %5259 = vmatpush2.msra.mxu0 0.0
  %5260 = vmatprep.subr.mxu0 0.0
  %5261 = vmatpush2.msra.mxu0 0.0
  %5262 = vmatprep.subr.mxu0 0.0
  %5263 = vmatpush2.msra.mxu0 0.0
  %5264 = vmatprep.subr.mxu0 0.0
  %5265 = vmatpush2.msra.mxu0 0.0
  %5266 = vmatprep.subr.mxu0 0.0
  %5267 = vmatpush2.msra.mxu0 0.0
  %5268 = vmatprep.subr.mxu0 0.0
  %5269 = vmatpush2.msra.mxu0 0.0
  %5270 = vmatprep.subr.mxu0 0.0
  %5271 = vmatpush2.msra.mxu0 0.0
  %5272 = vmatprep.subr.mxu0 0.0
  %5273 = vmatpush2.msra.mxu0 0.0
  %5274 = vmatprep.subr.mxu0 0.0
  %5275 = vmatpush2.msra.mxu0 0.0
  %5276 = vmatprep.mubr.f32.mxu0 0.0
  %5277 = vmatmul.mubr.f32.gmra.mxu0 %v1581
  %v5278 = vpop.f32.mrf.mxu0
  %v5279 = vadd.f32 0.0, %v5278
  %v5280 = vpop.f32.mrf.mxu0
  %v5281 = vadd.f32 0.0, %v5280
  %5282 = vmatprep.mubr.f32.mxu0 0.0
  %5283 = vmatmul.mubr.f32.gmra.mxu0 %v1584
  %v5284 = vpop.f32.mrf.mxu0
  %v5285 = vadd.f32 0.0, %v5284
  %v5286 = vpop.f32.mrf.mxu0
  %v5287 = vadd.f32 0.0, %v5286
  %5288 = vmatprep.mubr.f32.mxu0 0.0
  %5289 = vmatmul.mubr.f32.gmra.mxu0 %v1587
  %v5290 = vpop.f32.mrf.mxu0
  %v5291 = vadd.f32 0.0, %v5290
  %v5292 = vpop.f32.mrf.mxu0
  %v5293 = vadd.f32 0.0, %v5292
  %5294 = vmatprep.mubr.f32.mxu0 0.0
  %5295 = vmatmul.mubr.f32.gmra.mxu0 %v1590
  %v5296 = vpop.f32.mrf.mxu0
  %v5297 = vadd.f32 0.0, %v5296
  %v5298 = vpop.f32.mrf.mxu0
  %v5299 = vadd.f32 0.0, %v5298
  %5300 = vmatprep.mubr.f32.mxu0 0.0
  %5301 = vmatmul.mubr.f32.gmra.mxu0 %v1593
  %v5302 = vpop.f32.mrf.mxu0
  %v5303 = vadd.f32 0.0, %v5302
  %v5304 = vpop.f32.mrf.mxu0
  %v5305 = vadd.f32 0.0, %v5304
  %5306 = vmatprep.mubr.f32.mxu0 0.0
  %5307 = vmatmul.mubr.f32.gmra.mxu0 %v1596
  %v5308 = vpop.f32.mrf.mxu0
  %v5309 = vadd.f32 0.0, %v5308
  %v5310 = vpop.f32.mrf.mxu0
  %v5311 = vadd.f32 0.0, %v5310
  %5312 = vmatprep.mubr.f32.mxu0 0.0
  %5313 = vmatmul.mubr.f32.gmra.mxu0 %v1599
  %v5314 = vpop.f32.mrf.mxu0
  %v5315 = vadd.f32 0.0, %v5314
  %v5316 = vpop.f32.mrf.mxu0
  %v5317 = vadd.f32 0.0, %v5316
  %5318 = vmatprep.mubr.f32.mxu0 0.0
  %5319 = vmatmul.mubr.f32.gmra.mxu0 %v1602
  %v5320 = vpop.f32.mrf.mxu0
  %v5321 = vadd.f32 0.0, %v5320
  %v5322 = vpop.f32.mrf.mxu0
  %v5323 = vadd.f32 0.0, %v5322
  %5324 = vmatprep.mubr.f32.mxu0 0.0
  %5325 = vmatmul.mubr.f32.gmra.mxu0 %v1605
  %v5326 = vpop.f32.mrf.mxu0
  %v5327 = vadd.f32 0.0, %v5326
  %v5328 = vpop.f32.mrf.mxu0
  %v5329 = vadd.f32 0.0, %v5328
  %5330 = vmatprep.mubr.f32.mxu0 0.0
  %5331 = vmatmul.mubr.f32.gmra.mxu0 %v1608
  %v5332 = vpop.f32.mrf.mxu0
  %v5333 = vadd.f32 0.0, %v5332
  %v5334 = vpop.f32.mrf.mxu0
  %v5335 = vadd.f32 0.0, %v5334
  %5336 = vmatprep.mubr.f32.mxu0 0.0
  %5337 = vmatmul.mubr.f32.gmra.mxu0 %v1611
  %v5338 = vpop.f32.mrf.mxu0
  %v5339 = vadd.f32 0.0, %v5338
  %v5340 = vpop.f32.mrf.mxu0
  %v5341 = vadd.f32 0.0, %v5340
  %5342 = vmatprep.mubr.f32.mxu0 0.0
  %5343 = vmatmul.mubr.f32.gmra.mxu0 %v1614
  %v5344 = vpop.f32.mrf.mxu0
  %v5345 = vadd.f32 0.0, %v5344
  %v5346 = vpop.f32.mrf.mxu0
  %v5347 = vadd.f32 0.0, %v5346
  %5348 = vmatprep.mubr.f32.mxu0 0.0
  %5349 = vmatmul.mubr.f32.gmra.mxu0 %v1617
  %v5350 = vpop.f32.mrf.mxu0
  %v5351 = vadd.f32 0.0, %v5350
  %v5352 = vpop.f32.mrf.mxu0
  %v5353 = vadd.f32 0.0, %v5352
  %5354 = vmatprep.mubr.f32.mxu0 0.0
  %5355 = vmatmul.mubr.f32.gmra.mxu0 %v1620
  %v5356 = vpop.f32.mrf.mxu0
  %v5357 = vadd.f32 0.0, %v5356
  %v5358 = vpop.f32.mrf.mxu0
  %v5359 = vadd.f32 0.0, %v5358
  %5360 = vmatprep.mubr.f32.mxu0 0.0
  %5361 = vmatmul.mubr.f32.gmra.mxu0 %v1623
  %v5362 = vpop.f32.mrf.mxu0
  %v5363 = vadd.f32 0.0, %v5362
  %v5364 = vpop.f32.mrf.mxu0
  %v5365 = vadd.f32 0.0, %v5364
  %5366 = vmatprep.mubr.f32.mxu0 0.0
  %5367 = vmatmul.mubr.f32.gmra.mxu0 %v1626
  %v5368 = vpop.f32.mrf.mxu0
  %v5369 = vadd.f32 0.0, %v5368
  %v5370 = vpop.f32.mrf.mxu0
  %v5371 = vadd.f32 0.0, %v5370
  %5372 = vdwg.mxu0
  %5377 = vrot.lane.b32.xlu0 %v5279, 88
  %v5378 = vpop.permute.xlu0 %5377
  %5379 = vrot.lane.b32.xlu0 %v5285, 88
  %v5380 = vpop.permute.xlu0 %5379
  %5381 = vrot.lane.b32.xlu0 %v5291, 88
  %v5382 = vpop.permute.xlu0 %5381
  %5383 = vrot.lane.b32.xlu0 %v5297, 88
  %v5384 = vpop.permute.xlu0 %5383
  %5389 = vrot.lane.b32.xlu0 %v5279, 48
  %v5390 = vpop.permute.xlu0 %5389
  %5391 = vrot.lane.b32.xlu0 %v5285, 48
  %v5392 = vpop.permute.xlu0 %5391
  %5393 = vrot.lane.b32.xlu0 %v5291, 48
  %v5394 = vpop.permute.xlu0 %5393
  %5395 = vrot.lane.b32.xlu0 %v5297, 48
  %v5396 = vpop.permute.xlu0 %5395
  %5405 = vrot.lane.b32.xlu0 %v5279, 8
  %v5406 = vpop.permute.xlu0 %5405
  %5407 = vrot.lane.b32.xlu0 %v5281, 8
  %v5408 = vpop.permute.xlu0 %5407
  %5409 = vrot.lane.b32.xlu0 %v5285, 8
  %v5410 = vpop.permute.xlu0 %5409
  %5411 = vrot.lane.b32.xlu0 %v5287, 8
  %v5412 = vpop.permute.xlu0 %5411
  %5413 = vrot.lane.b32.xlu0 %v5291, 8
  %v5414 = vpop.permute.xlu0 %5413
  %5415 = vrot.lane.b32.xlu0 %v5293, 8
  %v5416 = vpop.permute.xlu0 %5415
  %5417 = vrot.lane.b32.xlu0 %v5297, 8
  %v5418 = vpop.permute.xlu0 %5417
  %5419 = vrot.lane.b32.xlu0 %v5299, 8
  %v5420 = vpop.permute.xlu0 %5419
  %v5421 = vsel %vm1837, %v5406, %v5408
  %v5422 = vsel %vm1837, %v5410, %v5412
  %v5423 = vsel %vm1837, %v5414, %v5416
  %v5424 = vsel %vm1837, %v5418, %v5420
  %5429 = vmatprep.subr.mxu0 0.0
  %5430 = vmatpush1.msra.mxu0 %v5424
  %5431 = vmatprep.subr.mxu0 0.0
  %5432 = vmatpush1.msra.mxu0 %v5423
  %5433 = vmatprep.subr.mxu0 0.0
  %5434 = vmatpush1.msra.mxu0 %v5422
  %5435 = vmatprep.subr.mxu0 0.0
  %5436 = vmatpush1.msra.mxu0 %v5421
  %5437 = vmatprep.subr.mxu0 0.0
  %5438 = vmatpush1.msra.mxu0 %v5396
  %5439 = vmatprep.subr.mxu0 0.0
  %5440 = vmatpush1.msra.mxu0 %v5394
  %5441 = vmatprep.subr.mxu0 0.0
  %5442 = vmatpush1.msra.mxu0 %v5392
  %5443 = vmatprep.subr.mxu0 0.0
  %5444 = vmatpush1.msra.mxu0 %v5390
  %5445 = vmatprep.subr.mxu0 0.0
  %5446 = vmatpush1.msra.mxu0 %v5384
  %5447 = vmatprep.subr.mxu0 0.0
  %5448 = vmatpush1.msra.mxu0 %v5382
  %5449 = vmatprep.subr.mxu0 0.0
  %5450 = vmatpush1.msra.mxu0 %v5380
  %5451 = vmatprep.subr.mxu0 0.0
  %5452 = vmatpush1.msra.mxu0 %v5378
  %5453 = vmatprep.subr.mxu0 0.0
  %5454 = vmatpush1.msra.mxu0 %v5297
  %5455 = vmatprep.subr.mxu0 0.0
  %5456 = vmatpush1.msra.mxu0 %v5291
  %5457 = vmatprep.subr.mxu0 0.0
  %5458 = vmatpush1.msra.mxu0 %v5285
  %5459 = vmatprep.subr.mxu0 0.0
  %5460 = vmatpush1.msra.mxu0 %v5279
  %5461 = vmatprep.subr.mxu0 0.0
  %5462 = vmatpush2.msra.mxu0 0.0
  %5463 = vmatprep.subr.mxu0 0.0
  %5464 = vmatpush2.msra.mxu0 0.0
  %5465 = vmatprep.subr.mxu0 0.0
  %5466 = vmatpush2.msra.mxu0 0.0
  %5467 = vmatprep.subr.mxu0 0.0
  %5468 = vmatpush2.msra.mxu0 0.0
  %5469 = vmatprep.subr.mxu0 0.0
  %5470 = vmatpush2.msra.mxu0 0.0
  %5471 = vmatprep.subr.mxu0 0.0
  %5472 = vmatpush2.msra.mxu0 0.0
  %5473 = vmatprep.subr.mxu0 0.0
  %5474 = vmatpush2.msra.mxu0 0.0
  %5475 = vmatprep.subr.mxu0 0.0
  %5476 = vmatpush2.msra.mxu0 0.0
  %5477 = vmatprep.subr.mxu0 0.0
  %5478 = vmatpush2.msra.mxu0 0.0
  %5479 = vmatprep.subr.mxu0 0.0
  %5480 = vmatpush2.msra.mxu0 0.0
  %5481 = vmatprep.subr.mxu0 0.0
  %5482 = vmatpush2.msra.mxu0 0.0
  %5483 = vmatprep.subr.mxu0 0.0
  %5484 = vmatpush2.msra.mxu0 0.0
  %5485 = vmatprep.subr.mxu0 0.0
  %5486 = vmatpush2.msra.mxu0 0.0
  %5487 = vmatprep.subr.mxu0 0.0
  %5488 = vmatpush2.msra.mxu0 0.0
  %5489 = vmatprep.subr.mxu0 0.0
  %5490 = vmatpush2.msra.mxu0 0.0
  %5491 = vmatprep.subr.mxu0 0.0
  %5492 = vmatpush2.msra.mxu0 0.0
  %5493 = vmatprep.mubr.f32.mxu0 0.0
  %5494 = vmatmul.mubr.f32.gmra.mxu0 %v220
  %v5495 = vpop.f32.mrf.mxu0
  %v5496 = vadd.f32 %v1849, %v5495
  %v5497 = vpop.f32.mrf.mxu0
  %5498 = vmatprep.mubr.f32.mxu0 0.0
  %5499 = vmatmul.mubr.f32.gmra.mxu0 %v221
  %v5500 = vpop.f32.mrf.mxu0
  %v5501 = vadd.f32 %v1854, %v5500
  %v5502 = vpop.f32.mrf.mxu0
  %5503 = vdwg.mxu0
  %v5504 = vmax.f32 %v5496, 0.0
  %v5505 = vmax.f32 %v5501, 0.0
  %5510 = vrot.lane.b32.xlu0 %v5303, 88
  %v5511 = vpop.permute.xlu0 %5510
  %5512 = vrot.lane.b32.xlu0 %v5309, 88
  %v5513 = vpop.permute.xlu0 %5512
  %5514 = vrot.lane.b32.xlu0 %v5315, 88
  %v5515 = vpop.permute.xlu0 %5514
  %5516 = vrot.lane.b32.xlu0 %v5321, 88
  %v5517 = vpop.permute.xlu0 %5516
  %5522 = vrot.lane.b32.xlu0 %v5303, 48
  %v5523 = vpop.permute.xlu0 %5522
  %5524 = vrot.lane.b32.xlu0 %v5309, 48
  %v5525 = vpop.permute.xlu0 %5524
  %5526 = vrot.lane.b32.xlu0 %v5315, 48
  %v5527 = vpop.permute.xlu0 %5526
  %5528 = vrot.lane.b32.xlu0 %v5321, 48
  %v5529 = vpop.permute.xlu0 %5528
  %5538 = vrot.lane.b32.xlu0 %v5303, 8
  %v5539 = vpop.permute.xlu0 %5538
  %5540 = vrot.lane.b32.xlu0 %v5305, 8
  %v5541 = vpop.permute.xlu0 %5540
  %5542 = vrot.lane.b32.xlu0 %v5309, 8
  %v5543 = vpop.permute.xlu0 %5542
  %5544 = vrot.lane.b32.xlu0 %v5311, 8
  %v5545 = vpop.permute.xlu0 %5544
  %5546 = vrot.lane.b32.xlu0 %v5315, 8
  %v5547 = vpop.permute.xlu0 %5546
  %5548 = vrot.lane.b32.xlu0 %v5317, 8
  %v5549 = vpop.permute.xlu0 %5548
  %5550 = vrot.lane.b32.xlu0 %v5321, 8
  %v5551 = vpop.permute.xlu0 %5550
  %5552 = vrot.lane.b32.xlu0 %v5323, 8
  %v5553 = vpop.permute.xlu0 %5552
  %v5554 = vsel %vm1837, %v5539, %v5541
  %v5555 = vsel %vm1837, %v5543, %v5545
  %v5556 = vsel %vm1837, %v5547, %v5549
  %v5557 = vsel %vm1837, %v5551, %v5553
  %5562 = vmatprep.subr.mxu0 0.0
  %5563 = vmatpush1.msra.mxu0 %v5557
  %5564 = vmatprep.subr.mxu0 0.0
  %5565 = vmatpush1.msra.mxu0 %v5556
  %5566 = vmatprep.subr.mxu0 0.0
  %5567 = vmatpush1.msra.mxu0 %v5555
  %5568 = vmatprep.subr.mxu0 0.0
  %5569 = vmatpush1.msra.mxu0 %v5554
  %5570 = vmatprep.subr.mxu0 0.0
  %5571 = vmatpush1.msra.mxu0 %v5529
  %5572 = vmatprep.subr.mxu0 0.0
  %5573 = vmatpush1.msra.mxu0 %v5527
  %5574 = vmatprep.subr.mxu0 0.0
  %5575 = vmatpush1.msra.mxu0 %v5525
  %5576 = vmatprep.subr.mxu0 0.0
  %5577 = vmatpush1.msra.mxu0 %v5523
  %5578 = vmatprep.subr.mxu0 0.0
  %5579 = vmatpush1.msra.mxu0 %v5517
  %5580 = vmatprep.subr.mxu0 0.0
  %5581 = vmatpush1.msra.mxu0 %v5515
  %5582 = vmatprep.subr.mxu0 0.0
  %5583 = vmatpush1.msra.mxu0 %v5513
  %5584 = vmatprep.subr.mxu0 0.0
  %5585 = vmatpush1.msra.mxu0 %v5511
  %5586 = vmatprep.subr.mxu0 0.0
  %5587 = vmatpush1.msra.mxu0 %v5321
  %5588 = vmatprep.subr.mxu0 0.0
  %5589 = vmatpush1.msra.mxu0 %v5315
  %5590 = vmatprep.subr.mxu0 0.0
  %5591 = vmatpush1.msra.mxu0 %v5309
  %5592 = vmatprep.subr.mxu0 0.0
  %5593 = vmatpush1.msra.mxu0 %v5303
  %5594 = vmatprep.subr.mxu0 0.0
  %5595 = vmatpush2.msra.mxu0 0.0
  %5596 = vmatprep.subr.mxu0 0.0
  %5597 = vmatpush2.msra.mxu0 0.0
  %5598 = vmatprep.subr.mxu0 0.0
  %5599 = vmatpush2.msra.mxu0 0.0
  %5600 = vmatprep.subr.mxu0 0.0
  %5601 = vmatpush2.msra.mxu0 0.0
  %5602 = vmatprep.subr.mxu0 0.0
  %5603 = vmatpush2.msra.mxu0 0.0
  %5604 = vmatprep.subr.mxu0 0.0
  %5605 = vmatpush2.msra.mxu0 0.0
  %5606 = vmatprep.subr.mxu0 0.0
  %5607 = vmatpush2.msra.mxu0 0.0
  %5608 = vmatprep.subr.mxu0 0.0
  %5609 = vmatpush2.msra.mxu0 0.0
  %5610 = vmatprep.subr.mxu0 0.0
  %5611 = vmatpush2.msra.mxu0 0.0
  %5612 = vmatprep.subr.mxu0 0.0
  %5613 = vmatpush2.msra.mxu0 0.0
  %5614 = vmatprep.subr.mxu0 0.0
  %5615 = vmatpush2.msra.mxu0 0.0
  %5616 = vmatprep.subr.mxu0 0.0
  %5617 = vmatpush2.msra.mxu0 0.0
  %5618 = vmatprep.subr.mxu0 0.0
  %5619 = vmatpush2.msra.mxu0 0.0
  %5620 = vmatprep.subr.mxu0 0.0
  %5621 = vmatpush2.msra.mxu0 0.0
  %5622 = vmatprep.subr.mxu0 0.0
  %5623 = vmatpush2.msra.mxu0 0.0
  %5624 = vmatprep.subr.mxu0 0.0
  %5625 = vmatpush2.msra.mxu0 0.0
  %5626 = vmatprep.mubr.f32.mxu0 0.0
  %5627 = vmatmul.mubr.f32.gmra.mxu0 %v220
  %v5628 = vpop.f32.mrf.mxu0
  %v5629 = vadd.f32 %v1849, %v5628
  %v5630 = vpop.f32.mrf.mxu0
  %5631 = vmatprep.mubr.f32.mxu0 0.0
  %5632 = vmatmul.mubr.f32.gmra.mxu0 %v221
  %v5633 = vpop.f32.mrf.mxu0
  %v5634 = vadd.f32 %v1854, %v5633
  %v5635 = vpop.f32.mrf.mxu0
  %5636 = vdwg.mxu0
  %v5637 = vmax.f32 %v5629, 0.0
  %v5638 = vmax.f32 %v5634, 0.0
  %5643 = vrot.lane.b32.xlu0 %v5327, 88
  %v5644 = vpop.permute.xlu0 %5643
  %5645 = vrot.lane.b32.xlu0 %v5333, 88
  %v5646 = vpop.permute.xlu0 %5645
  %5647 = vrot.lane.b32.xlu0 %v5339, 88
  %v5648 = vpop.permute.xlu0 %5647
  %5649 = vrot.lane.b32.xlu0 %v5345, 88
  %v5650 = vpop.permute.xlu0 %5649
  %5655 = vrot.lane.b32.xlu0 %v5327, 48
  %v5656 = vpop.permute.xlu0 %5655
  %5657 = vrot.lane.b32.xlu0 %v5333, 48
  %v5658 = vpop.permute.xlu0 %5657
  %5659 = vrot.lane.b32.xlu0 %v5339, 48
  %v5660 = vpop.permute.xlu0 %5659
  %5661 = vrot.lane.b32.xlu0 %v5345, 48
  %v5662 = vpop.permute.xlu0 %5661
  %5671 = vrot.lane.b32.xlu0 %v5327, 8
  %v5672 = vpop.permute.xlu0 %5671
  %5673 = vrot.lane.b32.xlu0 %v5329, 8
  %v5674 = vpop.permute.xlu0 %5673
  %5675 = vrot.lane.b32.xlu0 %v5333, 8
  %v5676 = vpop.permute.xlu0 %5675
  %5677 = vrot.lane.b32.xlu0 %v5335, 8
  %v5678 = vpop.permute.xlu0 %5677
  %5679 = vrot.lane.b32.xlu0 %v5339, 8
  %v5680 = vpop.permute.xlu0 %5679
  %5681 = vrot.lane.b32.xlu0 %v5341, 8
  %v5682 = vpop.permute.xlu0 %5681
  %5683 = vrot.lane.b32.xlu0 %v5345, 8
  %v5684 = vpop.permute.xlu0 %5683
  %5685 = vrot.lane.b32.xlu0 %v5347, 8
  %v5686 = vpop.permute.xlu0 %5685
  %v5687 = vsel %vm1837, %v5672, %v5674
  %v5688 = vsel %vm1837, %v5676, %v5678
  %v5689 = vsel %vm1837, %v5680, %v5682
  %v5690 = vsel %vm1837, %v5684, %v5686
  %5695 = vmatprep.subr.mxu0 0.0
  %5696 = vmatpush1.msra.mxu0 %v5690
  %5697 = vmatprep.subr.mxu0 0.0
  %5698 = vmatpush1.msra.mxu0 %v5689
  %5699 = vmatprep.subr.mxu0 0.0
  %5700 = vmatpush1.msra.mxu0 %v5688
  %5701 = vmatprep.subr.mxu0 0.0
  %5702 = vmatpush1.msra.mxu0 %v5687
  %5703 = vmatprep.subr.mxu0 0.0
  %5704 = vmatpush1.msra.mxu0 %v5662
  %5705 = vmatprep.subr.mxu0 0.0
  %5706 = vmatpush1.msra.mxu0 %v5660
  %5707 = vmatprep.subr.mxu0 0.0
  %5708 = vmatpush1.msra.mxu0 %v5658
  %5709 = vmatprep.subr.mxu0 0.0
  %5710 = vmatpush1.msra.mxu0 %v5656
  %5711 = vmatprep.subr.mxu0 0.0
  %5712 = vmatpush1.msra.mxu0 %v5650
  %5713 = vmatprep.subr.mxu0 0.0
  %5714 = vmatpush1.msra.mxu0 %v5648
  %5715 = vmatprep.subr.mxu0 0.0
  %5716 = vmatpush1.msra.mxu0 %v5646
  %5717 = vmatprep.subr.mxu0 0.0
  %5718 = vmatpush1.msra.mxu0 %v5644
  %5719 = vmatprep.subr.mxu0 0.0
  %5720 = vmatpush1.msra.mxu0 %v5345
  %5721 = vmatprep.subr.mxu0 0.0
  %5722 = vmatpush1.msra.mxu0 %v5339
  %5723 = vmatprep.subr.mxu0 0.0
  %5724 = vmatpush1.msra.mxu0 %v5333
  %5725 = vmatprep.subr.mxu0 0.0
  %5726 = vmatpush1.msra.mxu0 %v5327
  %5727 = vmatprep.subr.mxu0 0.0
  %5728 = vmatpush2.msra.mxu0 0.0
  %5729 = vmatprep.subr.mxu0 0.0
  %5730 = vmatpush2.msra.mxu0 0.0
  %5731 = vmatprep.subr.mxu0 0.0
  %5732 = vmatpush2.msra.mxu0 0.0
  %5733 = vmatprep.subr.mxu0 0.0
  %5734 = vmatpush2.msra.mxu0 0.0
  %5735 = vmatprep.subr.mxu0 0.0
  %5736 = vmatpush2.msra.mxu0 0.0
  %5737 = vmatprep.subr.mxu0 0.0
  %5738 = vmatpush2.msra.mxu0 0.0
  %5739 = vmatprep.subr.mxu0 0.0
  %5740 = vmatpush2.msra.mxu0 0.0
  %5741 = vmatprep.subr.mxu0 0.0
  %5742 = vmatpush2.msra.mxu0 0.0
  %5743 = vmatprep.subr.mxu0 0.0
  %5744 = vmatpush2.msra.mxu0 0.0
  %5745 = vmatprep.subr.mxu0 0.0
  %5746 = vmatpush2.msra.mxu0 0.0
  %5747 = vmatprep.subr.mxu0 0.0
  %5748 = vmatpush2.msra.mxu0 0.0
  %5749 = vmatprep.subr.mxu0 0.0
  %5750 = vmatpush2.msra.mxu0 0.0
  %5751 = vmatprep.subr.mxu0 0.0
  %5752 = vmatpush2.msra.mxu0 0.0
  %5753 = vmatprep.subr.mxu0 0.0
  %5754 = vmatpush2.msra.mxu0 0.0
  %5755 = vmatprep.subr.mxu0 0.0
  %5756 = vmatpush2.msra.mxu0 0.0
  %5757 = vmatprep.subr.mxu0 0.0
  %5758 = vmatpush2.msra.mxu0 0.0
  %5759 = vmatprep.mubr.f32.mxu0 0.0
  %5760 = vmatmul.mubr.f32.gmra.mxu0 %v220
  %v5761 = vpop.f32.mrf.mxu0
  %v5762 = vadd.f32 %v1849, %v5761
  %v5763 = vpop.f32.mrf.mxu0
  %5764 = vmatprep.mubr.f32.mxu0 0.0
  %5765 = vmatmul.mubr.f32.gmra.mxu0 %v221
  %v5766 = vpop.f32.mrf.mxu0
  %v5767 = vadd.f32 %v1854, %v5766
  %v5768 = vpop.f32.mrf.mxu0
  %5769 = vdwg.mxu0
  %v5770 = vmax.f32 %v5762, 0.0
  %v5771 = vmax.f32 %v5767, 0.0
  %5776 = vrot.lane.b32.xlu0 %v5351, 88
  %v5777 = vpop.permute.xlu0 %5776
  %5778 = vrot.lane.b32.xlu0 %v5357, 88
  %v5779 = vpop.permute.xlu0 %5778
  %5780 = vrot.lane.b32.xlu0 %v5363, 88
  %v5781 = vpop.permute.xlu0 %5780
  %5782 = vrot.lane.b32.xlu0 %v5369, 88
  %v5783 = vpop.permute.xlu0 %5782
  %5788 = vrot.lane.b32.xlu0 %v5351, 48
  %v5789 = vpop.permute.xlu0 %5788
  %5790 = vrot.lane.b32.xlu0 %v5357, 48
  %v5791 = vpop.permute.xlu0 %5790
  %5792 = vrot.lane.b32.xlu0 %v5363, 48
  %v5793 = vpop.permute.xlu0 %5792
  %5794 = vrot.lane.b32.xlu0 %v5369, 48
  %v5795 = vpop.permute.xlu0 %5794
  %5804 = vrot.lane.b32.xlu0 %v5351, 8
  %v5805 = vpop.permute.xlu0 %5804
  %5806 = vrot.lane.b32.xlu0 %v5353, 8
  %v5807 = vpop.permute.xlu0 %5806
  %5808 = vrot.lane.b32.xlu0 %v5357, 8
  %v5809 = vpop.permute.xlu0 %5808
  %5810 = vrot.lane.b32.xlu0 %v5359, 8
  %v5811 = vpop.permute.xlu0 %5810
  %5812 = vrot.lane.b32.xlu0 %v5363, 8
  %v5813 = vpop.permute.xlu0 %5812
  %5814 = vrot.lane.b32.xlu0 %v5365, 8
  %v5815 = vpop.permute.xlu0 %5814
  %5816 = vrot.lane.b32.xlu0 %v5369, 8
  %v5817 = vpop.permute.xlu0 %5816
  %5818 = vrot.lane.b32.xlu0 %v5371, 8
  %v5819 = vpop.permute.xlu0 %5818
  %v5820 = vsel %vm1837, %v5805, %v5807
  %v5821 = vsel %vm1837, %v5809, %v5811
  %v5822 = vsel %vm1837, %v5813, %v5815
  %v5823 = vsel %vm1837, %v5817, %v5819
  %5828 = vmatprep.subr.mxu0 0.0
  %5829 = vmatpush1.msra.mxu0 %v5823
  %5830 = vmatprep.subr.mxu0 0.0
  %5831 = vmatpush1.msra.mxu0 %v5822
  %5832 = vmatprep.subr.mxu0 0.0
  %5833 = vmatpush1.msra.mxu0 %v5821
  %5834 = vmatprep.subr.mxu0 0.0
  %5835 = vmatpush1.msra.mxu0 %v5820
  %5836 = vmatprep.subr.mxu0 0.0
  %5837 = vmatpush1.msra.mxu0 %v5795
  %5838 = vmatprep.subr.mxu0 0.0
  %5839 = vmatpush1.msra.mxu0 %v5793
  %5840 = vmatprep.subr.mxu0 0.0
  %5841 = vmatpush1.msra.mxu0 %v5791
  %5842 = vmatprep.subr.mxu0 0.0
  %5843 = vmatpush1.msra.mxu0 %v5789
  %5844 = vmatprep.subr.mxu0 0.0
  %5845 = vmatpush1.msra.mxu0 %v5783
  %5846 = vmatprep.subr.mxu0 0.0
  %5847 = vmatpush1.msra.mxu0 %v5781
  %5848 = vmatprep.subr.mxu0 0.0
  %5849 = vmatpush1.msra.mxu0 %v5779
  %5850 = vmatprep.subr.mxu0 0.0
  %5851 = vmatpush1.msra.mxu0 %v5777
  %5852 = vmatprep.subr.mxu0 0.0
  %5853 = vmatpush1.msra.mxu0 %v5369
  %5854 = vmatprep.subr.mxu0 0.0
  %5855 = vmatpush1.msra.mxu0 %v5363
  %5856 = vmatprep.subr.mxu0 0.0
  %5857 = vmatpush1.msra.mxu0 %v5357
  %5858 = vmatprep.subr.mxu0 0.0
  %5859 = vmatpush1.msra.mxu0 %v5351
  %5860 = vmatprep.subr.mxu0 0.0
  %5861 = vmatpush2.msra.mxu0 0.0
  %5862 = vmatprep.subr.mxu0 0.0
  %5863 = vmatpush2.msra.mxu0 0.0
  %5864 = vmatprep.subr.mxu0 0.0
  %5865 = vmatpush2.msra.mxu0 0.0
  %5866 = vmatprep.subr.mxu0 0.0
  %5867 = vmatpush2.msra.mxu0 0.0
  %5868 = vmatprep.subr.mxu0 0.0
  %5869 = vmatpush2.msra.mxu0 0.0
  %5870 = vmatprep.subr.mxu0 0.0
  %5871 = vmatpush2.msra.mxu0 0.0
  %5872 = vmatprep.subr.mxu0 0.0
  %5873 = vmatpush2.msra.mxu0 0.0
  %5874 = vmatprep.subr.mxu0 0.0
  %5875 = vmatpush2.msra.mxu0 0.0
  %5876 = vmatprep.subr.mxu0 0.0
  %5877 = vmatpush2.msra.mxu0 0.0
  %5878 = vmatprep.subr.mxu0 0.0
  %5879 = vmatpush2.msra.mxu0 0.0
  %5880 = vmatprep.subr.mxu0 0.0
  %5881 = vmatpush2.msra.mxu0 0.0
  %5882 = vmatprep.subr.mxu0 0.0
  %5883 = vmatpush2.msra.mxu0 0.0
  %5884 = vmatprep.subr.mxu0 0.0
  %5885 = vmatpush2.msra.mxu0 0.0
  %5886 = vmatprep.subr.mxu0 0.0
  %5887 = vmatpush2.msra.mxu0 0.0
  %5888 = vmatprep.subr.mxu0 0.0
  %5889 = vmatpush2.msra.mxu0 0.0
  %5890 = vmatprep.subr.mxu0 0.0
  %5891 = vmatpush2.msra.mxu0 0.0
  %5892 = vmatprep.mubr.f32.mxu0 0.0
  %5893 = vmatmul.mubr.f32.gmra.mxu0 %v220
  %v5894 = vpop.f32.mrf.mxu0
  %v5895 = vadd.f32 %v1849, %v5894
  %v5896 = vpop.f32.mrf.mxu0
  %5897 = vmatprep.mubr.f32.mxu0 0.0
  %5898 = vmatmul.mubr.f32.gmra.mxu0 %v221
  %v5899 = vpop.f32.mrf.mxu0
  %v5900 = vadd.f32 %v1854, %v5899
  %v5901 = vpop.f32.mrf.mxu0
  %5902 = vdwg.mxu0
  %v5903 = vmax.f32 %v5895, 0.0
  %v5904 = vmax.f32 %v5900, 0.0
  %v5906 = vsel %vm2332, %v5504, 0
  %v5909 = vsel %vm2332, %v5505, 0
  %v5912 = vsel %vm2332, %v5637, 0
  %v5915 = vsel %vm2332, %v5638, 0
  %v5918 = vsel %vm2332, %v5770, 0
  %v5921 = vsel %vm2332, %v5771, 0
  %v5924 = vsel %vm2332, %v5903, 0
  %v5927 = vsel %vm2332, %v5904, 0
  %5929 = vmatprep.subr.mxu0 0.0
  %5930 = vmatpush1.msra.mxu0 0.0
  %5931 = vmatprep.subr.mxu0 0.0
  %5932 = vmatpush1.msra.mxu0 0.0
  %5933 = vmatprep.subr.mxu0 0.0
  %5934 = vmatpush1.msra.mxu0 0.0
  %5935 = vmatprep.subr.mxu0 0.0
  %5936 = vmatpush1.msra.mxu0 0.0
  %5937 = vmatprep.subr.mxu0 0.0
  %5938 = vmatpush1.msra.mxu0 0.0
  %5939 = vmatprep.subr.mxu0 0.0
  %5940 = vmatpush1.msra.mxu0 0.0
  %5941 = vmatprep.subr.mxu0 0.0
  %5942 = vmatpush1.msra.mxu0 0.0
  %5943 = vmatprep.subr.mxu0 0.0
  %5944 = vmatpush1.msra.mxu0 0.0
  %5945 = vmatprep.subr.mxu0 0.0
  %5946 = vmatpush1.msra.mxu0 0.0
  %5947 = vmatprep.subr.mxu0 0.0
  %5948 = vmatpush1.msra.mxu0 0.0
  %5949 = vmatprep.subr.mxu0 0.0
  %5950 = vmatpush1.msra.mxu0 0.0
  %5951 = vmatprep.subr.mxu0 0.0
  %5952 = vmatpush1.msra.mxu0 %v167
  %5953 = vmatprep.subr.mxu0 0.0
  %5954 = vmatpush1.msra.mxu0 %v166
  %5955 = vmatprep.subr.mxu0 0.0
  %5956 = vmatpush1.msra.mxu0 %v165
  %5957 = vmatprep.subr.mxu0 0.0
  %5958 = vmatpush1.msra.mxu0 %v164
  %5959 = vmatprep.subr.mxu0 0.0
  %5960 = vmatpush1.msra.mxu0 %v163
  %5961 = vmatprep.subr.mxu0 0.0
  %5962 = vmatpush2.msra.mxu0 0.0
  %5963 = vmatprep.subr.mxu0 0.0
  %5964 = vmatpush2.msra.mxu0 0.0
  %5965 = vmatprep.subr.mxu0 0.0
  %5966 = vmatpush2.msra.mxu0 0.0
  %5967 = vmatprep.subr.mxu0 0.0
  %5968 = vmatpush2.msra.mxu0 0.0
  %5969 = vmatprep.subr.mxu0 0.0
  %5970 = vmatpush2.msra.mxu0 0.0
  %5971 = vmatprep.subr.mxu0 0.0
  %5972 = vmatpush2.msra.mxu0 0.0
  %5973 = vmatprep.subr.mxu0 0.0
  %5974 = vmatpush2.msra.mxu0 0.0
  %5975 = vmatprep.subr.mxu0 0.0
  %5976 = vmatpush2.msra.mxu0 0.0
  %5977 = vmatprep.subr.mxu0 0.0
  %5978 = vmatpush2.msra.mxu0 0.0
  %5979 = vmatprep.subr.mxu0 0.0
  %5980 = vmatpush2.msra.mxu0 0.0
  %5981 = vmatprep.subr.mxu0 0.0
  %5982 = vmatpush2.msra.mxu0 0.0
  %5983 = vmatprep.subr.mxu0 0.0
  %5984 = vmatpush2.msra.mxu0 0.0
  %5985 = vmatprep.subr.mxu0 0.0
  %5986 = vmatpush2.msra.mxu0 0.0
  %5987 = vmatprep.subr.mxu0 0.0
  %5988 = vmatpush2.msra.mxu0 0.0
  %5989 = vmatprep.subr.mxu0 0.0
  %5990 = vmatpush2.msra.mxu0 0.0
  %5991 = vmatprep.subr.mxu0 0.0
  %5992 = vmatpush2.msra.mxu0 0.0
  %5993 = vmatprep.mubr.f32.mxu0 0.0
  %5994 = vmatmul.mubr.f32.gmra.mxu0 %v5906
  %v5995 = vpop.f32.mrf.mxu0
  %v5996 = vadd.f32 0.0, %v5995
  %v5997 = vpop.f32.mrf.mxu0
  %5998 = vmatprep.mubr.f32.mxu0 0.0
  %5999 = vmatmul.mubr.f32.gmra.mxu0 %v5909
  %v6000 = vpop.f32.mrf.mxu0
  %v6001 = vadd.f32 0.0, %v6000
  %v6002 = vpop.f32.mrf.mxu0
  %6003 = vmatprep.mubr.f32.mxu0 0.0
  %6004 = vmatmul.mubr.f32.gmra.mxu0 %v5912
  %v6005 = vpop.f32.mrf.mxu0
  %v6006 = vadd.f32 0.0, %v6005
  %v6007 = vpop.f32.mrf.mxu0
  %6008 = vmatprep.mubr.f32.mxu0 0.0
  %6009 = vmatmul.mubr.f32.gmra.mxu0 %v5915
  %v6010 = vpop.f32.mrf.mxu0
  %v6011 = vadd.f32 0.0, %v6010
  %v6012 = vpop.f32.mrf.mxu0
  %6013 = vmatprep.mubr.f32.mxu0 0.0
  %6014 = vmatmul.mubr.f32.gmra.mxu0 %v5918
  %v6015 = vpop.f32.mrf.mxu0
  %v6016 = vadd.f32 0.0, %v6015
  %v6017 = vpop.f32.mrf.mxu0
  %6018 = vmatprep.mubr.f32.mxu0 0.0
  %6019 = vmatmul.mubr.f32.gmra.mxu0 %v5921
  %v6020 = vpop.f32.mrf.mxu0
  %v6021 = vadd.f32 0.0, %v6020
  %v6022 = vpop.f32.mrf.mxu0
  %6023 = vmatprep.mubr.f32.mxu0 0.0
  %6024 = vmatmul.mubr.f32.gmra.mxu0 %v5924
  %v6025 = vpop.f32.mrf.mxu0
  %v6026 = vadd.f32 0.0, %v6025
  %v6027 = vpop.f32.mrf.mxu0
  %6028 = vmatprep.mubr.f32.mxu0 0.0
  %6029 = vmatmul.mubr.f32.gmra.mxu0 %v5927
  %v6030 = vpop.f32.mrf.mxu0
  %v6031 = vadd.f32 0.0, %v6030
  %v6032 = vpop.f32.mrf.mxu0
  %6033 = vdwg.mxu0
  %6034 = vmatprep.subr.mxu0 0.0
  %6035 = vmatpush1.msra.mxu0 0.0
  %6036 = vmatprep.subr.mxu0 0.0
  %6037 = vmatpush1.msra.mxu0 0.0
  %6038 = vmatprep.subr.mxu0 0.0
  %6039 = vmatpush1.msra.mxu0 0.0
  %6040 = vmatprep.subr.mxu0 0.0
  %6041 = vmatpush1.msra.mxu0 0.0
  %6042 = vmatprep.subr.mxu0 0.0
  %6043 = vmatpush1.msra.mxu0 0.0
  %6044 = vmatprep.subr.mxu0 0.0
  %6045 = vmatpush1.msra.mxu0 0.0
  %6046 = vmatprep.subr.mxu0 0.0
  %6047 = vmatpush1.msra.mxu0 0.0
  %6048 = vmatprep.subr.mxu0 0.0
  %6049 = vmatpush1.msra.mxu0 0.0
  %6050 = vmatprep.subr.mxu0 0.0
  %6051 = vmatpush1.msra.mxu0 %v6031
  %6052 = vmatprep.subr.mxu0 0.0
  %6053 = vmatpush1.msra.mxu0 %v6026
  %6054 = vmatprep.subr.mxu0 0.0
  %6055 = vmatpush1.msra.mxu0 %v6021
  %6056 = vmatprep.subr.mxu0 0.0
  %6057 = vmatpush1.msra.mxu0 %v6016
  %6058 = vmatprep.subr.mxu0 0.0
  %6059 = vmatpush1.msra.mxu0 %v6011
  %6060 = vmatprep.subr.mxu0 0.0
  %6061 = vmatpush1.msra.mxu0 %v6006
  %6062 = vmatprep.subr.mxu0 0.0
  %6063 = vmatpush1.msra.mxu0 %v6001
  %6064 = vmatprep.subr.mxu0 0.0
  %6065 = vmatpush1.msra.mxu0 %v5996
  %6066 = vmatprep.subr.mxu0 0.0
  %6067 = vmatpush2.msra.mxu0 0.0
  %6068 = vmatprep.subr.mxu0 0.0
  %6069 = vmatpush2.msra.mxu0 0.0
  %6070 = vmatprep.subr.mxu0 0.0
  %6071 = vmatpush2.msra.mxu0 0.0
  %6072 = vmatprep.subr.mxu0 0.0
  %6073 = vmatpush2.msra.mxu0 0.0
  %6074 = vmatprep.subr.mxu0 0.0
  %6075 = vmatpush2.msra.mxu0 0.0
  %6076 = vmatprep.subr.mxu0 0.0
  %6077 = vmatpush2.msra.mxu0 0.0
  %6078 = vmatprep.subr.mxu0 0.0
  %6079 = vmatpush2.msra.mxu0 0.0
  %6080 = vmatprep.subr.mxu0 0.0
  %6081 = vmatpush2.msra.mxu0 0.0
  %6082 = vmatprep.subr.mxu0 0.0
  %6083 = vmatpush2.msra.mxu0 0.0
  %6084 = vmatprep.subr.mxu0 0.0
  %6085 = vmatpush2.msra.mxu0 0.0
  %6086 = vmatprep.subr.mxu0 0.0
  %6087 = vmatpush2.msra.mxu0 0.0
  %6088 = vmatprep.subr.mxu0 0.0
  %6089 = vmatpush2.msra.mxu0 0.0
  %6090 = vmatprep.subr.mxu0 0.0
  %6091 = vmatpush2.msra.mxu0 0.0
  %6092 = vmatprep.subr.mxu0 0.0
  %6093 = vmatpush2.msra.mxu0 0.0
  %6094 = vmatprep.subr.mxu0 0.0
  %6095 = vmatpush2.msra.mxu0 0.0
  %6096 = vmatprep.subr.mxu0 0.0
  %6097 = vmatpush2.msra.mxu0 0.0
  %6098 = vmatprep.mubr.f32.mxu0 0.0
  %6099 = vmatmul.mubr.f32.gmra.mxu0 %v2463
  %v6100 = vpop.f32.mrf.mxu0
  %v6101 = vadd.f32 0.0, %v6100
  %v6102 = vpop.f32.mrf.mxu0
  %6103 = vmatprep.mubr.f32.mxu0 0.0
  %6104 = vmatmul.mubr.f32.gmra.mxu0 %v2466
  %v6105 = vpop.f32.mrf.mxu0
  %v6106 = vadd.f32 0.0, %v6105
  %v6107 = vpop.f32.mrf.mxu0
  %6108 = vmatprep.mubr.f32.mxu0 0.0
  %6109 = vmatmul.mubr.f32.gmra.mxu0 %v2469
  %v6110 = vpop.f32.mrf.mxu0
  %v6111 = vadd.f32 0.0, %v6110
  %v6112 = vpop.f32.mrf.mxu0
  %6113 = vmatprep.mubr.f32.mxu0 0.0
  %6114 = vmatmul.mubr.f32.gmra.mxu0 %v2472
  %v6115 = vpop.f32.mrf.mxu0
  %v6116 = vadd.f32 0.0, %v6115
  %v6117 = vpop.f32.mrf.mxu0
  %6118 = vmatprep.mubr.f32.mxu0 0.0
  %6119 = vmatmul.mubr.f32.gmra.mxu0 %v2475
  %v6120 = vpop.f32.mrf.mxu0
  %v6121 = vadd.f32 0.0, %v6120
  %v6122 = vpop.f32.mrf.mxu0
  %6123 = vmatprep.mubr.f32.mxu0 0.0
  %6124 = vmatmul.mubr.f32.gmra.mxu0 %v2478
  %v6125 = vpop.f32.mrf.mxu0
  %v6126 = vadd.f32 0.0, %v6125
  %v6127 = vpop.f32.mrf.mxu0
  %6128 = vmatprep.mubr.f32.mxu0 0.0
  %6129 = vmatmul.mubr.f32.gmra.mxu0 %v2481
  %v6130 = vpop.f32.mrf.mxu0
  %v6131 = vadd.f32 0.0, %v6130
  %v6132 = vpop.f32.mrf.mxu0
  %6133 = vmatprep.mubr.f32.mxu0 0.0
  %6134 = vmatmul.mubr.f32.gmra.mxu0 %v2484
  %v6135 = vpop.f32.mrf.mxu0
  %v6136 = vadd.f32 0.0, %v6135
  %v6137 = vpop.f32.mrf.mxu0
  %6138 = vmatprep.mubr.f32.mxu0 0.0
  %6139 = vmatmul.mubr.f32.gmra.mxu0 %v2487
  %v6140 = vpop.f32.mrf.mxu0
  %v6141 = vadd.f32 0.0, %v6140
  %v6142 = vpop.f32.mrf.mxu0
  %6143 = vmatprep.mubr.f32.mxu0 0.0
  %6144 = vmatmul.mubr.f32.gmra.mxu0 %v2490
  %v6145 = vpop.f32.mrf.mxu0
  %v6146 = vadd.f32 0.0, %v6145
  %v6147 = vpop.f32.mrf.mxu0
  %6148 = vmatprep.mubr.f32.mxu0 0.0
  %6149 = vmatmul.mubr.f32.gmra.mxu0 %v2493
  %v6150 = vpop.f32.mrf.mxu0
  %v6151 = vadd.f32 0.0, %v6150
  %v6152 = vpop.f32.mrf.mxu0
  %6153 = vmatprep.mubr.f32.mxu0 0.0
  %6154 = vmatmul.mubr.f32.gmra.mxu0 %v2496
  %v6155 = vpop.f32.mrf.mxu0
  %v6156 = vadd.f32 0.0, %v6155
  %v6157 = vpop.f32.mrf.mxu0
  %6158 = vmatprep.mubr.f32.mxu0 0.0
  %6159 = vmatmul.mubr.f32.gmra.mxu0 %v2499
  %v6160 = vpop.f32.mrf.mxu0
  %v6161 = vadd.f32 0.0, %v6160
  %v6162 = vpop.f32.mrf.mxu0
  %6163 = vmatprep.mubr.f32.mxu0 0.0
  %6164 = vmatmul.mubr.f32.gmra.mxu0 %v2502
  %v6165 = vpop.f32.mrf.mxu0
  %v6166 = vadd.f32 0.0, %v6165
  %v6167 = vpop.f32.mrf.mxu0
  %6168 = vmatprep.mubr.f32.mxu0 0.0
  %6169 = vmatmul.mubr.f32.gmra.mxu0 %v2505
  %v6170 = vpop.f32.mrf.mxu0
  %v6171 = vadd.f32 0.0, %v6170
  %v6172 = vpop.f32.mrf.mxu0
  %6173 = vmatprep.mubr.f32.mxu0 0.0
  %6174 = vmatmul.mubr.f32.gmra.mxu0 %v2508
  %v6175 = vpop.f32.mrf.mxu0
  %v6176 = vadd.f32 0.0, %v6175
  %v6177 = vpop.f32.mrf.mxu0
  %6178 = vdwg.mxu0
  %6187 = vrot.lane.b32.xlu0 %v6101, 108
  %v6188 = vpop.permute.xlu0 %6187
  %6189 = vrot.lane.b32.xlu0 %v6106, 108
  %v6190 = vpop.permute.xlu0 %6189
  %6191 = vrot.lane.b32.xlu0 %v6111, 108
  %v6192 = vpop.permute.xlu0 %6191
  %6193 = vrot.lane.b32.xlu0 %v6116, 108
  %v6194 = vpop.permute.xlu0 %6193
  %6195 = vrot.lane.b32.xlu0 %v6121, 108
  %v6196 = vpop.permute.xlu0 %6195
  %6197 = vrot.lane.b32.xlu0 %v6126, 108
  %v6198 = vpop.permute.xlu0 %6197
  %6199 = vrot.lane.b32.xlu0 %v6131, 108
  %v6200 = vpop.permute.xlu0 %6199
  %6201 = vrot.lane.b32.xlu0 %v6136, 108
  %v6202 = vpop.permute.xlu0 %6201
  %6211 = vrot.lane.b32.xlu0 %v6101, 88
  %v6212 = vpop.permute.xlu0 %6211
  %6213 = vrot.lane.b32.xlu0 %v6106, 88
  %v6214 = vpop.permute.xlu0 %6213
  %6215 = vrot.lane.b32.xlu0 %v6111, 88
  %v6216 = vpop.permute.xlu0 %6215
  %6217 = vrot.lane.b32.xlu0 %v6116, 88
  %v6218 = vpop.permute.xlu0 %6217
  %6219 = vrot.lane.b32.xlu0 %v6121, 88
  %v6220 = vpop.permute.xlu0 %6219
  %6221 = vrot.lane.b32.xlu0 %v6126, 88
  %v6222 = vpop.permute.xlu0 %6221
  %6223 = vrot.lane.b32.xlu0 %v6131, 88
  %v6224 = vpop.permute.xlu0 %6223
  %6225 = vrot.lane.b32.xlu0 %v6136, 88
  %v6226 = vpop.permute.xlu0 %6225
  %6235 = vrot.lane.b32.xlu0 %v6101, 68
  %v6236 = vpop.permute.xlu0 %6235
  %6237 = vrot.lane.b32.xlu0 %v6106, 68
  %v6238 = vpop.permute.xlu0 %6237
  %6239 = vrot.lane.b32.xlu0 %v6111, 68
  %v6240 = vpop.permute.xlu0 %6239
  %6241 = vrot.lane.b32.xlu0 %v6116, 68
  %v6242 = vpop.permute.xlu0 %6241
  %6243 = vrot.lane.b32.xlu0 %v6121, 68
  %v6244 = vpop.permute.xlu0 %6243
  %6245 = vrot.lane.b32.xlu0 %v6126, 68
  %v6246 = vpop.permute.xlu0 %6245
  %6247 = vrot.lane.b32.xlu0 %v6131, 68
  %v6248 = vpop.permute.xlu0 %6247
  %6249 = vrot.lane.b32.xlu0 %v6136, 68
  %v6250 = vpop.permute.xlu0 %6249
  %6259 = vmatprep.subr.mxu0 0.0
  %6260 = vmatpush1.msra.mxu0 %v6202
  %6261 = vmatprep.subr.mxu0 0.0
  %6262 = vmatpush1.msra.mxu0 %v6200
  %6263 = vmatprep.subr.mxu0 0.0
  %6264 = vmatpush1.msra.mxu0 %v6198
  %6265 = vmatprep.subr.mxu0 0.0
  %6266 = vmatpush1.msra.mxu0 %v6196
  %6267 = vmatprep.subr.mxu0 0.0
  %6268 = vmatpush1.msra.mxu0 %v6194
  %6269 = vmatprep.subr.mxu0 0.0
  %6270 = vmatpush1.msra.mxu0 %v6192
  %6271 = vmatprep.subr.mxu0 0.0
  %6272 = vmatpush1.msra.mxu0 %v6190
  %6273 = vmatprep.subr.mxu0 0.0
  %6274 = vmatpush1.msra.mxu0 %v6188
  %6275 = vmatprep.subr.mxu0 0.0
  %6276 = vmatpush1.msra.mxu0 %v6136
  %6277 = vmatprep.subr.mxu0 0.0
  %6278 = vmatpush1.msra.mxu0 %v6131
  %6279 = vmatprep.subr.mxu0 0.0
  %6280 = vmatpush1.msra.mxu0 %v6126
  %6281 = vmatprep.subr.mxu0 0.0
  %6282 = vmatpush1.msra.mxu0 %v6121
  %6283 = vmatprep.subr.mxu0 0.0
  %6284 = vmatpush1.msra.mxu0 %v6116
  %6285 = vmatprep.subr.mxu0 0.0
  %6286 = vmatpush1.msra.mxu0 %v6111
  %6287 = vmatprep.subr.mxu0 0.0
  %6288 = vmatpush1.msra.mxu0 %v6106
  %6289 = vmatprep.subr.mxu0 0.0
  %6290 = vmatpush1.msra.mxu0 %v6101
  %6291 = vmatprep.subr.mxu0 0.0
  %6292 = vmatpush2.msra.mxu0 %v6250
  %6293 = vmatprep.subr.mxu0 0.0
  %6294 = vmatpush2.msra.mxu0 %v6248
  %6295 = vmatprep.subr.mxu0 0.0
  %6296 = vmatpush2.msra.mxu0 %v6246
  %6297 = vmatprep.subr.mxu0 0.0
  %6298 = vmatpush2.msra.mxu0 %v6244
  %6299 = vmatprep.subr.mxu0 0.0
  %6300 = vmatpush2.msra.mxu0 %v6242
  %6301 = vmatprep.subr.mxu0 0.0
  %6302 = vmatpush2.msra.mxu0 %v6240
  %6303 = vmatprep.subr.mxu0 0.0
  %6304 = vmatpush2.msra.mxu0 %v6238
  %6305 = vmatprep.subr.mxu0 0.0
  %6306 = vmatpush2.msra.mxu0 %v6236
  %6307 = vmatprep.subr.mxu0 0.0
  %6308 = vmatpush2.msra.mxu0 %v6226
  %6309 = vmatprep.subr.mxu0 0.0
  %6310 = vmatpush2.msra.mxu0 %v6224
  %6311 = vmatprep.subr.mxu0 0.0
  %6312 = vmatpush2.msra.mxu0 %v6222
  %6313 = vmatprep.subr.mxu0 0.0
  %6314 = vmatpush2.msra.mxu0 %v6220
  %6315 = vmatprep.subr.mxu0 0.0
  %6316 = vmatpush2.msra.mxu0 %v6218
  %6317 = vmatprep.subr.mxu0 0.0
  %6318 = vmatpush2.msra.mxu0 %v6216
  %6319 = vmatprep.subr.mxu0 0.0
  %6320 = vmatpush2.msra.mxu0 %v6214
  %6321 = vmatprep.subr.mxu0 0.0
  %6322 = vmatpush2.msra.mxu0 %v6212
  %6323 = vmatprep.mubr.f32.mxu0 %v223
  %6324 = vmatmul.mubr.f32.gmra.mxu0 %v222
  %v6325 = vpop.f32.mrf.mxu0
  %v6326 = vadd.f32 %v2738, %v6325
  %v6327 = vpop.f32.mrf.mxu0
  %6328 = vmatprep.mubr.f32.mxu0 %v225
  %6329 = vmatmul.mubr.f32.gmra.mxu0 %v224
  %v6330 = vpop.f32.mrf.mxu0
  %v6331 = vadd.f32 %v2743, %v6330
  %v6332 = vpop.f32.mrf.mxu0
  %6333 = vdwg.mxu0
  %v6334 = vmax.f32 %v6326, 0.0
  %v6335 = vmax.f32 %v6331, 0.0
  %6344 = vrot.lane.b32.xlu0 %v6141, 108
  %v6345 = vpop.permute.xlu0 %6344
  %6346 = vrot.lane.b32.xlu0 %v6146, 108
  %v6347 = vpop.permute.xlu0 %6346
  %6348 = vrot.lane.b32.xlu0 %v6151, 108
  %v6349 = vpop.permute.xlu0 %6348
  %6350 = vrot.lane.b32.xlu0 %v6156, 108
  %v6351 = vpop.permute.xlu0 %6350
  %6352 = vrot.lane.b32.xlu0 %v6161, 108
  %v6353 = vpop.permute.xlu0 %6352
  %6354 = vrot.lane.b32.xlu0 %v6166, 108
  %v6355 = vpop.permute.xlu0 %6354
  %6356 = vrot.lane.b32.xlu0 %v6171, 108
  %v6357 = vpop.permute.xlu0 %6356
  %6358 = vrot.lane.b32.xlu0 %v6176, 108
  %v6359 = vpop.permute.xlu0 %6358
  %6368 = vrot.lane.b32.xlu0 %v6141, 88
  %v6369 = vpop.permute.xlu0 %6368
  %6370 = vrot.lane.b32.xlu0 %v6146, 88
  %v6371 = vpop.permute.xlu0 %6370
  %6372 = vrot.lane.b32.xlu0 %v6151, 88
  %v6373 = vpop.permute.xlu0 %6372
  %6374 = vrot.lane.b32.xlu0 %v6156, 88
  %v6375 = vpop.permute.xlu0 %6374
  %6376 = vrot.lane.b32.xlu0 %v6161, 88
  %v6377 = vpop.permute.xlu0 %6376
  %6378 = vrot.lane.b32.xlu0 %v6166, 88
  %v6379 = vpop.permute.xlu0 %6378
  %6380 = vrot.lane.b32.xlu0 %v6171, 88
  %v6381 = vpop.permute.xlu0 %6380
  %6382 = vrot.lane.b32.xlu0 %v6176, 88
  %v6383 = vpop.permute.xlu0 %6382
  %6392 = vrot.lane.b32.xlu0 %v6141, 68
  %v6393 = vpop.permute.xlu0 %6392
  %6394 = vrot.lane.b32.xlu0 %v6146, 68
  %v6395 = vpop.permute.xlu0 %6394
  %6396 = vrot.lane.b32.xlu0 %v6151, 68
  %v6397 = vpop.permute.xlu0 %6396
  %6398 = vrot.lane.b32.xlu0 %v6156, 68
  %v6399 = vpop.permute.xlu0 %6398
  %6400 = vrot.lane.b32.xlu0 %v6161, 68
  %v6401 = vpop.permute.xlu0 %6400
  %6402 = vrot.lane.b32.xlu0 %v6166, 68
  %v6403 = vpop.permute.xlu0 %6402
  %6404 = vrot.lane.b32.xlu0 %v6171, 68
  %v6405 = vpop.permute.xlu0 %6404
  %6406 = vrot.lane.b32.xlu0 %v6176, 68
  %v6407 = vpop.permute.xlu0 %6406
  %6416 = vmatprep.subr.mxu0 0.0
  %6417 = vmatpush1.msra.mxu0 %v6359
  %6418 = vmatprep.subr.mxu0 0.0
  %6419 = vmatpush1.msra.mxu0 %v6357
  %6420 = vmatprep.subr.mxu0 0.0
  %6421 = vmatpush1.msra.mxu0 %v6355
  %6422 = vmatprep.subr.mxu0 0.0
  %6423 = vmatpush1.msra.mxu0 %v6353
  %6424 = vmatprep.subr.mxu0 0.0
  %6425 = vmatpush1.msra.mxu0 %v6351
  %6426 = vmatprep.subr.mxu0 0.0
  %6427 = vmatpush1.msra.mxu0 %v6349
  %6428 = vmatprep.subr.mxu0 0.0
  %6429 = vmatpush1.msra.mxu0 %v6347
  %6430 = vmatprep.subr.mxu0 0.0
  %6431 = vmatpush1.msra.mxu0 %v6345
  %6432 = vmatprep.subr.mxu0 0.0
  %6433 = vmatpush1.msra.mxu0 %v6176
  %6434 = vmatprep.subr.mxu0 0.0
  %6435 = vmatpush1.msra.mxu0 %v6171
  %6436 = vmatprep.subr.mxu0 0.0
  %6437 = vmatpush1.msra.mxu0 %v6166
  %6438 = vmatprep.subr.mxu0 0.0
  %6439 = vmatpush1.msra.mxu0 %v6161
  %6440 = vmatprep.subr.mxu0 0.0
  %6441 = vmatpush1.msra.mxu0 %v6156
  %6442 = vmatprep.subr.mxu0 0.0
  %6443 = vmatpush1.msra.mxu0 %v6151
  %6444 = vmatprep.subr.mxu0 0.0
  %6445 = vmatpush1.msra.mxu0 %v6146
  %6446 = vmatprep.subr.mxu0 0.0
  %6447 = vmatpush1.msra.mxu0 %v6141
  %6448 = vmatprep.subr.mxu0 0.0
  %6449 = vmatpush2.msra.mxu0 %v6407
  %6450 = vmatprep.subr.mxu0 0.0
  %6451 = vmatpush2.msra.mxu0 %v6405
  %6452 = vmatprep.subr.mxu0 0.0
  %6453 = vmatpush2.msra.mxu0 %v6403
  %6454 = vmatprep.subr.mxu0 0.0
  %6455 = vmatpush2.msra.mxu0 %v6401
  %6456 = vmatprep.subr.mxu0 0.0
  %6457 = vmatpush2.msra.mxu0 %v6399
  %6458 = vmatprep.subr.mxu0 0.0
  %6459 = vmatpush2.msra.mxu0 %v6397
  %6460 = vmatprep.subr.mxu0 0.0
  %6461 = vmatpush2.msra.mxu0 %v6395
  %6462 = vmatprep.subr.mxu0 0.0
  %6463 = vmatpush2.msra.mxu0 %v6393
  %6464 = vmatprep.subr.mxu0 0.0
  %6465 = vmatpush2.msra.mxu0 %v6383
  %6466 = vmatprep.subr.mxu0 0.0
  %6467 = vmatpush2.msra.mxu0 %v6381
  %6468 = vmatprep.subr.mxu0 0.0
  %6469 = vmatpush2.msra.mxu0 %v6379
  %6470 = vmatprep.subr.mxu0 0.0
  %6471 = vmatpush2.msra.mxu0 %v6377
  %6472 = vmatprep.subr.mxu0 0.0
  %6473 = vmatpush2.msra.mxu0 %v6375
  %6474 = vmatprep.subr.mxu0 0.0
  %6475 = vmatpush2.msra.mxu0 %v6373
  %6476 = vmatprep.subr.mxu0 0.0
  %6477 = vmatpush2.msra.mxu0 %v6371
  %6478 = vmatprep.subr.mxu0 0.0
  %6479 = vmatpush2.msra.mxu0 %v6369
  %6480 = vmatprep.mubr.f32.mxu0 %v223
  %6481 = vmatmul.mubr.f32.gmra.mxu0 %v222
  %v6482 = vpop.f32.mrf.mxu0
  %v6483 = vadd.f32 %v2738, %v6482
  %v6484 = vpop.f32.mrf.mxu0
  %6485 = vmatprep.mubr.f32.mxu0 %v225
  %6486 = vmatmul.mubr.f32.gmra.mxu0 %v224
  %v6487 = vpop.f32.mrf.mxu0
  %v6488 = vadd.f32 %v2743, %v6487
  %v6489 = vpop.f32.mrf.mxu0
  %6490 = vdwg.mxu0
  %v6491 = vmax.f32 %v6483, 0.0
  %v6492 = vmax.f32 %v6488, 0.0
  %v6494 = vsel %vm2979, %v6334, 0
  %v6497 = vsel %vm2979, %v6335, 0
  %v6500 = vsel %vm2979, %v6491, 0
  %v6503 = vsel %vm2979, %v6492, 0
  %6505 = vmatprep.subr.mxu0 0.0
  %6506 = vmatpush1.msra.mxu0 0.0
  %6507 = vmatprep.subr.mxu0 0.0
  %6508 = vmatpush1.msra.mxu0 0.0
  %6509 = vmatprep.subr.mxu0 0.0
  %6510 = vmatpush1.msra.mxu0 0.0
  %6511 = vmatprep.subr.mxu0 0.0
  %6512 = vmatpush1.msra.mxu0 0.0
  %6513 = vmatprep.subr.mxu0 0.0
  %6514 = vmatpush1.msra.mxu0 0.0
  %6515 = vmatprep.subr.mxu0 0.0
  %6516 = vmatpush1.msra.mxu0 0.0
  %6517 = vmatprep.subr.mxu0 0.0
  %6518 = vmatpush1.msra.mxu0 0.0
  %6519 = vmatprep.subr.mxu0 0.0
  %6520 = vmatpush1.msra.mxu0 0.0
  %6521 = vmatprep.subr.mxu0 0.0
  %6522 = vmatpush1.msra.mxu0 0.0
  %6523 = vmatprep.subr.mxu0 0.0
  %6524 = vmatpush1.msra.mxu0 0.0
  %6525 = vmatprep.subr.mxu0 0.0
  %6526 = vmatpush1.msra.mxu0 0.0
  %6527 = vmatprep.subr.mxu0 0.0
  %6528 = vmatpush1.msra.mxu0 0.0
  %6529 = vmatprep.subr.mxu0 0.0
  %6530 = vmatpush1.msra.mxu0 0.0
  %6531 = vmatprep.subr.mxu0 0.0
  %6532 = vmatpush1.msra.mxu0 %v2994
  %6533 = vmatprep.subr.mxu0 0.0
  %6534 = vmatpush1.msra.mxu0 %v169
  %6535 = vmatprep.subr.mxu0 0.0
  %6536 = vmatpush1.msra.mxu0 %v168
  %6537 = vmatprep.subr.mxu0 0.0
  %6538 = vmatpush2.msra.mxu0 0.0
  %6539 = vmatprep.subr.mxu0 0.0
  %6540 = vmatpush2.msra.mxu0 0.0
  %6541 = vmatprep.subr.mxu0 0.0
  %6542 = vmatpush2.msra.mxu0 0.0
  %6543 = vmatprep.subr.mxu0 0.0
  %6544 = vmatpush2.msra.mxu0 0.0
  %6545 = vmatprep.subr.mxu0 0.0
  %6546 = vmatpush2.msra.mxu0 0.0
  %6547 = vmatprep.subr.mxu0 0.0
  %6548 = vmatpush2.msra.mxu0 0.0
  %6549 = vmatprep.subr.mxu0 0.0
  %6550 = vmatpush2.msra.mxu0 0.0
  %6551 = vmatprep.subr.mxu0 0.0
  %6552 = vmatpush2.msra.mxu0 0.0
  %6553 = vmatprep.subr.mxu0 0.0
  %6554 = vmatpush2.msra.mxu0 0.0
  %6555 = vmatprep.subr.mxu0 0.0
  %6556 = vmatpush2.msra.mxu0 0.0
  %6557 = vmatprep.subr.mxu0 0.0
  %6558 = vmatpush2.msra.mxu0 0.0
  %6559 = vmatprep.subr.mxu0 0.0
  %6560 = vmatpush2.msra.mxu0 0.0
  %6561 = vmatprep.subr.mxu0 0.0
  %6562 = vmatpush2.msra.mxu0 0.0
  %6563 = vmatprep.subr.mxu0 0.0
  %6564 = vmatpush2.msra.mxu0 0.0
  %6565 = vmatprep.subr.mxu0 0.0
  %6566 = vmatpush2.msra.mxu0 0.0
  %6567 = vmatprep.subr.mxu0 0.0
  %6568 = vmatpush2.msra.mxu0 0.0
  %6569 = vmatprep.mubr.f32.mxu0 0.0
  %6570 = vmatmul.mubr.f32.gmra.mxu0 %v6494
  %v6571 = vpop.f32.mrf.mxu0
  %v6572 = vadd.f32 0.0, %v6571
  %v6573 = vpop.f32.mrf.mxu0
  %6574 = vmatprep.mubr.f32.mxu0 0.0
  %6575 = vmatmul.mubr.f32.gmra.mxu0 %v6497
  %v6576 = vpop.f32.mrf.mxu0
  %v6577 = vadd.f32 0.0, %v6576
  %v6578 = vpop.f32.mrf.mxu0
  %6579 = vmatprep.mubr.f32.mxu0 0.0
  %6580 = vmatmul.mubr.f32.gmra.mxu0 %v6500
  %v6581 = vpop.f32.mrf.mxu0
  %v6582 = vadd.f32 0.0, %v6581
  %v6583 = vpop.f32.mrf.mxu0
  %6584 = vmatprep.mubr.f32.mxu0 0.0
  %6585 = vmatmul.mubr.f32.gmra.mxu0 %v6503
  %v6586 = vpop.f32.mrf.mxu0
  %v6587 = vadd.f32 0.0, %v6586
  %v6588 = vpop.f32.mrf.mxu0
  %6589 = vdwg.mxu0
  %6590 = vmatprep.subr.mxu0 0.0
  %6591 = vmatpush1.msra.mxu0 0.0
  %6592 = vmatprep.subr.mxu0 0.0
  %6593 = vmatpush1.msra.mxu0 0.0
  %6594 = vmatprep.subr.mxu0 0.0
  %6595 = vmatpush1.msra.mxu0 0.0
  %6596 = vmatprep.subr.mxu0 0.0
  %6597 = vmatpush1.msra.mxu0 0.0
  %6598 = vmatprep.subr.mxu0 0.0
  %6599 = vmatpush1.msra.mxu0 0.0
  %6600 = vmatprep.subr.mxu0 0.0
  %6601 = vmatpush1.msra.mxu0 0.0
  %6602 = vmatprep.subr.mxu0 0.0
  %6603 = vmatpush1.msra.mxu0 0.0
  %6604 = vmatprep.subr.mxu0 0.0
  %6605 = vmatpush1.msra.mxu0 0.0
  %6606 = vmatprep.subr.mxu0 0.0
  %6607 = vmatpush1.msra.mxu0 0.0
  %6608 = vmatprep.subr.mxu0 0.0
  %6609 = vmatpush1.msra.mxu0 0.0
  %6610 = vmatprep.subr.mxu0 0.0
  %6611 = vmatpush1.msra.mxu0 0.0
  %6612 = vmatprep.subr.mxu0 0.0
  %6613 = vmatpush1.msra.mxu0 0.0
  %6614 = vmatprep.subr.mxu0 0.0
  %6615 = vmatpush1.msra.mxu0 %v6587
  %6616 = vmatprep.subr.mxu0 0.0
  %6617 = vmatpush1.msra.mxu0 %v6582
  %6618 = vmatprep.subr.mxu0 0.0
  %6619 = vmatpush1.msra.mxu0 %v6577
  %6620 = vmatprep.subr.mxu0 0.0
  %6621 = vmatpush1.msra.mxu0 %v6572
  %6622 = vmatprep.subr.mxu0 0.0
  %6623 = vmatpush2.msra.mxu0 0.0
  %6624 = vmatprep.subr.mxu0 0.0
  %6625 = vmatpush2.msra.mxu0 0.0
  %6626 = vmatprep.subr.mxu0 0.0
  %6627 = vmatpush2.msra.mxu0 0.0
  %6628 = vmatprep.subr.mxu0 0.0
  %6629 = vmatpush2.msra.mxu0 0.0
  %6630 = vmatprep.subr.mxu0 0.0
  %6631 = vmatpush2.msra.mxu0 0.0
  %6632 = vmatprep.subr.mxu0 0.0
  %6633 = vmatpush2.msra.mxu0 0.0
  %6634 = vmatprep.subr.mxu0 0.0
  %6635 = vmatpush2.msra.mxu0 0.0
  %6636 = vmatprep.subr.mxu0 0.0
  %6637 = vmatpush2.msra.mxu0 0.0
  %6638 = vmatprep.subr.mxu0 0.0
  %6639 = vmatpush2.msra.mxu0 0.0
  %6640 = vmatprep.subr.mxu0 0.0
  %6641 = vmatpush2.msra.mxu0 0.0
  %6642 = vmatprep.subr.mxu0 0.0
  %6643 = vmatpush2.msra.mxu0 0.0
  %6644 = vmatprep.subr.mxu0 0.0
  %6645 = vmatpush2.msra.mxu0 0.0
  %6646 = vmatprep.subr.mxu0 0.0
  %6647 = vmatpush2.msra.mxu0 0.0
  %6648 = vmatprep.subr.mxu0 0.0
  %6649 = vmatpush2.msra.mxu0 0.0
  %6650 = vmatprep.subr.mxu0 0.0
  %6651 = vmatpush2.msra.mxu0 0.0
  %6652 = vmatprep.subr.mxu0 0.0
  %6653 = vmatpush2.msra.mxu0 0.0
  %6654 = vmatprep.mubr.f32.mxu0 0.0
  %6655 = vmatmul.mubr.f32.gmra.mxu0 %v3082
  %v6656 = vpop.f32.mrf.mxu0
  %v6657 = vadd.f32 0.0, %v6656
  %v6658 = vpop.f32.mrf.mxu0
  %6659 = vmatprep.mubr.f32.mxu0 0.0
  %6660 = vmatmul.mubr.f32.gmra.mxu0 %v3085
  %v6661 = vpop.f32.mrf.mxu0
  %v6662 = vadd.f32 0.0, %v6661
  %v6663 = vpop.f32.mrf.mxu0
  %6664 = vmatprep.mubr.f32.mxu0 0.0
  %6665 = vmatmul.mubr.f32.gmra.mxu0 %v3088
  %v6666 = vpop.f32.mrf.mxu0
  %v6667 = vadd.f32 0.0, %v6666
  %v6668 = vpop.f32.mrf.mxu0
  %6669 = vmatprep.mubr.f32.mxu0 0.0
  %6670 = vmatmul.mubr.f32.gmra.mxu0 %v3091
  %v6671 = vpop.f32.mrf.mxu0
  %v6672 = vadd.f32 0.0, %v6671
  %v6673 = vpop.f32.mrf.mxu0
  %6674 = vmatprep.mubr.f32.mxu0 0.0
  %6675 = vmatmul.mubr.f32.gmra.mxu0 %v3094
  %v6676 = vpop.f32.mrf.mxu0
  %v6677 = vadd.f32 0.0, %v6676
  %v6678 = vpop.f32.mrf.mxu0
  %6679 = vmatprep.mubr.f32.mxu0 0.0
  %6680 = vmatmul.mubr.f32.gmra.mxu0 %v3097
  %v6681 = vpop.f32.mrf.mxu0
  %v6682 = vadd.f32 0.0, %v6681
  %v6683 = vpop.f32.mrf.mxu0
  %6684 = vmatprep.mubr.f32.mxu0 0.0
  %6685 = vmatmul.mubr.f32.gmra.mxu0 %v3100
  %v6686 = vpop.f32.mrf.mxu0
  %v6687 = vadd.f32 0.0, %v6686
  %v6688 = vpop.f32.mrf.mxu0
  %6689 = vmatprep.mubr.f32.mxu0 0.0
  %6690 = vmatmul.mubr.f32.gmra.mxu0 %v3103
  %v6691 = vpop.f32.mrf.mxu0
  %v6692 = vadd.f32 0.0, %v6691
  %v6693 = vpop.f32.mrf.mxu0
  %6694 = vdwg.mxu0
  %6703 = vrot.lane.b32.xlu0 %v6657, 118
  %v6704 = vpop.permute.xlu0 %6703
  %6705 = vrot.lane.b32.xlu0 %v6662, 118
  %v6706 = vpop.permute.xlu0 %6705
  %6707 = vrot.lane.b32.xlu0 %v6667, 118
  %v6708 = vpop.permute.xlu0 %6707
  %6709 = vrot.lane.b32.xlu0 %v6672, 118
  %v6710 = vpop.permute.xlu0 %6709
  %6711 = vrot.lane.b32.xlu0 %v6677, 118
  %v6712 = vpop.permute.xlu0 %6711
  %6713 = vrot.lane.b32.xlu0 %v6682, 118
  %v6714 = vpop.permute.xlu0 %6713
  %6715 = vrot.lane.b32.xlu0 %v6687, 118
  %v6716 = vpop.permute.xlu0 %6715
  %6717 = vrot.lane.b32.xlu0 %v6692, 118
  %v6718 = vpop.permute.xlu0 %6717
  %6727 = vrot.lane.b32.xlu0 %v6657, 108
  %v6728 = vpop.permute.xlu0 %6727
  %6729 = vrot.lane.b32.xlu0 %v6662, 108
  %v6730 = vpop.permute.xlu0 %6729
  %6731 = vrot.lane.b32.xlu0 %v6667, 108
  %v6732 = vpop.permute.xlu0 %6731
  %6733 = vrot.lane.b32.xlu0 %v6672, 108
  %v6734 = vpop.permute.xlu0 %6733
  %6735 = vrot.lane.b32.xlu0 %v6677, 108
  %v6736 = vpop.permute.xlu0 %6735
  %6737 = vrot.lane.b32.xlu0 %v6682, 108
  %v6738 = vpop.permute.xlu0 %6737
  %6739 = vrot.lane.b32.xlu0 %v6687, 108
  %v6740 = vpop.permute.xlu0 %6739
  %6741 = vrot.lane.b32.xlu0 %v6692, 108
  %v6742 = vpop.permute.xlu0 %6741
  %6751 = vrot.lane.b32.xlu0 %v6657, 98
  %v6752 = vpop.permute.xlu0 %6751
  %6753 = vrot.lane.b32.xlu0 %v6662, 98
  %v6754 = vpop.permute.xlu0 %6753
  %6755 = vrot.lane.b32.xlu0 %v6667, 98
  %v6756 = vpop.permute.xlu0 %6755
  %6757 = vrot.lane.b32.xlu0 %v6672, 98
  %v6758 = vpop.permute.xlu0 %6757
  %6759 = vrot.lane.b32.xlu0 %v6677, 98
  %v6760 = vpop.permute.xlu0 %6759
  %6761 = vrot.lane.b32.xlu0 %v6682, 98
  %v6762 = vpop.permute.xlu0 %6761
  %6763 = vrot.lane.b32.xlu0 %v6687, 98
  %v6764 = vpop.permute.xlu0 %6763
  %6765 = vrot.lane.b32.xlu0 %v6692, 98
  %v6766 = vpop.permute.xlu0 %6765
  %6775 = vmatprep.subr.mxu0 0.0
  %6776 = vmatpush1.msra.mxu0 %v6718
  %6777 = vmatprep.subr.mxu0 0.0
  %6778 = vmatpush1.msra.mxu0 %v6716
  %6779 = vmatprep.subr.mxu0 0.0
  %6780 = vmatpush1.msra.mxu0 %v6714
  %6781 = vmatprep.subr.mxu0 0.0
  %6782 = vmatpush1.msra.mxu0 %v6712
  %6783 = vmatprep.subr.mxu0 0.0
  %6784 = vmatpush1.msra.mxu0 %v6710
  %6785 = vmatprep.subr.mxu0 0.0
  %6786 = vmatpush1.msra.mxu0 %v6708
  %6787 = vmatprep.subr.mxu0 0.0
  %6788 = vmatpush1.msra.mxu0 %v6706
  %6789 = vmatprep.subr.mxu0 0.0
  %6790 = vmatpush1.msra.mxu0 %v6704
  %6791 = vmatprep.subr.mxu0 0.0
  %6792 = vmatpush1.msra.mxu0 %v6692
  %6793 = vmatprep.subr.mxu0 0.0
  %6794 = vmatpush1.msra.mxu0 %v6687
  %6795 = vmatprep.subr.mxu0 0.0
  %6796 = vmatpush1.msra.mxu0 %v6682
  %6797 = vmatprep.subr.mxu0 0.0
  %6798 = vmatpush1.msra.mxu0 %v6677
  %6799 = vmatprep.subr.mxu0 0.0
  %6800 = vmatpush1.msra.mxu0 %v6672
  %6801 = vmatprep.subr.mxu0 0.0
  %6802 = vmatpush1.msra.mxu0 %v6667
  %6803 = vmatprep.subr.mxu0 0.0
  %6804 = vmatpush1.msra.mxu0 %v6662
  %6805 = vmatprep.subr.mxu0 0.0
  %6806 = vmatpush1.msra.mxu0 %v6657
  %6807 = vmatprep.subr.mxu0 0.0
  %6808 = vmatpush2.msra.mxu0 %v6766
  %6809 = vmatprep.subr.mxu0 0.0
  %6810 = vmatpush2.msra.mxu0 %v6764
  %6811 = vmatprep.subr.mxu0 0.0
  %6812 = vmatpush2.msra.mxu0 %v6762
  %6813 = vmatprep.subr.mxu0 0.0
  %6814 = vmatpush2.msra.mxu0 %v6760
  %6815 = vmatprep.subr.mxu0 0.0
  %6816 = vmatpush2.msra.mxu0 %v6758
  %6817 = vmatprep.subr.mxu0 0.0
  %6818 = vmatpush2.msra.mxu0 %v6756
  %6819 = vmatprep.subr.mxu0 0.0
  %6820 = vmatpush2.msra.mxu0 %v6754
  %6821 = vmatprep.subr.mxu0 0.0
  %6822 = vmatpush2.msra.mxu0 %v6752
  %6823 = vmatprep.subr.mxu0 0.0
  %6824 = vmatpush2.msra.mxu0 %v6742
  %6825 = vmatprep.subr.mxu0 0.0
  %6826 = vmatpush2.msra.mxu0 %v6740
  %6827 = vmatprep.subr.mxu0 0.0
  %6828 = vmatpush2.msra.mxu0 %v6738
  %6829 = vmatprep.subr.mxu0 0.0
  %6830 = vmatpush2.msra.mxu0 %v6736
  %6831 = vmatprep.subr.mxu0 0.0
  %6832 = vmatpush2.msra.mxu0 %v6734
  %6833 = vmatprep.subr.mxu0 0.0
  %6834 = vmatpush2.msra.mxu0 %v6732
  %6835 = vmatprep.subr.mxu0 0.0
  %6836 = vmatpush2.msra.mxu0 %v6730
  %6837 = vmatprep.subr.mxu0 0.0
  %6838 = vmatpush2.msra.mxu0 %v6728
  %6839 = vmatprep.mubr.f32.mxu0 %v227
  %6840 = vmatmul.mubr.f32.gmra.mxu0 %v226
  %v6841 = vpop.f32.mrf.mxu0
  %v6842 = vadd.f32 %v3293, %v6841
  %v6843 = vpop.f32.mrf.mxu0
  %6844 = vmatprep.mubr.f32.mxu0 %v229
  %6845 = vmatmul.mubr.f32.gmra.mxu0 %v228
  %v6846 = vpop.f32.mrf.mxu0
  %v6847 = vadd.f32 %v3298, %v6846
  %v6848 = vpop.f32.mrf.mxu0
  %6849 = vmatprep.mubr.f32.mxu0 %v231
  %6850 = vmatmul.mubr.f32.gmra.mxu0 %v230
  %v6851 = vpop.f32.mrf.mxu0
  %v6852 = vadd.f32 %v3303, %v6851
  %v6853 = vpop.f32.mrf.mxu0
  %6854 = vmatprep.mubr.f32.mxu0 %v233
  %6855 = vmatmul.mubr.f32.gmra.mxu0 %v232
  %v6856 = vpop.f32.mrf.mxu0
  %v6857 = vadd.f32 %v3308, %v6856
  %v6858 = vpop.f32.mrf.mxu0
  %6859 = vdwg.mxu0
  %v6860 = vmax.f32 %v6842, 0.0
  %v6861 = vmax.f32 %v6847, 0.0
  %v6862 = vmax.f32 %v6852, 0.0
  %v6863 = vmax.f32 %v6857, 0.0
  %6868 = vrot.lane.b32.xlu0 %v6860, 127
  %v6869 = vpop.permute.xlu0 %6868
  %6870 = vrot.lane.b32.xlu0 %v6861, 127
  %v6871 = vpop.permute.xlu0 %6870
  %6872 = vrot.lane.b32.xlu0 %v6862, 127
  %v6873 = vpop.permute.xlu0 %6872
  %6874 = vrot.lane.b32.xlu0 %v6863, 127
  %v6875 = vpop.permute.xlu0 %6874
  %6880 = vrot.lane.b32.xlu0 %v6860, 126
  %v6881 = vpop.permute.xlu0 %6880
  %6882 = vrot.lane.b32.xlu0 %v6861, 126
  %v6883 = vpop.permute.xlu0 %6882
  %6884 = vrot.lane.b32.xlu0 %v6862, 126
  %v6885 = vpop.permute.xlu0 %6884
  %6886 = vrot.lane.b32.xlu0 %v6863, 126
  %v6887 = vpop.permute.xlu0 %6886
  %6892 = vrot.lane.b32.xlu0 %v6860, 125
  %v6893 = vpop.permute.xlu0 %6892
  %6894 = vrot.lane.b32.xlu0 %v6861, 125
  %v6895 = vpop.permute.xlu0 %6894
  %6896 = vrot.lane.b32.xlu0 %v6862, 125
  %v6897 = vpop.permute.xlu0 %6896
  %6898 = vrot.lane.b32.xlu0 %v6863, 125
  %v6899 = vpop.permute.xlu0 %6898
  %6904 = vrot.lane.b32.xlu0 %v6860, 124
  %v6905 = vpop.permute.xlu0 %6904
  %6906 = vrot.lane.b32.xlu0 %v6861, 124
  %v6907 = vpop.permute.xlu0 %6906
  %6908 = vrot.lane.b32.xlu0 %v6862, 124
  %v6909 = vpop.permute.xlu0 %6908
  %6910 = vrot.lane.b32.xlu0 %v6863, 124
  %v6911 = vpop.permute.xlu0 %6910
  %6916 = vrot.lane.b32.xlu0 %v6860, 123
  %v6917 = vpop.permute.xlu0 %6916
  %6918 = vrot.lane.b32.xlu0 %v6861, 123
  %v6919 = vpop.permute.xlu0 %6918
  %6920 = vrot.lane.b32.xlu0 %v6862, 123
  %v6921 = vpop.permute.xlu0 %6920
  %6922 = vrot.lane.b32.xlu0 %v6863, 123
  %v6923 = vpop.permute.xlu0 %6922
  %6928 = vrot.lane.b32.xlu0 %v6860, 122
  %v6929 = vpop.permute.xlu0 %6928
  %6930 = vrot.lane.b32.xlu0 %v6861, 122
  %v6931 = vpop.permute.xlu0 %6930
  %6932 = vrot.lane.b32.xlu0 %v6862, 122
  %v6933 = vpop.permute.xlu0 %6932
  %6934 = vrot.lane.b32.xlu0 %v6863, 122
  %v6935 = vpop.permute.xlu0 %6934
  %6940 = vrot.lane.b32.xlu0 %v6860, 121
  %v6941 = vpop.permute.xlu0 %6940
  %6942 = vrot.lane.b32.xlu0 %v6861, 121
  %v6943 = vpop.permute.xlu0 %6942
  %6944 = vrot.lane.b32.xlu0 %v6862, 121
  %v6945 = vpop.permute.xlu0 %6944
  %6946 = vrot.lane.b32.xlu0 %v6863, 121
  %v6947 = vpop.permute.xlu0 %6946
  %6952 = vrot.lane.b32.xlu0 %v6860, 120
  %v6953 = vpop.permute.xlu0 %6952
  %6954 = vrot.lane.b32.xlu0 %v6861, 120
  %v6955 = vpop.permute.xlu0 %6954
  %6956 = vrot.lane.b32.xlu0 %v6862, 120
  %v6957 = vpop.permute.xlu0 %6956
  %6958 = vrot.lane.b32.xlu0 %v6863, 120
  %v6959 = vpop.permute.xlu0 %6958
  %6964 = vrot.lane.b32.xlu0 %v6860, 119
  %v6965 = vpop.permute.xlu0 %6964
  %6966 = vrot.lane.b32.xlu0 %v6861, 119
  %v6967 = vpop.permute.xlu0 %6966
  %6968 = vrot.lane.b32.xlu0 %v6862, 119
  %v6969 = vpop.permute.xlu0 %6968
  %6970 = vrot.lane.b32.xlu0 %v6863, 119
  %v6971 = vpop.permute.xlu0 %6970
  %6976 = vmatprep.subr.mxu0 0.0
  %6977 = vmatpush1.msra.mxu0 %v6899
  %6978 = vmatprep.subr.mxu0 0.0
  %6979 = vmatpush1.msra.mxu0 %v6897
  %6980 = vmatprep.subr.mxu0 0.0
  %6981 = vmatpush1.msra.mxu0 %v6895
  %6982 = vmatprep.subr.mxu0 0.0
  %6983 = vmatpush1.msra.mxu0 %v6893
  %6984 = vmatprep.subr.mxu0 0.0
  %6985 = vmatpush1.msra.mxu0 %v6887
  %6986 = vmatprep.subr.mxu0 0.0
  %6987 = vmatpush1.msra.mxu0 %v6885
  %6988 = vmatprep.subr.mxu0 0.0
  %6989 = vmatpush1.msra.mxu0 %v6883
  %6990 = vmatprep.subr.mxu0 0.0
  %6991 = vmatpush1.msra.mxu0 %v6881
  %6992 = vmatprep.subr.mxu0 0.0
  %6993 = vmatpush1.msra.mxu0 %v6875
  %6994 = vmatprep.subr.mxu0 0.0
  %6995 = vmatpush1.msra.mxu0 %v6873
  %6996 = vmatprep.subr.mxu0 0.0
  %6997 = vmatpush1.msra.mxu0 %v6871
  %6998 = vmatprep.subr.mxu0 0.0
  %6999 = vmatpush1.msra.mxu0 %v6869
  %7000 = vmatprep.subr.mxu0 0.0
  %7001 = vmatpush1.msra.mxu0 %v6863
  %7002 = vmatprep.subr.mxu0 0.0
  %7003 = vmatpush1.msra.mxu0 %v6862
  %7004 = vmatprep.subr.mxu0 0.0
  %7005 = vmatpush1.msra.mxu0 %v6861
  %7006 = vmatprep.subr.mxu0 0.0
  %7007 = vmatpush1.msra.mxu0 %v6860
  %7008 = vmatprep.subr.mxu0 0.0
  %7009 = vmatpush2.msra.mxu0 %v6947
  %7010 = vmatprep.subr.mxu0 0.0
  %7011 = vmatpush2.msra.mxu0 %v6945
  %7012 = vmatprep.subr.mxu0 0.0
  %7013 = vmatpush2.msra.mxu0 %v6943
  %7014 = vmatprep.subr.mxu0 0.0
  %7015 = vmatpush2.msra.mxu0 %v6941
  %7016 = vmatprep.subr.mxu0 0.0
  %7017 = vmatpush2.msra.mxu0 %v6935
  %7018 = vmatprep.subr.mxu0 0.0
  %7019 = vmatpush2.msra.mxu0 %v6933
  %7020 = vmatprep.subr.mxu0 0.0
  %7021 = vmatpush2.msra.mxu0 %v6931
  %7022 = vmatprep.subr.mxu0 0.0
  %7023 = vmatpush2.msra.mxu0 %v6929
  %7024 = vmatprep.subr.mxu0 0.0
  %7025 = vmatpush2.msra.mxu0 %v6923
  %7026 = vmatprep.subr.mxu0 0.0
  %7027 = vmatpush2.msra.mxu0 %v6921
  %7028 = vmatprep.subr.mxu0 0.0
  %7029 = vmatpush2.msra.mxu0 %v6919
  %7030 = vmatprep.subr.mxu0 0.0
  %7031 = vmatpush2.msra.mxu0 %v6917
  %7032 = vmatprep.subr.mxu0 0.0
  %7033 = vmatpush2.msra.mxu0 %v6911
  %7034 = vmatprep.subr.mxu0 0.0
  %7035 = vmatpush2.msra.mxu0 %v6909
  %7036 = vmatprep.subr.mxu0 0.0
  %7037 = vmatpush2.msra.mxu0 %v6907
  %7038 = vmatprep.subr.mxu0 0.0
  %7039 = vmatpush2.msra.mxu0 %v6905
  %7040 = vmatprep.mubr.f32.mxu0 %v244
  %7041 = vmatmul.mubr.f32.gmra.mxu0 %v243
  %v7042 = vpop.f32.mrf.mxu0
  %v7043 = vadd.f32 %v255, %v7042
  %v7044 = vpop.f32.mrf.mxu0
  %7045 = vmatprep.mubr.f32.mxu0 %v247
  %7046 = vmatmul.mubr.f32.gmra.mxu0 %v246
  %v7047 = vpop.f32.mrf.mxu0
  %v7048 = vadd.f32 %v256, %v7047
  %v7049 = vpop.f32.mrf.mxu0
  %7050 = vmatprep.mubr.f32.mxu0 %v250
  %7051 = vmatmul.mubr.f32.gmra.mxu0 %v249
  %v7052 = vpop.f32.mrf.mxu0
  %v7053 = vadd.f32 %v257, %v7052
  %v7054 = vpop.f32.mrf.mxu0
  %7055 = vmatprep.mubr.f32.mxu0 %v253
  %7056 = vmatmul.mubr.f32.gmra.mxu0 %v252
  %v7057 = vpop.f32.mrf.mxu0
  %v7058 = vadd.f32 %v258, %v7057
  %v7059 = vpop.f32.mrf.mxu0
  %7060 = vdwg.mxu0
  %7061 = vmatprep.subr.mxu0 0.0
  %7062 = vmatpush1.msra.mxu0 0.0
  %7063 = vmatprep.subr.mxu0 0.0
  %7064 = vmatpush1.msra.mxu0 0.0
  %7065 = vmatprep.subr.mxu0 0.0
  %7066 = vmatpush1.msra.mxu0 0.0
  %7067 = vmatprep.subr.mxu0 0.0
  %7068 = vmatpush1.msra.mxu0 0.0
  %7069 = vmatprep.subr.mxu0 0.0
  %7070 = vmatpush1.msra.mxu0 0.0
  %7071 = vmatprep.subr.mxu0 0.0
  %7072 = vmatpush1.msra.mxu0 0.0
  %7073 = vmatprep.subr.mxu0 0.0
  %7074 = vmatpush1.msra.mxu0 0.0
  %7075 = vmatprep.subr.mxu0 0.0
  %7076 = vmatpush1.msra.mxu0 0.0
  %7077 = vmatprep.subr.mxu0 0.0
  %7078 = vmatpush1.msra.mxu0 %v6971
  %7079 = vmatprep.subr.mxu0 0.0
  %7080 = vmatpush1.msra.mxu0 %v6969
  %7081 = vmatprep.subr.mxu0 0.0
  %7082 = vmatpush1.msra.mxu0 %v6967
  %7083 = vmatprep.subr.mxu0 0.0
  %7084 = vmatpush1.msra.mxu0 %v6965
  %7085 = vmatprep.subr.mxu0 0.0
  %7086 = vmatpush1.msra.mxu0 %v6959
  %7087 = vmatprep.subr.mxu0 0.0
  %7088 = vmatpush1.msra.mxu0 %v6957
  %7089 = vmatprep.subr.mxu0 0.0
  %7090 = vmatpush1.msra.mxu0 %v6955
  %7091 = vmatprep.subr.mxu0 0.0
  %7092 = vmatpush1.msra.mxu0 %v6953
  %7093 = vmatprep.subr.mxu0 0.0
  %7094 = vmatpush2.msra.mxu0 0.0
  %7095 = vmatprep.subr.mxu0 0.0
  %7096 = vmatpush2.msra.mxu0 0.0
  %7097 = vmatprep.subr.mxu0 0.0
  %7098 = vmatpush2.msra.mxu0 0.0
  %7099 = vmatprep.subr.mxu0 0.0
  %7100 = vmatpush2.msra.mxu0 0.0
  %7101 = vmatprep.subr.mxu0 0.0
  %7102 = vmatpush2.msra.mxu0 0.0
  %7103 = vmatprep.subr.mxu0 0.0
  %7104 = vmatpush2.msra.mxu0 0.0
  %7105 = vmatprep.subr.mxu0 0.0
  %7106 = vmatpush2.msra.mxu0 0.0
  %7107 = vmatprep.subr.mxu0 0.0
  %7108 = vmatpush2.msra.mxu0 0.0
  %7109 = vmatprep.subr.mxu0 0.0
  %7110 = vmatpush2.msra.mxu0 0.0
  %7111 = vmatprep.subr.mxu0 0.0
  %7112 = vmatpush2.msra.mxu0 0.0
  %7113 = vmatprep.subr.mxu0 0.0
  %7114 = vmatpush2.msra.mxu0 0.0
  %7115 = vmatprep.subr.mxu0 0.0
  %7116 = vmatpush2.msra.mxu0 0.0
  %7117 = vmatprep.subr.mxu0 0.0
  %7118 = vmatpush2.msra.mxu0 0.0
  %7119 = vmatprep.subr.mxu0 0.0
  %7120 = vmatpush2.msra.mxu0 0.0
  %7121 = vmatprep.subr.mxu0 0.0
  %7122 = vmatpush2.msra.mxu0 0.0
  %7123 = vmatprep.subr.mxu0 0.0
  %7124 = vmatpush2.msra.mxu0 0.0
  %7125 = vmatprep.mubr.f32.mxu0 0.0
  %7126 = vmatmul.mubr.f32.gmra.mxu0 %v3512
  %v7127 = vpop.f32.mrf.mxu0
  %v7128 = vadd.f32 %v7043, %v7127
  %v7129 = vpop.f32.mrf.mxu0
  %7130 = vmatprep.mubr.f32.mxu0 0.0
  %7131 = vmatmul.mubr.f32.gmra.mxu0 %v3515
  %v7132 = vpop.f32.mrf.mxu0
  %v7133 = vadd.f32 %v7048, %v7132
  %v7134 = vpop.f32.mrf.mxu0
  %7135 = vmatprep.mubr.f32.mxu0 0.0
  %7136 = vmatmul.mubr.f32.gmra.mxu0 %v3518
  %v7137 = vpop.f32.mrf.mxu0
  %v7138 = vadd.f32 %v7053, %v7137
  %v7139 = vpop.f32.mrf.mxu0
  %7140 = vmatprep.mubr.f32.mxu0 0.0
  %7141 = vmatmul.mubr.f32.gmra.mxu0 %v3521
  %v7142 = vpop.f32.mrf.mxu0
  %v7143 = vadd.f32 %v7058, %v7142
  %v7144 = vpop.f32.mrf.mxu0
  %7145 = vdwg.mxu0
  %v7146 = vmax.f32 %v7128, 0.0
  %v7147 = vmax.f32 %v7133, 0.0
  %v7148 = vmax.f32 %v7138, 0.0
  %v7149 = vmax.f32 %v7143, 0.0
  %7150 = vrot.lane.b32.xlu0 %v289, 127
  %v7151 = vpop.permute.xlu0 %7150
  %v7152 = vsel %vm3710, %v7151, 0
  %7154 = vmatprep.subr.mxu0 0.0
  %7155 = vmatpush1.msra.mxu0 0.0
  %7156 = vmatprep.subr.mxu0 0.0
  %7157 = vmatpush1.msra.mxu0 0.0
  %7158 = vmatprep.subr.mxu0 0.0
  %7159 = vmatpush1.msra.mxu0 0.0
  %7160 = vmatprep.subr.mxu0 0.0
  %7161 = vmatpush1.msra.mxu0 0.0
  %7162 = vmatprep.subr.mxu0 0.0
  %7163 = vmatpush1.msra.mxu0 0.0
  %7164 = vmatprep.subr.mxu0 0.0
  %7165 = vmatpush1.msra.mxu0 0.0
  %7166 = vmatprep.subr.mxu0 0.0
  %7167 = vmatpush1.msra.mxu0 0.0
  %7168 = vmatprep.subr.mxu0 0.0
  %7169 = vmatpush1.msra.mxu0 0.0
  %7170 = vmatprep.subr.mxu0 0.0
  %7171 = vmatpush1.msra.mxu0 0.0
  %7172 = vmatprep.subr.mxu0 0.0
  %7173 = vmatpush1.msra.mxu0 0.0
  %7174 = vmatprep.subr.mxu0 0.0
  %7175 = vmatpush1.msra.mxu0 0.0
  %7176 = vmatprep.subr.mxu0 0.0
  %7177 = vmatpush1.msra.mxu0 %v7152
  %7178 = vmatprep.subr.mxu0 0.0
  %7179 = vmatpush1.msra.mxu0 %v7149
  %7180 = vmatprep.subr.mxu0 0.0
  %7181 = vmatpush1.msra.mxu0 %v7148
  %7182 = vmatprep.subr.mxu0 0.0
  %7183 = vmatpush1.msra.mxu0 %v7147
  %7184 = vmatprep.subr.mxu0 0.0
  %7185 = vmatpush1.msra.mxu0 %v7146
  %7186 = vmatprep.subr.mxu0 0.0
  %7187 = vmatpush2.msra.mxu0 0.0
  %7188 = vmatprep.subr.mxu0 0.0
  %7189 = vmatpush2.msra.mxu0 0.0
  %7190 = vmatprep.subr.mxu0 0.0
  %7191 = vmatpush2.msra.mxu0 0.0
  %7192 = vmatprep.subr.mxu0 0.0
  %7193 = vmatpush2.msra.mxu0 0.0
  %7194 = vmatprep.subr.mxu0 0.0
  %7195 = vmatpush2.msra.mxu0 0.0
  %7196 = vmatprep.subr.mxu0 0.0
  %7197 = vmatpush2.msra.mxu0 0.0
  %7198 = vmatprep.subr.mxu0 0.0
  %7199 = vmatpush2.msra.mxu0 0.0
  %7200 = vmatprep.subr.mxu0 0.0
  %7201 = vmatpush2.msra.mxu0 0.0
  %7202 = vmatprep.subr.mxu0 0.0
  %7203 = vmatpush2.msra.mxu0 0.0
  %7204 = vmatprep.subr.mxu0 0.0
  %7205 = vmatpush2.msra.mxu0 0.0
  %7206 = vmatprep.subr.mxu0 0.0
  %7207 = vmatpush2.msra.mxu0 0.0
  %7208 = vmatprep.subr.mxu0 0.0
  %7209 = vmatpush2.msra.mxu0 0.0
  %7210 = vmatprep.subr.mxu0 0.0
  %7211 = vmatpush2.msra.mxu0 0.0
  %7212 = vmatprep.subr.mxu0 0.0
  %7213 = vmatpush2.msra.mxu0 0.0
  %7214 = vmatprep.subr.mxu0 0.0
  %7215 = vmatpush2.msra.mxu0 0.0
  %7216 = vmatprep.subr.mxu0 0.0
  %7217 = vmatpush2.msra.mxu0 0.0
  %7218 = vmatprep.mubr.f32.mxu0 0.0
  %7219 = vmatmul.mubr.f32.gmra.mxu0 %v3699
  %v7220 = vpop.f32.mrf.mxu0
  %v7221 = vadd.f32 %v266, %v7220
  %v7222 = vpop.f32.mrf.mxu0
  %7223 = vmatprep.mubr.f32.mxu0 0.0
  %7224 = vmatmul.mubr.f32.gmra.mxu0 %v3702
  %v7225 = vpop.f32.mrf.mxu0
  %v7226 = vadd.f32 %v267, %v7225
  %v7227 = vpop.f32.mrf.mxu0
  %7228 = vmatprep.mubr.f32.mxu0 0.0
  %7229 = vmatmul.mubr.f32.gmra.mxu0 %v3705
  %v7230 = vpop.f32.mrf.mxu0
  %v7231 = vadd.f32 %v268, %v7230
  %v7232 = vpop.f32.mrf.mxu0
  %7233 = vmatprep.mubr.f32.mxu0 0.0
  %7234 = vmatmul.mubr.f32.gmra.mxu0 %v3708
  %v7235 = vpop.f32.mrf.mxu0
  %v7236 = vadd.f32 %v269, %v7235
  %v7237 = vpop.f32.mrf.mxu0
  %7238 = vdwg.mxu0
  %v7239 = vmax.f32 %v7221, 0.0
  %v7240 = vmax.f32 %v7226, 0.0
  %v7241 = vmax.f32 %v7231, 0.0
  %v7242 = vmax.f32 %v7236, 0.0
  %7243 = vmatprep.subr.mxu0 0.0
  %7244 = vmatpush1.msra.mxu0 0.0
  %7245 = vmatprep.subr.mxu0 0.0
  %7246 = vmatpush1.msra.mxu0 0.0
  %7247 = vmatprep.subr.mxu0 0.0
  %7248 = vmatpush1.msra.mxu0 0.0
  %7249 = vmatprep.subr.mxu0 0.0
  %7250 = vmatpush1.msra.mxu0 0.0
  %7251 = vmatprep.subr.mxu0 0.0
  %7252 = vmatpush1.msra.mxu0 0.0
  %7253 = vmatprep.subr.mxu0 0.0
  %7254 = vmatpush1.msra.mxu0 0.0
  %7255 = vmatprep.subr.mxu0 0.0
  %7256 = vmatpush1.msra.mxu0 0.0
  %7257 = vmatprep.subr.mxu0 0.0
  %7258 = vmatpush1.msra.mxu0 0.0
  %7259 = vmatprep.subr.mxu0 0.0
  %7260 = vmatpush1.msra.mxu0 0.0
  %7261 = vmatprep.subr.mxu0 0.0
  %7262 = vmatpush1.msra.mxu0 0.0
  %7263 = vmatprep.subr.mxu0 0.0
  %7264 = vmatpush1.msra.mxu0 0.0
  %7265 = vmatprep.subr.mxu0 0.0
  %7266 = vmatpush1.msra.mxu0 0.0
  %7267 = vmatprep.subr.mxu0 0.0
  %7268 = vmatpush1.msra.mxu0 %v7242
  %7269 = vmatprep.subr.mxu0 0.0
  %7270 = vmatpush1.msra.mxu0 %v7241
  %7271 = vmatprep.subr.mxu0 0.0
  %7272 = vmatpush1.msra.mxu0 %v7240
  %7273 = vmatprep.subr.mxu0 0.0
  %7274 = vmatpush1.msra.mxu0 %v7239
  %7275 = vmatprep.subr.mxu0 0.0
  %7276 = vmatpush2.msra.mxu0 0.0
  %7277 = vmatprep.subr.mxu0 0.0
  %7278 = vmatpush2.msra.mxu0 0.0
  %7279 = vmatprep.subr.mxu0 0.0
  %7280 = vmatpush2.msra.mxu0 0.0
  %7281 = vmatprep.subr.mxu0 0.0
  %7282 = vmatpush2.msra.mxu0 0.0
  %7283 = vmatprep.subr.mxu0 0.0
  %7284 = vmatpush2.msra.mxu0 0.0
  %7285 = vmatprep.subr.mxu0 0.0
  %7286 = vmatpush2.msra.mxu0 0.0
  %7287 = vmatprep.subr.mxu0 0.0
  %7288 = vmatpush2.msra.mxu0 0.0
  %7289 = vmatprep.subr.mxu0 0.0
  %7290 = vmatpush2.msra.mxu0 0.0
  %7291 = vmatprep.subr.mxu0 0.0
  %7292 = vmatpush2.msra.mxu0 0.0
  %7293 = vmatprep.subr.mxu0 0.0
  %7294 = vmatpush2.msra.mxu0 0.0
  %7295 = vmatprep.subr.mxu0 0.0
  %7296 = vmatpush2.msra.mxu0 0.0
  %7297 = vmatprep.subr.mxu0 0.0
  %7298 = vmatpush2.msra.mxu0 0.0
  %7299 = vmatprep.subr.mxu0 0.0
  %7300 = vmatpush2.msra.mxu0 0.0
  %7301 = vmatprep.subr.mxu0 0.0
  %7302 = vmatpush2.msra.mxu0 0.0
  %7303 = vmatprep.subr.mxu0 0.0
  %7304 = vmatpush2.msra.mxu0 0.0
  %7305 = vmatprep.subr.mxu0 0.0
  %7306 = vmatpush2.msra.mxu0 0.0
  %7307 = vmatprep.mubr.f32.mxu0 0.0
  %7308 = vmatmul.mubr.f32.gmra.mxu0 %v3804
  %v7309 = vpop.f32.mrf.mxu0
  %v7310 = vadd.f32 %v270, %v7309
  %v7311 = vpop.f32.mrf.mxu0
  %7312 = vmatprep.mubr.f32.mxu0 0.0
  %7313 = vmatmul.mubr.f32.gmra.mxu0 %v3807
  %v7314 = vpop.f32.mrf.mxu0
  %v7315 = vadd.f32 %v271, %v7314
  %v7316 = vpop.f32.mrf.mxu0
  %7317 = vdwg.mxu0
  %v7318 = vmax.f32 %v7310, 0.0
  %v7319 = vmax.f32 %v7315, 0.0
  %7320 = vmatprep.subr.mxu0 0.0
  %7321 = vmatpush1.msra.mxu0 0.0
  %7322 = vmatprep.subr.mxu0 0.0
  %7323 = vmatpush1.msra.mxu0 0.0
  %7324 = vmatprep.subr.mxu0 0.0
  %7325 = vmatpush1.msra.mxu0 0.0
  %7326 = vmatprep.subr.mxu0 0.0
  %7327 = vmatpush1.msra.mxu0 0.0
  %7328 = vmatprep.subr.mxu0 0.0
  %7329 = vmatpush1.msra.mxu0 0.0
  %7330 = vmatprep.subr.mxu0 0.0
  %7331 = vmatpush1.msra.mxu0 0.0
  %7332 = vmatprep.subr.mxu0 0.0
  %7333 = vmatpush1.msra.mxu0 0.0
  %7334 = vmatprep.subr.mxu0 0.0
  %7335 = vmatpush1.msra.mxu0 0.0
  %7336 = vmatprep.subr.mxu0 0.0
  %7337 = vmatpush1.msra.mxu0 0.0
  %7338 = vmatprep.subr.mxu0 0.0
  %7339 = vmatpush1.msra.mxu0 0.0
  %7340 = vmatprep.subr.mxu0 0.0
  %7341 = vmatpush1.msra.mxu0 0.0
  %7342 = vmatprep.subr.mxu0 0.0
  %7343 = vmatpush1.msra.mxu0 0.0
  %7344 = vmatprep.subr.mxu0 0.0
  %7345 = vmatpush1.msra.mxu0 0.0
  %7346 = vmatprep.subr.mxu0 0.0
  %7347 = vmatpush1.msra.mxu0 0.0
  %7348 = vmatprep.subr.mxu0 0.0
  %7349 = vmatpush1.msra.mxu0 %v7319
  %7350 = vmatprep.subr.mxu0 0.0
  %7351 = vmatpush1.msra.mxu0 %v7318
  %7352 = vmatprep.subr.mxu0 0.0
  %7353 = vmatpush2.msra.mxu0 0.0
  %7354 = vmatprep.subr.mxu0 0.0
  %7355 = vmatpush2.msra.mxu0 0.0
  %7356 = vmatprep.subr.mxu0 0.0
  %7357 = vmatpush2.msra.mxu0 0.0
  %7358 = vmatprep.subr.mxu0 0.0
  %7359 = vmatpush2.msra.mxu0 0.0
  %7360 = vmatprep.subr.mxu0 0.0
  %7361 = vmatpush2.msra.mxu0 0.0
  %7362 = vmatprep.subr.mxu0 0.0
  %7363 = vmatpush2.msra.mxu0 0.0
  %7364 = vmatprep.subr.mxu0 0.0
  %7365 = vmatpush2.msra.mxu0 0.0
  %7366 = vmatprep.subr.mxu0 0.0
  %7367 = vmatpush2.msra.mxu0 0.0
  %7368 = vmatprep.subr.mxu0 0.0
  %7369 = vmatpush2.msra.mxu0 0.0
  %7370 = vmatprep.subr.mxu0 0.0
  %7371 = vmatpush2.msra.mxu0 0.0
  %7372 = vmatprep.subr.mxu0 0.0
  %7373 = vmatpush2.msra.mxu0 0.0
  %7374 = vmatprep.subr.mxu0 0.0
  %7375 = vmatpush2.msra.mxu0 0.0
  %7376 = vmatprep.subr.mxu0 0.0
  %7377 = vmatpush2.msra.mxu0 0.0
  %7378 = vmatprep.subr.mxu0 0.0
  %7379 = vmatpush2.msra.mxu0 0.0
  %7380 = vmatprep.subr.mxu0 0.0
  %7381 = vmatpush2.msra.mxu0 0.0
  %7382 = vmatprep.subr.mxu0 0.0
  %7383 = vmatpush2.msra.mxu0 0.0
  %7384 = vmatprep.mubr.f32.mxu0 0.0
  %7385 = vmatmul.mubr.f32.gmra.mxu0 %v3887
  %v7386 = vpop.f32.mrf.mxu0
  %v7387 = vadd.f32 %v272, %v7386
  %v7388 = vpop.f32.mrf.mxu0
  %7389 = vdwg.mxu0
  %7391 = vrot.lane.b32.xlu0 %v7387, 1
  %v7392 = vpop.permute.xlu0 %7391
  %vm7394 = vcmask 7168
  %v7395 = vsel %vm7394, %v3956, %v7392
  %vm7396 = vcmask 11264
  %7397 = vst.msk [vmem:[%s26] sm:$0xf] %vm7396, %v7395
  // Predicated region
  $region106: #{dqn_conv_forward.1} parent=0 // pred_check
    _
  $region107: #{dqn_conv_forward.1} parent=0 // pred_check_branch
    %7399 = sbr.rel (0) target = $region109
  $region108: #{dqn_conv_forward.1} parent=0 // pred_region
    _
  $region109: #{dqn_conv_forward.1} parent=0 // pred_fallthru
    _
  // Predicated region
  $region110: #{dqn_conv_forward.1} parent=0 // pred_check
    _
  $region111: #{dqn_conv_forward.1} parent=0 // pred_check_branch
    %7401 = sbr.rel (0) target = $region113
  $region112: #{dqn_conv_forward.1} parent=0 // pred_region
    _
  $region113: #{dqn_conv_forward.1} parent=0 // pred_fallthru
    _

</llo_original>
